<compile_context>
chip_gen: v6e
topology: v6e:2x2x1
jax: 0.10.0
libtpu: 0.0.40
codegen_flags: <defaults>
</compile_context>

<pallas_src>
import functools

import jax
import jax.numpy as jnp
from jax.experimental import pallas as pl
from jax.experimental.pallas import tpu as pltpu


def global_model_kernel(x_ref, wih_ref, whh_ref, brnn_ref, m_ref, bias_ref,
                        out_ref, h_ref, *, seq_len, num_chains):
    """One grid step = (batch tile b, time chunk c) of the Elman recurrence.

    x_ref    : (TB, TC, D)  current (batch tile, time chunk) of x (batch_first)
    wih_ref  : (D, H)       W_ih^T
    whh_ref  : (H, H)       W_hh^T
    brnn_ref : (1, H)       b_ih + b_hh
    m_ref    : (H, OW)      fused tail matrix (fc -> view -> dec -> @W folded)
    bias_ref : (1, OW)      fused tail bias
    out_ref  : (TB, OW)
    h_ref    : (TB, H)      VMEM scratch carrying the hidden state across chunks
    """
    TB, TC, D = x_ref.shape
    H = whh_ref.shape[0]
    chunk = pl.program_id(1)

    @pl.when(chunk == 0)
    def _init():
        h_ref[...] = jnp.zeros_like(h_ref)
        out_ref[...] = jnp.zeros_like(out_ref)   # never leave the output buffer uninit

    # ---- hoisted input projection: ONE 2-D matmul per chunk, off the serial path.
    # Merging (TB, TC) -> TB*TC is relayout-free when TC % 8 == 0 (always true for
    # multi-chunk runs); single-chunk runs pay at most one small VMEM copy.
    xw = (jnp.dot(x_ref[...].reshape(TB * TC, D), wih_ref[...],
                  preferred_element_type=jnp.float32)
          + brnn_ref[...]).reshape(TB, TC, H)

    whh = whh_ref[...]
    rows = TB // num_chains
    needs_mask = (seq_len % TC) != 0          # static; only the tail chunk is partial

    # ---- serial recurrence, statically unrolled (TC is a Python int).
    # `num_chains` independent batch sub-tiles are round-robined per time step so the
    # MXU push -> pop -> tanh latency of one chain overlaps the others.
    hs = [h_ref[pl.ds(c * rows, rows), :] for c in range(num_chains)]
    for t in range(TC):
        valid = (chunk * TC + t) < seq_len if needs_mask else None
        for c in range(num_chains):
            h_new = jnp.tanh(
                xw[c * rows:(c + 1) * rows, t, :]
                + jnp.dot(hs[c], whh, preferred_element_type=jnp.float32))
            hs[c] = jnp.where(valid, h_new, hs[c]) if needs_mask else h_new
    for c in range(num_chains):
        h_ref[pl.ds(c * rows, rows), :] = hs[c]

    # ---- fused tail on the last chunk only: out = h_last @ M + bias.
    @pl.when(chunk == pl.num_programs(1) - 1)
    def _finalize():
        out_ref[...] = (jnp.dot(h_ref[...], m_ref[...],
                                preferred_element_type=jnp.float32)
                        + bias_ref[...])


def _vmem_limit_bytes():
    """Generation-aware scoped-VMEM limit (v5e/v6e: ~64 MiB, v7x: ~32 MiB)."""
    try:
        cap = int(pltpu.get_tpu_info().vmem_capacity_bytes)
    except Exception:
        cap = 64 * 1024 * 1024
    return int(max(32 * 1024 * 1024, min(cap // 2, 96 * 1024 * 1024)))


def _pick_batch_tile(B):
    if B <= 8:
        return B
    for tb in (128, 64, 32, 16, 8):
        if B % tb == 0:
            return tb
    return B


def _pick_time_chunk(T, TB, D, H, x_budget_bytes):
    # Bound (a) the vreg live-range of the hoisted projection (<= ~128 KiB) and
    # (b) the double-buffered x block in VMEM; keep TC a multiple of 8 so the
    # in-kernel reshape stays tile-aligned.
    max_by_vreg = max(8, (128 * 1024) // max(1, TB * H * 4))
    max_by_vmem = max(8, x_budget_bytes // max(1, 2 * TB * D * 4))
    cap = min(max_by_vreg, max_by_vmem, 1024)
    if T <= cap:
        return T
    return max(8, (cap // 8) * 8)


def global_model_forward(x, params, time_chunk=None, batch_tile=None, num_chains=None):
    """x: (B, T, D) float32, batch_first like the PyTorch module. Returns (B, OW)."""
    B, T, D = x.shape
    H = params["w_hh"].shape[0]
    OW = params["b0"].shape[0]
    f32 = jnp.float32

    # ---- fold fc -> view(-1, OW, D) -> dec -> @W -> +b0 into (H, OW) matrix + bias:
    # final[b,o] = sum_d fc_out[b, o*D+d] * v[d] + fc_b-part + dec_b@W + b0[o],
    # with v = dec_w^T @ W.  (Rounding-level deviation from the exact PyTorch
    # summation order; well within 1e-4.)
    v = params["dec_w"].T.astype(f32) @ params["W"].astype(f32)                      # (D,)
    M = jnp.einsum("hod,d->ho",
                   params["fc_w"].T.astype(f32).reshape(H, OW, D), v)                # (H, OW)
    bias = (params["fc_b"].astype(f32).reshape(OW, D) @ v
            + params["dec_b"].astype(f32) @ params["W"].astype(f32)
            + params["b0"].astype(f32)).reshape(1, OW)                               # (1, OW)

    vmem_limit = _vmem_limit_bytes()

    if batch_tile is None:
        batch_tile = _pick_batch_tile(B)
    TB = min(batch_tile, B)

    if time_chunk is None:
        time_chunk = _pick_time_chunk(T, TB, D, H, vmem_limit // 3)
    time_chunk = min(time_chunk, T)
    if time_chunk != T and time_chunk % 8 != 0:      # keep the sublane dim tileable
        time_chunk = min(T, max(8, (time_chunk // 8) * 8))
    TC = time_chunk

    if num_chains is None:
        num_chains = 4 if TB % 4 == 0 else (2 if TB % 2 == 0 else 1)
    assert TB % num_chains == 0

    num_batch_tiles = pl.cdiv(B, TB)
    num_chunks = pl.cdiv(T, TC)

    args = (
        x.astype(f32),                                                 # (B, T, D), no transpose
        params["w_ih"].T.astype(f32),                                  # (D, H)
        params["w_hh"].T.astype(f32),                                  # (H, H)
        (params["b_ih"] + params["b_hh"]).reshape(1, H).astype(f32),   # (1, H)
        M,                                                             # (H, OW)
        bias,                                                          # (1, OW)
    )

    flops = 2 * T * B * D * H + 2 * T * B * H * H + 2 * B * H * OW
    transcendentals = T * B * H
    bytes_accessed = 4 * (B * T * D + D * H + H * H + H + H * OW + OW + B * OW)

    def build(single_buffer_consts):
        def const_spec(shape):
            idx = lambda b, c: (0,) * len(shape)
            if single_buffer_consts:
                return pl.BlockSpec(shape, idx, pipeline_mode=pl.Buffered(1))
            return pl.BlockSpec(shape, idx)

        grid_spec = pltpu.PrefetchScalarGridSpec(
            num_scalar_prefetch=0,
            grid=(num_batch_tiles, num_chunks),
            in_specs=[
                pl.BlockSpec((TB, TC, D), lambda b, c: (b, c, 0)),     # streamed x
                const_spec((D, H)),
                const_spec((H, H)),
                const_spec((1, H)),
                const_spec((H, OW)),
                const_spec((1, OW)),
            ],
            out_specs=pl.BlockSpec((TB, OW), lambda b, c: (b, 0)),     # resident over chunks
            scratch_shapes=[pltpu.VMEM((TB, H), jnp.float32)],         # carried hidden state
        )
        return pl.pallas_call(
            functools.partial(global_model_kernel, seq_len=T, num_chains=num_chains),
            out_shape=jax.ShapeDtypeStruct((B, OW), jnp.float32),
            grid_spec=grid_spec,
            compiler_params=pltpu.CompilerParams(
                dimension_semantics=("parallel", "arbitrary"),
                vmem_limit_bytes=vmem_limit),
            cost_estimate=pl.CostEstimate(
                flops=flops, transcendentals=transcendentals,
                bytes_accessed=bytes_accessed),
        )

    # Prefer single-buffered grid-invariant operands (saves VMEM, esp. on v7x); fall
    # back to default double buffering if this Pallas build rejects Buffered(1).
    try:
        return build(True)(*args)
    except Exception:
        return build(False)(*args)


def global_model_reference(x, params):
    """Pure-JAX reference mirroring the PyTorch forward exactly."""
    B, T, D = x.shape
    H = params["w_hh"].shape[0]
    OW = params["b0"].shape[0]
    h = jnp.zeros((B, H), jnp.float32)
    for t in range(T):
        h = jnp.tanh(x[:, t, :] @ params["w_ih"].T + params["b_ih"]
                     + h @ params["w_hh"].T + params["b_hh"])
    fc = h @ params["fc_w"].T + params["fc_b"]                         # (B, OW*D)
    out = fc.reshape(B, OW, D)
    red = jnp.einsum("bod,kd->bok", out, params["dec_w"]) + params["dec_b"]
    return jnp.einsum("bok,k->bo", red, params["W"]) + params["b0"]


if __name__ == "__main__":
    # Small shapes consistent with the module (B, T, D, hidden, K, output_window).
    B, T, D, H, K, OW = 2, 20, 4, 32, 3, 6

    key = jax.random.PRNGKey(0)
    ks = jax.random.split(key, 11)
    params = {
        "w_ih":  0.3 * jax.random.normal(ks[0], (H, D), jnp.float32),
        "w_hh":  0.3 * jax.random.normal(ks[1], (H, H), jnp.float32),
        "b_ih":  0.1 * jax.random.normal(ks[2], (H,), jnp.float32),
        "b_hh":  0.1 * jax.random.normal(ks[3], (H,), jnp.float32),
        "fc_w":  0.3 * jax.random.normal(ks[4], (D * OW, H), jnp.float32),
        "fc_b":  0.1 * jax.random.normal(ks[5], (D * OW,), jnp.float32),
        "dec_w": 0.3 * jax.random.normal(ks[6], (K, D), jnp.float32),
        "dec_b": 0.1 * jax.random.normal(ks[7], (K,), jnp.float32),
        "W":     jax.random.normal(ks[8], (K,), jnp.float32),
        "b0":    jax.random.normal(ks[9], (OW,), jnp.float32),
    }
    x = jax.random.normal(ks[10], (B, T, D), jnp.float32)

    ref = global_model_reference(x, params)

    # Default path: heuristic chunking (single chunk at these tiny sizes).
    out_a = jax.block_until_ready(global_model_forward(x, params))
    # Streamed path: 8-step chunks over T=20 -> 3 chunks, last one partial; exercises
    # the carried hidden state, x streaming, and the tail-step masking.
    out_b = jax.block_until_ready(global_model_forward(x, params, time_chunk=8))

    assert out_a.shape == (B, OW) and out_b.shape == (B, OW)
    assert jnp.allclose(out_a, ref, atol=1e-4, rtol=1e-4), (out_a, ref)
    assert jnp.allclose(out_b, ref, atol=1e-4, rtol=1e-4), (out_b, ref)
    print("KERNEL_OK")
</pallas_src>

<mosaic_0001>
module attributes {stable_mosaic.version = 11 : i64} {
  func.func @global_model_kernel(%arg0: i32, %arg1: i32, %arg2: memref<2x20x4xf32, #tpu.memory_space<vmem>>, %arg3: memref<4x32xf32, #tpu.memory_space<vmem>>, %arg4: memref<32x32xf32, #tpu.memory_space<vmem>>, %arg5: memref<1x32xf32, #tpu.memory_space<vmem>>, %arg6: memref<32x6xf32, #tpu.memory_space<vmem>>, %arg7: memref<1x6xf32, #tpu.memory_space<vmem>>, %arg8: memref<2x6xf32, #tpu.memory_space<vmem>>, %arg9: memref<2x32xf32, #tpu.memory_space<vmem>>) attributes {dimension_semantics = [#tpu.dimension_semantics<parallel>, #tpu.dimension_semantics<arbitrary>], iteration_bounds = array<i64: 1, 1>, scalar_prefetch = 0 : i64, scratch_operands = 1 : i64, tpu.core_type = #tpu.core_type<tc>, window_params = [{transform_indices = @transform_0, window_bounds = array<i64: 2, 20, 4>}, {pipeline_mode = #tpu.pipeline_mode<synchronous>, transform_indices = @transform_1, window_bounds = array<i64: 4, 32>}, {pipeline_mode = #tpu.pipeline_mode<synchronous>, transform_indices = @transform_2, window_bounds = array<i64: 32, 32>}, {pipeline_mode = #tpu.pipeline_mode<synchronous>, transform_indices = @transform_3, window_bounds = array<i64: 1, 32>}, {pipeline_mode = #tpu.pipeline_mode<synchronous>, transform_indices = @transform_4, window_bounds = array<i64: 32, 6>}, {pipeline_mode = #tpu.pipeline_mode<synchronous>, transform_indices = @transform_5, window_bounds = array<i64: 1, 6>}, {transform_indices = @transform_6, window_bounds = array<i64: 2, 6>}]} {
    %c0_i32 = arith.constant 0 : i32
    %0 = arith.cmpi eq, %arg1, %c0_i32 : i32
    %1 = arith.extui %0 : i1 to i32
    %c0_i32_0 = arith.constant 0 : i32
    %2 = arith.cmpi ne, %1, %c0_i32_0 : i32
    scf.if %2 {
      %cst_58 = arith.constant 0.000000e+00 : f32
      %219 = vector.broadcast %cst_58 : f32 to vector<2x32xf32>
      %c0_59 = arith.constant 0 : index
      %c0_60 = arith.constant 0 : index
      %220 = vector.load %arg9[%c0_59, %c0_60] : memref<2x32xf32, #tpu.memory_space<vmem>>, vector<2x32xf32>
      tpu.vector_store %arg9[%c0_59, %c0_60], %219 {strides = array<i32>} : memref<2x32xf32, #tpu.memory_space<vmem>>, vector<2x32xf32>,
      %cst_61 = arith.constant 0.000000e+00 : f32
      %221 = vector.broadcast %cst_61 : f32 to vector<2x6xf32>
      %c0_62 = arith.constant 0 : index
      %c0_63 = arith.constant 0 : index
      %222 = vector.load %arg8[%c0_62, %c0_63] : memref<2x6xf32, #tpu.memory_space<vmem>>, vector<2x6xf32>
      tpu.vector_store %arg8[%c0_62, %c0_63], %221 {strides = array<i32>} : memref<2x6xf32, #tpu.memory_space<vmem>>, vector<2x6xf32>,
    } else {
    }
    %c0 = arith.constant 0 : index
    %c0_1 = arith.constant 0 : index
    %c0_2 = arith.constant 0 : index
    %3 = vector.load %arg2[%c0, %c0_1, %c0_2] : memref<2x20x4xf32, #tpu.memory_space<vmem>>, vector<2x20x4xf32>
    %4 = vector.shape_cast %3 : vector<2x20x4xf32> to vector<40x4xf32>
    %c0_3 = arith.constant 0 : index
    %c0_4 = arith.constant 0 : index
    %5 = vector.load %arg3[%c0_3, %c0_4] : memref<4x32xf32, #tpu.memory_space<vmem>>, vector<4x32xf32>
    %cst = arith.constant dense<0.000000e+00> : vector<40x32xf32>
    %6 = tpu.matmul %4, %5, %cst {dimension_numbers = #tpu.dot_dimension_numbers<[1], [0], [0], [1], [0, 0, 1, 1], [], []>} : vector<40x4xf32>, vector<4x32xf32>, vector<40x32xf32> -> vector<40x32xf32>
    %c0_5 = arith.constant 0 : index
    %c0_6 = arith.constant 0 : index
    %7 = vector.load %arg5[%c0_5, %c0_6] : memref<1x32xf32, #tpu.memory_space<vmem>>, vector<1x32xf32>
    %8 = vector.broadcast %7 : vector<1x32xf32> to vector<40x32xf32>
    %9 = arith.addf %6, %8 : vector<40x32xf32>
    %10 = vector.shape_cast %9 : vector<40x32xf32> to vector<2x20x32xf32>
    %c0_7 = arith.constant 0 : index
    %c0_8 = arith.constant 0 : index
    %11 = vector.load %arg4[%c0_7, %c0_8] : memref<32x32xf32, #tpu.memory_space<vmem>>, vector<32x32xf32>
    %c0_9 = arith.constant 0 : index
    %c0_10 = arith.constant 0 : index
    %12 = vector.load %arg9[%c0_9, %c0_10] : memref<2x32xf32, #tpu.memory_space<vmem>>, vector<1x32xf32>
    %c1 = arith.constant 1 : index
    %c0_11 = arith.constant 0 : index
    %13 = vector.load %arg9[%c1, %c0_11] : memref<2x32xf32, #tpu.memory_space<vmem>>, vector<1x32xf32>
    %14 = vector.extract_strided_slice %10 {offsets = [0, 0, 0], sizes = [1, 1, 32], strides = [1, 1, 1]} : vector<2x20x32xf32> to vector<1x1x32xf32>
    %15 = vector.shape_cast %14 : vector<1x1x32xf32> to vector<1x32xf32>
    %cst_12 = arith.constant dense<0.000000e+00> : vector<1x32xf32>
    %16 = tpu.matmul %12, %11, %cst_12 {dimension_numbers = #tpu.dot_dimension_numbers<[1], [0], [0], [1], [0, 0, 1, 1], [], []>} : vector<1x32xf32>, vector<32x32xf32>, vector<1x32xf32> -> vector<1x32xf32>
    %17 = arith.addf %15, %16 : vector<1x32xf32>
    %18 = math.tanh %17 : vector<1x32xf32>
    %19 = vector.extract_strided_slice %10 {offsets = [1, 0, 0], sizes = [1, 1, 32], strides = [1, 1, 1]} : vector<2x20x32xf32> to vector<1x1x32xf32>
    %20 = vector.shape_cast %19 : vector<1x1x32xf32> to vector<1x32xf32>
    %cst_13 = arith.constant dense<0.000000e+00> : vector<1x32xf32>
    %21 = tpu.matmul %13, %11, %cst_13 {dimension_numbers = #tpu.dot_dimension_numbers<[1], [0], [0], [1], [0, 0, 1, 1], [], []>} : vector<1x32xf32>, vector<32x32xf32>, vector<1x32xf32> -> vector<1x32xf32>
    %22 = arith.addf %20, %21 : vector<1x32xf32>
    %23 = math.tanh %22 : vector<1x32xf32>
    %24 = vector.extract_strided_slice %10 {offsets = [0, 1, 0], sizes = [1, 1, 32], strides = [1, 1, 1]} : vector<2x20x32xf32> to vector<1x1x32xf32>
    %25 = vector.shape_cast %24 : vector<1x1x32xf32> to vector<1x32xf32>
    %cst_14 = arith.constant dense<0.000000e+00> : vector<1x32xf32>
    %26 = tpu.matmul %18, %11, %cst_14 {dimension_numbers = #tpu.dot_dimension_numbers<[1], [0], [0], [1], [0, 0, 1, 1], [], []>} : vector<1x32xf32>, vector<32x32xf32>, vector<1x32xf32> -> vector<1x32xf32>
    %27 = arith.addf %25, %26 : vector<1x32xf32>
    %28 = math.tanh %27 : vector<1x32xf32>
    %29 = vector.extract_strided_slice %10 {offsets = [1, 1, 0], sizes = [1, 1, 32], strides = [1, 1, 1]} : vector<2x20x32xf32> to vector<1x1x32xf32>
    %30 = vector.shape_cast %29 : vector<1x1x32xf32> to vector<1x32xf32>
    %cst_15 = arith.constant dense<0.000000e+00> : vector<1x32xf32>
    %31 = tpu.matmul %23, %11, %cst_15 {dimension_numbers = #tpu.dot_dimension_numbers<[1], [0], [0], [1], [0, 0, 1, 1], [], []>} : vector<1x32xf32>, vector<32x32xf32>, vector<1x32xf32> -> vector<1x32xf32>
    %32 = arith.addf %30, %31 : vector<1x32xf32>
    %33 = math.tanh %32 : vector<1x32xf32>
    %34 = vector.extract_strided_slice %10 {offsets = [0, 2, 0], sizes = [1, 1, 32], strides = [1, 1, 1]} : vector<2x20x32xf32> to vector<1x1x32xf32>
    %35 = vector.shape_cast %34 : vector<1x1x32xf32> to vector<1x32xf32>
    %cst_16 = arith.constant dense<0.000000e+00> : vector<1x32xf32>
    %36 = tpu.matmul %28, %11, %cst_16 {dimension_numbers = #tpu.dot_dimension_numbers<[1], [0], [0], [1], [0, 0, 1, 1], [], []>} : vector<1x32xf32>, vector<32x32xf32>, vector<1x32xf32> -> vector<1x32xf32>
    %37 = arith.addf %35, %36 : vector<1x32xf32>
    %38 = math.tanh %37 : vector<1x32xf32>
    %39 = vector.extract_strided_slice %10 {offsets = [1, 2, 0], sizes = [1, 1, 32], strides = [1, 1, 1]} : vector<2x20x32xf32> to vector<1x1x32xf32>
    %40 = vector.shape_cast %39 : vector<1x1x32xf32> to vector<1x32xf32>
    %cst_17 = arith.constant dense<0.000000e+00> : vector<1x32xf32>
    %41 = tpu.matmul %33, %11, %cst_17 {dimension_numbers = #tpu.dot_dimension_numbers<[1], [0], [0], [1], [0, 0, 1, 1], [], []>} : vector<1x32xf32>, vector<32x32xf32>, vector<1x32xf32> -> vector<1x32xf32>
    %42 = arith.addf %40, %41 : vector<1x32xf32>
    %43 = math.tanh %42 : vector<1x32xf32>
    %44 = vector.extract_strided_slice %10 {offsets = [0, 3, 0], sizes = [1, 1, 32], strides = [1, 1, 1]} : vector<2x20x32xf32> to vector<1x1x32xf32>
    %45 = vector.shape_cast %44 : vector<1x1x32xf32> to vector<1x32xf32>
    %cst_18 = arith.constant dense<0.000000e+00> : vector<1x32xf32>
    %46 = tpu.matmul %38, %11, %cst_18 {dimension_numbers = #tpu.dot_dimension_numbers<[1], [0], [0], [1], [0, 0, 1, 1], [], []>} : vector<1x32xf32>, vector<32x32xf32>, vector<1x32xf32> -> vector<1x32xf32>
    %47 = arith.addf %45, %46 : vector<1x32xf32>
    %48 = math.tanh %47 : vector<1x32xf32>
    %49 = vector.extract_strided_slice %10 {offsets = [1, 3, 0], sizes = [1, 1, 32], strides = [1, 1, 1]} : vector<2x20x32xf32> to vector<1x1x32xf32>
    %50 = vector.shape_cast %49 : vector<1x1x32xf32> to vector<1x32xf32>
    %cst_19 = arith.constant dense<0.000000e+00> : vector<1x32xf32>
    %51 = tpu.matmul %43, %11, %cst_19 {dimension_numbers = #tpu.dot_dimension_numbers<[1], [0], [0], [1], [0, 0, 1, 1], [], []>} : vector<1x32xf32>, vector<32x32xf32>, vector<1x32xf32> -> vector<1x32xf32>
    %52 = arith.addf %50, %51 : vector<1x32xf32>
    %53 = math.tanh %52 : vector<1x32xf32>
    %54 = vector.extract_strided_slice %10 {offsets = [0, 4, 0], sizes = [1, 1, 32], strides = [1, 1, 1]} : vector<2x20x32xf32> to vector<1x1x32xf32>
    %55 = vector.shape_cast %54 : vector<1x1x32xf32> to vector<1x32xf32>
    %cst_20 = arith.constant dense<0.000000e+00> : vector<1x32xf32>
    %56 = tpu.matmul %48, %11, %cst_20 {dimension_numbers = #tpu.dot_dimension_numbers<[1], [0], [0], [1], [0, 0, 1, 1], [], []>} : vector<1x32xf32>, vector<32x32xf32>, vector<1x32xf32> -> vector<1x32xf32>
    %57 = arith.addf %55, %56 : vector<1x32xf32>
    %58 = math.tanh %57 : vector<1x32xf32>
    %59 = vector.extract_strided_slice %10 {offsets = [1, 4, 0], sizes = [1, 1, 32], strides = [1, 1, 1]} : vector<2x20x32xf32> to vector<1x1x32xf32>
    %60 = vector.shape_cast %59 : vector<1x1x32xf32> to vector<1x32xf32>
    %cst_21 = arith.constant dense<0.000000e+00> : vector<1x32xf32>
    %61 = tpu.matmul %53, %11, %cst_21 {dimension_numbers = #tpu.dot_dimension_numbers<[1], [0], [0], [1], [0, 0, 1, 1], [], []>} : vector<1x32xf32>, vector<32x32xf32>, vector<1x32xf32> -> vector<1x32xf32>
    %62 = arith.addf %60, %61 : vector<1x32xf32>
    %63 = math.tanh %62 : vector<1x32xf32>
    %64 = vector.extract_strided_slice %10 {offsets = [0, 5, 0], sizes = [1, 1, 32], strides = [1, 1, 1]} : vector<2x20x32xf32> to vector<1x1x32xf32>
    %65 = vector.shape_cast %64 : vector<1x1x32xf32> to vector<1x32xf32>
    %cst_22 = arith.constant dense<0.000000e+00> : vector<1x32xf32>
    %66 = tpu.matmul %58, %11, %cst_22 {dimension_numbers = #tpu.dot_dimension_numbers<[1], [0], [0], [1], [0, 0, 1, 1], [], []>} : vector<1x32xf32>, vector<32x32xf32>, vector<1x32xf32> -> vector<1x32xf32>
    %67 = arith.addf %65, %66 : vector<1x32xf32>
    %68 = math.tanh %67 : vector<1x32xf32>
    %69 = vector.extract_strided_slice %10 {offsets = [1, 5, 0], sizes = [1, 1, 32], strides = [1, 1, 1]} : vector<2x20x32xf32> to vector<1x1x32xf32>
    %70 = vector.shape_cast %69 : vector<1x1x32xf32> to vector<1x32xf32>
    %cst_23 = arith.constant dense<0.000000e+00> : vector<1x32xf32>
    %71 = tpu.matmul %63, %11, %cst_23 {dimension_numbers = #tpu.dot_dimension_numbers<[1], [0], [0], [1], [0, 0, 1, 1], [], []>} : vector<1x32xf32>, vector<32x32xf32>, vector<1x32xf32> -> vector<1x32xf32>
    %72 = arith.addf %70, %71 : vector<1x32xf32>
    %73 = math.tanh %72 : vector<1x32xf32>
    %74 = vector.extract_strided_slice %10 {offsets = [0, 6, 0], sizes = [1, 1, 32], strides = [1, 1, 1]} : vector<2x20x32xf32> to vector<1x1x32xf32>
    %75 = vector.shape_cast %74 : vector<1x1x32xf32> to vector<1x32xf32>
    %cst_24 = arith.constant dense<0.000000e+00> : vector<1x32xf32>
    %76 = tpu.matmul %68, %11, %cst_24 {dimension_numbers = #tpu.dot_dimension_numbers<[1], [0], [0], [1], [0, 0, 1, 1], [], []>} : vector<1x32xf32>, vector<32x32xf32>, vector<1x32xf32> -> vector<1x32xf32>
    %77 = arith.addf %75, %76 : vector<1x32xf32>
    %78 = math.tanh %77 : vector<1x32xf32>
    %79 = vector.extract_strided_slice %10 {offsets = [1, 6, 0], sizes = [1, 1, 32], strides = [1, 1, 1]} : vector<2x20x32xf32> to vector<1x1x32xf32>
    %80 = vector.shape_cast %79 : vector<1x1x32xf32> to vector<1x32xf32>
    %cst_25 = arith.constant dense<0.000000e+00> : vector<1x32xf32>
    %81 = tpu.matmul %73, %11, %cst_25 {dimension_numbers = #tpu.dot_dimension_numbers<[1], [0], [0], [1], [0, 0, 1, 1], [], []>} : vector<1x32xf32>, vector<32x32xf32>, vector<1x32xf32> -> vector<1x32xf32>
    %82 = arith.addf %80, %81 : vector<1x32xf32>
    %83 = math.tanh %82 : vector<1x32xf32>
    %84 = vector.extract_strided_slice %10 {offsets = [0, 7, 0], sizes = [1, 1, 32], strides = [1, 1, 1]} : vector<2x20x32xf32> to vector<1x1x32xf32>
    %85 = vector.shape_cast %84 : vector<1x1x32xf32> to vector<1x32xf32>
    %cst_26 = arith.constant dense<0.000000e+00> : vector<1x32xf32>
    %86 = tpu.matmul %78, %11, %cst_26 {dimension_numbers = #tpu.dot_dimension_numbers<[1], [0], [0], [1], [0, 0, 1, 1], [], []>} : vector<1x32xf32>, vector<32x32xf32>, vector<1x32xf32> -> vector<1x32xf32>
    %87 = arith.addf %85, %86 : vector<1x32xf32>
    %88 = math.tanh %87 : vector<1x32xf32>
    %89 = vector.extract_strided_slice %10 {offsets = [1, 7, 0], sizes = [1, 1, 32], strides = [1, 1, 1]} : vector<2x20x32xf32> to vector<1x1x32xf32>
    %90 = vector.shape_cast %89 : vector<1x1x32xf32> to vector<1x32xf32>
    %cst_27 = arith.constant dense<0.000000e+00> : vector<1x32xf32>
    %91 = tpu.matmul %83, %11, %cst_27 {dimension_numbers = #tpu.dot_dimension_numbers<[1], [0], [0], [1], [0, 0, 1, 1], [], []>} : vector<1x32xf32>, vector<32x32xf32>, vector<1x32xf32> -> vector<1x32xf32>
    %92 = arith.addf %90, %91 : vector<1x32xf32>
    %93 = math.tanh %92 : vector<1x32xf32>
    %94 = vector.extract_strided_slice %10 {offsets = [0, 8, 0], sizes = [1, 1, 32], strides = [1, 1, 1]} : vector<2x20x32xf32> to vector<1x1x32xf32>
    %95 = vector.shape_cast %94 : vector<1x1x32xf32> to vector<1x32xf32>
    %cst_28 = arith.constant dense<0.000000e+00> : vector<1x32xf32>
    %96 = tpu.matmul %88, %11, %cst_28 {dimension_numbers = #tpu.dot_dimension_numbers<[1], [0], [0], [1], [0, 0, 1, 1], [], []>} : vector<1x32xf32>, vector<32x32xf32>, vector<1x32xf32> -> vector<1x32xf32>
    %97 = arith.addf %95, %96 : vector<1x32xf32>
    %98 = math.tanh %97 : vector<1x32xf32>
    %99 = vector.extract_strided_slice %10 {offsets = [1, 8, 0], sizes = [1, 1, 32], strides = [1, 1, 1]} : vector<2x20x32xf32> to vector<1x1x32xf32>
    %100 = vector.shape_cast %99 : vector<1x1x32xf32> to vector<1x32xf32>
    %cst_29 = arith.constant dense<0.000000e+00> : vector<1x32xf32>
    %101 = tpu.matmul %93, %11, %cst_29 {dimension_numbers = #tpu.dot_dimension_numbers<[1], [0], [0], [1], [0, 0, 1, 1], [], []>} : vector<1x32xf32>, vector<32x32xf32>, vector<1x32xf32> -> vector<1x32xf32>
    %102 = arith.addf %100, %101 : vector<1x32xf32>
    %103 = math.tanh %102 : vector<1x32xf32>
    %104 = vector.extract_strided_slice %10 {offsets = [0, 9, 0], sizes = [1, 1, 32], strides = [1, 1, 1]} : vector<2x20x32xf32> to vector<1x1x32xf32>
    %105 = vector.shape_cast %104 : vector<1x1x32xf32> to vector<1x32xf32>
    %cst_30 = arith.constant dense<0.000000e+00> : vector<1x32xf32>
    %106 = tpu.matmul %98, %11, %cst_30 {dimension_numbers = #tpu.dot_dimension_numbers<[1], [0], [0], [1], [0, 0, 1, 1], [], []>} : vector<1x32xf32>, vector<32x32xf32>, vector<1x32xf32> -> vector<1x32xf32>
    %107 = arith.addf %105, %106 : vector<1x32xf32>
    %108 = math.tanh %107 : vector<1x32xf32>
    %109 = vector.extract_strided_slice %10 {offsets = [1, 9, 0], sizes = [1, 1, 32], strides = [1, 1, 1]} : vector<2x20x32xf32> to vector<1x1x32xf32>
    %110 = vector.shape_cast %109 : vector<1x1x32xf32> to vector<1x32xf32>
    %cst_31 = arith.constant dense<0.000000e+00> : vector<1x32xf32>
    %111 = tpu.matmul %103, %11, %cst_31 {dimension_numbers = #tpu.dot_dimension_numbers<[1], [0], [0], [1], [0, 0, 1, 1], [], []>} : vector<1x32xf32>, vector<32x32xf32>, vector<1x32xf32> -> vector<1x32xf32>
    %112 = arith.addf %110, %111 : vector<1x32xf32>
    %113 = math.tanh %112 : vector<1x32xf32>
    %114 = vector.extract_strided_slice %10 {offsets = [0, 10, 0], sizes = [1, 1, 32], strides = [1, 1, 1]} : vector<2x20x32xf32> to vector<1x1x32xf32>
    %115 = vector.shape_cast %114 : vector<1x1x32xf32> to vector<1x32xf32>
    %cst_32 = arith.constant dense<0.000000e+00> : vector<1x32xf32>
    %116 = tpu.matmul %108, %11, %cst_32 {dimension_numbers = #tpu.dot_dimension_numbers<[1], [0], [0], [1], [0, 0, 1, 1], [], []>} : vector<1x32xf32>, vector<32x32xf32>, vector<1x32xf32> -> vector<1x32xf32>
    %117 = arith.addf %115, %116 : vector<1x32xf32>
    %118 = math.tanh %117 : vector<1x32xf32>
    %119 = vector.extract_strided_slice %10 {offsets = [1, 10, 0], sizes = [1, 1, 32], strides = [1, 1, 1]} : vector<2x20x32xf32> to vector<1x1x32xf32>
    %120 = vector.shape_cast %119 : vector<1x1x32xf32> to vector<1x32xf32>
    %cst_33 = arith.constant dense<0.000000e+00> : vector<1x32xf32>
    %121 = tpu.matmul %113, %11, %cst_33 {dimension_numbers = #tpu.dot_dimension_numbers<[1], [0], [0], [1], [0, 0, 1, 1], [], []>} : vector<1x32xf32>, vector<32x32xf32>, vector<1x32xf32> -> vector<1x32xf32>
    %122 = arith.addf %120, %121 : vector<1x32xf32>
    %123 = math.tanh %122 : vector<1x32xf32>
    %124 = vector.extract_strided_slice %10 {offsets = [0, 11, 0], sizes = [1, 1, 32], strides = [1, 1, 1]} : vector<2x20x32xf32> to vector<1x1x32xf32>
    %125 = vector.shape_cast %124 : vector<1x1x32xf32> to vector<1x32xf32>
    %cst_34 = arith.constant dense<0.000000e+00> : vector<1x32xf32>
    %126 = tpu.matmul %118, %11, %cst_34 {dimension_numbers = #tpu.dot_dimension_numbers<[1], [0], [0], [1], [0, 0, 1, 1], [], []>} : vector<1x32xf32>, vector<32x32xf32>, vector<1x32xf32> -> vector<1x32xf32>
    %127 = arith.addf %125, %126 : vector<1x32xf32>
    %128 = math.tanh %127 : vector<1x32xf32>
    %129 = vector.extract_strided_slice %10 {offsets = [1, 11, 0], sizes = [1, 1, 32], strides = [1, 1, 1]} : vector<2x20x32xf32> to vector<1x1x32xf32>
    %130 = vector.shape_cast %129 : vector<1x1x32xf32> to vector<1x32xf32>
    %cst_35 = arith.constant dense<0.000000e+00> : vector<1x32xf32>
    %131 = tpu.matmul %123, %11, %cst_35 {dimension_numbers = #tpu.dot_dimension_numbers<[1], [0], [0], [1], [0, 0, 1, 1], [], []>} : vector<1x32xf32>, vector<32x32xf32>, vector<1x32xf32> -> vector<1x32xf32>
    %132 = arith.addf %130, %131 : vector<1x32xf32>
    %133 = math.tanh %132 : vector<1x32xf32>
    %134 = vector.extract_strided_slice %10 {offsets = [0, 12, 0], sizes = [1, 1, 32], strides = [1, 1, 1]} : vector<2x20x32xf32> to vector<1x1x32xf32>
    %135 = vector.shape_cast %134 : vector<1x1x32xf32> to vector<1x32xf32>
    %cst_36 = arith.constant dense<0.000000e+00> : vector<1x32xf32>
    %136 = tpu.matmul %128, %11, %cst_36 {dimension_numbers = #tpu.dot_dimension_numbers<[1], [0], [0], [1], [0, 0, 1, 1], [], []>} : vector<1x32xf32>, vector<32x32xf32>, vector<1x32xf32> -> vector<1x32xf32>
    %137 = arith.addf %135, %136 : vector<1x32xf32>
    %138 = math.tanh %137 : vector<1x32xf32>
    %139 = vector.extract_strided_slice %10 {offsets = [1, 12, 0], sizes = [1, 1, 32], strides = [1, 1, 1]} : vector<2x20x32xf32> to vector<1x1x32xf32>
    %140 = vector.shape_cast %139 : vector<1x1x32xf32> to vector<1x32xf32>
    %cst_37 = arith.constant dense<0.000000e+00> : vector<1x32xf32>
    %141 = tpu.matmul %133, %11, %cst_37 {dimension_numbers = #tpu.dot_dimension_numbers<[1], [0], [0], [1], [0, 0, 1, 1], [], []>} : vector<1x32xf32>, vector<32x32xf32>, vector<1x32xf32> -> vector<1x32xf32>
    %142 = arith.addf %140, %141 : vector<1x32xf32>
    %143 = math.tanh %142 : vector<1x32xf32>
    %144 = vector.extract_strided_slice %10 {offsets = [0, 13, 0], sizes = [1, 1, 32], strides = [1, 1, 1]} : vector<2x20x32xf32> to vector<1x1x32xf32>
    %145 = vector.shape_cast %144 : vector<1x1x32xf32> to vector<1x32xf32>
    %cst_38 = arith.constant dense<0.000000e+00> : vector<1x32xf32>
    %146 = tpu.matmul %138, %11, %cst_38 {dimension_numbers = #tpu.dot_dimension_numbers<[1], [0], [0], [1], [0, 0, 1, 1], [], []>} : vector<1x32xf32>, vector<32x32xf32>, vector<1x32xf32> -> vector<1x32xf32>
    %147 = arith.addf %145, %146 : vector<1x32xf32>
    %148 = math.tanh %147 : vector<1x32xf32>
    %149 = vector.extract_strided_slice %10 {offsets = [1, 13, 0], sizes = [1, 1, 32], strides = [1, 1, 1]} : vector<2x20x32xf32> to vector<1x1x32xf32>
    %150 = vector.shape_cast %149 : vector<1x1x32xf32> to vector<1x32xf32>
    %cst_39 = arith.constant dense<0.000000e+00> : vector<1x32xf32>
    %151 = tpu.matmul %143, %11, %cst_39 {dimension_numbers = #tpu.dot_dimension_numbers<[1], [0], [0], [1], [0, 0, 1, 1], [], []>} : vector<1x32xf32>, vector<32x32xf32>, vector<1x32xf32> -> vector<1x32xf32>
    %152 = arith.addf %150, %151 : vector<1x32xf32>
    %153 = math.tanh %152 : vector<1x32xf32>
    %154 = vector.extract_strided_slice %10 {offsets = [0, 14, 0], sizes = [1, 1, 32], strides = [1, 1, 1]} : vector<2x20x32xf32> to vector<1x1x32xf32>
    %155 = vector.shape_cast %154 : vector<1x1x32xf32> to vector<1x32xf32>
    %cst_40 = arith.constant dense<0.000000e+00> : vector<1x32xf32>
    %156 = tpu.matmul %148, %11, %cst_40 {dimension_numbers = #tpu.dot_dimension_numbers<[1], [0], [0], [1], [0, 0, 1, 1], [], []>} : vector<1x32xf32>, vector<32x32xf32>, vector<1x32xf32> -> vector<1x32xf32>
    %157 = arith.addf %155, %156 : vector<1x32xf32>
    %158 = math.tanh %157 : vector<1x32xf32>
    %159 = vector.extract_strided_slice %10 {offsets = [1, 14, 0], sizes = [1, 1, 32], strides = [1, 1, 1]} : vector<2x20x32xf32> to vector<1x1x32xf32>
    %160 = vector.shape_cast %159 : vector<1x1x32xf32> to vector<1x32xf32>
    %cst_41 = arith.constant dense<0.000000e+00> : vector<1x32xf32>
    %161 = tpu.matmul %153, %11, %cst_41 {dimension_numbers = #tpu.dot_dimension_numbers<[1], [0], [0], [1], [0, 0, 1, 1], [], []>} : vector<1x32xf32>, vector<32x32xf32>, vector<1x32xf32> -> vector<1x32xf32>
    %162 = arith.addf %160, %161 : vector<1x32xf32>
    %163 = math.tanh %162 : vector<1x32xf32>
    %164 = vector.extract_strided_slice %10 {offsets = [0, 15, 0], sizes = [1, 1, 32], strides = [1, 1, 1]} : vector<2x20x32xf32> to vector<1x1x32xf32>
    %165 = vector.shape_cast %164 : vector<1x1x32xf32> to vector<1x32xf32>
    %cst_42 = arith.constant dense<0.000000e+00> : vector<1x32xf32>
    %166 = tpu.matmul %158, %11, %cst_42 {dimension_numbers = #tpu.dot_dimension_numbers<[1], [0], [0], [1], [0, 0, 1, 1], [], []>} : vector<1x32xf32>, vector<32x32xf32>, vector<1x32xf32> -> vector<1x32xf32>
    %167 = arith.addf %165, %166 : vector<1x32xf32>
    %168 = math.tanh %167 : vector<1x32xf32>
    %169 = vector.extract_strided_slice %10 {offsets = [1, 15, 0], sizes = [1, 1, 32], strides = [1, 1, 1]} : vector<2x20x32xf32> to vector<1x1x32xf32>
    %170 = vector.shape_cast %169 : vector<1x1x32xf32> to vector<1x32xf32>
    %cst_43 = arith.constant dense<0.000000e+00> : vector<1x32xf32>
    %171 = tpu.matmul %163, %11, %cst_43 {dimension_numbers = #tpu.dot_dimension_numbers<[1], [0], [0], [1], [0, 0, 1, 1], [], []>} : vector<1x32xf32>, vector<32x32xf32>, vector<1x32xf32> -> vector<1x32xf32>
    %172 = arith.addf %170, %171 : vector<1x32xf32>
    %173 = math.tanh %172 : vector<1x32xf32>
    %174 = vector.extract_strided_slice %10 {offsets = [0, 16, 0], sizes = [1, 1, 32], strides = [1, 1, 1]} : vector<2x20x32xf32> to vector<1x1x32xf32>
    %175 = vector.shape_cast %174 : vector<1x1x32xf32> to vector<1x32xf32>
    %cst_44 = arith.constant dense<0.000000e+00> : vector<1x32xf32>
    %176 = tpu.matmul %168, %11, %cst_44 {dimension_numbers = #tpu.dot_dimension_numbers<[1], [0], [0], [1], [0, 0, 1, 1], [], []>} : vector<1x32xf32>, vector<32x32xf32>, vector<1x32xf32> -> vector<1x32xf32>
    %177 = arith.addf %175, %176 : vector<1x32xf32>
    %178 = math.tanh %177 : vector<1x32xf32>
    %179 = vector.extract_strided_slice %10 {offsets = [1, 16, 0], sizes = [1, 1, 32], strides = [1, 1, 1]} : vector<2x20x32xf32> to vector<1x1x32xf32>
    %180 = vector.shape_cast %179 : vector<1x1x32xf32> to vector<1x32xf32>
    %cst_45 = arith.constant dense<0.000000e+00> : vector<1x32xf32>
    %181 = tpu.matmul %173, %11, %cst_45 {dimension_numbers = #tpu.dot_dimension_numbers<[1], [0], [0], [1], [0, 0, 1, 1], [], []>} : vector<1x32xf32>, vector<32x32xf32>, vector<1x32xf32> -> vector<1x32xf32>
    %182 = arith.addf %180, %181 : vector<1x32xf32>
    %183 = math.tanh %182 : vector<1x32xf32>
    %184 = vector.extract_strided_slice %10 {offsets = [0, 17, 0], sizes = [1, 1, 32], strides = [1, 1, 1]} : vector<2x20x32xf32> to vector<1x1x32xf32>
    %185 = vector.shape_cast %184 : vector<1x1x32xf32> to vector<1x32xf32>
    %cst_46 = arith.constant dense<0.000000e+00> : vector<1x32xf32>
    %186 = tpu.matmul %178, %11, %cst_46 {dimension_numbers = #tpu.dot_dimension_numbers<[1], [0], [0], [1], [0, 0, 1, 1], [], []>} : vector<1x32xf32>, vector<32x32xf32>, vector<1x32xf32> -> vector<1x32xf32>
    %187 = arith.addf %185, %186 : vector<1x32xf32>
    %188 = math.tanh %187 : vector<1x32xf32>
    %189 = vector.extract_strided_slice %10 {offsets = [1, 17, 0], sizes = [1, 1, 32], strides = [1, 1, 1]} : vector<2x20x32xf32> to vector<1x1x32xf32>
    %190 = vector.shape_cast %189 : vector<1x1x32xf32> to vector<1x32xf32>
    %cst_47 = arith.constant dense<0.000000e+00> : vector<1x32xf32>
    %191 = tpu.matmul %183, %11, %cst_47 {dimension_numbers = #tpu.dot_dimension_numbers<[1], [0], [0], [1], [0, 0, 1, 1], [], []>} : vector<1x32xf32>, vector<32x32xf32>, vector<1x32xf32> -> vector<1x32xf32>
    %192 = arith.addf %190, %191 : vector<1x32xf32>
    %193 = math.tanh %192 : vector<1x32xf32>
    %194 = vector.extract_strided_slice %10 {offsets = [0, 18, 0], sizes = [1, 1, 32], strides = [1, 1, 1]} : vector<2x20x32xf32> to vector<1x1x32xf32>
    %195 = vector.shape_cast %194 : vector<1x1x32xf32> to vector<1x32xf32>
    %cst_48 = arith.constant dense<0.000000e+00> : vector<1x32xf32>
    %196 = tpu.matmul %188, %11, %cst_48 {dimension_numbers = #tpu.dot_dimension_numbers<[1], [0], [0], [1], [0, 0, 1, 1], [], []>} : vector<1x32xf32>, vector<32x32xf32>, vector<1x32xf32> -> vector<1x32xf32>
    %197 = arith.addf %195, %196 : vector<1x32xf32>
    %198 = math.tanh %197 : vector<1x32xf32>
    %199 = vector.extract_strided_slice %10 {offsets = [1, 18, 0], sizes = [1, 1, 32], strides = [1, 1, 1]} : vector<2x20x32xf32> to vector<1x1x32xf32>
    %200 = vector.shape_cast %199 : vector<1x1x32xf32> to vector<1x32xf32>
    %cst_49 = arith.constant dense<0.000000e+00> : vector<1x32xf32>
    %201 = tpu.matmul %193, %11, %cst_49 {dimension_numbers = #tpu.dot_dimension_numbers<[1], [0], [0], [1], [0, 0, 1, 1], [], []>} : vector<1x32xf32>, vector<32x32xf32>, vector<1x32xf32> -> vector<1x32xf32>
    %202 = arith.addf %200, %201 : vector<1x32xf32>
    %203 = math.tanh %202 : vector<1x32xf32>
    %204 = vector.extract_strided_slice %10 {offsets = [0, 19, 0], sizes = [1, 1, 32], strides = [1, 1, 1]} : vector<2x20x32xf32> to vector<1x1x32xf32>
    %205 = vector.shape_cast %204 : vector<1x1x32xf32> to vector<1x32xf32>
    %cst_50 = arith.constant dense<0.000000e+00> : vector<1x32xf32>
    %206 = tpu.matmul %198, %11, %cst_50 {dimension_numbers = #tpu.dot_dimension_numbers<[1], [0], [0], [1], [0, 0, 1, 1], [], []>} : vector<1x32xf32>, vector<32x32xf32>, vector<1x32xf32> -> vector<1x32xf32>
    %207 = arith.addf %205, %206 : vector<1x32xf32>
    %208 = math.tanh %207 : vector<1x32xf32>
    %209 = vector.extract_strided_slice %10 {offsets = [1, 19, 0], sizes = [1, 1, 32], strides = [1, 1, 1]} : vector<2x20x32xf32> to vector<1x1x32xf32>
    %210 = vector.shape_cast %209 : vector<1x1x32xf32> to vector<1x32xf32>
    %cst_51 = arith.constant dense<0.000000e+00> : vector<1x32xf32>
    %211 = tpu.matmul %203, %11, %cst_51 {dimension_numbers = #tpu.dot_dimension_numbers<[1], [0], [0], [1], [0, 0, 1, 1], [], []>} : vector<1x32xf32>, vector<32x32xf32>, vector<1x32xf32> -> vector<1x32xf32>
    %212 = arith.addf %210, %211 : vector<1x32xf32>
    %213 = math.tanh %212 : vector<1x32xf32>
    %c0_52 = arith.constant 0 : index
    %c0_53 = arith.constant 0 : index
    %214 = vector.load %arg9[%c0_52, %c0_53] : memref<2x32xf32, #tpu.memory_space<vmem>>, vector<1x32xf32>
    tpu.vector_store %arg9[%c0_52, %c0_53], %208 {strides = array<i32>} : memref<2x32xf32, #tpu.memory_space<vmem>>, vector<1x32xf32>,
    %c1_54 = arith.constant 1 : index
    %c0_55 = arith.constant 0 : index
    %215 = vector.load %arg9[%c1_54, %c0_55] : memref<2x32xf32, #tpu.memory_space<vmem>>, vector<1x32xf32>
    tpu.vector_store %arg9[%c1_54, %c0_55], %213 {strides = array<i32>} : memref<2x32xf32, #tpu.memory_space<vmem>>, vector<1x32xf32>,
    %c0_i32_56 = arith.constant 0 : i32
    %216 = arith.cmpi eq, %arg1, %c0_i32_56 : i32
    %217 = arith.extui %216 : i1 to i32
    %c0_i32_57 = arith.constant 0 : i32
    %218 = arith.cmpi ne, %217, %c0_i32_57 : i32
    scf.if %218 {
      %c0_58 = arith.constant 0 : index
      %c0_59 = arith.constant 0 : index
      %219 = vector.load %arg9[%c0_58, %c0_59] : memref<2x32xf32, #tpu.memory_space<vmem>>, vector<2x32xf32>
      %c0_60 = arith.constant 0 : index
      %c0_61 = arith.constant 0 : index
      %220 = vector.load %arg6[%c0_60, %c0_61] : memref<32x6xf32, #tpu.memory_space<vmem>>, vector<32x6xf32>
      %cst_62 = arith.constant dense<0.000000e+00> : vector<2x6xf32>
      %221 = tpu.matmul %219, %220, %cst_62 {dimension_numbers = #tpu.dot_dimension_numbers<[1], [0], [0], [1], [0, 0, 1, 1], [], []>} : vector<2x32xf32>, vector<32x6xf32>, vector<2x6xf32> -> vector<2x6xf32>
      %c0_63 = arith.constant 0 : index
      %c0_64 = arith.constant 0 : index
      %222 = vector.load %arg7[%c0_63, %c0_64] : memref<1x6xf32, #tpu.memory_space<vmem>>, vector<1x6xf32>
      %223 = vector.broadcast %222 : vector<1x6xf32> to vector<2x6xf32>
      %224 = arith.addf %221, %223 : vector<2x6xf32>
      %c0_65 = arith.constant 0 : index
      %c0_66 = arith.constant 0 : index
      %225 = vector.load %arg8[%c0_65, %c0_66] : memref<2x6xf32, #tpu.memory_space<vmem>>, vector<2x6xf32>
      tpu.vector_store %arg8[%c0_65, %c0_66], %224 {strides = array<i32>} : memref<2x6xf32, #tpu.memory_space<vmem>>, vector<2x6xf32>,
    } else {
    }
    return
  }
  func.func @transform_0(%arg0: i32, %arg1: i32) -> (i32, i32, i32) {
    %c0_i32 = arith.constant 0 : i32
    %c0_i32_0 = arith.constant 0 : i32
    return %arg0, %arg1, %c0_i32 : i32, i32, i32
  }
  func.func @transform_1(%arg0: i32, %arg1: i32) -> (i32, i32) {
    %c0_i32 = arith.constant 0 : i32
    %c0_i32_0 = arith.constant 0 : i32
    %c0_i32_1 = arith.constant 0 : i32
    return %c0_i32, %c0_i32_0 : i32, i32
  }
  func.func @transform_2(%arg0: i32, %arg1: i32) -> (i32, i32) {
    %c0_i32 = arith.constant 0 : i32
    %c0_i32_0 = arith.constant 0 : i32
    %c0_i32_1 = arith.constant 0 : i32
    return %c0_i32, %c0_i32_0 : i32, i32
  }
  func.func @transform_3(%arg0: i32, %arg1: i32) -> (i32, i32) {
    %c0_i32 = arith.constant 0 : i32
    %c0_i32_0 = arith.constant 0 : i32
    %c0_i32_1 = arith.constant 0 : i32
    return %c0_i32, %c0_i32_0 : i32, i32
  }
  func.func @transform_4(%arg0: i32, %arg1: i32) -> (i32, i32) {
    %c0_i32 = arith.constant 0 : i32
    %c0_i32_0 = arith.constant 0 : i32
    %c0_i32_1 = arith.constant 0 : i32
    return %c0_i32, %c0_i32_0 : i32, i32
  }
  func.func @transform_5(%arg0: i32, %arg1: i32) -> (i32, i32) {
    %c0_i32 = arith.constant 0 : i32
    %c0_i32_0 = arith.constant 0 : i32
    %c0_i32_1 = arith.constant 0 : i32
    return %c0_i32, %c0_i32_0 : i32, i32
  }
  func.func @transform_6(%arg0: i32, %arg1: i32) -> (i32, i32) {
    %c0_i32 = arith.constant 0 : i32
    %c0_i32_0 = arith.constant 0 : i32
    return %arg0, %c0_i32 : i32, i32
  }
}

module attributes {stable_mosaic.version = 11 : i64} {
  func.func @global_model_kernel(%arg0: i32, %arg1: i32, %arg2: memref<2x20x4xf32, #tpu.memory_space<vmem>>, %arg3: memref<4x32xf32, #tpu.memory_space<vmem>>, %arg4: memref<32x32xf32, #tpu.memory_space<vmem>>, %arg5: memref<1x32xf32, #tpu.memory_space<vmem>>, %arg6: memref<32x6xf32, #tpu.memory_space<vmem>>, %arg7: memref<1x6xf32, #tpu.memory_space<vmem>>, %arg8: memref<2x6xf32, #tpu.memory_space<vmem>>, %arg9: memref<2x32xf32, #tpu.memory_space<vmem>>) attributes {dimension_semantics = [#tpu.dimension_semantics<parallel>, #tpu.dimension_semantics<arbitrary>], iteration_bounds = array<i64: 1, 1>, scalar_prefetch = 0 : i64, scratch_operands = 1 : i64, tpu.core_type = #tpu.core_type<tc>, window_params = [{transform_indices = @transform_0, window_bounds = array<i64: 2, 20, 4>}, {pipeline_mode = #tpu.pipeline_mode<synchronous>, transform_indices = @transform_1, window_bounds = array<i64: 4, 32>}, {pipeline_mode = #tpu.pipeline_mode<synchronous>, transform_indices = @transform_2, window_bounds = array<i64: 32, 32>}, {pipeline_mode = #tpu.pipeline_mode<synchronous>, transform_indices = @transform_3, window_bounds = array<i64: 1, 32>}, {pipeline_mode = #tpu.pipeline_mode<synchronous>, transform_indices = @transform_4, window_bounds = array<i64: 32, 6>}, {pipeline_mode = #tpu.pipeline_mode<synchronous>, transform_indices = @transform_5, window_bounds = array<i64: 1, 6>}, {transform_indices = @transform_6, window_bounds = array<i64: 2, 6>}]} {
    %c0_i32 = arith.constant 0 : i32
    %0 = arith.cmpi eq, %arg1, %c0_i32 : i32
    %1 = arith.extui %0 : i1 to i32
    %c0_i32_0 = arith.constant 0 : i32
    %2 = arith.cmpi ne, %1, %c0_i32_0 : i32
    scf.if %2 {
      %cst_58 = arith.constant 0.000000e+00 : f32
      %219 = vector.broadcast %cst_58 : f32 to vector<2x32xf32>
      %c0_59 = arith.constant 0 : index
      %c0_60 = arith.constant 0 : index
      %220 = vector.load %arg9[%c0_59, %c0_60] : memref<2x32xf32, #tpu.memory_space<vmem>>, vector<2x32xf32>
      tpu.vector_store %arg9[%c0_59, %c0_60], %219 {strides = array<i32>} : memref<2x32xf32, #tpu.memory_space<vmem>>, vector<2x32xf32>,
      %cst_61 = arith.constant 0.000000e+00 : f32
      %221 = vector.broadcast %cst_61 : f32 to vector<2x6xf32>
      %c0_62 = arith.constant 0 : index
      %c0_63 = arith.constant 0 : index
      %222 = vector.load %arg8[%c0_62, %c0_63] : memref<2x6xf32, #tpu.memory_space<vmem>>, vector<2x6xf32>
      tpu.vector_store %arg8[%c0_62, %c0_63], %221 {strides = array<i32>} : memref<2x6xf32, #tpu.memory_space<vmem>>, vector<2x6xf32>,
    } else {
    }
    %c0 = arith.constant 0 : index
    %c0_1 = arith.constant 0 : index
    %c0_2 = arith.constant 0 : index
    %3 = vector.load %arg2[%c0, %c0_1, %c0_2] : memref<2x20x4xf32, #tpu.memory_space<vmem>>, vector<2x20x4xf32>
    %4 = vector.shape_cast %3 : vector<2x20x4xf32> to vector<40x4xf32>
    %c0_3 = arith.constant 0 : index
    %c0_4 = arith.constant 0 : index
    %5 = vector.load %arg3[%c0_3, %c0_4] : memref<4x32xf32, #tpu.memory_space<vmem>>, vector<4x32xf32>
    %cst = arith.constant dense<0.000000e+00> : vector<40x32xf32>
    %6 = tpu.matmul %4, %5, %cst {dimension_numbers = #tpu.dot_dimension_numbers<[1], [0], [0], [1], [0, 0, 1, 1], [], []>} : vector<40x4xf32>, vector<4x32xf32>, vector<40x32xf32> -> vector<40x32xf32>
    %c0_5 = arith.constant 0 : index
    %c0_6 = arith.constant 0 : index
    %7 = vector.load %arg5[%c0_5, %c0_6] : memref<1x32xf32, #tpu.memory_space<vmem>>, vector<1x32xf32>
    %8 = vector.broadcast %7 : vector<1x32xf32> to vector<40x32xf32>
    %9 = arith.addf %6, %8 : vector<40x32xf32>
    %10 = vector.shape_cast %9 : vector<40x32xf32> to vector<2x20x32xf32>
    %c0_7 = arith.constant 0 : index
    %c0_8 = arith.constant 0 : index
    %11 = vector.load %arg4[%c0_7, %c0_8] : memref<32x32xf32, #tpu.memory_space<vmem>>, vector<32x32xf32>
    %c0_9 = arith.constant 0 : index
    %c0_10 = arith.constant 0 : index
    %12 = vector.load %arg9[%c0_9, %c0_10] : memref<2x32xf32, #tpu.memory_space<vmem>>, vector<1x32xf32>
    %c1 = arith.constant 1 : index
    %c0_11 = arith.constant 0 : index
    %13 = vector.load %arg9[%c1, %c0_11] : memref<2x32xf32, #tpu.memory_space<vmem>>, vector<1x32xf32>
    %14 = vector.extract_strided_slice %10 {offsets = [0, 0, 0], sizes = [1, 1, 32], strides = [1, 1, 1]} : vector<2x20x32xf32> to vector<1x1x32xf32>
    %15 = vector.shape_cast %14 : vector<1x1x32xf32> to vector<1x32xf32>
    %cst_12 = arith.constant dense<0.000000e+00> : vector<1x32xf32>
    %16 = tpu.matmul %12, %11, %cst_12 {dimension_numbers = #tpu.dot_dimension_numbers<[1], [0], [0], [1], [0, 0, 1, 1], [], []>} : vector<1x32xf32>, vector<32x32xf32>, vector<1x32xf32> -> vector<1x32xf32>
    %17 = arith.addf %15, %16 : vector<1x32xf32>
    %18 = math.tanh %17 : vector<1x32xf32>
    %19 = vector.extract_strided_slice %10 {offsets = [1, 0, 0], sizes = [1, 1, 32], strides = [1, 1, 1]} : vector<2x20x32xf32> to vector<1x1x32xf32>
    %20 = vector.shape_cast %19 : vector<1x1x32xf32> to vector<1x32xf32>
    %cst_13 = arith.constant dense<0.000000e+00> : vector<1x32xf32>
    %21 = tpu.matmul %13, %11, %cst_13 {dimension_numbers = #tpu.dot_dimension_numbers<[1], [0], [0], [1], [0, 0, 1, 1], [], []>} : vector<1x32xf32>, vector<32x32xf32>, vector<1x32xf32> -> vector<1x32xf32>
    %22 = arith.addf %20, %21 : vector<1x32xf32>
    %23 = math.tanh %22 : vector<1x32xf32>
    %24 = vector.extract_strided_slice %10 {offsets = [0, 1, 0], sizes = [1, 1, 32], strides = [1, 1, 1]} : vector<2x20x32xf32> to vector<1x1x32xf32>
    %25 = vector.shape_cast %24 : vector<1x1x32xf32> to vector<1x32xf32>
    %cst_14 = arith.constant dense<0.000000e+00> : vector<1x32xf32>
    %26 = tpu.matmul %18, %11, %cst_14 {dimension_numbers = #tpu.dot_dimension_numbers<[1], [0], [0], [1], [0, 0, 1, 1], [], []>} : vector<1x32xf32>, vector<32x32xf32>, vector<1x32xf32> -> vector<1x32xf32>
    %27 = arith.addf %25, %26 : vector<1x32xf32>
    %28 = math.tanh %27 : vector<1x32xf32>
    %29 = vector.extract_strided_slice %10 {offsets = [1, 1, 0], sizes = [1, 1, 32], strides = [1, 1, 1]} : vector<2x20x32xf32> to vector<1x1x32xf32>
    %30 = vector.shape_cast %29 : vector<1x1x32xf32> to vector<1x32xf32>
    %cst_15 = arith.constant dense<0.000000e+00> : vector<1x32xf32>
    %31 = tpu.matmul %23, %11, %cst_15 {dimension_numbers = #tpu.dot_dimension_numbers<[1], [0], [0], [1], [0, 0, 1, 1], [], []>} : vector<1x32xf32>, vector<32x32xf32>, vector<1x32xf32> -> vector<1x32xf32>
    %32 = arith.addf %30, %31 : vector<1x32xf32>
    %33 = math.tanh %32 : vector<1x32xf32>
    %34 = vector.extract_strided_slice %10 {offsets = [0, 2, 0], sizes = [1, 1, 32], strides = [1, 1, 1]} : vector<2x20x32xf32> to vector<1x1x32xf32>
    %35 = vector.shape_cast %34 : vector<1x1x32xf32> to vector<1x32xf32>
    %cst_16 = arith.constant dense<0.000000e+00> : vector<1x32xf32>
    %36 = tpu.matmul %28, %11, %cst_16 {dimension_numbers = #tpu.dot_dimension_numbers<[1], [0], [0], [1], [0, 0, 1, 1], [], []>} : vector<1x32xf32>, vector<32x32xf32>, vector<1x32xf32> -> vector<1x32xf32>
    %37 = arith.addf %35, %36 : vector<1x32xf32>
    %38 = math.tanh %37 : vector<1x32xf32>
    %39 = vector.extract_strided_slice %10 {offsets = [1, 2, 0], sizes = [1, 1, 32], strides = [1, 1, 1]} : vector<2x20x32xf32> to vector<1x1x32xf32>
    %40 = vector.shape_cast %39 : vector<1x1x32xf32> to vector<1x32xf32>
    %cst_17 = arith.constant dense<0.000000e+00> : vector<1x32xf32>
    %41 = tpu.matmul %33, %11, %cst_17 {dimension_numbers = #tpu.dot_dimension_numbers<[1], [0], [0], [1], [0, 0, 1, 1], [], []>} : vector<1x32xf32>, vector<32x32xf32>, vector<1x32xf32> -> vector<1x32xf32>
    %42 = arith.addf %40, %41 : vector<1x32xf32>
    %43 = math.tanh %42 : vector<1x32xf32>
    %44 = vector.extract_strided_slice %10 {offsets = [0, 3, 0], sizes = [1, 1, 32], strides = [1, 1, 1]} : vector<2x20x32xf32> to vector<1x1x32xf32>
    %45 = vector.shape_cast %44 : vector<1x1x32xf32> to vector<1x32xf32>
    %cst_18 = arith.constant dense<0.000000e+00> : vector<1x32xf32>
    %46 = tpu.matmul %38, %11, %cst_18 {dimension_numbers = #tpu.dot_dimension_numbers<[1], [0], [0], [1], [0, 0, 1, 1], [], []>} : vector<1x32xf32>, vector<32x32xf32>, vector<1x32xf32> -> vector<1x32xf32>
    %47 = arith.addf %45, %46 : vector<1x32xf32>
    %48 = math.tanh %47 : vector<1x32xf32>
    %49 = vector.extract_strided_slice %10 {offsets = [1, 3, 0], sizes = [1, 1, 32], strides = [1, 1, 1]} : vector<2x20x32xf32> to vector<1x1x32xf32>
    %50 = vector.shape_cast %49 : vector<1x1x32xf32> to vector<1x32xf32>
    %cst_19 = arith.constant dense<0.000000e+00> : vector<1x32xf32>
    %51 = tpu.matmul %43, %11, %cst_19 {dimension_numbers = #tpu.dot_dimension_numbers<[1], [0], [0], [1], [0, 0, 1, 1], [], []>} : vector<1x32xf32>, vector<32x32xf32>, vector<1x32xf32> -> vector<1x32xf32>
    %52 = arith.addf %50, %51 : vector<1x32xf32>
    %53 = math.tanh %52 : vector<1x32xf32>
    %54 = vector.extract_strided_slice %10 {offsets = [0, 4, 0], sizes = [1, 1, 32], strides = [1, 1, 1]} : vector<2x20x32xf32> to vector<1x1x32xf32>
    %55 = vector.shape_cast %54 : vector<1x1x32xf32> to vector<1x32xf32>
    %cst_20 = arith.constant dense<0.000000e+00> : vector<1x32xf32>
    %56 = tpu.matmul %48, %11, %cst_20 {dimension_numbers = #tpu.dot_dimension_numbers<[1], [0], [0], [1], [0, 0, 1, 1], [], []>} : vector<1x32xf32>, vector<32x32xf32>, vector<1x32xf32> -> vector<1x32xf32>
    %57 = arith.addf %55, %56 : vector<1x32xf32>
    %58 = math.tanh %57 : vector<1x32xf32>
    %59 = vector.extract_strided_slice %10 {offsets = [1, 4, 0], sizes = [1, 1, 32], strides = [1, 1, 1]} : vector<2x20x32xf32> to vector<1x1x32xf32>
    %60 = vector.shape_cast %59 : vector<1x1x32xf32> to vector<1x32xf32>
    %cst_21 = arith.constant dense<0.000000e+00> : vector<1x32xf32>
    %61 = tpu.matmul %53, %11, %cst_21 {dimension_numbers = #tpu.dot_dimension_numbers<[1], [0], [0], [1], [0, 0, 1, 1], [], []>} : vector<1x32xf32>, vector<32x32xf32>, vector<1x32xf32> -> vector<1x32xf32>
    %62 = arith.addf %60, %61 : vector<1x32xf32>
    %63 = math.tanh %62 : vector<1x32xf32>
    %64 = vector.extract_strided_slice %10 {offsets = [0, 5, 0], sizes = [1, 1, 32], strides = [1, 1, 1]} : vector<2x20x32xf32> to vector<1x1x32xf32>
    %65 = vector.shape_cast %64 : vector<1x1x32xf32> to vector<1x32xf32>
    %cst_22 = arith.constant dense<0.000000e+00> : vector<1x32xf32>
    %66 = tpu.matmul %58, %11, %cst_22 {dimension_numbers = #tpu.dot_dimension_numbers<[1], [0], [0], [1], [0, 0, 1, 1], [], []>} : vector<1x32xf32>, vector<32x32xf32>, vector<1x32xf32> -> vector<1x32xf32>
    %67 = arith.addf %65, %66 : vector<1x32xf32>
    %68 = math.tanh %67 : vector<1x32xf32>
    %69 = vector.extract_strided_slice %10 {offsets = [1, 5, 0], sizes = [1, 1, 32], strides = [1, 1, 1]} : vector<2x20x32xf32> to vector<1x1x32xf32>
    %70 = vector.shape_cast %69 : vector<1x1x32xf32> to vector<1x32xf32>
    %cst_23 = arith.constant dense<0.000000e+00> : vector<1x32xf32>
    %71 = tpu.matmul %63, %11, %cst_23 {dimension_numbers = #tpu.dot_dimension_numbers<[1], [0], [0], [1], [0, 0, 1, 1], [], []>} : vector<1x32xf32>, vector<32x32xf32>, vector<1x32xf32> -> vector<1x32xf32>
    %72 = arith.addf %70, %71 : vector<1x32xf32>
    %73 = math.tanh %72 : vector<1x32xf32>
    %74 = vector.extract_strided_slice %10 {offsets = [0, 6, 0], sizes = [1, 1, 32], strides = [1, 1, 1]} : vector<2x20x32xf32> to vector<1x1x32xf32>
    %75 = vector.shape_cast %74 : vector<1x1x32xf32> to vector<1x32xf32>
    %cst_24 = arith.constant dense<0.000000e+00> : vector<1x32xf32>
    %76 = tpu.matmul %68, %11, %cst_24 {dimension_numbers = #tpu.dot_dimension_numbers<[1], [0], [0], [1], [0, 0, 1, 1], [], []>} : vector<1x32xf32>, vector<32x32xf32>, vector<1x32xf32> -> vector<1x32xf32>
    %77 = arith.addf %75, %76 : vector<1x32xf32>
    %78 = math.tanh %77 : vector<1x32xf32>
    %79 = vector.extract_strided_slice %10 {offsets = [1, 6, 0], sizes = [1, 1, 32], strides = [1, 1, 1]} : vector<2x20x32xf32> to vector<1x1x32xf32>
    %80 = vector.shape_cast %79 : vector<1x1x32xf32> to vector<1x32xf32>
    %cst_25 = arith.constant dense<0.000000e+00> : vector<1x32xf32>
    %81 = tpu.matmul %73, %11, %cst_25 {dimension_numbers = #tpu.dot_dimension_numbers<[1], [0], [0], [1], [0, 0, 1, 1], [], []>} : vector<1x32xf32>, vector<32x32xf32>, vector<1x32xf32> -> vector<1x32xf32>
    %82 = arith.addf %80, %81 : vector<1x32xf32>
    %83 = math.tanh %82 : vector<1x32xf32>
    %84 = vector.extract_strided_slice %10 {offsets = [0, 7, 0], sizes = [1, 1, 32], strides = [1, 1, 1]} : vector<2x20x32xf32> to vector<1x1x32xf32>
    %85 = vector.shape_cast %84 : vector<1x1x32xf32> to vector<1x32xf32>
    %cst_26 = arith.constant dense<0.000000e+00> : vector<1x32xf32>
    %86 = tpu.matmul %78, %11, %cst_26 {dimension_numbers = #tpu.dot_dimension_numbers<[1], [0], [0], [1], [0, 0, 1, 1], [], []>} : vector<1x32xf32>, vector<32x32xf32>, vector<1x32xf32> -> vector<1x32xf32>
    %87 = arith.addf %85, %86 : vector<1x32xf32>
    %88 = math.tanh %87 : vector<1x32xf32>
    %89 = vector.extract_strided_slice %10 {offsets = [1, 7, 0], sizes = [1, 1, 32], strides = [1, 1, 1]} : vector<2x20x32xf32> to vector<1x1x32xf32>
    %90 = vector.shape_cast %89 : vector<1x1x32xf32> to vector<1x32xf32>
    %cst_27 = arith.constant dense<0.000000e+00> : vector<1x32xf32>
    %91 = tpu.matmul %83, %11, %cst_27 {dimension_numbers = #tpu.dot_dimension_numbers<[1], [0], [0], [1], [0, 0, 1, 1], [], []>} : vector<1x32xf32>, vector<32x32xf32>, vector<1x32xf32> -> vector<1x32xf32>
    %92 = arith.addf %90, %91 : vector<1x32xf32>
    %93 = math.tanh %92 : vector<1x32xf32>
    %94 = vector.extract_strided_slice %10 {offsets = [0, 8, 0], sizes = [1, 1, 32], strides = [1, 1, 1]} : vector<2x20x32xf32> to vector<1x1x32xf32>
    %95 = vector.shape_cast %94 : vector<1x1x32xf32> to vector<1x32xf32>
    %cst_28 = arith.constant dense<0.000000e+00> : vector<1x32xf32>
    %96 = tpu.matmul %88, %11, %cst_28 {dimension_numbers = #tpu.dot_dimension_numbers<[1], [0], [0], [1], [0, 0, 1, 1], [], []>} : vector<1x32xf32>, vector<32x32xf32>, vector<1x32xf32> -> vector<1x32xf32>
    %97 = arith.addf %95, %96 : vector<1x32xf32>
    %98 = math.tanh %97 : vector<1x32xf32>
    %99 = vector.extract_strided_slice %10 {offsets = [1, 8, 0], sizes = [1, 1, 32], strides = [1, 1, 1]} : vector<2x20x32xf32> to vector<1x1x32xf32>
    %100 = vector.shape_cast %99 : vector<1x1x32xf32> to vector<1x32xf32>
    %cst_29 = arith.constant dense<0.000000e+00> : vector<1x32xf32>
    %101 = tpu.matmul %93, %11, %cst_29 {dimension_numbers = #tpu.dot_dimension_numbers<[1], [0], [0], [1], [0, 0, 1, 1], [], []>} : vector<1x32xf32>, vector<32x32xf32>, vector<1x32xf32> -> vector<1x32xf32>
    %102 = arith.addf %100, %101 : vector<1x32xf32>
    %103 = math.tanh %102 : vector<1x32xf32>
    %104 = vector.extract_strided_slice %10 {offsets = [0, 9, 0], sizes = [1, 1, 32], strides = [1, 1, 1]} : vector<2x20x32xf32> to vector<1x1x32xf32>
    %105 = vector.shape_cast %104 : vector<1x1x32xf32> to vector<1x32xf32>
    %cst_30 = arith.constant dense<0.000000e+00> : vector<1x32xf32>
    %106 = tpu.matmul %98, %11, %cst_30 {dimension_numbers = #tpu.dot_dimension_numbers<[1], [0], [0], [1], [0, 0, 1, 1], [], []>} : vector<1x32xf32>, vector<32x32xf32>, vector<1x32xf32> -> vector<1x32xf32>
    %107 = arith.addf %105, %106 : vector<1x32xf32>
    %108 = math.tanh %107 : vector<1x32xf32>
    %109 = vector.extract_strided_slice %10 {offsets = [1, 9, 0], sizes = [1, 1, 32], strides = [1, 1, 1]} : vector<2x20x32xf32> to vector<1x1x32xf32>
    %110 = vector.shape_cast %109 : vector<1x1x32xf32> to vector<1x32xf32>
    %cst_31 = arith.constant dense<0.000000e+00> : vector<1x32xf32>
    %111 = tpu.matmul %103, %11, %cst_31 {dimension_numbers = #tpu.dot_dimension_numbers<[1], [0], [0], [1], [0, 0, 1, 1], [], []>} : vector<1x32xf32>, vector<32x32xf32>, vector<1x32xf32> -> vector<1x32xf32>
    %112 = arith.addf %110, %111 : vector<1x32xf32>
    %113 = math.tanh %112 : vector<1x32xf32>
    %114 = vector.extract_strided_slice %10 {offsets = [0, 10, 0], sizes = [1, 1, 32], strides = [1, 1, 1]} : vector<2x20x32xf32> to vector<1x1x32xf32>
    %115 = vector.shape_cast %114 : vector<1x1x32xf32> to vector<1x32xf32>
    %cst_32 = arith.constant dense<0.000000e+00> : vector<1x32xf32>
    %116 = tpu.matmul %108, %11, %cst_32 {dimension_numbers = #tpu.dot_dimension_numbers<[1], [0], [0], [1], [0, 0, 1, 1], [], []>} : vector<1x32xf32>, vector<32x32xf32>, vector<1x32xf32> -> vector<1x32xf32>
    %117 = arith.addf %115, %116 : vector<1x32xf32>
    %118 = math.tanh %117 : vector<1x32xf32>
    %119 = vector.extract_strided_slice %10 {offsets = [1, 10, 0], sizes = [1, 1, 32], strides = [1, 1, 1]} : vector<2x20x32xf32> to vector<1x1x32xf32>
    %120 = vector.shape_cast %119 : vector<1x1x32xf32> to vector<1x32xf32>
    %cst_33 = arith.constant dense<0.000000e+00> : vector<1x32xf32>
    %121 = tpu.matmul %113, %11, %cst_33 {dimension_numbers = #tpu.dot_dimension_numbers<[1], [0], [0], [1], [0, 0, 1, 1], [], []>} : vector<1x32xf32>, vector<32x32xf32>, vector<1x32xf32> -> vector<1x32xf32>
    %122 = arith.addf %120, %121 : vector<1x32xf32>
    %123 = math.tanh %122 : vector<1x32xf32>
    %124 = vector.extract_strided_slice %10 {offsets = [0, 11, 0], sizes = [1, 1, 32], strides = [1, 1, 1]} : vector<2x20x32xf32> to vector<1x1x32xf32>
    %125 = vector.shape_cast %124 : vector<1x1x32xf32> to vector<1x32xf32>
    %cst_34 = arith.constant dense<0.000000e+00> : vector<1x32xf32>
    %126 = tpu.matmul %118, %11, %cst_34 {dimension_numbers = #tpu.dot_dimension_numbers<[1], [0], [0], [1], [0, 0, 1, 1], [], []>} : vector<1x32xf32>, vector<32x32xf32>, vector<1x32xf32> -> vector<1x32xf32>
    %127 = arith.addf %125, %126 : vector<1x32xf32>
    %128 = math.tanh %127 : vector<1x32xf32>
    %129 = vector.extract_strided_slice %10 {offsets = [1, 11, 0], sizes = [1, 1, 32], strides = [1, 1, 1]} : vector<2x20x32xf32> to vector<1x1x32xf32>
    %130 = vector.shape_cast %129 : vector<1x1x32xf32> to vector<1x32xf32>
    %cst_35 = arith.constant dense<0.000000e+00> : vector<1x32xf32>
    %131 = tpu.matmul %123, %11, %cst_35 {dimension_numbers = #tpu.dot_dimension_numbers<[1], [0], [0], [1], [0, 0, 1, 1], [], []>} : vector<1x32xf32>, vector<32x32xf32>, vector<1x32xf32> -> vector<1x32xf32>
    %132 = arith.addf %130, %131 : vector<1x32xf32>
    %133 = math.tanh %132 : vector<1x32xf32>
    %134 = vector.extract_strided_slice %10 {offsets = [0, 12, 0], sizes = [1, 1, 32], strides = [1, 1, 1]} : vector<2x20x32xf32> to vector<1x1x32xf32>
    %135 = vector.shape_cast %134 : vector<1x1x32xf32> to vector<1x32xf32>
    %cst_36 = arith.constant dense<0.000000e+00> : vector<1x32xf32>
    %136 = tpu.matmul %128, %11, %cst_36 {dimension_numbers = #tpu.dot_dimension_numbers<[1], [0], [0], [1], [0, 0, 1, 1], [], []>} : vector<1x32xf32>, vector<32x32xf32>, vector<1x32xf32> -> vector<1x32xf32>
    %137 = arith.addf %135, %136 : vector<1x32xf32>
    %138 = math.tanh %137 : vector<1x32xf32>
    %139 = vector.extract_strided_slice %10 {offsets = [1, 12, 0], sizes = [1, 1, 32], strides = [1, 1, 1]} : vector<2x20x32xf32> to vector<1x1x32xf32>
    %140 = vector.shape_cast %139 : vector<1x1x32xf32> to vector<1x32xf32>
    %cst_37 = arith.constant dense<0.000000e+00> : vector<1x32xf32>
    %141 = tpu.matmul %133, %11, %cst_37 {dimension_numbers = #tpu.dot_dimension_numbers<[1], [0], [0], [1], [0, 0, 1, 1], [], []>} : vector<1x32xf32>, vector<32x32xf32>, vector<1x32xf32> -> vector<1x32xf32>
    %142 = arith.addf %140, %141 : vector<1x32xf32>
    %143 = math.tanh %142 : vector<1x32xf32>
    %144 = vector.extract_strided_slice %10 {offsets = [0, 13, 0], sizes = [1, 1, 32], strides = [1, 1, 1]} : vector<2x20x32xf32> to vector<1x1x32xf32>
    %145 = vector.shape_cast %144 : vector<1x1x32xf32> to vector<1x32xf32>
    %cst_38 = arith.constant dense<0.000000e+00> : vector<1x32xf32>
    %146 = tpu.matmul %138, %11, %cst_38 {dimension_numbers = #tpu.dot_dimension_numbers<[1], [0], [0], [1], [0, 0, 1, 1], [], []>} : vector<1x32xf32>, vector<32x32xf32>, vector<1x32xf32> -> vector<1x32xf32>
    %147 = arith.addf %145, %146 : vector<1x32xf32>
    %148 = math.tanh %147 : vector<1x32xf32>
    %149 = vector.extract_strided_slice %10 {offsets = [1, 13, 0], sizes = [1, 1, 32], strides = [1, 1, 1]} : vector<2x20x32xf32> to vector<1x1x32xf32>
    %150 = vector.shape_cast %149 : vector<1x1x32xf32> to vector<1x32xf32>
    %cst_39 = arith.constant dense<0.000000e+00> : vector<1x32xf32>
    %151 = tpu.matmul %143, %11, %cst_39 {dimension_numbers = #tpu.dot_dimension_numbers<[1], [0], [0], [1], [0, 0, 1, 1], [], []>} : vector<1x32xf32>, vector<32x32xf32>, vector<1x32xf32> -> vector<1x32xf32>
    %152 = arith.addf %150, %151 : vector<1x32xf32>
    %153 = math.tanh %152 : vector<1x32xf32>
    %154 = vector.extract_strided_slice %10 {offsets = [0, 14, 0], sizes = [1, 1, 32], strides = [1, 1, 1]} : vector<2x20x32xf32> to vector<1x1x32xf32>
    %155 = vector.shape_cast %154 : vector<1x1x32xf32> to vector<1x32xf32>
    %cst_40 = arith.constant dense<0.000000e+00> : vector<1x32xf32>
    %156 = tpu.matmul %148, %11, %cst_40 {dimension_numbers = #tpu.dot_dimension_numbers<[1], [0], [0], [1], [0, 0, 1, 1], [], []>} : vector<1x32xf32>, vector<32x32xf32>, vector<1x32xf32> -> vector<1x32xf32>
    %157 = arith.addf %155, %156 : vector<1x32xf32>
    %158 = math.tanh %157 : vector<1x32xf32>
    %159 = vector.extract_strided_slice %10 {offsets = [1, 14, 0], sizes = [1, 1, 32], strides = [1, 1, 1]} : vector<2x20x32xf32> to vector<1x1x32xf32>
    %160 = vector.shape_cast %159 : vector<1x1x32xf32> to vector<1x32xf32>
    %cst_41 = arith.constant dense<0.000000e+00> : vector<1x32xf32>
    %161 = tpu.matmul %153, %11, %cst_41 {dimension_numbers = #tpu.dot_dimension_numbers<[1], [0], [0], [1], [0, 0, 1, 1], [], []>} : vector<1x32xf32>, vector<32x32xf32>, vector<1x32xf32> -> vector<1x32xf32>
    %162 = arith.addf %160, %161 : vector<1x32xf32>
    %163 = math.tanh %162 : vector<1x32xf32>
    %164 = vector.extract_strided_slice %10 {offsets = [0, 15, 0], sizes = [1, 1, 32], strides = [1, 1, 1]} : vector<2x20x32xf32> to vector<1x1x32xf32>
    %165 = vector.shape_cast %164 : vector<1x1x32xf32> to vector<1x32xf32>
    %cst_42 = arith.constant dense<0.000000e+00> : vector<1x32xf32>
    %166 = tpu.matmul %158, %11, %cst_42 {dimension_numbers = #tpu.dot_dimension_numbers<[1], [0], [0], [1], [0, 0, 1, 1], [], []>} : vector<1x32xf32>, vector<32x32xf32>, vector<1x32xf32> -> vector<1x32xf32>
    %167 = arith.addf %165, %166 : vector<1x32xf32>
    %168 = math.tanh %167 : vector<1x32xf32>
    %169 = vector.extract_strided_slice %10 {offsets = [1, 15, 0], sizes = [1, 1, 32], strides = [1, 1, 1]} : vector<2x20x32xf32> to vector<1x1x32xf32>
    %170 = vector.shape_cast %169 : vector<1x1x32xf32> to vector<1x32xf32>
    %cst_43 = arith.constant dense<0.000000e+00> : vector<1x32xf32>
    %171 = tpu.matmul %163, %11, %cst_43 {dimension_numbers = #tpu.dot_dimension_numbers<[1], [0], [0], [1], [0, 0, 1, 1], [], []>} : vector<1x32xf32>, vector<32x32xf32>, vector<1x32xf32> -> vector<1x32xf32>
    %172 = arith.addf %170, %171 : vector<1x32xf32>
    %173 = math.tanh %172 : vector<1x32xf32>
    %174 = vector.extract_strided_slice %10 {offsets = [0, 16, 0], sizes = [1, 1, 32], strides = [1, 1, 1]} : vector<2x20x32xf32> to vector<1x1x32xf32>
    %175 = vector.shape_cast %174 : vector<1x1x32xf32> to vector<1x32xf32>
    %cst_44 = arith.constant dense<0.000000e+00> : vector<1x32xf32>
    %176 = tpu.matmul %168, %11, %cst_44 {dimension_numbers = #tpu.dot_dimension_numbers<[1], [0], [0], [1], [0, 0, 1, 1], [], []>} : vector<1x32xf32>, vector<32x32xf32>, vector<1x32xf32> -> vector<1x32xf32>
    %177 = arith.addf %175, %176 : vector<1x32xf32>
    %178 = math.tanh %177 : vector<1x32xf32>
    %179 = vector.extract_strided_slice %10 {offsets = [1, 16, 0], sizes = [1, 1, 32], strides = [1, 1, 1]} : vector<2x20x32xf32> to vector<1x1x32xf32>
    %180 = vector.shape_cast %179 : vector<1x1x32xf32> to vector<1x32xf32>
    %cst_45 = arith.constant dense<0.000000e+00> : vector<1x32xf32>
    %181 = tpu.matmul %173, %11, %cst_45 {dimension_numbers = #tpu.dot_dimension_numbers<[1], [0], [0], [1], [0, 0, 1, 1], [], []>} : vector<1x32xf32>, vector<32x32xf32>, vector<1x32xf32> -> vector<1x32xf32>
    %182 = arith.addf %180, %181 : vector<1x32xf32>
    %183 = math.tanh %182 : vector<1x32xf32>
    %184 = vector.extract_strided_slice %10 {offsets = [0, 17, 0], sizes = [1, 1, 32], strides = [1, 1, 1]} : vector<2x20x32xf32> to vector<1x1x32xf32>
    %185 = vector.shape_cast %184 : vector<1x1x32xf32> to vector<1x32xf32>
    %cst_46 = arith.constant dense<0.000000e+00> : vector<1x32xf32>
    %186 = tpu.matmul %178, %11, %cst_46 {dimension_numbers = #tpu.dot_dimension_numbers<[1], [0], [0], [1], [0, 0, 1, 1], [], []>} : vector<1x32xf32>, vector<32x32xf32>, vector<1x32xf32> -> vector<1x32xf32>
    %187 = arith.addf %185, %186 : vector<1x32xf32>
    %188 = math.tanh %187 : vector<1x32xf32>
    %189 = vector.extract_strided_slice %10 {offsets = [1, 17, 0], sizes = [1, 1, 32], strides = [1, 1, 1]} : vector<2x20x32xf32> to vector<1x1x32xf32>
    %190 = vector.shape_cast %189 : vector<1x1x32xf32> to vector<1x32xf32>
    %cst_47 = arith.constant dense<0.000000e+00> : vector<1x32xf32>
    %191 = tpu.matmul %183, %11, %cst_47 {dimension_numbers = #tpu.dot_dimension_numbers<[1], [0], [0], [1], [0, 0, 1, 1], [], []>} : vector<1x32xf32>, vector<32x32xf32>, vector<1x32xf32> -> vector<1x32xf32>
    %192 = arith.addf %190, %191 : vector<1x32xf32>
    %193 = math.tanh %192 : vector<1x32xf32>
    %194 = vector.extract_strided_slice %10 {offsets = [0, 18, 0], sizes = [1, 1, 32], strides = [1, 1, 1]} : vector<2x20x32xf32> to vector<1x1x32xf32>
    %195 = vector.shape_cast %194 : vector<1x1x32xf32> to vector<1x32xf32>
    %cst_48 = arith.constant dense<0.000000e+00> : vector<1x32xf32>
    %196 = tpu.matmul %188, %11, %cst_48 {dimension_numbers = #tpu.dot_dimension_numbers<[1], [0], [0], [1], [0, 0, 1, 1], [], []>} : vector<1x32xf32>, vector<32x32xf32>, vector<1x32xf32> -> vector<1x32xf32>
    %197 = arith.addf %195, %196 : vector<1x32xf32>
    %198 = math.tanh %197 : vector<1x32xf32>
    %199 = vector.extract_strided_slice %10 {offsets = [1, 18, 0], sizes = [1, 1, 32], strides = [1, 1, 1]} : vector<2x20x32xf32> to vector<1x1x32xf32>
    %200 = vector.shape_cast %199 : vector<1x1x32xf32> to vector<1x32xf32>
    %cst_49 = arith.constant dense<0.000000e+00> : vector<1x32xf32>
    %201 = tpu.matmul %193, %11, %cst_49 {dimension_numbers = #tpu.dot_dimension_numbers<[1], [0], [0], [1], [0, 0, 1, 1], [], []>} : vector<1x32xf32>, vector<32x32xf32>, vector<1x32xf32> -> vector<1x32xf32>
    %202 = arith.addf %200, %201 : vector<1x32xf32>
    %203 = math.tanh %202 : vector<1x32xf32>
    %204 = vector.extract_strided_slice %10 {offsets = [0, 19, 0], sizes = [1, 1, 32], strides = [1, 1, 1]} : vector<2x20x32xf32> to vector<1x1x32xf32>
    %205 = vector.shape_cast %204 : vector<1x1x32xf32> to vector<1x32xf32>
    %cst_50 = arith.constant dense<0.000000e+00> : vector<1x32xf32>
    %206 = tpu.matmul %198, %11, %cst_50 {dimension_numbers = #tpu.dot_dimension_numbers<[1], [0], [0], [1], [0, 0, 1, 1], [], []>} : vector<1x32xf32>, vector<32x32xf32>, vector<1x32xf32> -> vector<1x32xf32>
    %207 = arith.addf %205, %206 : vector<1x32xf32>
    %208 = math.tanh %207 : vector<1x32xf32>
    %209 = vector.extract_strided_slice %10 {offsets = [1, 19, 0], sizes = [1, 1, 32], strides = [1, 1, 1]} : vector<2x20x32xf32> to vector<1x1x32xf32>
    %210 = vector.shape_cast %209 : vector<1x1x32xf32> to vector<1x32xf32>
    %cst_51 = arith.constant dense<0.000000e+00> : vector<1x32xf32>
    %211 = tpu.matmul %203, %11, %cst_51 {dimension_numbers = #tpu.dot_dimension_numbers<[1], [0], [0], [1], [0, 0, 1, 1], [], []>} : vector<1x32xf32>, vector<32x32xf32>, vector<1x32xf32> -> vector<1x32xf32>
    %212 = arith.addf %210, %211 : vector<1x32xf32>
    %213 = math.tanh %212 : vector<1x32xf32>
    %c0_52 = arith.constant 0 : index
    %c0_53 = arith.constant 0 : index
    %214 = vector.load %arg9[%c0_52, %c0_53] : memref<2x32xf32, #tpu.memory_space<vmem>>, vector<1x32xf32>
    tpu.vector_store %arg9[%c0_52, %c0_53], %208 {strides = array<i32>} : memref<2x32xf32, #tpu.memory_space<vmem>>, vector<1x32xf32>,
    %c1_54 = arith.constant 1 : index
    %c0_55 = arith.constant 0 : index
    %215 = vector.load %arg9[%c1_54, %c0_55] : memref<2x32xf32, #tpu.memory_space<vmem>>, vector<1x32xf32>
    tpu.vector_store %arg9[%c1_54, %c0_55], %213 {strides = array<i32>} : memref<2x32xf32, #tpu.memory_space<vmem>>, vector<1x32xf32>,
    %c0_i32_56 = arith.constant 0 : i32
    %216 = arith.cmpi eq, %arg1, %c0_i32_56 : i32
    %217 = arith.extui %216 : i1 to i32
    %c0_i32_57 = arith.constant 0 : i32
    %218 = arith.cmpi ne, %217, %c0_i32_57 : i32
    scf.if %218 {
      %c0_58 = arith.constant 0 : index
      %c0_59 = arith.constant 0 : index
      %219 = vector.load %arg9[%c0_58, %c0_59] : memref<2x32xf32, #tpu.memory_space<vmem>>, vector<2x32xf32>
      %c0_60 = arith.constant 0 : index
      %c0_61 = arith.constant 0 : index
      %220 = vector.load %arg6[%c0_60, %c0_61] : memref<32x6xf32, #tpu.memory_space<vmem>>, vector<32x6xf32>
      %cst_62 = arith.constant dense<0.000000e+00> : vector<2x6xf32>
      %221 = tpu.matmul %219, %220, %cst_62 {dimension_numbers = #tpu.dot_dimension_numbers<[1], [0], [0], [1], [0, 0, 1, 1], [], []>} : vector<2x32xf32>, vector<32x6xf32>, vector<2x6xf32> -> vector<2x6xf32>
      %c0_63 = arith.constant 0 : index
      %c0_64 = arith.constant 0 : index
      %222 = vector.load %arg7[%c0_63, %c0_64] : memref<1x6xf32, #tpu.memory_space<vmem>>, vector<1x6xf32>
      %223 = vector.broadcast %222 : vector<1x6xf32> to vector<2x6xf32>
      %224 = arith.addf %221, %223 : vector<2x6xf32>
      %c0_65 = arith.constant 0 : index
      %c0_66 = arith.constant 0 : index
      %225 = vector.load %arg8[%c0_65, %c0_66] : memref<2x6xf32, #tpu.memory_space<vmem>>, vector<2x6xf32>
      tpu.vector_store %arg8[%c0_65, %c0_66], %224 {strides = array<i32>} : memref<2x6xf32, #tpu.memory_space<vmem>>, vector<2x6xf32>,
    } else {
    }
    return
  }
  func.func @transform_0(%arg0: i32, %arg1: i32) -> (i32, i32, i32) {
    %c0_i32 = arith.constant 0 : i32
    %c0_i32_0 = arith.constant 0 : i32
    return %arg0, %arg1, %c0_i32 : i32, i32, i32
  }
  func.func @transform_1(%arg0: i32, %arg1: i32) -> (i32, i32) {
    %c0_i32 = arith.constant 0 : i32
    %c0_i32_0 = arith.constant 0 : i32
    %c0_i32_1 = arith.constant 0 : i32
    return %c0_i32, %c0_i32_0 : i32, i32
  }
  func.func @transform_2(%arg0: i32, %arg1: i32) -> (i32, i32) {
    %c0_i32 = arith.constant 0 : i32
    %c0_i32_0 = arith.constant 0 : i32
    %c0_i32_1 = arith.constant 0 : i32
    return %c0_i32, %c0_i32_0 : i32, i32
  }
  func.func @transform_3(%arg0: i32, %arg1: i32) -> (i32, i32) {
    %c0_i32 = arith.constant 0 : i32
    %c0_i32_0 = arith.constant 0 : i32
    %c0_i32_1 = arith.constant 0 : i32
    return %c0_i32, %c0_i32_0 : i32, i32
  }
  func.func @transform_4(%arg0: i32, %arg1: i32) -> (i32, i32) {
    %c0_i32 = arith.constant 0 : i32
    %c0_i32_0 = arith.constant 0 : i32
    %c0_i32_1 = arith.constant 0 : i32
    return %c0_i32, %c0_i32_0 : i32, i32
  }
  func.func @transform_5(%arg0: i32, %arg1: i32) -> (i32, i32) {
    %c0_i32 = arith.constant 0 : i32
    %c0_i32_0 = arith.constant 0 : i32
    %c0_i32_1 = arith.constant 0 : i32
    return %c0_i32, %c0_i32_0 : i32, i32
  }
  func.func @transform_6(%arg0: i32, %arg1: i32) -> (i32, i32) {
    %c0_i32 = arith.constant 0 : i32
    %c0_i32_0 = arith.constant 0 : i32
    return %arg0, %c0_i32 : i32, i32
  }
}

</mosaic_0001>

<llo_original>
// kernel: tpu_custom_call.1
$region0: #{tpu_custom_call.1}
  #allocation0 [shape = 'u32[]', space=smem, size = 0x4, offset = 0x4, fixed_abs, tag = 'smem constant byte address 0x4 - core index']
  #allocation1 [shape = 'u32[144,128]{1,0:T(1,128)}', space=vmem, size = 0x12000, scoped, tag = 'internal scratch']
  #allocation2 [shape = 'f32[2,32]{1,0:T(2,128)}', space=vmem, size = 0x400, scoped, tag = 'scratch operand']
  %s0 = inlined_call_operand.vmem [shape: f32[2,20,4], index: 0, kind: input, shape index: {}]
  %s1 = inlined_call_operand.vmem [shape: f32[4,32], index: 1, kind: input, shape index: {}]
  %s2 = inlined_call_operand.vmem [shape: f32[32,32], index: 2, kind: input, shape index: {}]
  %s3 = inlined_call_operand.vmem [shape: f32[1,32], index: 3, kind: input, shape index: {}]
  %s4 = inlined_call_operand.vmem [shape: f32[32,6], index: 4, kind: input, shape index: {}]
  %s5 = inlined_call_operand.vmem [shape: f32[1,6], index: 5, kind: input, shape index: {}]
  %s6 = inlined_call_operand.hbm [shape: f32[2,6], index: 6, kind: output, shape index: {}]
  %s7 = sld [smem:[#allocation0]]
  $region42: #{tpu_custom_call.1} parent=0
    _
  %s9 = ssub.s32 1, %s7
  %s10 = scalar_select 0, %s9, %s7
  $region1: #{tpu_custom_call.1} parent=0
    #allocation3 [shape = 'u8[1024]{0}', space=vmem, size = 0x400, scoped, tag = 'output window, operand 0, single buffered']
    #allocation4 [shape = 's32[1]{0}', space=sflag, size = 0x4, scoped, tag = 'scoped memory for tpu_custom_call.1']
    %11 = vsyncpa [#allocation4], 0
    // Predicated region
    $region2: #{tpu_custom_call.1} parent=1 // pred_check
      _
    $region3: #{tpu_custom_call.1} parent=1 // pred_check_branch
      %13 = sbr.rel (0) target = $region5
    $region4: #{tpu_custom_call.1} parent=1 // pred_region
      _
    $region5: #{tpu_custom_call.1} parent=1 // pred_fallthru
      _
    // Predicated region
    $region6: #{tpu_custom_call.1} parent=1 // pred_check
      _
    $region7: #{tpu_custom_call.1} parent=1 // pred_check_branch
      %15 = sbr.rel (0) target = $region9
    $region8: #{tpu_custom_call.1} parent=1 // pred_region
      _
    $region9: #{tpu_custom_call.1} parent=1 // pred_fallthru
      _
    // Predicated region
    $region10: #{tpu_custom_call.1} parent=1 // pred_check
      _
    $region11: #{tpu_custom_call.1} parent=1 // pred_check_branch
      %17 = sbr.rel (0) target = $region13
    $region12: #{tpu_custom_call.1} parent=1 // pred_region
      _
    $region13: #{tpu_custom_call.1} parent=1 // pred_fallthru
      _
    // Predicated region
    $region14: #{tpu_custom_call.1} parent=1 // pred_check
      _
    $region15: #{tpu_custom_call.1} parent=1 // pred_check_branch
      %19 = sbr.rel (0) target = $region17
    $region16: #{tpu_custom_call.1} parent=1 // pred_region
      _
    $region17: #{tpu_custom_call.1} parent=1 // pred_fallthru
      _
    // Predicated region
    $region18: #{tpu_custom_call.1} parent=1 // pred_check
      _
    $region19: #{tpu_custom_call.1} parent=1 // pred_check_branch
      %21 = sbr.rel (0) target = $region21
    $region20: #{tpu_custom_call.1} parent=1 // pred_region
      _
    $region21: #{tpu_custom_call.1} parent=1 // pred_fallthru
      _
    // Predicated region
    $region22: #{tpu_custom_call.1} parent=1 // pred_check
      _
    $region23: #{tpu_custom_call.1} parent=1 // pred_check_branch
      %23 = sbr.rel (0) target = $region25
    $region24: #{tpu_custom_call.1} parent=1 // pred_region
      _
    $region25: #{tpu_custom_call.1} parent=1 // pred_fallthru
      _
    %p24 = scmp.eq.s32.totalorder 0, 0
    // Predicated region
    $region26: #{tpu_custom_call.1} parent=1 // pred_check
      %p25 = pneg %p24
    $region27: #{tpu_custom_call.1} parent=1 // pred_check_branch
      %27 = sbr.rel (%p25) target = $region29
    $region28: #{tpu_custom_call.1} parent=1 // pred_region
      %vm28 = vcmask 254976
      %29 = vst.msk [vmem:[#allocation2] sm:$0x3] %vm28, 0.0
      %vm30 = vcmask 41984
      %31 = vst.msk [vmem:[#allocation3] sm:$0x3] %vm30, 0.0
    $region29: #{tpu_custom_call.1} parent=1 // pred_fallthru
      _
    %v32 = vld [vmem:[%s0] sm:$0xff]
    %v33 = vld [vmem:[%s0 + $0x8] sm:$0xff]
    %v34 = vld [vmem:[%s0 + $0x10] sm:$0xf]
    %v35 = vld [vmem:[%s0 + $0x18] sm:$0xff]
    %v36 = vld [vmem:[%s0 + $0x20] sm:$0xff]
    %v37 = vld [vmem:[%s0 + $0x28] sm:$0xf]
    %v44 = vcombine.high %v32, %v32
    %v45 = vcombine.high %v33, %v33
    %v46 = vcombine.high %v35, %v35
    %v47 = vcombine.high %v36, %v36
    %v48 = vld [vmem:[%s1] sm:$0xf]
    %v49 = vld [vmem:[%s3] sm:$0x1]
    %v51 = vlaneseq
    %v52 = vshrl.u32 %v51, 7
    %v53 = vsub.s32 0, %v52
    %v54 = vrot.slane %v49, %v53
    %v56 = vcombine.low %v32, %v44
    %v57 = vcombine.low %v33, %v45
    %v58 = vcombine.low %v34, %v35
    %v59 = vcombine.low %v46, %v36
    %v60 = vcombine.low %v47, %v37
    %vm61 = vcmask 31744
    %v62 = vsel %vm61, %v56, 0
    %v64 = vsel %vm61, %v57, 0
    %v66 = vsel %vm61, %v58, 0
    %v68 = vsel %vm61, %v59, 0
    %v70 = vsel %vm61, %v60, 0
    %vm72 = vcmask 1043456
    %v74 = vsel %vm72, %v48, 0
    %76 = vmatprep.subr.mxu0 0.0
    %77 = vmatpush1.msra.mxu0 0.0
    %78 = vmatprep.subr.mxu0 0.0
    %79 = vmatpush1.msra.mxu0 0.0
    %80 = vmatprep.subr.mxu0 0.0
    %81 = vmatpush1.msra.mxu0 0.0
    %82 = vmatprep.subr.mxu0 0.0
    %83 = vmatpush1.msra.mxu0 0.0
    %84 = vmatprep.subr.mxu0 0.0
    %85 = vmatpush1.msra.mxu0 0.0
    %86 = vmatprep.subr.mxu0 0.0
    %87 = vmatpush1.msra.mxu0 0.0
    %88 = vmatprep.subr.mxu0 0.0
    %89 = vmatpush1.msra.mxu0 0.0
    %90 = vmatprep.subr.mxu0 0.0
    %91 = vmatpush1.msra.mxu0 0.0
    %92 = vmatprep.subr.mxu0 0.0
    %93 = vmatpush1.msra.mxu0 0.0
    %94 = vmatprep.subr.mxu0 0.0
    %95 = vmatpush1.msra.mxu0 0.0
    %96 = vmatprep.subr.mxu0 0.0
    %97 = vmatpush1.msra.mxu0 0.0
    %98 = vmatprep.subr.mxu0 0.0
    %99 = vmatpush1.msra.mxu0 0.0
    %100 = vmatprep.subr.mxu0 0.0
    %101 = vmatpush1.msra.mxu0 0.0
    %102 = vmatprep.subr.mxu0 0.0
    %103 = vmatpush1.msra.mxu0 0.0
    %104 = vmatprep.subr.mxu0 0.0
    %105 = vmatpush1.msra.mxu0 0.0
    %106 = vmatprep.subr.mxu0 0.0
    %107 = vmatpush1.msra.mxu0 %v74
    %108 = vmatprep.subr.mxu0 0.0
    %109 = vmatpush2.msra.mxu0 0.0
    %110 = vmatprep.subr.mxu0 0.0
    %111 = vmatpush2.msra.mxu0 0.0
    %112 = vmatprep.subr.mxu0 0.0
    %113 = vmatpush2.msra.mxu0 0.0
    %114 = vmatprep.subr.mxu0 0.0
    %115 = vmatpush2.msra.mxu0 0.0
    %116 = vmatprep.subr.mxu0 0.0
    %117 = vmatpush2.msra.mxu0 0.0
    %118 = vmatprep.subr.mxu0 0.0
    %119 = vmatpush2.msra.mxu0 0.0
    %120 = vmatprep.subr.mxu0 0.0
    %121 = vmatpush2.msra.mxu0 0.0
    %122 = vmatprep.subr.mxu0 0.0
    %123 = vmatpush2.msra.mxu0 0.0
    %124 = vmatprep.subr.mxu0 0.0
    %125 = vmatpush2.msra.mxu0 0.0
    %126 = vmatprep.subr.mxu0 0.0
    %127 = vmatpush2.msra.mxu0 0.0
    %128 = vmatprep.subr.mxu0 0.0
    %129 = vmatpush2.msra.mxu0 0.0
    %130 = vmatprep.subr.mxu0 0.0
    %131 = vmatpush2.msra.mxu0 0.0
    %132 = vmatprep.subr.mxu0 0.0
    %133 = vmatpush2.msra.mxu0 0.0
    %134 = vmatprep.subr.mxu0 0.0
    %135 = vmatpush2.msra.mxu0 0.0
    %136 = vmatprep.subr.mxu0 0.0
    %137 = vmatpush2.msra.mxu0 0.0
    %138 = vmatprep.subr.mxu0 0.0
    %139 = vmatpush2.msra.mxu0 0.0
    %140 = vmatprep.mubr.f32.mxu0 0.0
    %141 = vmatmul.mubr.f32.gmra.mxu0 %v62
    %v142 = vpop.f32.mrf.mxu0
    %v143 = vadd.f32 %v54, %v142
    %v144 = vpop.f32.mrf.mxu0
    %145 = vmatprep.mubr.f32.mxu0 0.0
    %146 = vmatmul.mubr.f32.gmra.mxu0 %v64
    %v147 = vpop.f32.mrf.mxu0
    %v148 = vadd.f32 %v54, %v147
    %v149 = vpop.f32.mrf.mxu0
    %150 = vmatprep.mubr.f32.mxu0 0.0
    %151 = vmatmul.mubr.f32.gmra.mxu0 %v66
    %v152 = vpop.f32.mrf.mxu0
    %v153 = vadd.f32 %v54, %v152
    %v154 = vpop.f32.mrf.mxu0
    %155 = vmatprep.mubr.f32.mxu0 0.0
    %156 = vmatmul.mubr.f32.gmra.mxu0 %v68
    %v157 = vpop.f32.mrf.mxu0
    %v158 = vadd.f32 %v54, %v157
    %v159 = vpop.f32.mrf.mxu0
    %160 = vmatprep.mubr.f32.mxu0 0.0
    %161 = vmatmul.mubr.f32.gmra.mxu0 %v70
    %v162 = vpop.f32.mrf.mxu0
    %v163 = vadd.f32 %v54, %v162
    %v164 = vpop.f32.mrf.mxu0
    %165 = vdwg.mxu0
    %v166 = vld [vmem:[%s2] sm:$0xff]
    %v167 = vld [vmem:[%s2 + $0x8] sm:$0xff]
    %v168 = vld [vmem:[%s2 + $0x10] sm:$0xff]
    %v169 = vld [vmem:[%s2 + $0x18] sm:$0xff]
    %v170 = vld [vmem:[#allocation2] sm:$0x1]
    %v171 = vld [vmem:[#allocation2 + $0x1] sm:$0x1]
    %vm172 = vcmask 261120
    %v174 = vsel %vm172, %v170, 0
    %176 = vmatprep.subr.mxu0 0.0
    %177 = vmatpush1.msra.mxu0 0.0
    %178 = vmatprep.subr.mxu0 0.0
    %179 = vmatpush1.msra.mxu0 0.0
    %180 = vmatprep.subr.mxu0 0.0
    %181 = vmatpush1.msra.mxu0 0.0
    %182 = vmatprep.subr.mxu0 0.0
    %183 = vmatpush1.msra.mxu0 0.0
    %184 = vmatprep.subr.mxu0 0.0
    %185 = vmatpush1.msra.mxu0 0.0
    %186 = vmatprep.subr.mxu0 0.0
    %187 = vmatpush1.msra.mxu0 0.0
    %188 = vmatprep.subr.mxu0 0.0
    %189 = vmatpush1.msra.mxu0 0.0
    %190 = vmatprep.subr.mxu0 0.0
    %191 = vmatpush1.msra.mxu0 0.0
    %192 = vmatprep.subr.mxu0 0.0
    %193 = vmatpush1.msra.mxu0 0.0
    %194 = vmatprep.subr.mxu0 0.0
    %195 = vmatpush1.msra.mxu0 0.0
    %196 = vmatprep.subr.mxu0 0.0
    %197 = vmatpush1.msra.mxu0 0.0
    %198 = vmatprep.subr.mxu0 0.0
    %199 = vmatpush1.msra.mxu0 0.0
    %200 = vmatprep.subr.mxu0 0.0
    %201 = vmatpush1.msra.mxu0 %v169
    %202 = vmatprep.subr.mxu0 0.0
    %203 = vmatpush1.msra.mxu0 %v168
    %204 = vmatprep.subr.mxu0 0.0
    %205 = vmatpush1.msra.mxu0 %v167
    %206 = vmatprep.subr.mxu0 0.0
    %207 = vmatpush1.msra.mxu0 %v166
    %208 = vmatprep.subr.mxu0 0.0
    %209 = vmatpush2.msra.mxu0 0.0
    %210 = vmatprep.subr.mxu0 0.0
    %211 = vmatpush2.msra.mxu0 0.0
    %212 = vmatprep.subr.mxu0 0.0
    %213 = vmatpush2.msra.mxu0 0.0
    %214 = vmatprep.subr.mxu0 0.0
    %215 = vmatpush2.msra.mxu0 0.0
    %216 = vmatprep.subr.mxu0 0.0
    %217 = vmatpush2.msra.mxu0 0.0
    %218 = vmatprep.subr.mxu0 0.0
    %219 = vmatpush2.msra.mxu0 0.0
    %220 = vmatprep.subr.mxu0 0.0
    %221 = vmatpush2.msra.mxu0 0.0
    %222 = vmatprep.subr.mxu0 0.0
    %223 = vmatpush2.msra.mxu0 0.0
    %224 = vmatprep.subr.mxu0 0.0
    %225 = vmatpush2.msra.mxu0 0.0
    %226 = vmatprep.subr.mxu0 0.0
    %227 = vmatpush2.msra.mxu0 0.0
    %228 = vmatprep.subr.mxu0 0.0
    %229 = vmatpush2.msra.mxu0 0.0
    %230 = vmatprep.subr.mxu0 0.0
    %231 = vmatpush2.msra.mxu0 0.0
    %232 = vmatprep.subr.mxu0 0.0
    %233 = vmatpush2.msra.mxu0 0.0
    %234 = vmatprep.subr.mxu0 0.0
    %235 = vmatpush2.msra.mxu0 0.0
    %236 = vmatprep.subr.mxu0 0.0
    %237 = vmatpush2.msra.mxu0 0.0
    %238 = vmatprep.subr.mxu0 0.0
    %239 = vmatpush2.msra.mxu0 0.0
    %240 = vmatprep.mubr.f32.mxu0 0.0
    %241 = vmatmul.mubr.f32.gmra.mxu0 %v174
    %v242 = vpop.f32.mrf.mxu0
    %v243 = vadd.f32 0.0, %v242
    %v244 = vpop.f32.mrf.mxu0
    %245 = vdwg.mxu0
    %v246 = vadd.f32 %v143, %v243
    %v247 = vtanh.pop %v246
    %v249 = vsel %vm172, %v171, 0
    %251 = vmatprep.subr.mxu0 0.0
    %252 = vmatpush1.msra.mxu0 0.0
    %253 = vmatprep.subr.mxu0 0.0
    %254 = vmatpush1.msra.mxu0 0.0
    %255 = vmatprep.subr.mxu0 0.0
    %256 = vmatpush1.msra.mxu0 0.0
    %257 = vmatprep.subr.mxu0 0.0
    %258 = vmatpush1.msra.mxu0 0.0
    %259 = vmatprep.subr.mxu0 0.0
    %260 = vmatpush1.msra.mxu0 0.0
    %261 = vmatprep.subr.mxu0 0.0
    %262 = vmatpush1.msra.mxu0 0.0
    %263 = vmatprep.subr.mxu0 0.0
    %264 = vmatpush1.msra.mxu0 0.0
    %265 = vmatprep.subr.mxu0 0.0
    %266 = vmatpush1.msra.mxu0 0.0
    %267 = vmatprep.subr.mxu0 0.0
    %268 = vmatpush1.msra.mxu0 0.0
    %269 = vmatprep.subr.mxu0 0.0
    %270 = vmatpush1.msra.mxu0 0.0
    %271 = vmatprep.subr.mxu0 0.0
    %272 = vmatpush1.msra.mxu0 0.0
    %273 = vmatprep.subr.mxu0 0.0
    %274 = vmatpush1.msra.mxu0 0.0
    %275 = vmatprep.subr.mxu0 0.0
    %276 = vmatpush1.msra.mxu0 %v169
    %277 = vmatprep.subr.mxu0 0.0
    %278 = vmatpush1.msra.mxu0 %v168
    %279 = vmatprep.subr.mxu0 0.0
    %280 = vmatpush1.msra.mxu0 %v167
    %281 = vmatprep.subr.mxu0 0.0
    %282 = vmatpush1.msra.mxu0 %v166
    %283 = vmatprep.subr.mxu0 0.0
    %284 = vmatpush2.msra.mxu0 0.0
    %285 = vmatprep.subr.mxu0 0.0
    %286 = vmatpush2.msra.mxu0 0.0
    %287 = vmatprep.subr.mxu0 0.0
    %288 = vmatpush2.msra.mxu0 0.0
    %289 = vmatprep.subr.mxu0 0.0
    %290 = vmatpush2.msra.mxu0 0.0
    %291 = vmatprep.subr.mxu0 0.0
    %292 = vmatpush2.msra.mxu0 0.0
    %293 = vmatprep.subr.mxu0 0.0
    %294 = vmatpush2.msra.mxu0 0.0
    %295 = vmatprep.subr.mxu0 0.0
    %296 = vmatpush2.msra.mxu0 0.0
    %297 = vmatprep.subr.mxu0 0.0
    %298 = vmatpush2.msra.mxu0 0.0
    %299 = vmatprep.subr.mxu0 0.0
    %300 = vmatpush2.msra.mxu0 0.0
    %301 = vmatprep.subr.mxu0 0.0
    %302 = vmatpush2.msra.mxu0 0.0
    %303 = vmatprep.subr.mxu0 0.0
    %304 = vmatpush2.msra.mxu0 0.0
    %305 = vmatprep.subr.mxu0 0.0
    %306 = vmatpush2.msra.mxu0 0.0
    %307 = vmatprep.subr.mxu0 0.0
    %308 = vmatpush2.msra.mxu0 0.0
    %309 = vmatprep.subr.mxu0 0.0
    %310 = vmatpush2.msra.mxu0 0.0
    %311 = vmatprep.subr.mxu0 0.0
    %312 = vmatpush2.msra.mxu0 0.0
    %313 = vmatprep.subr.mxu0 0.0
    %314 = vmatpush2.msra.mxu0 0.0
    %315 = vmatprep.mubr.f32.mxu0 0.0
    %316 = vmatmul.mubr.f32.gmra.mxu0 %v249
    %v317 = vpop.f32.mrf.mxu0
    %v318 = vadd.f32 0.0, %v317
    %v319 = vpop.f32.mrf.mxu0
    %320 = vdwg.mxu0
    %v322 = vrot.slane %v318, 4
    %v324 = vadd.f32 %v153, %v322
    %v325 = vtanh.pop %v324
    %v327 = vsel %vm172, %v247, 0
    %329 = vmatprep.subr.mxu0 0.0
    %330 = vmatpush1.msra.mxu0 0.0
    %331 = vmatprep.subr.mxu0 0.0
    %332 = vmatpush1.msra.mxu0 0.0
    %333 = vmatprep.subr.mxu0 0.0
    %334 = vmatpush1.msra.mxu0 0.0
    %335 = vmatprep.subr.mxu0 0.0
    %336 = vmatpush1.msra.mxu0 0.0
    %337 = vmatprep.subr.mxu0 0.0
    %338 = vmatpush1.msra.mxu0 0.0
    %339 = vmatprep.subr.mxu0 0.0
    %340 = vmatpush1.msra.mxu0 0.0
    %341 = vmatprep.subr.mxu0 0.0
    %342 = vmatpush1.msra.mxu0 0.0
    %343 = vmatprep.subr.mxu0 0.0
    %344 = vmatpush1.msra.mxu0 0.0
    %345 = vmatprep.subr.mxu0 0.0
    %346 = vmatpush1.msra.mxu0 0.0
    %347 = vmatprep.subr.mxu0 0.0
    %348 = vmatpush1.msra.mxu0 0.0
    %349 = vmatprep.subr.mxu0 0.0
    %350 = vmatpush1.msra.mxu0 0.0
    %351 = vmatprep.subr.mxu0 0.0
    %352 = vmatpush1.msra.mxu0 0.0
    %353 = vmatprep.subr.mxu0 0.0
    %354 = vmatpush1.msra.mxu0 %v169
    %355 = vmatprep.subr.mxu0 0.0
    %356 = vmatpush1.msra.mxu0 %v168
    %357 = vmatprep.subr.mxu0 0.0
    %358 = vmatpush1.msra.mxu0 %v167
    %359 = vmatprep.subr.mxu0 0.0
    %360 = vmatpush1.msra.mxu0 %v166
    %361 = vmatprep.subr.mxu0 0.0
    %362 = vmatpush2.msra.mxu0 0.0
    %363 = vmatprep.subr.mxu0 0.0
    %364 = vmatpush2.msra.mxu0 0.0
    %365 = vmatprep.subr.mxu0 0.0
    %366 = vmatpush2.msra.mxu0 0.0
    %367 = vmatprep.subr.mxu0 0.0
    %368 = vmatpush2.msra.mxu0 0.0
    %369 = vmatprep.subr.mxu0 0.0
    %370 = vmatpush2.msra.mxu0 0.0
    %371 = vmatprep.subr.mxu0 0.0
    %372 = vmatpush2.msra.mxu0 0.0
    %373 = vmatprep.subr.mxu0 0.0
    %374 = vmatpush2.msra.mxu0 0.0
    %375 = vmatprep.subr.mxu0 0.0
    %376 = vmatpush2.msra.mxu0 0.0
    %377 = vmatprep.subr.mxu0 0.0
    %378 = vmatpush2.msra.mxu0 0.0
    %379 = vmatprep.subr.mxu0 0.0
    %380 = vmatpush2.msra.mxu0 0.0
    %381 = vmatprep.subr.mxu0 0.0
    %382 = vmatpush2.msra.mxu0 0.0
    %383 = vmatprep.subr.mxu0 0.0
    %384 = vmatpush2.msra.mxu0 0.0
    %385 = vmatprep.subr.mxu0 0.0
    %386 = vmatpush2.msra.mxu0 0.0
    %387 = vmatprep.subr.mxu0 0.0
    %388 = vmatpush2.msra.mxu0 0.0
    %389 = vmatprep.subr.mxu0 0.0
    %390 = vmatpush2.msra.mxu0 0.0
    %391 = vmatprep.subr.mxu0 0.0
    %392 = vmatpush2.msra.mxu0 0.0
    %393 = vmatprep.mubr.f32.mxu0 0.0
    %394 = vmatmul.mubr.f32.gmra.mxu0 %v327
    %v395 = vpop.f32.mrf.mxu0
    %v396 = vadd.f32 0.0, %v395
    %v397 = vpop.f32.mrf.mxu0
    %398 = vdwg.mxu0
    %v400 = vrot.slane %v396, 7
    %v402 = vadd.f32 %v143, %v400
    %v403 = vtanh.pop %v402
    %v405 = vrot.slane %v325, 4
    %v406 = vsel %vm172, %v405, 0
    %408 = vmatprep.subr.mxu0 0.0
    %409 = vmatpush1.msra.mxu0 0.0
    %410 = vmatprep.subr.mxu0 0.0
    %411 = vmatpush1.msra.mxu0 0.0
    %412 = vmatprep.subr.mxu0 0.0
    %413 = vmatpush1.msra.mxu0 0.0
    %414 = vmatprep.subr.mxu0 0.0
    %415 = vmatpush1.msra.mxu0 0.0
    %416 = vmatprep.subr.mxu0 0.0
    %417 = vmatpush1.msra.mxu0 0.0
    %418 = vmatprep.subr.mxu0 0.0
    %419 = vmatpush1.msra.mxu0 0.0
    %420 = vmatprep.subr.mxu0 0.0
    %421 = vmatpush1.msra.mxu0 0.0
    %422 = vmatprep.subr.mxu0 0.0
    %423 = vmatpush1.msra.mxu0 0.0
    %424 = vmatprep.subr.mxu0 0.0
    %425 = vmatpush1.msra.mxu0 0.0
    %426 = vmatprep.subr.mxu0 0.0
    %427 = vmatpush1.msra.mxu0 0.0
    %428 = vmatprep.subr.mxu0 0.0
    %429 = vmatpush1.msra.mxu0 0.0
    %430 = vmatprep.subr.mxu0 0.0
    %431 = vmatpush1.msra.mxu0 0.0
    %432 = vmatprep.subr.mxu0 0.0
    %433 = vmatpush1.msra.mxu0 %v169
    %434 = vmatprep.subr.mxu0 0.0
    %435 = vmatpush1.msra.mxu0 %v168
    %436 = vmatprep.subr.mxu0 0.0
    %437 = vmatpush1.msra.mxu0 %v167
    %438 = vmatprep.subr.mxu0 0.0
    %439 = vmatpush1.msra.mxu0 %v166
    %440 = vmatprep.subr.mxu0 0.0
    %441 = vmatpush2.msra.mxu0 0.0
    %442 = vmatprep.subr.mxu0 0.0
    %443 = vmatpush2.msra.mxu0 0.0
    %444 = vmatprep.subr.mxu0 0.0
    %445 = vmatpush2.msra.mxu0 0.0
    %446 = vmatprep.subr.mxu0 0.0
    %447 = vmatpush2.msra.mxu0 0.0
    %448 = vmatprep.subr.mxu0 0.0
    %449 = vmatpush2.msra.mxu0 0.0
    %450 = vmatprep.subr.mxu0 0.0
    %451 = vmatpush2.msra.mxu0 0.0
    %452 = vmatprep.subr.mxu0 0.0
    %453 = vmatpush2.msra.mxu0 0.0
    %454 = vmatprep.subr.mxu0 0.0
    %455 = vmatpush2.msra.mxu0 0.0
    %456 = vmatprep.subr.mxu0 0.0
    %457 = vmatpush2.msra.mxu0 0.0
    %458 = vmatprep.subr.mxu0 0.0
    %459 = vmatpush2.msra.mxu0 0.0
    %460 = vmatprep.subr.mxu0 0.0
    %461 = vmatpush2.msra.mxu0 0.0
    %462 = vmatprep.subr.mxu0 0.0
    %463 = vmatpush2.msra.mxu0 0.0
    %464 = vmatprep.subr.mxu0 0.0
    %465 = vmatpush2.msra.mxu0 0.0
    %466 = vmatprep.subr.mxu0 0.0
    %467 = vmatpush2.msra.mxu0 0.0
    %468 = vmatprep.subr.mxu0 0.0
    %469 = vmatpush2.msra.mxu0 0.0
    %470 = vmatprep.subr.mxu0 0.0
    %471 = vmatpush2.msra.mxu0 0.0
    %472 = vmatprep.mubr.f32.mxu0 0.0
    %473 = vmatmul.mubr.f32.gmra.mxu0 %v406
    %v474 = vpop.f32.mrf.mxu0
    %v475 = vadd.f32 0.0, %v474
    %v476 = vpop.f32.mrf.mxu0
    %477 = vdwg.mxu0
    %v479 = vrot.slane %v475, 3
    %v481 = vadd.f32 %v153, %v479
    %v482 = vtanh.pop %v481
    %v484 = vrot.slane %v403, 1
    %v485 = vsel %vm172, %v484, 0
    %487 = vmatprep.subr.mxu0 0.0
    %488 = vmatpush1.msra.mxu0 0.0
    %489 = vmatprep.subr.mxu0 0.0
    %490 = vmatpush1.msra.mxu0 0.0
    %491 = vmatprep.subr.mxu0 0.0
    %492 = vmatpush1.msra.mxu0 0.0
    %493 = vmatprep.subr.mxu0 0.0
    %494 = vmatpush1.msra.mxu0 0.0
    %495 = vmatprep.subr.mxu0 0.0
    %496 = vmatpush1.msra.mxu0 0.0
    %497 = vmatprep.subr.mxu0 0.0
    %498 = vmatpush1.msra.mxu0 0.0
    %499 = vmatprep.subr.mxu0 0.0
    %500 = vmatpush1.msra.mxu0 0.0
    %501 = vmatprep.subr.mxu0 0.0
    %502 = vmatpush1.msra.mxu0 0.0
    %503 = vmatprep.subr.mxu0 0.0
    %504 = vmatpush1.msra.mxu0 0.0
    %505 = vmatprep.subr.mxu0 0.0
    %506 = vmatpush1.msra.mxu0 0.0
    %507 = vmatprep.subr.mxu0 0.0
    %508 = vmatpush1.msra.mxu0 0.0
    %509 = vmatprep.subr.mxu0 0.0
    %510 = vmatpush1.msra.mxu0 0.0
    %511 = vmatprep.subr.mxu0 0.0
    %512 = vmatpush1.msra.mxu0 %v169
    %513 = vmatprep.subr.mxu0 0.0
    %514 = vmatpush1.msra.mxu0 %v168
    %515 = vmatprep.subr.mxu0 0.0
    %516 = vmatpush1.msra.mxu0 %v167
    %517 = vmatprep.subr.mxu0 0.0
    %518 = vmatpush1.msra.mxu0 %v166
    %519 = vmatprep.subr.mxu0 0.0
    %520 = vmatpush2.msra.mxu0 0.0
    %521 = vmatprep.subr.mxu0 0.0
    %522 = vmatpush2.msra.mxu0 0.0
    %523 = vmatprep.subr.mxu0 0.0
    %524 = vmatpush2.msra.mxu0 0.0
    %525 = vmatprep.subr.mxu0 0.0
    %526 = vmatpush2.msra.mxu0 0.0
    %527 = vmatprep.subr.mxu0 0.0
    %528 = vmatpush2.msra.mxu0 0.0
    %529 = vmatprep.subr.mxu0 0.0
    %530 = vmatpush2.msra.mxu0 0.0
    %531 = vmatprep.subr.mxu0 0.0
    %532 = vmatpush2.msra.mxu0 0.0
    %533 = vmatprep.subr.mxu0 0.0
    %534 = vmatpush2.msra.mxu0 0.0
    %535 = vmatprep.subr.mxu0 0.0
    %536 = vmatpush2.msra.mxu0 0.0
    %537 = vmatprep.subr.mxu0 0.0
    %538 = vmatpush2.msra.mxu0 0.0
    %539 = vmatprep.subr.mxu0 0.0
    %540 = vmatpush2.msra.mxu0 0.0
    %541 = vmatprep.subr.mxu0 0.0
    %542 = vmatpush2.msra.mxu0 0.0
    %543 = vmatprep.subr.mxu0 0.0
    %544 = vmatpush2.msra.mxu0 0.0
    %545 = vmatprep.subr.mxu0 0.0
    %546 = vmatpush2.msra.mxu0 0.0
    %547 = vmatprep.subr.mxu0 0.0
    %548 = vmatpush2.msra.mxu0 0.0
    %549 = vmatprep.subr.mxu0 0.0
    %550 = vmatpush2.msra.mxu0 0.0
    %551 = vmatprep.mubr.f32.mxu0 0.0
    %552 = vmatmul.mubr.f32.gmra.mxu0 %v485
    %v553 = vpop.f32.mrf.mxu0
    %v554 = vadd.f32 0.0, %v553
    %v555 = vpop.f32.mrf.mxu0
    %556 = vdwg.mxu0
    %v558 = vrot.slane %v554, 6
    %v560 = vadd.f32 %v143, %v558
    %v561 = vtanh.pop %v560
    %v563 = vrot.slane %v482, 5
    %v564 = vsel %vm172, %v563, 0
    %566 = vmatprep.subr.mxu0 0.0
    %567 = vmatpush1.msra.mxu0 0.0
    %568 = vmatprep.subr.mxu0 0.0
    %569 = vmatpush1.msra.mxu0 0.0
    %570 = vmatprep.subr.mxu0 0.0
    %571 = vmatpush1.msra.mxu0 0.0
    %572 = vmatprep.subr.mxu0 0.0
    %573 = vmatpush1.msra.mxu0 0.0
    %574 = vmatprep.subr.mxu0 0.0
    %575 = vmatpush1.msra.mxu0 0.0
    %576 = vmatprep.subr.mxu0 0.0
    %577 = vmatpush1.msra.mxu0 0.0
    %578 = vmatprep.subr.mxu0 0.0
    %579 = vmatpush1.msra.mxu0 0.0
    %580 = vmatprep.subr.mxu0 0.0
    %581 = vmatpush1.msra.mxu0 0.0
    %582 = vmatprep.subr.mxu0 0.0
    %583 = vmatpush1.msra.mxu0 0.0
    %584 = vmatprep.subr.mxu0 0.0
    %585 = vmatpush1.msra.mxu0 0.0
    %586 = vmatprep.subr.mxu0 0.0
    %587 = vmatpush1.msra.mxu0 0.0
    %588 = vmatprep.subr.mxu0 0.0
    %589 = vmatpush1.msra.mxu0 0.0
    %590 = vmatprep.subr.mxu0 0.0
    %591 = vmatpush1.msra.mxu0 %v169
    %592 = vmatprep.subr.mxu0 0.0
    %593 = vmatpush1.msra.mxu0 %v168
    %594 = vmatprep.subr.mxu0 0.0
    %595 = vmatpush1.msra.mxu0 %v167
    %596 = vmatprep.subr.mxu0 0.0
    %597 = vmatpush1.msra.mxu0 %v166
    %598 = vmatprep.subr.mxu0 0.0
    %599 = vmatpush2.msra.mxu0 0.0
    %600 = vmatprep.subr.mxu0 0.0
    %601 = vmatpush2.msra.mxu0 0.0
    %602 = vmatprep.subr.mxu0 0.0
    %603 = vmatpush2.msra.mxu0 0.0
    %604 = vmatprep.subr.mxu0 0.0
    %605 = vmatpush2.msra.mxu0 0.0
    %606 = vmatprep.subr.mxu0 0.0
    %607 = vmatpush2.msra.mxu0 0.0
    %608 = vmatprep.subr.mxu0 0.0
    %609 = vmatpush2.msra.mxu0 0.0
    %610 = vmatprep.subr.mxu0 0.0
    %611 = vmatpush2.msra.mxu0 0.0
    %612 = vmatprep.subr.mxu0 0.0
    %613 = vmatpush2.msra.mxu0 0.0
    %614 = vmatprep.subr.mxu0 0.0
    %615 = vmatpush2.msra.mxu0 0.0
    %616 = vmatprep.subr.mxu0 0.0
    %617 = vmatpush2.msra.mxu0 0.0
    %618 = vmatprep.subr.mxu0 0.0
    %619 = vmatpush2.msra.mxu0 0.0
    %620 = vmatprep.subr.mxu0 0.0
    %621 = vmatpush2.msra.mxu0 0.0
    %622 = vmatprep.subr.mxu0 0.0
    %623 = vmatpush2.msra.mxu0 0.0
    %624 = vmatprep.subr.mxu0 0.0
    %625 = vmatpush2.msra.mxu0 0.0
    %626 = vmatprep.subr.mxu0 0.0
    %627 = vmatpush2.msra.mxu0 0.0
    %628 = vmatprep.subr.mxu0 0.0
    %629 = vmatpush2.msra.mxu0 0.0
    %630 = vmatprep.mubr.f32.mxu0 0.0
    %631 = vmatmul.mubr.f32.gmra.mxu0 %v564
    %v632 = vpop.f32.mrf.mxu0
    %v633 = vadd.f32 0.0, %v632
    %v634 = vpop.f32.mrf.mxu0
    %635 = vdwg.mxu0
    %v637 = vrot.slane %v633, 2
    %v639 = vadd.f32 %v153, %v637
    %v640 = vtanh.pop %v639
    %v642 = vrot.slane %v561, 2
    %v643 = vsel %vm172, %v642, 0
    %645 = vmatprep.subr.mxu0 0.0
    %646 = vmatpush1.msra.mxu0 0.0
    %647 = vmatprep.subr.mxu0 0.0
    %648 = vmatpush1.msra.mxu0 0.0
    %649 = vmatprep.subr.mxu0 0.0
    %650 = vmatpush1.msra.mxu0 0.0
    %651 = vmatprep.subr.mxu0 0.0
    %652 = vmatpush1.msra.mxu0 0.0
    %653 = vmatprep.subr.mxu0 0.0
    %654 = vmatpush1.msra.mxu0 0.0
    %655 = vmatprep.subr.mxu0 0.0
    %656 = vmatpush1.msra.mxu0 0.0
    %657 = vmatprep.subr.mxu0 0.0
    %658 = vmatpush1.msra.mxu0 0.0
    %659 = vmatprep.subr.mxu0 0.0
    %660 = vmatpush1.msra.mxu0 0.0
    %661 = vmatprep.subr.mxu0 0.0
    %662 = vmatpush1.msra.mxu0 0.0
    %663 = vmatprep.subr.mxu0 0.0
    %664 = vmatpush1.msra.mxu0 0.0
    %665 = vmatprep.subr.mxu0 0.0
    %666 = vmatpush1.msra.mxu0 0.0
    %667 = vmatprep.subr.mxu0 0.0
    %668 = vmatpush1.msra.mxu0 0.0
    %669 = vmatprep.subr.mxu0 0.0
    %670 = vmatpush1.msra.mxu0 %v169
    %671 = vmatprep.subr.mxu0 0.0
    %672 = vmatpush1.msra.mxu0 %v168
    %673 = vmatprep.subr.mxu0 0.0
    %674 = vmatpush1.msra.mxu0 %v167
    %675 = vmatprep.subr.mxu0 0.0
    %676 = vmatpush1.msra.mxu0 %v166
    %677 = vmatprep.subr.mxu0 0.0
    %678 = vmatpush2.msra.mxu0 0.0
    %679 = vmatprep.subr.mxu0 0.0
    %680 = vmatpush2.msra.mxu0 0.0
    %681 = vmatprep.subr.mxu0 0.0
    %682 = vmatpush2.msra.mxu0 0.0
    %683 = vmatprep.subr.mxu0 0.0
    %684 = vmatpush2.msra.mxu0 0.0
    %685 = vmatprep.subr.mxu0 0.0
    %686 = vmatpush2.msra.mxu0 0.0
    %687 = vmatprep.subr.mxu0 0.0
    %688 = vmatpush2.msra.mxu0 0.0
    %689 = vmatprep.subr.mxu0 0.0
    %690 = vmatpush2.msra.mxu0 0.0
    %691 = vmatprep.subr.mxu0 0.0
    %692 = vmatpush2.msra.mxu0 0.0
    %693 = vmatprep.subr.mxu0 0.0
    %694 = vmatpush2.msra.mxu0 0.0
    %695 = vmatprep.subr.mxu0 0.0
    %696 = vmatpush2.msra.mxu0 0.0
    %697 = vmatprep.subr.mxu0 0.0
    %698 = vmatpush2.msra.mxu0 0.0
    %699 = vmatprep.subr.mxu0 0.0
    %700 = vmatpush2.msra.mxu0 0.0
    %701 = vmatprep.subr.mxu0 0.0
    %702 = vmatpush2.msra.mxu0 0.0
    %703 = vmatprep.subr.mxu0 0.0
    %704 = vmatpush2.msra.mxu0 0.0
    %705 = vmatprep.subr.mxu0 0.0
    %706 = vmatpush2.msra.mxu0 0.0
    %707 = vmatprep.subr.mxu0 0.0
    %708 = vmatpush2.msra.mxu0 0.0
    %709 = vmatprep.mubr.f32.mxu0 0.0
    %710 = vmatmul.mubr.f32.gmra.mxu0 %v643
    %v711 = vpop.f32.mrf.mxu0
    %v712 = vadd.f32 0.0, %v711
    %v713 = vpop.f32.mrf.mxu0
    %714 = vdwg.mxu0
    %v716 = vrot.slane %v712, 5
    %v718 = vadd.f32 %v143, %v716
    %v719 = vtanh.pop %v718
    %v721 = vrot.slane %v640, 6
    %v722 = vsel %vm172, %v721, 0
    %724 = vmatprep.subr.mxu0 0.0
    %725 = vmatpush1.msra.mxu0 0.0
    %726 = vmatprep.subr.mxu0 0.0
    %727 = vmatpush1.msra.mxu0 0.0
    %728 = vmatprep.subr.mxu0 0.0
    %729 = vmatpush1.msra.mxu0 0.0
    %730 = vmatprep.subr.mxu0 0.0
    %731 = vmatpush1.msra.mxu0 0.0
    %732 = vmatprep.subr.mxu0 0.0
    %733 = vmatpush1.msra.mxu0 0.0
    %734 = vmatprep.subr.mxu0 0.0
    %735 = vmatpush1.msra.mxu0 0.0
    %736 = vmatprep.subr.mxu0 0.0
    %737 = vmatpush1.msra.mxu0 0.0
    %738 = vmatprep.subr.mxu0 0.0
    %739 = vmatpush1.msra.mxu0 0.0
    %740 = vmatprep.subr.mxu0 0.0
    %741 = vmatpush1.msra.mxu0 0.0
    %742 = vmatprep.subr.mxu0 0.0
    %743 = vmatpush1.msra.mxu0 0.0
    %744 = vmatprep.subr.mxu0 0.0
    %745 = vmatpush1.msra.mxu0 0.0
    %746 = vmatprep.subr.mxu0 0.0
    %747 = vmatpush1.msra.mxu0 0.0
    %748 = vmatprep.subr.mxu0 0.0
    %749 = vmatpush1.msra.mxu0 %v169
    %750 = vmatprep.subr.mxu0 0.0
    %751 = vmatpush1.msra.mxu0 %v168
    %752 = vmatprep.subr.mxu0 0.0
    %753 = vmatpush1.msra.mxu0 %v167
    %754 = vmatprep.subr.mxu0 0.0
    %755 = vmatpush1.msra.mxu0 %v166
    %756 = vmatprep.subr.mxu0 0.0
    %757 = vmatpush2.msra.mxu0 0.0
    %758 = vmatprep.subr.mxu0 0.0
    %759 = vmatpush2.msra.mxu0 0.0
    %760 = vmatprep.subr.mxu0 0.0
    %761 = vmatpush2.msra.mxu0 0.0
    %762 = vmatprep.subr.mxu0 0.0
    %763 = vmatpush2.msra.mxu0 0.0
    %764 = vmatprep.subr.mxu0 0.0
    %765 = vmatpush2.msra.mxu0 0.0
    %766 = vmatprep.subr.mxu0 0.0
    %767 = vmatpush2.msra.mxu0 0.0
    %768 = vmatprep.subr.mxu0 0.0
    %769 = vmatpush2.msra.mxu0 0.0
    %770 = vmatprep.subr.mxu0 0.0
    %771 = vmatpush2.msra.mxu0 0.0
    %772 = vmatprep.subr.mxu0 0.0
    %773 = vmatpush2.msra.mxu0 0.0
    %774 = vmatprep.subr.mxu0 0.0
    %775 = vmatpush2.msra.mxu0 0.0
    %776 = vmatprep.subr.mxu0 0.0
    %777 = vmatpush2.msra.mxu0 0.0
    %778 = vmatprep.subr.mxu0 0.0
    %779 = vmatpush2.msra.mxu0 0.0
    %780 = vmatprep.subr.mxu0 0.0
    %781 = vmatpush2.msra.mxu0 0.0
    %782 = vmatprep.subr.mxu0 0.0
    %783 = vmatpush2.msra.mxu0 0.0
    %784 = vmatprep.subr.mxu0 0.0
    %785 = vmatpush2.msra.mxu0 0.0
    %786 = vmatprep.subr.mxu0 0.0
    %787 = vmatpush2.msra.mxu0 0.0
    %788 = vmatprep.mubr.f32.mxu0 0.0
    %789 = vmatmul.mubr.f32.gmra.mxu0 %v722
    %v790 = vpop.f32.mrf.mxu0
    %v791 = vadd.f32 0.0, %v790
    %v792 = vpop.f32.mrf.mxu0
    %793 = vdwg.mxu0
    %v795 = vrot.slane %v791, 1
    %v797 = vadd.f32 %v153, %v795
    %v798 = vtanh.pop %v797
    %v800 = vrot.slane %v719, 3
    %v801 = vsel %vm172, %v800, 0
    %803 = vmatprep.subr.mxu0 0.0
    %804 = vmatpush1.msra.mxu0 0.0
    %805 = vmatprep.subr.mxu0 0.0
    %806 = vmatpush1.msra.mxu0 0.0
    %807 = vmatprep.subr.mxu0 0.0
    %808 = vmatpush1.msra.mxu0 0.0
    %809 = vmatprep.subr.mxu0 0.0
    %810 = vmatpush1.msra.mxu0 0.0
    %811 = vmatprep.subr.mxu0 0.0
    %812 = vmatpush1.msra.mxu0 0.0
    %813 = vmatprep.subr.mxu0 0.0
    %814 = vmatpush1.msra.mxu0 0.0
    %815 = vmatprep.subr.mxu0 0.0
    %816 = vmatpush1.msra.mxu0 0.0
    %817 = vmatprep.subr.mxu0 0.0
    %818 = vmatpush1.msra.mxu0 0.0
    %819 = vmatprep.subr.mxu0 0.0
    %820 = vmatpush1.msra.mxu0 0.0
    %821 = vmatprep.subr.mxu0 0.0
    %822 = vmatpush1.msra.mxu0 0.0
    %823 = vmatprep.subr.mxu0 0.0
    %824 = vmatpush1.msra.mxu0 0.0
    %825 = vmatprep.subr.mxu0 0.0
    %826 = vmatpush1.msra.mxu0 0.0
    %827 = vmatprep.subr.mxu0 0.0
    %828 = vmatpush1.msra.mxu0 %v169
    %829 = vmatprep.subr.mxu0 0.0
    %830 = vmatpush1.msra.mxu0 %v168
    %831 = vmatprep.subr.mxu0 0.0
    %832 = vmatpush1.msra.mxu0 %v167
    %833 = vmatprep.subr.mxu0 0.0
    %834 = vmatpush1.msra.mxu0 %v166
    %835 = vmatprep.subr.mxu0 0.0
    %836 = vmatpush2.msra.mxu0 0.0
    %837 = vmatprep.subr.mxu0 0.0
    %838 = vmatpush2.msra.mxu0 0.0
    %839 = vmatprep.subr.mxu0 0.0
    %840 = vmatpush2.msra.mxu0 0.0
    %841 = vmatprep.subr.mxu0 0.0
    %842 = vmatpush2.msra.mxu0 0.0
    %843 = vmatprep.subr.mxu0 0.0
    %844 = vmatpush2.msra.mxu0 0.0
    %845 = vmatprep.subr.mxu0 0.0
    %846 = vmatpush2.msra.mxu0 0.0
    %847 = vmatprep.subr.mxu0 0.0
    %848 = vmatpush2.msra.mxu0 0.0
    %849 = vmatprep.subr.mxu0 0.0
    %850 = vmatpush2.msra.mxu0 0.0
    %851 = vmatprep.subr.mxu0 0.0
    %852 = vmatpush2.msra.mxu0 0.0
    %853 = vmatprep.subr.mxu0 0.0
    %854 = vmatpush2.msra.mxu0 0.0
    %855 = vmatprep.subr.mxu0 0.0
    %856 = vmatpush2.msra.mxu0 0.0
    %857 = vmatprep.subr.mxu0 0.0
    %858 = vmatpush2.msra.mxu0 0.0
    %859 = vmatprep.subr.mxu0 0.0
    %860 = vmatpush2.msra.mxu0 0.0
    %861 = vmatprep.subr.mxu0 0.0
    %862 = vmatpush2.msra.mxu0 0.0
    %863 = vmatprep.subr.mxu0 0.0
    %864 = vmatpush2.msra.mxu0 0.0
    %865 = vmatprep.subr.mxu0 0.0
    %866 = vmatpush2.msra.mxu0 0.0
    %867 = vmatprep.mubr.f32.mxu0 0.0
    %868 = vmatmul.mubr.f32.gmra.mxu0 %v801
    %v869 = vpop.f32.mrf.mxu0
    %v870 = vadd.f32 0.0, %v869
    %v871 = vpop.f32.mrf.mxu0
    %872 = vdwg.mxu0
    %v874 = vrot.slane %v870, 4
    %v876 = vadd.f32 %v143, %v874
    %v877 = vtanh.pop %v876
    %v879 = vrot.slane %v798, 7
    %v880 = vsel %vm172, %v879, 0
    %882 = vmatprep.subr.mxu0 0.0
    %883 = vmatpush1.msra.mxu0 0.0
    %884 = vmatprep.subr.mxu0 0.0
    %885 = vmatpush1.msra.mxu0 0.0
    %886 = vmatprep.subr.mxu0 0.0
    %887 = vmatpush1.msra.mxu0 0.0
    %888 = vmatprep.subr.mxu0 0.0
    %889 = vmatpush1.msra.mxu0 0.0
    %890 = vmatprep.subr.mxu0 0.0
    %891 = vmatpush1.msra.mxu0 0.0
    %892 = vmatprep.subr.mxu0 0.0
    %893 = vmatpush1.msra.mxu0 0.0
    %894 = vmatprep.subr.mxu0 0.0
    %895 = vmatpush1.msra.mxu0 0.0
    %896 = vmatprep.subr.mxu0 0.0
    %897 = vmatpush1.msra.mxu0 0.0
    %898 = vmatprep.subr.mxu0 0.0
    %899 = vmatpush1.msra.mxu0 0.0
    %900 = vmatprep.subr.mxu0 0.0
    %901 = vmatpush1.msra.mxu0 0.0
    %902 = vmatprep.subr.mxu0 0.0
    %903 = vmatpush1.msra.mxu0 0.0
    %904 = vmatprep.subr.mxu0 0.0
    %905 = vmatpush1.msra.mxu0 0.0
    %906 = vmatprep.subr.mxu0 0.0
    %907 = vmatpush1.msra.mxu0 %v169
    %908 = vmatprep.subr.mxu0 0.0
    %909 = vmatpush1.msra.mxu0 %v168
    %910 = vmatprep.subr.mxu0 0.0
    %911 = vmatpush1.msra.mxu0 %v167
    %912 = vmatprep.subr.mxu0 0.0
    %913 = vmatpush1.msra.mxu0 %v166
    %914 = vmatprep.subr.mxu0 0.0
    %915 = vmatpush2.msra.mxu0 0.0
    %916 = vmatprep.subr.mxu0 0.0
    %917 = vmatpush2.msra.mxu0 0.0
    %918 = vmatprep.subr.mxu0 0.0
    %919 = vmatpush2.msra.mxu0 0.0
    %920 = vmatprep.subr.mxu0 0.0
    %921 = vmatpush2.msra.mxu0 0.0
    %922 = vmatprep.subr.mxu0 0.0
    %923 = vmatpush2.msra.mxu0 0.0
    %924 = vmatprep.subr.mxu0 0.0
    %925 = vmatpush2.msra.mxu0 0.0
    %926 = vmatprep.subr.mxu0 0.0
    %927 = vmatpush2.msra.mxu0 0.0
    %928 = vmatprep.subr.mxu0 0.0
    %929 = vmatpush2.msra.mxu0 0.0
    %930 = vmatprep.subr.mxu0 0.0
    %931 = vmatpush2.msra.mxu0 0.0
    %932 = vmatprep.subr.mxu0 0.0
    %933 = vmatpush2.msra.mxu0 0.0
    %934 = vmatprep.subr.mxu0 0.0
    %935 = vmatpush2.msra.mxu0 0.0
    %936 = vmatprep.subr.mxu0 0.0
    %937 = vmatpush2.msra.mxu0 0.0
    %938 = vmatprep.subr.mxu0 0.0
    %939 = vmatpush2.msra.mxu0 0.0
    %940 = vmatprep.subr.mxu0 0.0
    %941 = vmatpush2.msra.mxu0 0.0
    %942 = vmatprep.subr.mxu0 0.0
    %943 = vmatpush2.msra.mxu0 0.0
    %944 = vmatprep.subr.mxu0 0.0
    %945 = vmatpush2.msra.mxu0 0.0
    %946 = vmatprep.mubr.f32.mxu0 0.0
    %947 = vmatmul.mubr.f32.gmra.mxu0 %v880
    %v948 = vpop.f32.mrf.mxu0
    %v949 = vadd.f32 0.0, %v948
    %v950 = vpop.f32.mrf.mxu0
    %951 = vdwg.mxu0
    %v952 = vadd.f32 %v158, %v949
    %v953 = vtanh.pop %v952
    %v955 = vrot.slane %v877, 4
    %v956 = vsel %vm172, %v955, 0
    %958 = vmatprep.subr.mxu0 0.0
    %959 = vmatpush1.msra.mxu0 0.0
    %960 = vmatprep.subr.mxu0 0.0
    %961 = vmatpush1.msra.mxu0 0.0
    %962 = vmatprep.subr.mxu0 0.0
    %963 = vmatpush1.msra.mxu0 0.0
    %964 = vmatprep.subr.mxu0 0.0
    %965 = vmatpush1.msra.mxu0 0.0
    %966 = vmatprep.subr.mxu0 0.0
    %967 = vmatpush1.msra.mxu0 0.0
    %968 = vmatprep.subr.mxu0 0.0
    %969 = vmatpush1.msra.mxu0 0.0
    %970 = vmatprep.subr.mxu0 0.0
    %971 = vmatpush1.msra.mxu0 0.0
    %972 = vmatprep.subr.mxu0 0.0
    %973 = vmatpush1.msra.mxu0 0.0
    %974 = vmatprep.subr.mxu0 0.0
    %975 = vmatpush1.msra.mxu0 0.0
    %976 = vmatprep.subr.mxu0 0.0
    %977 = vmatpush1.msra.mxu0 0.0
    %978 = vmatprep.subr.mxu0 0.0
    %979 = vmatpush1.msra.mxu0 0.0
    %980 = vmatprep.subr.mxu0 0.0
    %981 = vmatpush1.msra.mxu0 0.0
    %982 = vmatprep.subr.mxu0 0.0
    %983 = vmatpush1.msra.mxu0 %v169
    %984 = vmatprep.subr.mxu0 0.0
    %985 = vmatpush1.msra.mxu0 %v168
    %986 = vmatprep.subr.mxu0 0.0
    %987 = vmatpush1.msra.mxu0 %v167
    %988 = vmatprep.subr.mxu0 0.0
    %989 = vmatpush1.msra.mxu0 %v166
    %990 = vmatprep.subr.mxu0 0.0
    %991 = vmatpush2.msra.mxu0 0.0
    %992 = vmatprep.subr.mxu0 0.0
    %993 = vmatpush2.msra.mxu0 0.0
    %994 = vmatprep.subr.mxu0 0.0
    %995 = vmatpush2.msra.mxu0 0.0
    %996 = vmatprep.subr.mxu0 0.0
    %997 = vmatpush2.msra.mxu0 0.0
    %998 = vmatprep.subr.mxu0 0.0
    %999 = vmatpush2.msra.mxu0 0.0
    %1000 = vmatprep.subr.mxu0 0.0
    %1001 = vmatpush2.msra.mxu0 0.0
    %1002 = vmatprep.subr.mxu0 0.0
    %1003 = vmatpush2.msra.mxu0 0.0
    %1004 = vmatprep.subr.mxu0 0.0
    %1005 = vmatpush2.msra.mxu0 0.0
    %1006 = vmatprep.subr.mxu0 0.0
    %1007 = vmatpush2.msra.mxu0 0.0
    %1008 = vmatprep.subr.mxu0 0.0
    %1009 = vmatpush2.msra.mxu0 0.0
    %1010 = vmatprep.subr.mxu0 0.0
    %1011 = vmatpush2.msra.mxu0 0.0
    %1012 = vmatprep.subr.mxu0 0.0
    %1013 = vmatpush2.msra.mxu0 0.0
    %1014 = vmatprep.subr.mxu0 0.0
    %1015 = vmatpush2.msra.mxu0 0.0
    %1016 = vmatprep.subr.mxu0 0.0
    %1017 = vmatpush2.msra.mxu0 0.0
    %1018 = vmatprep.subr.mxu0 0.0
    %1019 = vmatpush2.msra.mxu0 0.0
    %1020 = vmatprep.subr.mxu0 0.0
    %1021 = vmatpush2.msra.mxu0 0.0
    %1022 = vmatprep.mubr.f32.mxu0 0.0
    %1023 = vmatmul.mubr.f32.gmra.mxu0 %v956
    %v1024 = vpop.f32.mrf.mxu0
    %v1025 = vadd.f32 0.0, %v1024
    %v1026 = vpop.f32.mrf.mxu0
    %1027 = vdwg.mxu0
    %v1029 = vrot.slane %v1025, 3
    %v1031 = vadd.f32 %v143, %v1029
    %v1032 = vtanh.pop %v1031
    %v1034 = vsel %vm172, %v953, 0
    %1036 = vmatprep.subr.mxu0 0.0
    %1037 = vmatpush1.msra.mxu0 0.0
    %1038 = vmatprep.subr.mxu0 0.0
    %1039 = vmatpush1.msra.mxu0 0.0
    %1040 = vmatprep.subr.mxu0 0.0
    %1041 = vmatpush1.msra.mxu0 0.0
    %1042 = vmatprep.subr.mxu0 0.0
    %1043 = vmatpush1.msra.mxu0 0.0
    %1044 = vmatprep.subr.mxu0 0.0
    %1045 = vmatpush1.msra.mxu0 0.0
    %1046 = vmatprep.subr.mxu0 0.0
    %1047 = vmatpush1.msra.mxu0 0.0
    %1048 = vmatprep.subr.mxu0 0.0
    %1049 = vmatpush1.msra.mxu0 0.0
    %1050 = vmatprep.subr.mxu0 0.0
    %1051 = vmatpush1.msra.mxu0 0.0
    %1052 = vmatprep.subr.mxu0 0.0
    %1053 = vmatpush1.msra.mxu0 0.0
    %1054 = vmatprep.subr.mxu0 0.0
    %1055 = vmatpush1.msra.mxu0 0.0
    %1056 = vmatprep.subr.mxu0 0.0
    %1057 = vmatpush1.msra.mxu0 0.0
    %1058 = vmatprep.subr.mxu0 0.0
    %1059 = vmatpush1.msra.mxu0 0.0
    %1060 = vmatprep.subr.mxu0 0.0
    %1061 = vmatpush1.msra.mxu0 %v169
    %1062 = vmatprep.subr.mxu0 0.0
    %1063 = vmatpush1.msra.mxu0 %v168
    %1064 = vmatprep.subr.mxu0 0.0
    %1065 = vmatpush1.msra.mxu0 %v167
    %1066 = vmatprep.subr.mxu0 0.0
    %1067 = vmatpush1.msra.mxu0 %v166
    %1068 = vmatprep.subr.mxu0 0.0
    %1069 = vmatpush2.msra.mxu0 0.0
    %1070 = vmatprep.subr.mxu0 0.0
    %1071 = vmatpush2.msra.mxu0 0.0
    %1072 = vmatprep.subr.mxu0 0.0
    %1073 = vmatpush2.msra.mxu0 0.0
    %1074 = vmatprep.subr.mxu0 0.0
    %1075 = vmatpush2.msra.mxu0 0.0
    %1076 = vmatprep.subr.mxu0 0.0
    %1077 = vmatpush2.msra.mxu0 0.0
    %1078 = vmatprep.subr.mxu0 0.0
    %1079 = vmatpush2.msra.mxu0 0.0
    %1080 = vmatprep.subr.mxu0 0.0
    %1081 = vmatpush2.msra.mxu0 0.0
    %1082 = vmatprep.subr.mxu0 0.0
    %1083 = vmatpush2.msra.mxu0 0.0
    %1084 = vmatprep.subr.mxu0 0.0
    %1085 = vmatpush2.msra.mxu0 0.0
    %1086 = vmatprep.subr.mxu0 0.0
    %1087 = vmatpush2.msra.mxu0 0.0
    %1088 = vmatprep.subr.mxu0 0.0
    %1089 = vmatpush2.msra.mxu0 0.0
    %1090 = vmatprep.subr.mxu0 0.0
    %1091 = vmatpush2.msra.mxu0 0.0
    %1092 = vmatprep.subr.mxu0 0.0
    %1093 = vmatpush2.msra.mxu0 0.0
    %1094 = vmatprep.subr.mxu0 0.0
    %1095 = vmatpush2.msra.mxu0 0.0
    %1096 = vmatprep.subr.mxu0 0.0
    %1097 = vmatpush2.msra.mxu0 0.0
    %1098 = vmatprep.subr.mxu0 0.0
    %1099 = vmatpush2.msra.mxu0 0.0
    %1100 = vmatprep.mubr.f32.mxu0 0.0
    %1101 = vmatmul.mubr.f32.gmra.mxu0 %v1034
    %v1102 = vpop.f32.mrf.mxu0
    %v1103 = vadd.f32 0.0, %v1102
    %v1104 = vpop.f32.mrf.mxu0
    %1105 = vdwg.mxu0
    %v1107 = vrot.slane %v1103, 7
    %v1109 = vadd.f32 %v158, %v1107
    %v1110 = vtanh.pop %v1109
    %v1112 = vrot.slane %v1032, 5
    %v1113 = vsel %vm172, %v1112, 0
    %1115 = vmatprep.subr.mxu0 0.0
    %1116 = vmatpush1.msra.mxu0 0.0
    %1117 = vmatprep.subr.mxu0 0.0
    %1118 = vmatpush1.msra.mxu0 0.0
    %1119 = vmatprep.subr.mxu0 0.0
    %1120 = vmatpush1.msra.mxu0 0.0
    %1121 = vmatprep.subr.mxu0 0.0
    %1122 = vmatpush1.msra.mxu0 0.0
    %1123 = vmatprep.subr.mxu0 0.0
    %1124 = vmatpush1.msra.mxu0 0.0
    %1125 = vmatprep.subr.mxu0 0.0
    %1126 = vmatpush1.msra.mxu0 0.0
    %1127 = vmatprep.subr.mxu0 0.0
    %1128 = vmatpush1.msra.mxu0 0.0
    %1129 = vmatprep.subr.mxu0 0.0
    %1130 = vmatpush1.msra.mxu0 0.0
    %1131 = vmatprep.subr.mxu0 0.0
    %1132 = vmatpush1.msra.mxu0 0.0
    %1133 = vmatprep.subr.mxu0 0.0
    %1134 = vmatpush1.msra.mxu0 0.0
    %1135 = vmatprep.subr.mxu0 0.0
    %1136 = vmatpush1.msra.mxu0 0.0
    %1137 = vmatprep.subr.mxu0 0.0
    %1138 = vmatpush1.msra.mxu0 0.0
    %1139 = vmatprep.subr.mxu0 0.0
    %1140 = vmatpush1.msra.mxu0 %v169
    %1141 = vmatprep.subr.mxu0 0.0
    %1142 = vmatpush1.msra.mxu0 %v168
    %1143 = vmatprep.subr.mxu0 0.0
    %1144 = vmatpush1.msra.mxu0 %v167
    %1145 = vmatprep.subr.mxu0 0.0
    %1146 = vmatpush1.msra.mxu0 %v166
    %1147 = vmatprep.subr.mxu0 0.0
    %1148 = vmatpush2.msra.mxu0 0.0
    %1149 = vmatprep.subr.mxu0 0.0
    %1150 = vmatpush2.msra.mxu0 0.0
    %1151 = vmatprep.subr.mxu0 0.0
    %1152 = vmatpush2.msra.mxu0 0.0
    %1153 = vmatprep.subr.mxu0 0.0
    %1154 = vmatpush2.msra.mxu0 0.0
    %1155 = vmatprep.subr.mxu0 0.0
    %1156 = vmatpush2.msra.mxu0 0.0
    %1157 = vmatprep.subr.mxu0 0.0
    %1158 = vmatpush2.msra.mxu0 0.0
    %1159 = vmatprep.subr.mxu0 0.0
    %1160 = vmatpush2.msra.mxu0 0.0
    %1161 = vmatprep.subr.mxu0 0.0
    %1162 = vmatpush2.msra.mxu0 0.0
    %1163 = vmatprep.subr.mxu0 0.0
    %1164 = vmatpush2.msra.mxu0 0.0
    %1165 = vmatprep.subr.mxu0 0.0
    %1166 = vmatpush2.msra.mxu0 0.0
    %1167 = vmatprep.subr.mxu0 0.0
    %1168 = vmatpush2.msra.mxu0 0.0
    %1169 = vmatprep.subr.mxu0 0.0
    %1170 = vmatpush2.msra.mxu0 0.0
    %1171 = vmatprep.subr.mxu0 0.0
    %1172 = vmatpush2.msra.mxu0 0.0
    %1173 = vmatprep.subr.mxu0 0.0
    %1174 = vmatpush2.msra.mxu0 0.0
    %1175 = vmatprep.subr.mxu0 0.0
    %1176 = vmatpush2.msra.mxu0 0.0
    %1177 = vmatprep.subr.mxu0 0.0
    %1178 = vmatpush2.msra.mxu0 0.0
    %1179 = vmatprep.mubr.f32.mxu0 0.0
    %1180 = vmatmul.mubr.f32.gmra.mxu0 %v1113
    %v1181 = vpop.f32.mrf.mxu0
    %v1182 = vadd.f32 0.0, %v1181
    %v1183 = vpop.f32.mrf.mxu0
    %1184 = vdwg.mxu0
    %v1186 = vrot.slane %v1182, 2
    %v1188 = vadd.f32 %v143, %v1186
    %v1189 = vtanh.pop %v1188
    %v1191 = vrot.slane %v1110, 1
    %v1192 = vsel %vm172, %v1191, 0
    %1194 = vmatprep.subr.mxu0 0.0
    %1195 = vmatpush1.msra.mxu0 0.0
    %1196 = vmatprep.subr.mxu0 0.0
    %1197 = vmatpush1.msra.mxu0 0.0
    %1198 = vmatprep.subr.mxu0 0.0
    %1199 = vmatpush1.msra.mxu0 0.0
    %1200 = vmatprep.subr.mxu0 0.0
    %1201 = vmatpush1.msra.mxu0 0.0
    %1202 = vmatprep.subr.mxu0 0.0
    %1203 = vmatpush1.msra.mxu0 0.0
    %1204 = vmatprep.subr.mxu0 0.0
    %1205 = vmatpush1.msra.mxu0 0.0
    %1206 = vmatprep.subr.mxu0 0.0
    %1207 = vmatpush1.msra.mxu0 0.0
    %1208 = vmatprep.subr.mxu0 0.0
    %1209 = vmatpush1.msra.mxu0 0.0
    %1210 = vmatprep.subr.mxu0 0.0
    %1211 = vmatpush1.msra.mxu0 0.0
    %1212 = vmatprep.subr.mxu0 0.0
    %1213 = vmatpush1.msra.mxu0 0.0
    %1214 = vmatprep.subr.mxu0 0.0
    %1215 = vmatpush1.msra.mxu0 0.0
    %1216 = vmatprep.subr.mxu0 0.0
    %1217 = vmatpush1.msra.mxu0 0.0
    %1218 = vmatprep.subr.mxu0 0.0
    %1219 = vmatpush1.msra.mxu0 %v169
    %1220 = vmatprep.subr.mxu0 0.0
    %1221 = vmatpush1.msra.mxu0 %v168
    %1222 = vmatprep.subr.mxu0 0.0
    %1223 = vmatpush1.msra.mxu0 %v167
    %1224 = vmatprep.subr.mxu0 0.0
    %1225 = vmatpush1.msra.mxu0 %v166
    %1226 = vmatprep.subr.mxu0 0.0
    %1227 = vmatpush2.msra.mxu0 0.0
    %1228 = vmatprep.subr.mxu0 0.0
    %1229 = vmatpush2.msra.mxu0 0.0
    %1230 = vmatprep.subr.mxu0 0.0
    %1231 = vmatpush2.msra.mxu0 0.0
    %1232 = vmatprep.subr.mxu0 0.0
    %1233 = vmatpush2.msra.mxu0 0.0
    %1234 = vmatprep.subr.mxu0 0.0
    %1235 = vmatpush2.msra.mxu0 0.0
    %1236 = vmatprep.subr.mxu0 0.0
    %1237 = vmatpush2.msra.mxu0 0.0
    %1238 = vmatprep.subr.mxu0 0.0
    %1239 = vmatpush2.msra.mxu0 0.0
    %1240 = vmatprep.subr.mxu0 0.0
    %1241 = vmatpush2.msra.mxu0 0.0
    %1242 = vmatprep.subr.mxu0 0.0
    %1243 = vmatpush2.msra.mxu0 0.0
    %1244 = vmatprep.subr.mxu0 0.0
    %1245 = vmatpush2.msra.mxu0 0.0
    %1246 = vmatprep.subr.mxu0 0.0
    %1247 = vmatpush2.msra.mxu0 0.0
    %1248 = vmatprep.subr.mxu0 0.0
    %1249 = vmatpush2.msra.mxu0 0.0
    %1250 = vmatprep.subr.mxu0 0.0
    %1251 = vmatpush2.msra.mxu0 0.0
    %1252 = vmatprep.subr.mxu0 0.0
    %1253 = vmatpush2.msra.mxu0 0.0
    %1254 = vmatprep.subr.mxu0 0.0
    %1255 = vmatpush2.msra.mxu0 0.0
    %1256 = vmatprep.subr.mxu0 0.0
    %1257 = vmatpush2.msra.mxu0 0.0
    %1258 = vmatprep.mubr.f32.mxu0 0.0
    %1259 = vmatmul.mubr.f32.gmra.mxu0 %v1192
    %v1260 = vpop.f32.mrf.mxu0
    %v1261 = vadd.f32 0.0, %v1260
    %v1262 = vpop.f32.mrf.mxu0
    %1263 = vdwg.mxu0
    %v1265 = vrot.slane %v1261, 6
    %v1267 = vadd.f32 %v158, %v1265
    %v1268 = vtanh.pop %v1267
    %v1270 = vrot.slane %v1189, 6
    %v1271 = vsel %vm172, %v1270, 0
    %1273 = vmatprep.subr.mxu0 0.0
    %1274 = vmatpush1.msra.mxu0 0.0
    %1275 = vmatprep.subr.mxu0 0.0
    %1276 = vmatpush1.msra.mxu0 0.0
    %1277 = vmatprep.subr.mxu0 0.0
    %1278 = vmatpush1.msra.mxu0 0.0
    %1279 = vmatprep.subr.mxu0 0.0
    %1280 = vmatpush1.msra.mxu0 0.0
    %1281 = vmatprep.subr.mxu0 0.0
    %1282 = vmatpush1.msra.mxu0 0.0
    %1283 = vmatprep.subr.mxu0 0.0
    %1284 = vmatpush1.msra.mxu0 0.0
    %1285 = vmatprep.subr.mxu0 0.0
    %1286 = vmatpush1.msra.mxu0 0.0
    %1287 = vmatprep.subr.mxu0 0.0
    %1288 = vmatpush1.msra.mxu0 0.0
    %1289 = vmatprep.subr.mxu0 0.0
    %1290 = vmatpush1.msra.mxu0 0.0
    %1291 = vmatprep.subr.mxu0 0.0
    %1292 = vmatpush1.msra.mxu0 0.0
    %1293 = vmatprep.subr.mxu0 0.0
    %1294 = vmatpush1.msra.mxu0 0.0
    %1295 = vmatprep.subr.mxu0 0.0
    %1296 = vmatpush1.msra.mxu0 0.0
    %1297 = vmatprep.subr.mxu0 0.0
    %1298 = vmatpush1.msra.mxu0 %v169
    %1299 = vmatprep.subr.mxu0 0.0
    %1300 = vmatpush1.msra.mxu0 %v168
    %1301 = vmatprep.subr.mxu0 0.0
    %1302 = vmatpush1.msra.mxu0 %v167
    %1303 = vmatprep.subr.mxu0 0.0
    %1304 = vmatpush1.msra.mxu0 %v166
    %1305 = vmatprep.subr.mxu0 0.0
    %1306 = vmatpush2.msra.mxu0 0.0
    %1307 = vmatprep.subr.mxu0 0.0
    %1308 = vmatpush2.msra.mxu0 0.0
    %1309 = vmatprep.subr.mxu0 0.0
    %1310 = vmatpush2.msra.mxu0 0.0
    %1311 = vmatprep.subr.mxu0 0.0
    %1312 = vmatpush2.msra.mxu0 0.0
    %1313 = vmatprep.subr.mxu0 0.0
    %1314 = vmatpush2.msra.mxu0 0.0
    %1315 = vmatprep.subr.mxu0 0.0
    %1316 = vmatpush2.msra.mxu0 0.0
    %1317 = vmatprep.subr.mxu0 0.0
    %1318 = vmatpush2.msra.mxu0 0.0
    %1319 = vmatprep.subr.mxu0 0.0
    %1320 = vmatpush2.msra.mxu0 0.0
    %1321 = vmatprep.subr.mxu0 0.0
    %1322 = vmatpush2.msra.mxu0 0.0
    %1323 = vmatprep.subr.mxu0 0.0
    %1324 = vmatpush2.msra.mxu0 0.0
    %1325 = vmatprep.subr.mxu0 0.0
    %1326 = vmatpush2.msra.mxu0 0.0
    %1327 = vmatprep.subr.mxu0 0.0
    %1328 = vmatpush2.msra.mxu0 0.0
    %1329 = vmatprep.subr.mxu0 0.0
    %1330 = vmatpush2.msra.mxu0 0.0
    %1331 = vmatprep.subr.mxu0 0.0
    %1332 = vmatpush2.msra.mxu0 0.0
    %1333 = vmatprep.subr.mxu0 0.0
    %1334 = vmatpush2.msra.mxu0 0.0
    %1335 = vmatprep.subr.mxu0 0.0
    %1336 = vmatpush2.msra.mxu0 0.0
    %1337 = vmatprep.mubr.f32.mxu0 0.0
    %1338 = vmatmul.mubr.f32.gmra.mxu0 %v1271
    %v1339 = vpop.f32.mrf.mxu0
    %v1340 = vadd.f32 0.0, %v1339
    %v1341 = vpop.f32.mrf.mxu0
    %1342 = vdwg.mxu0
    %v1344 = vrot.slane %v1340, 1
    %v1346 = vadd.f32 %v143, %v1344
    %v1347 = vtanh.pop %v1346
    %v1349 = vrot.slane %v1268, 2
    %v1350 = vsel %vm172, %v1349, 0
    %1352 = vmatprep.subr.mxu0 0.0
    %1353 = vmatpush1.msra.mxu0 0.0
    %1354 = vmatprep.subr.mxu0 0.0
    %1355 = vmatpush1.msra.mxu0 0.0
    %1356 = vmatprep.subr.mxu0 0.0
    %1357 = vmatpush1.msra.mxu0 0.0
    %1358 = vmatprep.subr.mxu0 0.0
    %1359 = vmatpush1.msra.mxu0 0.0
    %1360 = vmatprep.subr.mxu0 0.0
    %1361 = vmatpush1.msra.mxu0 0.0
    %1362 = vmatprep.subr.mxu0 0.0
    %1363 = vmatpush1.msra.mxu0 0.0
    %1364 = vmatprep.subr.mxu0 0.0
    %1365 = vmatpush1.msra.mxu0 0.0
    %1366 = vmatprep.subr.mxu0 0.0
    %1367 = vmatpush1.msra.mxu0 0.0
    %1368 = vmatprep.subr.mxu0 0.0
    %1369 = vmatpush1.msra.mxu0 0.0
    %1370 = vmatprep.subr.mxu0 0.0
    %1371 = vmatpush1.msra.mxu0 0.0
    %1372 = vmatprep.subr.mxu0 0.0
    %1373 = vmatpush1.msra.mxu0 0.0
    %1374 = vmatprep.subr.mxu0 0.0
    %1375 = vmatpush1.msra.mxu0 0.0
    %1376 = vmatprep.subr.mxu0 0.0
    %1377 = vmatpush1.msra.mxu0 %v169
    %1378 = vmatprep.subr.mxu0 0.0
    %1379 = vmatpush1.msra.mxu0 %v168
    %1380 = vmatprep.subr.mxu0 0.0
    %1381 = vmatpush1.msra.mxu0 %v167
    %1382 = vmatprep.subr.mxu0 0.0
    %1383 = vmatpush1.msra.mxu0 %v166
    %1384 = vmatprep.subr.mxu0 0.0
    %1385 = vmatpush2.msra.mxu0 0.0
    %1386 = vmatprep.subr.mxu0 0.0
    %1387 = vmatpush2.msra.mxu0 0.0
    %1388 = vmatprep.subr.mxu0 0.0
    %1389 = vmatpush2.msra.mxu0 0.0
    %1390 = vmatprep.subr.mxu0 0.0
    %1391 = vmatpush2.msra.mxu0 0.0
    %1392 = vmatprep.subr.mxu0 0.0
    %1393 = vmatpush2.msra.mxu0 0.0
    %1394 = vmatprep.subr.mxu0 0.0
    %1395 = vmatpush2.msra.mxu0 0.0
    %1396 = vmatprep.subr.mxu0 0.0
    %1397 = vmatpush2.msra.mxu0 0.0
    %1398 = vmatprep.subr.mxu0 0.0
    %1399 = vmatpush2.msra.mxu0 0.0
    %1400 = vmatprep.subr.mxu0 0.0
    %1401 = vmatpush2.msra.mxu0 0.0
    %1402 = vmatprep.subr.mxu0 0.0
    %1403 = vmatpush2.msra.mxu0 0.0
    %1404 = vmatprep.subr.mxu0 0.0
    %1405 = vmatpush2.msra.mxu0 0.0
    %1406 = vmatprep.subr.mxu0 0.0
    %1407 = vmatpush2.msra.mxu0 0.0
    %1408 = vmatprep.subr.mxu0 0.0
    %1409 = vmatpush2.msra.mxu0 0.0
    %1410 = vmatprep.subr.mxu0 0.0
    %1411 = vmatpush2.msra.mxu0 0.0
    %1412 = vmatprep.subr.mxu0 0.0
    %1413 = vmatpush2.msra.mxu0 0.0
    %1414 = vmatprep.subr.mxu0 0.0
    %1415 = vmatpush2.msra.mxu0 0.0
    %1416 = vmatprep.mubr.f32.mxu0 0.0
    %1417 = vmatmul.mubr.f32.gmra.mxu0 %v1350
    %v1418 = vpop.f32.mrf.mxu0
    %v1419 = vadd.f32 0.0, %v1418
    %v1420 = vpop.f32.mrf.mxu0
    %1421 = vdwg.mxu0
    %v1423 = vrot.slane %v1419, 5
    %v1425 = vadd.f32 %v158, %v1423
    %v1426 = vtanh.pop %v1425
    %v1428 = vrot.slane %v1347, 7
    %v1429 = vsel %vm172, %v1428, 0
    %1431 = vmatprep.subr.mxu0 0.0
    %1432 = vmatpush1.msra.mxu0 0.0
    %1433 = vmatprep.subr.mxu0 0.0
    %1434 = vmatpush1.msra.mxu0 0.0
    %1435 = vmatprep.subr.mxu0 0.0
    %1436 = vmatpush1.msra.mxu0 0.0
    %1437 = vmatprep.subr.mxu0 0.0
    %1438 = vmatpush1.msra.mxu0 0.0
    %1439 = vmatprep.subr.mxu0 0.0
    %1440 = vmatpush1.msra.mxu0 0.0
    %1441 = vmatprep.subr.mxu0 0.0
    %1442 = vmatpush1.msra.mxu0 0.0
    %1443 = vmatprep.subr.mxu0 0.0
    %1444 = vmatpush1.msra.mxu0 0.0
    %1445 = vmatprep.subr.mxu0 0.0
    %1446 = vmatpush1.msra.mxu0 0.0
    %1447 = vmatprep.subr.mxu0 0.0
    %1448 = vmatpush1.msra.mxu0 0.0
    %1449 = vmatprep.subr.mxu0 0.0
    %1450 = vmatpush1.msra.mxu0 0.0
    %1451 = vmatprep.subr.mxu0 0.0
    %1452 = vmatpush1.msra.mxu0 0.0
    %1453 = vmatprep.subr.mxu0 0.0
    %1454 = vmatpush1.msra.mxu0 0.0
    %1455 = vmatprep.subr.mxu0 0.0
    %1456 = vmatpush1.msra.mxu0 %v169
    %1457 = vmatprep.subr.mxu0 0.0
    %1458 = vmatpush1.msra.mxu0 %v168
    %1459 = vmatprep.subr.mxu0 0.0
    %1460 = vmatpush1.msra.mxu0 %v167
    %1461 = vmatprep.subr.mxu0 0.0
    %1462 = vmatpush1.msra.mxu0 %v166
    %1463 = vmatprep.subr.mxu0 0.0
    %1464 = vmatpush2.msra.mxu0 0.0
    %1465 = vmatprep.subr.mxu0 0.0
    %1466 = vmatpush2.msra.mxu0 0.0
    %1467 = vmatprep.subr.mxu0 0.0
    %1468 = vmatpush2.msra.mxu0 0.0
    %1469 = vmatprep.subr.mxu0 0.0
    %1470 = vmatpush2.msra.mxu0 0.0
    %1471 = vmatprep.subr.mxu0 0.0
    %1472 = vmatpush2.msra.mxu0 0.0
    %1473 = vmatprep.subr.mxu0 0.0
    %1474 = vmatpush2.msra.mxu0 0.0
    %1475 = vmatprep.subr.mxu0 0.0
    %1476 = vmatpush2.msra.mxu0 0.0
    %1477 = vmatprep.subr.mxu0 0.0
    %1478 = vmatpush2.msra.mxu0 0.0
    %1479 = vmatprep.subr.mxu0 0.0
    %1480 = vmatpush2.msra.mxu0 0.0
    %1481 = vmatprep.subr.mxu0 0.0
    %1482 = vmatpush2.msra.mxu0 0.0
    %1483 = vmatprep.subr.mxu0 0.0
    %1484 = vmatpush2.msra.mxu0 0.0
    %1485 = vmatprep.subr.mxu0 0.0
    %1486 = vmatpush2.msra.mxu0 0.0
    %1487 = vmatprep.subr.mxu0 0.0
    %1488 = vmatpush2.msra.mxu0 0.0
    %1489 = vmatprep.subr.mxu0 0.0
    %1490 = vmatpush2.msra.mxu0 0.0
    %1491 = vmatprep.subr.mxu0 0.0
    %1492 = vmatpush2.msra.mxu0 0.0
    %1493 = vmatprep.subr.mxu0 0.0
    %1494 = vmatpush2.msra.mxu0 0.0
    %1495 = vmatprep.mubr.f32.mxu0 0.0
    %1496 = vmatmul.mubr.f32.gmra.mxu0 %v1429
    %v1497 = vpop.f32.mrf.mxu0
    %v1498 = vadd.f32 0.0, %v1497
    %v1499 = vpop.f32.mrf.mxu0
    %1500 = vdwg.mxu0
    %v1501 = vadd.f32 %v148, %v1498
    %v1502 = vtanh.pop %v1501
    %v1504 = vrot.slane %v1426, 3
    %v1505 = vsel %vm172, %v1504, 0
    %1507 = vmatprep.subr.mxu0 0.0
    %1508 = vmatpush1.msra.mxu0 0.0
    %1509 = vmatprep.subr.mxu0 0.0
    %1510 = vmatpush1.msra.mxu0 0.0
    %1511 = vmatprep.subr.mxu0 0.0
    %1512 = vmatpush1.msra.mxu0 0.0
    %1513 = vmatprep.subr.mxu0 0.0
    %1514 = vmatpush1.msra.mxu0 0.0
    %1515 = vmatprep.subr.mxu0 0.0
    %1516 = vmatpush1.msra.mxu0 0.0
    %1517 = vmatprep.subr.mxu0 0.0
    %1518 = vmatpush1.msra.mxu0 0.0
    %1519 = vmatprep.subr.mxu0 0.0
    %1520 = vmatpush1.msra.mxu0 0.0
    %1521 = vmatprep.subr.mxu0 0.0
    %1522 = vmatpush1.msra.mxu0 0.0
    %1523 = vmatprep.subr.mxu0 0.0
    %1524 = vmatpush1.msra.mxu0 0.0
    %1525 = vmatprep.subr.mxu0 0.0
    %1526 = vmatpush1.msra.mxu0 0.0
    %1527 = vmatprep.subr.mxu0 0.0
    %1528 = vmatpush1.msra.mxu0 0.0
    %1529 = vmatprep.subr.mxu0 0.0
    %1530 = vmatpush1.msra.mxu0 0.0
    %1531 = vmatprep.subr.mxu0 0.0
    %1532 = vmatpush1.msra.mxu0 %v169
    %1533 = vmatprep.subr.mxu0 0.0
    %1534 = vmatpush1.msra.mxu0 %v168
    %1535 = vmatprep.subr.mxu0 0.0
    %1536 = vmatpush1.msra.mxu0 %v167
    %1537 = vmatprep.subr.mxu0 0.0
    %1538 = vmatpush1.msra.mxu0 %v166
    %1539 = vmatprep.subr.mxu0 0.0
    %1540 = vmatpush2.msra.mxu0 0.0
    %1541 = vmatprep.subr.mxu0 0.0
    %1542 = vmatpush2.msra.mxu0 0.0
    %1543 = vmatprep.subr.mxu0 0.0
    %1544 = vmatpush2.msra.mxu0 0.0
    %1545 = vmatprep.subr.mxu0 0.0
    %1546 = vmatpush2.msra.mxu0 0.0
    %1547 = vmatprep.subr.mxu0 0.0
    %1548 = vmatpush2.msra.mxu0 0.0
    %1549 = vmatprep.subr.mxu0 0.0
    %1550 = vmatpush2.msra.mxu0 0.0
    %1551 = vmatprep.subr.mxu0 0.0
    %1552 = vmatpush2.msra.mxu0 0.0
    %1553 = vmatprep.subr.mxu0 0.0
    %1554 = vmatpush2.msra.mxu0 0.0
    %1555 = vmatprep.subr.mxu0 0.0
    %1556 = vmatpush2.msra.mxu0 0.0
    %1557 = vmatprep.subr.mxu0 0.0
    %1558 = vmatpush2.msra.mxu0 0.0
    %1559 = vmatprep.subr.mxu0 0.0
    %1560 = vmatpush2.msra.mxu0 0.0
    %1561 = vmatprep.subr.mxu0 0.0
    %1562 = vmatpush2.msra.mxu0 0.0
    %1563 = vmatprep.subr.mxu0 0.0
    %1564 = vmatpush2.msra.mxu0 0.0
    %1565 = vmatprep.subr.mxu0 0.0
    %1566 = vmatpush2.msra.mxu0 0.0
    %1567 = vmatprep.subr.mxu0 0.0
    %1568 = vmatpush2.msra.mxu0 0.0
    %1569 = vmatprep.subr.mxu0 0.0
    %1570 = vmatpush2.msra.mxu0 0.0
    %1571 = vmatprep.mubr.f32.mxu0 0.0
    %1572 = vmatmul.mubr.f32.gmra.mxu0 %v1505
    %v1573 = vpop.f32.mrf.mxu0
    %v1574 = vadd.f32 0.0, %v1573
    %v1575 = vpop.f32.mrf.mxu0
    %1576 = vdwg.mxu0
    %v1578 = vrot.slane %v1574, 4
    %v1580 = vadd.f32 %v158, %v1578
    %v1581 = vtanh.pop %v1580
    %v1583 = vsel %vm172, %v1502, 0
    %1585 = vmatprep.subr.mxu0 0.0
    %1586 = vmatpush1.msra.mxu0 0.0
    %1587 = vmatprep.subr.mxu0 0.0
    %1588 = vmatpush1.msra.mxu0 0.0
    %1589 = vmatprep.subr.mxu0 0.0
    %1590 = vmatpush1.msra.mxu0 0.0
    %1591 = vmatprep.subr.mxu0 0.0
    %1592 = vmatpush1.msra.mxu0 0.0
    %1593 = vmatprep.subr.mxu0 0.0
    %1594 = vmatpush1.msra.mxu0 0.0
    %1595 = vmatprep.subr.mxu0 0.0
    %1596 = vmatpush1.msra.mxu0 0.0
    %1597 = vmatprep.subr.mxu0 0.0
    %1598 = vmatpush1.msra.mxu0 0.0
    %1599 = vmatprep.subr.mxu0 0.0
    %1600 = vmatpush1.msra.mxu0 0.0
    %1601 = vmatprep.subr.mxu0 0.0
    %1602 = vmatpush1.msra.mxu0 0.0
    %1603 = vmatprep.subr.mxu0 0.0
    %1604 = vmatpush1.msra.mxu0 0.0
    %1605 = vmatprep.subr.mxu0 0.0
    %1606 = vmatpush1.msra.mxu0 0.0
    %1607 = vmatprep.subr.mxu0 0.0
    %1608 = vmatpush1.msra.mxu0 0.0
    %1609 = vmatprep.subr.mxu0 0.0
    %1610 = vmatpush1.msra.mxu0 %v169
    %1611 = vmatprep.subr.mxu0 0.0
    %1612 = vmatpush1.msra.mxu0 %v168
    %1613 = vmatprep.subr.mxu0 0.0
    %1614 = vmatpush1.msra.mxu0 %v167
    %1615 = vmatprep.subr.mxu0 0.0
    %1616 = vmatpush1.msra.mxu0 %v166
    %1617 = vmatprep.subr.mxu0 0.0
    %1618 = vmatpush2.msra.mxu0 0.0
    %1619 = vmatprep.subr.mxu0 0.0
    %1620 = vmatpush2.msra.mxu0 0.0
    %1621 = vmatprep.subr.mxu0 0.0
    %1622 = vmatpush2.msra.mxu0 0.0
    %1623 = vmatprep.subr.mxu0 0.0
    %1624 = vmatpush2.msra.mxu0 0.0
    %1625 = vmatprep.subr.mxu0 0.0
    %1626 = vmatpush2.msra.mxu0 0.0
    %1627 = vmatprep.subr.mxu0 0.0
    %1628 = vmatpush2.msra.mxu0 0.0
    %1629 = vmatprep.subr.mxu0 0.0
    %1630 = vmatpush2.msra.mxu0 0.0
    %1631 = vmatprep.subr.mxu0 0.0
    %1632 = vmatpush2.msra.mxu0 0.0
    %1633 = vmatprep.subr.mxu0 0.0
    %1634 = vmatpush2.msra.mxu0 0.0
    %1635 = vmatprep.subr.mxu0 0.0
    %1636 = vmatpush2.msra.mxu0 0.0
    %1637 = vmatprep.subr.mxu0 0.0
    %1638 = vmatpush2.msra.mxu0 0.0
    %1639 = vmatprep.subr.mxu0 0.0
    %1640 = vmatpush2.msra.mxu0 0.0
    %1641 = vmatprep.subr.mxu0 0.0
    %1642 = vmatpush2.msra.mxu0 0.0
    %1643 = vmatprep.subr.mxu0 0.0
    %1644 = vmatpush2.msra.mxu0 0.0
    %1645 = vmatprep.subr.mxu0 0.0
    %1646 = vmatpush2.msra.mxu0 0.0
    %1647 = vmatprep.subr.mxu0 0.0
    %1648 = vmatpush2.msra.mxu0 0.0
    %1649 = vmatprep.mubr.f32.mxu0 0.0
    %1650 = vmatmul.mubr.f32.gmra.mxu0 %v1583
    %v1651 = vpop.f32.mrf.mxu0
    %v1652 = vadd.f32 0.0, %v1651
    %v1653 = vpop.f32.mrf.mxu0
    %1654 = vdwg.mxu0
    %v1656 = vrot.slane %v1652, 7
    %v1658 = vadd.f32 %v148, %v1656
    %v1659 = vtanh.pop %v1658
    %v1661 = vrot.slane %v1581, 4
    %v1662 = vsel %vm172, %v1661, 0
    %1664 = vmatprep.subr.mxu0 0.0
    %1665 = vmatpush1.msra.mxu0 0.0
    %1666 = vmatprep.subr.mxu0 0.0
    %1667 = vmatpush1.msra.mxu0 0.0
    %1668 = vmatprep.subr.mxu0 0.0
    %1669 = vmatpush1.msra.mxu0 0.0
    %1670 = vmatprep.subr.mxu0 0.0
    %1671 = vmatpush1.msra.mxu0 0.0
    %1672 = vmatprep.subr.mxu0 0.0
    %1673 = vmatpush1.msra.mxu0 0.0
    %1674 = vmatprep.subr.mxu0 0.0
    %1675 = vmatpush1.msra.mxu0 0.0
    %1676 = vmatprep.subr.mxu0 0.0
    %1677 = vmatpush1.msra.mxu0 0.0
    %1678 = vmatprep.subr.mxu0 0.0
    %1679 = vmatpush1.msra.mxu0 0.0
    %1680 = vmatprep.subr.mxu0 0.0
    %1681 = vmatpush1.msra.mxu0 0.0
    %1682 = vmatprep.subr.mxu0 0.0
    %1683 = vmatpush1.msra.mxu0 0.0
    %1684 = vmatprep.subr.mxu0 0.0
    %1685 = vmatpush1.msra.mxu0 0.0
    %1686 = vmatprep.subr.mxu0 0.0
    %1687 = vmatpush1.msra.mxu0 0.0
    %1688 = vmatprep.subr.mxu0 0.0
    %1689 = vmatpush1.msra.mxu0 %v169
    %1690 = vmatprep.subr.mxu0 0.0
    %1691 = vmatpush1.msra.mxu0 %v168
    %1692 = vmatprep.subr.mxu0 0.0
    %1693 = vmatpush1.msra.mxu0 %v167
    %1694 = vmatprep.subr.mxu0 0.0
    %1695 = vmatpush1.msra.mxu0 %v166
    %1696 = vmatprep.subr.mxu0 0.0
    %1697 = vmatpush2.msra.mxu0 0.0
    %1698 = vmatprep.subr.mxu0 0.0
    %1699 = vmatpush2.msra.mxu0 0.0
    %1700 = vmatprep.subr.mxu0 0.0
    %1701 = vmatpush2.msra.mxu0 0.0
    %1702 = vmatprep.subr.mxu0 0.0
    %1703 = vmatpush2.msra.mxu0 0.0
    %1704 = vmatprep.subr.mxu0 0.0
    %1705 = vmatpush2.msra.mxu0 0.0
    %1706 = vmatprep.subr.mxu0 0.0
    %1707 = vmatpush2.msra.mxu0 0.0
    %1708 = vmatprep.subr.mxu0 0.0
    %1709 = vmatpush2.msra.mxu0 0.0
    %1710 = vmatprep.subr.mxu0 0.0
    %1711 = vmatpush2.msra.mxu0 0.0
    %1712 = vmatprep.subr.mxu0 0.0
    %1713 = vmatpush2.msra.mxu0 0.0
    %1714 = vmatprep.subr.mxu0 0.0
    %1715 = vmatpush2.msra.mxu0 0.0
    %1716 = vmatprep.subr.mxu0 0.0
    %1717 = vmatpush2.msra.mxu0 0.0
    %1718 = vmatprep.subr.mxu0 0.0
    %1719 = vmatpush2.msra.mxu0 0.0
    %1720 = vmatprep.subr.mxu0 0.0
    %1721 = vmatpush2.msra.mxu0 0.0
    %1722 = vmatprep.subr.mxu0 0.0
    %1723 = vmatpush2.msra.mxu0 0.0
    %1724 = vmatprep.subr.mxu0 0.0
    %1725 = vmatpush2.msra.mxu0 0.0
    %1726 = vmatprep.subr.mxu0 0.0
    %1727 = vmatpush2.msra.mxu0 0.0
    %1728 = vmatprep.mubr.f32.mxu0 0.0
    %1729 = vmatmul.mubr.f32.gmra.mxu0 %v1662
    %v1730 = vpop.f32.mrf.mxu0
    %v1731 = vadd.f32 0.0, %v1730
    %v1732 = vpop.f32.mrf.mxu0
    %1733 = vdwg.mxu0
    %v1735 = vrot.slane %v1731, 3
    %v1737 = vadd.f32 %v158, %v1735
    %v1738 = vtanh.pop %v1737
    %v1740 = vrot.slane %v1659, 1
    %v1741 = vsel %vm172, %v1740, 0
    %1743 = vmatprep.subr.mxu0 0.0
    %1744 = vmatpush1.msra.mxu0 0.0
    %1745 = vmatprep.subr.mxu0 0.0
    %1746 = vmatpush1.msra.mxu0 0.0
    %1747 = vmatprep.subr.mxu0 0.0
    %1748 = vmatpush1.msra.mxu0 0.0
    %1749 = vmatprep.subr.mxu0 0.0
    %1750 = vmatpush1.msra.mxu0 0.0
    %1751 = vmatprep.subr.mxu0 0.0
    %1752 = vmatpush1.msra.mxu0 0.0
    %1753 = vmatprep.subr.mxu0 0.0
    %1754 = vmatpush1.msra.mxu0 0.0
    %1755 = vmatprep.subr.mxu0 0.0
    %1756 = vmatpush1.msra.mxu0 0.0
    %1757 = vmatprep.subr.mxu0 0.0
    %1758 = vmatpush1.msra.mxu0 0.0
    %1759 = vmatprep.subr.mxu0 0.0
    %1760 = vmatpush1.msra.mxu0 0.0
    %1761 = vmatprep.subr.mxu0 0.0
    %1762 = vmatpush1.msra.mxu0 0.0
    %1763 = vmatprep.subr.mxu0 0.0
    %1764 = vmatpush1.msra.mxu0 0.0
    %1765 = vmatprep.subr.mxu0 0.0
    %1766 = vmatpush1.msra.mxu0 0.0
    %1767 = vmatprep.subr.mxu0 0.0
    %1768 = vmatpush1.msra.mxu0 %v169
    %1769 = vmatprep.subr.mxu0 0.0
    %1770 = vmatpush1.msra.mxu0 %v168
    %1771 = vmatprep.subr.mxu0 0.0
    %1772 = vmatpush1.msra.mxu0 %v167
    %1773 = vmatprep.subr.mxu0 0.0
    %1774 = vmatpush1.msra.mxu0 %v166
    %1775 = vmatprep.subr.mxu0 0.0
    %1776 = vmatpush2.msra.mxu0 0.0
    %1777 = vmatprep.subr.mxu0 0.0
    %1778 = vmatpush2.msra.mxu0 0.0
    %1779 = vmatprep.subr.mxu0 0.0
    %1780 = vmatpush2.msra.mxu0 0.0
    %1781 = vmatprep.subr.mxu0 0.0
    %1782 = vmatpush2.msra.mxu0 0.0
    %1783 = vmatprep.subr.mxu0 0.0
    %1784 = vmatpush2.msra.mxu0 0.0
    %1785 = vmatprep.subr.mxu0 0.0
    %1786 = vmatpush2.msra.mxu0 0.0
    %1787 = vmatprep.subr.mxu0 0.0
    %1788 = vmatpush2.msra.mxu0 0.0
    %1789 = vmatprep.subr.mxu0 0.0
    %1790 = vmatpush2.msra.mxu0 0.0
    %1791 = vmatprep.subr.mxu0 0.0
    %1792 = vmatpush2.msra.mxu0 0.0
    %1793 = vmatprep.subr.mxu0 0.0
    %1794 = vmatpush2.msra.mxu0 0.0
    %1795 = vmatprep.subr.mxu0 0.0
    %1796 = vmatpush2.msra.mxu0 0.0
    %1797 = vmatprep.subr.mxu0 0.0
    %1798 = vmatpush2.msra.mxu0 0.0
    %1799 = vmatprep.subr.mxu0 0.0
    %1800 = vmatpush2.msra.mxu0 0.0
    %1801 = vmatprep.subr.mxu0 0.0
    %1802 = vmatpush2.msra.mxu0 0.0
    %1803 = vmatprep.subr.mxu0 0.0
    %1804 = vmatpush2.msra.mxu0 0.0
    %1805 = vmatprep.subr.mxu0 0.0
    %1806 = vmatpush2.msra.mxu0 0.0
    %1807 = vmatprep.mubr.f32.mxu0 0.0
    %1808 = vmatmul.mubr.f32.gmra.mxu0 %v1741
    %v1809 = vpop.f32.mrf.mxu0
    %v1810 = vadd.f32 0.0, %v1809
    %v1811 = vpop.f32.mrf.mxu0
    %1812 = vdwg.mxu0
    %v1814 = vrot.slane %v1810, 6
    %v1816 = vadd.f32 %v148, %v1814
    %v1817 = vtanh.pop %v1816
    %v1819 = vrot.slane %v1738, 5
    %v1820 = vsel %vm172, %v1819, 0
    %1822 = vmatprep.subr.mxu0 0.0
    %1823 = vmatpush1.msra.mxu0 0.0
    %1824 = vmatprep.subr.mxu0 0.0
    %1825 = vmatpush1.msra.mxu0 0.0
    %1826 = vmatprep.subr.mxu0 0.0
    %1827 = vmatpush1.msra.mxu0 0.0
    %1828 = vmatprep.subr.mxu0 0.0
    %1829 = vmatpush1.msra.mxu0 0.0
    %1830 = vmatprep.subr.mxu0 0.0
    %1831 = vmatpush1.msra.mxu0 0.0
    %1832 = vmatprep.subr.mxu0 0.0
    %1833 = vmatpush1.msra.mxu0 0.0
    %1834 = vmatprep.subr.mxu0 0.0
    %1835 = vmatpush1.msra.mxu0 0.0
    %1836 = vmatprep.subr.mxu0 0.0
    %1837 = vmatpush1.msra.mxu0 0.0
    %1838 = vmatprep.subr.mxu0 0.0
    %1839 = vmatpush1.msra.mxu0 0.0
    %1840 = vmatprep.subr.mxu0 0.0
    %1841 = vmatpush1.msra.mxu0 0.0
    %1842 = vmatprep.subr.mxu0 0.0
    %1843 = vmatpush1.msra.mxu0 0.0
    %1844 = vmatprep.subr.mxu0 0.0
    %1845 = vmatpush1.msra.mxu0 0.0
    %1846 = vmatprep.subr.mxu0 0.0
    %1847 = vmatpush1.msra.mxu0 %v169
    %1848 = vmatprep.subr.mxu0 0.0
    %1849 = vmatpush1.msra.mxu0 %v168
    %1850 = vmatprep.subr.mxu0 0.0
    %1851 = vmatpush1.msra.mxu0 %v167
    %1852 = vmatprep.subr.mxu0 0.0
    %1853 = vmatpush1.msra.mxu0 %v166
    %1854 = vmatprep.subr.mxu0 0.0
    %1855 = vmatpush2.msra.mxu0 0.0
    %1856 = vmatprep.subr.mxu0 0.0
    %1857 = vmatpush2.msra.mxu0 0.0
    %1858 = vmatprep.subr.mxu0 0.0
    %1859 = vmatpush2.msra.mxu0 0.0
    %1860 = vmatprep.subr.mxu0 0.0
    %1861 = vmatpush2.msra.mxu0 0.0
    %1862 = vmatprep.subr.mxu0 0.0
    %1863 = vmatpush2.msra.mxu0 0.0
    %1864 = vmatprep.subr.mxu0 0.0
    %1865 = vmatpush2.msra.mxu0 0.0
    %1866 = vmatprep.subr.mxu0 0.0
    %1867 = vmatpush2.msra.mxu0 0.0
    %1868 = vmatprep.subr.mxu0 0.0
    %1869 = vmatpush2.msra.mxu0 0.0
    %1870 = vmatprep.subr.mxu0 0.0
    %1871 = vmatpush2.msra.mxu0 0.0
    %1872 = vmatprep.subr.mxu0 0.0
    %1873 = vmatpush2.msra.mxu0 0.0
    %1874 = vmatprep.subr.mxu0 0.0
    %1875 = vmatpush2.msra.mxu0 0.0
    %1876 = vmatprep.subr.mxu0 0.0
    %1877 = vmatpush2.msra.mxu0 0.0
    %1878 = vmatprep.subr.mxu0 0.0
    %1879 = vmatpush2.msra.mxu0 0.0
    %1880 = vmatprep.subr.mxu0 0.0
    %1881 = vmatpush2.msra.mxu0 0.0
    %1882 = vmatprep.subr.mxu0 0.0
    %1883 = vmatpush2.msra.mxu0 0.0
    %1884 = vmatprep.subr.mxu0 0.0
    %1885 = vmatpush2.msra.mxu0 0.0
    %1886 = vmatprep.mubr.f32.mxu0 0.0
    %1887 = vmatmul.mubr.f32.gmra.mxu0 %v1820
    %v1888 = vpop.f32.mrf.mxu0
    %v1889 = vadd.f32 0.0, %v1888
    %v1890 = vpop.f32.mrf.mxu0
    %1891 = vdwg.mxu0
    %v1893 = vrot.slane %v1889, 2
    %v1895 = vadd.f32 %v158, %v1893
    %v1896 = vtanh.pop %v1895
    %v1898 = vrot.slane %v1817, 2
    %v1899 = vsel %vm172, %v1898, 0
    %1901 = vmatprep.subr.mxu0 0.0
    %1902 = vmatpush1.msra.mxu0 0.0
    %1903 = vmatprep.subr.mxu0 0.0
    %1904 = vmatpush1.msra.mxu0 0.0
    %1905 = vmatprep.subr.mxu0 0.0
    %1906 = vmatpush1.msra.mxu0 0.0
    %1907 = vmatprep.subr.mxu0 0.0
    %1908 = vmatpush1.msra.mxu0 0.0
    %1909 = vmatprep.subr.mxu0 0.0
    %1910 = vmatpush1.msra.mxu0 0.0
    %1911 = vmatprep.subr.mxu0 0.0
    %1912 = vmatpush1.msra.mxu0 0.0
    %1913 = vmatprep.subr.mxu0 0.0
    %1914 = vmatpush1.msra.mxu0 0.0
    %1915 = vmatprep.subr.mxu0 0.0
    %1916 = vmatpush1.msra.mxu0 0.0
    %1917 = vmatprep.subr.mxu0 0.0
    %1918 = vmatpush1.msra.mxu0 0.0
    %1919 = vmatprep.subr.mxu0 0.0
    %1920 = vmatpush1.msra.mxu0 0.0
    %1921 = vmatprep.subr.mxu0 0.0
    %1922 = vmatpush1.msra.mxu0 0.0
    %1923 = vmatprep.subr.mxu0 0.0
    %1924 = vmatpush1.msra.mxu0 0.0
    %1925 = vmatprep.subr.mxu0 0.0
    %1926 = vmatpush1.msra.mxu0 %v169
    %1927 = vmatprep.subr.mxu0 0.0
    %1928 = vmatpush1.msra.mxu0 %v168
    %1929 = vmatprep.subr.mxu0 0.0
    %1930 = vmatpush1.msra.mxu0 %v167
    %1931 = vmatprep.subr.mxu0 0.0
    %1932 = vmatpush1.msra.mxu0 %v166
    %1933 = vmatprep.subr.mxu0 0.0
    %1934 = vmatpush2.msra.mxu0 0.0
    %1935 = vmatprep.subr.mxu0 0.0
    %1936 = vmatpush2.msra.mxu0 0.0
    %1937 = vmatprep.subr.mxu0 0.0
    %1938 = vmatpush2.msra.mxu0 0.0
    %1939 = vmatprep.subr.mxu0 0.0
    %1940 = vmatpush2.msra.mxu0 0.0
    %1941 = vmatprep.subr.mxu0 0.0
    %1942 = vmatpush2.msra.mxu0 0.0
    %1943 = vmatprep.subr.mxu0 0.0
    %1944 = vmatpush2.msra.mxu0 0.0
    %1945 = vmatprep.subr.mxu0 0.0
    %1946 = vmatpush2.msra.mxu0 0.0
    %1947 = vmatprep.subr.mxu0 0.0
    %1948 = vmatpush2.msra.mxu0 0.0
    %1949 = vmatprep.subr.mxu0 0.0
    %1950 = vmatpush2.msra.mxu0 0.0
    %1951 = vmatprep.subr.mxu0 0.0
    %1952 = vmatpush2.msra.mxu0 0.0
    %1953 = vmatprep.subr.mxu0 0.0
    %1954 = vmatpush2.msra.mxu0 0.0
    %1955 = vmatprep.subr.mxu0 0.0
    %1956 = vmatpush2.msra.mxu0 0.0
    %1957 = vmatprep.subr.mxu0 0.0
    %1958 = vmatpush2.msra.mxu0 0.0
    %1959 = vmatprep.subr.mxu0 0.0
    %1960 = vmatpush2.msra.mxu0 0.0
    %1961 = vmatprep.subr.mxu0 0.0
    %1962 = vmatpush2.msra.mxu0 0.0
    %1963 = vmatprep.subr.mxu0 0.0
    %1964 = vmatpush2.msra.mxu0 0.0
    %1965 = vmatprep.mubr.f32.mxu0 0.0
    %1966 = vmatmul.mubr.f32.gmra.mxu0 %v1899
    %v1967 = vpop.f32.mrf.mxu0
    %v1968 = vadd.f32 0.0, %v1967
    %v1969 = vpop.f32.mrf.mxu0
    %1970 = vdwg.mxu0
    %v1972 = vrot.slane %v1968, 5
    %v1974 = vadd.f32 %v148, %v1972
    %v1975 = vtanh.pop %v1974
    %v1977 = vrot.slane %v1896, 6
    %v1978 = vsel %vm172, %v1977, 0
    %1980 = vmatprep.subr.mxu0 0.0
    %1981 = vmatpush1.msra.mxu0 0.0
    %1982 = vmatprep.subr.mxu0 0.0
    %1983 = vmatpush1.msra.mxu0 0.0
    %1984 = vmatprep.subr.mxu0 0.0
    %1985 = vmatpush1.msra.mxu0 0.0
    %1986 = vmatprep.subr.mxu0 0.0
    %1987 = vmatpush1.msra.mxu0 0.0
    %1988 = vmatprep.subr.mxu0 0.0
    %1989 = vmatpush1.msra.mxu0 0.0
    %1990 = vmatprep.subr.mxu0 0.0
    %1991 = vmatpush1.msra.mxu0 0.0
    %1992 = vmatprep.subr.mxu0 0.0
    %1993 = vmatpush1.msra.mxu0 0.0
    %1994 = vmatprep.subr.mxu0 0.0
    %1995 = vmatpush1.msra.mxu0 0.0
    %1996 = vmatprep.subr.mxu0 0.0
    %1997 = vmatpush1.msra.mxu0 0.0
    %1998 = vmatprep.subr.mxu0 0.0
    %1999 = vmatpush1.msra.mxu0 0.0
    %2000 = vmatprep.subr.mxu0 0.0
    %2001 = vmatpush1.msra.mxu0 0.0
    %2002 = vmatprep.subr.mxu0 0.0
    %2003 = vmatpush1.msra.mxu0 0.0
    %2004 = vmatprep.subr.mxu0 0.0
    %2005 = vmatpush1.msra.mxu0 %v169
    %2006 = vmatprep.subr.mxu0 0.0
    %2007 = vmatpush1.msra.mxu0 %v168
    %2008 = vmatprep.subr.mxu0 0.0
    %2009 = vmatpush1.msra.mxu0 %v167
    %2010 = vmatprep.subr.mxu0 0.0
    %2011 = vmatpush1.msra.mxu0 %v166
    %2012 = vmatprep.subr.mxu0 0.0
    %2013 = vmatpush2.msra.mxu0 0.0
    %2014 = vmatprep.subr.mxu0 0.0
    %2015 = vmatpush2.msra.mxu0 0.0
    %2016 = vmatprep.subr.mxu0 0.0
    %2017 = vmatpush2.msra.mxu0 0.0
    %2018 = vmatprep.subr.mxu0 0.0
    %2019 = vmatpush2.msra.mxu0 0.0
    %2020 = vmatprep.subr.mxu0 0.0
    %2021 = vmatpush2.msra.mxu0 0.0
    %2022 = vmatprep.subr.mxu0 0.0
    %2023 = vmatpush2.msra.mxu0 0.0
    %2024 = vmatprep.subr.mxu0 0.0
    %2025 = vmatpush2.msra.mxu0 0.0
    %2026 = vmatprep.subr.mxu0 0.0
    %2027 = vmatpush2.msra.mxu0 0.0
    %2028 = vmatprep.subr.mxu0 0.0
    %2029 = vmatpush2.msra.mxu0 0.0
    %2030 = vmatprep.subr.mxu0 0.0
    %2031 = vmatpush2.msra.mxu0 0.0
    %2032 = vmatprep.subr.mxu0 0.0
    %2033 = vmatpush2.msra.mxu0 0.0
    %2034 = vmatprep.subr.mxu0 0.0
    %2035 = vmatpush2.msra.mxu0 0.0
    %2036 = vmatprep.subr.mxu0 0.0
    %2037 = vmatpush2.msra.mxu0 0.0
    %2038 = vmatprep.subr.mxu0 0.0
    %2039 = vmatpush2.msra.mxu0 0.0
    %2040 = vmatprep.subr.mxu0 0.0
    %2041 = vmatpush2.msra.mxu0 0.0
    %2042 = vmatprep.subr.mxu0 0.0
    %2043 = vmatpush2.msra.mxu0 0.0
    %2044 = vmatprep.mubr.f32.mxu0 0.0
    %2045 = vmatmul.mubr.f32.gmra.mxu0 %v1978
    %v2046 = vpop.f32.mrf.mxu0
    %v2047 = vadd.f32 0.0, %v2046
    %v2048 = vpop.f32.mrf.mxu0
    %2049 = vdwg.mxu0
    %v2051 = vrot.slane %v2047, 1
    %v2053 = vadd.f32 %v158, %v2051
    %v2054 = vtanh.pop %v2053
    %v2056 = vrot.slane %v1975, 3
    %v2057 = vsel %vm172, %v2056, 0
    %2059 = vmatprep.subr.mxu0 0.0
    %2060 = vmatpush1.msra.mxu0 0.0
    %2061 = vmatprep.subr.mxu0 0.0
    %2062 = vmatpush1.msra.mxu0 0.0
    %2063 = vmatprep.subr.mxu0 0.0
    %2064 = vmatpush1.msra.mxu0 0.0
    %2065 = vmatprep.subr.mxu0 0.0
    %2066 = vmatpush1.msra.mxu0 0.0
    %2067 = vmatprep.subr.mxu0 0.0
    %2068 = vmatpush1.msra.mxu0 0.0
    %2069 = vmatprep.subr.mxu0 0.0
    %2070 = vmatpush1.msra.mxu0 0.0
    %2071 = vmatprep.subr.mxu0 0.0
    %2072 = vmatpush1.msra.mxu0 0.0
    %2073 = vmatprep.subr.mxu0 0.0
    %2074 = vmatpush1.msra.mxu0 0.0
    %2075 = vmatprep.subr.mxu0 0.0
    %2076 = vmatpush1.msra.mxu0 0.0
    %2077 = vmatprep.subr.mxu0 0.0
    %2078 = vmatpush1.msra.mxu0 0.0
    %2079 = vmatprep.subr.mxu0 0.0
    %2080 = vmatpush1.msra.mxu0 0.0
    %2081 = vmatprep.subr.mxu0 0.0
    %2082 = vmatpush1.msra.mxu0 0.0
    %2083 = vmatprep.subr.mxu0 0.0
    %2084 = vmatpush1.msra.mxu0 %v169
    %2085 = vmatprep.subr.mxu0 0.0
    %2086 = vmatpush1.msra.mxu0 %v168
    %2087 = vmatprep.subr.mxu0 0.0
    %2088 = vmatpush1.msra.mxu0 %v167
    %2089 = vmatprep.subr.mxu0 0.0
    %2090 = vmatpush1.msra.mxu0 %v166
    %2091 = vmatprep.subr.mxu0 0.0
    %2092 = vmatpush2.msra.mxu0 0.0
    %2093 = vmatprep.subr.mxu0 0.0
    %2094 = vmatpush2.msra.mxu0 0.0
    %2095 = vmatprep.subr.mxu0 0.0
    %2096 = vmatpush2.msra.mxu0 0.0
    %2097 = vmatprep.subr.mxu0 0.0
    %2098 = vmatpush2.msra.mxu0 0.0
    %2099 = vmatprep.subr.mxu0 0.0
    %2100 = vmatpush2.msra.mxu0 0.0
    %2101 = vmatprep.subr.mxu0 0.0
    %2102 = vmatpush2.msra.mxu0 0.0
    %2103 = vmatprep.subr.mxu0 0.0
    %2104 = vmatpush2.msra.mxu0 0.0
    %2105 = vmatprep.subr.mxu0 0.0
    %2106 = vmatpush2.msra.mxu0 0.0
    %2107 = vmatprep.subr.mxu0 0.0
    %2108 = vmatpush2.msra.mxu0 0.0
    %2109 = vmatprep.subr.mxu0 0.0
    %2110 = vmatpush2.msra.mxu0 0.0
    %2111 = vmatprep.subr.mxu0 0.0
    %2112 = vmatpush2.msra.mxu0 0.0
    %2113 = vmatprep.subr.mxu0 0.0
    %2114 = vmatpush2.msra.mxu0 0.0
    %2115 = vmatprep.subr.mxu0 0.0
    %2116 = vmatpush2.msra.mxu0 0.0
    %2117 = vmatprep.subr.mxu0 0.0
    %2118 = vmatpush2.msra.mxu0 0.0
    %2119 = vmatprep.subr.mxu0 0.0
    %2120 = vmatpush2.msra.mxu0 0.0
    %2121 = vmatprep.subr.mxu0 0.0
    %2122 = vmatpush2.msra.mxu0 0.0
    %2123 = vmatprep.mubr.f32.mxu0 0.0
    %2124 = vmatmul.mubr.f32.gmra.mxu0 %v2057
    %v2125 = vpop.f32.mrf.mxu0
    %v2126 = vadd.f32 0.0, %v2125
    %v2127 = vpop.f32.mrf.mxu0
    %2128 = vdwg.mxu0
    %v2130 = vrot.slane %v2126, 4
    %v2132 = vadd.f32 %v148, %v2130
    %v2133 = vtanh.pop %v2132
    %v2135 = vrot.slane %v2054, 7
    %v2136 = vsel %vm172, %v2135, 0
    %2138 = vmatprep.subr.mxu0 0.0
    %2139 = vmatpush1.msra.mxu0 0.0
    %2140 = vmatprep.subr.mxu0 0.0
    %2141 = vmatpush1.msra.mxu0 0.0
    %2142 = vmatprep.subr.mxu0 0.0
    %2143 = vmatpush1.msra.mxu0 0.0
    %2144 = vmatprep.subr.mxu0 0.0
    %2145 = vmatpush1.msra.mxu0 0.0
    %2146 = vmatprep.subr.mxu0 0.0
    %2147 = vmatpush1.msra.mxu0 0.0
    %2148 = vmatprep.subr.mxu0 0.0
    %2149 = vmatpush1.msra.mxu0 0.0
    %2150 = vmatprep.subr.mxu0 0.0
    %2151 = vmatpush1.msra.mxu0 0.0
    %2152 = vmatprep.subr.mxu0 0.0
    %2153 = vmatpush1.msra.mxu0 0.0
    %2154 = vmatprep.subr.mxu0 0.0
    %2155 = vmatpush1.msra.mxu0 0.0
    %2156 = vmatprep.subr.mxu0 0.0
    %2157 = vmatpush1.msra.mxu0 0.0
    %2158 = vmatprep.subr.mxu0 0.0
    %2159 = vmatpush1.msra.mxu0 0.0
    %2160 = vmatprep.subr.mxu0 0.0
    %2161 = vmatpush1.msra.mxu0 0.0
    %2162 = vmatprep.subr.mxu0 0.0
    %2163 = vmatpush1.msra.mxu0 %v169
    %2164 = vmatprep.subr.mxu0 0.0
    %2165 = vmatpush1.msra.mxu0 %v168
    %2166 = vmatprep.subr.mxu0 0.0
    %2167 = vmatpush1.msra.mxu0 %v167
    %2168 = vmatprep.subr.mxu0 0.0
    %2169 = vmatpush1.msra.mxu0 %v166
    %2170 = vmatprep.subr.mxu0 0.0
    %2171 = vmatpush2.msra.mxu0 0.0
    %2172 = vmatprep.subr.mxu0 0.0
    %2173 = vmatpush2.msra.mxu0 0.0
    %2174 = vmatprep.subr.mxu0 0.0
    %2175 = vmatpush2.msra.mxu0 0.0
    %2176 = vmatprep.subr.mxu0 0.0
    %2177 = vmatpush2.msra.mxu0 0.0
    %2178 = vmatprep.subr.mxu0 0.0
    %2179 = vmatpush2.msra.mxu0 0.0
    %2180 = vmatprep.subr.mxu0 0.0
    %2181 = vmatpush2.msra.mxu0 0.0
    %2182 = vmatprep.subr.mxu0 0.0
    %2183 = vmatpush2.msra.mxu0 0.0
    %2184 = vmatprep.subr.mxu0 0.0
    %2185 = vmatpush2.msra.mxu0 0.0
    %2186 = vmatprep.subr.mxu0 0.0
    %2187 = vmatpush2.msra.mxu0 0.0
    %2188 = vmatprep.subr.mxu0 0.0
    %2189 = vmatpush2.msra.mxu0 0.0
    %2190 = vmatprep.subr.mxu0 0.0
    %2191 = vmatpush2.msra.mxu0 0.0
    %2192 = vmatprep.subr.mxu0 0.0
    %2193 = vmatpush2.msra.mxu0 0.0
    %2194 = vmatprep.subr.mxu0 0.0
    %2195 = vmatpush2.msra.mxu0 0.0
    %2196 = vmatprep.subr.mxu0 0.0
    %2197 = vmatpush2.msra.mxu0 0.0
    %2198 = vmatprep.subr.mxu0 0.0
    %2199 = vmatpush2.msra.mxu0 0.0
    %2200 = vmatprep.subr.mxu0 0.0
    %2201 = vmatpush2.msra.mxu0 0.0
    %2202 = vmatprep.mubr.f32.mxu0 0.0
    %2203 = vmatmul.mubr.f32.gmra.mxu0 %v2136
    %v2204 = vpop.f32.mrf.mxu0
    %v2205 = vadd.f32 0.0, %v2204
    %v2206 = vpop.f32.mrf.mxu0
    %2207 = vdwg.mxu0
    %v2208 = vadd.f32 %v163, %v2205
    %v2209 = vtanh.pop %v2208
    %v2211 = vrot.slane %v2133, 4
    %v2212 = vsel %vm172, %v2211, 0
    %2214 = vmatprep.subr.mxu0 0.0
    %2215 = vmatpush1.msra.mxu0 0.0
    %2216 = vmatprep.subr.mxu0 0.0
    %2217 = vmatpush1.msra.mxu0 0.0
    %2218 = vmatprep.subr.mxu0 0.0
    %2219 = vmatpush1.msra.mxu0 0.0
    %2220 = vmatprep.subr.mxu0 0.0
    %2221 = vmatpush1.msra.mxu0 0.0
    %2222 = vmatprep.subr.mxu0 0.0
    %2223 = vmatpush1.msra.mxu0 0.0
    %2224 = vmatprep.subr.mxu0 0.0
    %2225 = vmatpush1.msra.mxu0 0.0
    %2226 = vmatprep.subr.mxu0 0.0
    %2227 = vmatpush1.msra.mxu0 0.0
    %2228 = vmatprep.subr.mxu0 0.0
    %2229 = vmatpush1.msra.mxu0 0.0
    %2230 = vmatprep.subr.mxu0 0.0
    %2231 = vmatpush1.msra.mxu0 0.0
    %2232 = vmatprep.subr.mxu0 0.0
    %2233 = vmatpush1.msra.mxu0 0.0
    %2234 = vmatprep.subr.mxu0 0.0
    %2235 = vmatpush1.msra.mxu0 0.0
    %2236 = vmatprep.subr.mxu0 0.0
    %2237 = vmatpush1.msra.mxu0 0.0
    %2238 = vmatprep.subr.mxu0 0.0
    %2239 = vmatpush1.msra.mxu0 %v169
    %2240 = vmatprep.subr.mxu0 0.0
    %2241 = vmatpush1.msra.mxu0 %v168
    %2242 = vmatprep.subr.mxu0 0.0
    %2243 = vmatpush1.msra.mxu0 %v167
    %2244 = vmatprep.subr.mxu0 0.0
    %2245 = vmatpush1.msra.mxu0 %v166
    %2246 = vmatprep.subr.mxu0 0.0
    %2247 = vmatpush2.msra.mxu0 0.0
    %2248 = vmatprep.subr.mxu0 0.0
    %2249 = vmatpush2.msra.mxu0 0.0
    %2250 = vmatprep.subr.mxu0 0.0
    %2251 = vmatpush2.msra.mxu0 0.0
    %2252 = vmatprep.subr.mxu0 0.0
    %2253 = vmatpush2.msra.mxu0 0.0
    %2254 = vmatprep.subr.mxu0 0.0
    %2255 = vmatpush2.msra.mxu0 0.0
    %2256 = vmatprep.subr.mxu0 0.0
    %2257 = vmatpush2.msra.mxu0 0.0
    %2258 = vmatprep.subr.mxu0 0.0
    %2259 = vmatpush2.msra.mxu0 0.0
    %2260 = vmatprep.subr.mxu0 0.0
    %2261 = vmatpush2.msra.mxu0 0.0
    %2262 = vmatprep.subr.mxu0 0.0
    %2263 = vmatpush2.msra.mxu0 0.0
    %2264 = vmatprep.subr.mxu0 0.0
    %2265 = vmatpush2.msra.mxu0 0.0
    %2266 = vmatprep.subr.mxu0 0.0
    %2267 = vmatpush2.msra.mxu0 0.0
    %2268 = vmatprep.subr.mxu0 0.0
    %2269 = vmatpush2.msra.mxu0 0.0
    %2270 = vmatprep.subr.mxu0 0.0
    %2271 = vmatpush2.msra.mxu0 0.0
    %2272 = vmatprep.subr.mxu0 0.0
    %2273 = vmatpush2.msra.mxu0 0.0
    %2274 = vmatprep.subr.mxu0 0.0
    %2275 = vmatpush2.msra.mxu0 0.0
    %2276 = vmatprep.subr.mxu0 0.0
    %2277 = vmatpush2.msra.mxu0 0.0
    %2278 = vmatprep.mubr.f32.mxu0 0.0
    %2279 = vmatmul.mubr.f32.gmra.mxu0 %v2212
    %v2280 = vpop.f32.mrf.mxu0
    %v2281 = vadd.f32 0.0, %v2280
    %v2282 = vpop.f32.mrf.mxu0
    %2283 = vdwg.mxu0
    %v2285 = vrot.slane %v2281, 3
    %v2287 = vadd.f32 %v148, %v2285
    %v2288 = vtanh.pop %v2287
    %v2290 = vsel %vm172, %v2209, 0
    %2292 = vmatprep.subr.mxu0 0.0
    %2293 = vmatpush1.msra.mxu0 0.0
    %2294 = vmatprep.subr.mxu0 0.0
    %2295 = vmatpush1.msra.mxu0 0.0
    %2296 = vmatprep.subr.mxu0 0.0
    %2297 = vmatpush1.msra.mxu0 0.0
    %2298 = vmatprep.subr.mxu0 0.0
    %2299 = vmatpush1.msra.mxu0 0.0
    %2300 = vmatprep.subr.mxu0 0.0
    %2301 = vmatpush1.msra.mxu0 0.0
    %2302 = vmatprep.subr.mxu0 0.0
    %2303 = vmatpush1.msra.mxu0 0.0
    %2304 = vmatprep.subr.mxu0 0.0
    %2305 = vmatpush1.msra.mxu0 0.0
    %2306 = vmatprep.subr.mxu0 0.0
    %2307 = vmatpush1.msra.mxu0 0.0
    %2308 = vmatprep.subr.mxu0 0.0
    %2309 = vmatpush1.msra.mxu0 0.0
    %2310 = vmatprep.subr.mxu0 0.0
    %2311 = vmatpush1.msra.mxu0 0.0
    %2312 = vmatprep.subr.mxu0 0.0
    %2313 = vmatpush1.msra.mxu0 0.0
    %2314 = vmatprep.subr.mxu0 0.0
    %2315 = vmatpush1.msra.mxu0 0.0
    %2316 = vmatprep.subr.mxu0 0.0
    %2317 = vmatpush1.msra.mxu0 %v169
    %2318 = vmatprep.subr.mxu0 0.0
    %2319 = vmatpush1.msra.mxu0 %v168
    %2320 = vmatprep.subr.mxu0 0.0
    %2321 = vmatpush1.msra.mxu0 %v167
    %2322 = vmatprep.subr.mxu0 0.0
    %2323 = vmatpush1.msra.mxu0 %v166
    %2324 = vmatprep.subr.mxu0 0.0
    %2325 = vmatpush2.msra.mxu0 0.0
    %2326 = vmatprep.subr.mxu0 0.0
    %2327 = vmatpush2.msra.mxu0 0.0
    %2328 = vmatprep.subr.mxu0 0.0
    %2329 = vmatpush2.msra.mxu0 0.0
    %2330 = vmatprep.subr.mxu0 0.0
    %2331 = vmatpush2.msra.mxu0 0.0
    %2332 = vmatprep.subr.mxu0 0.0
    %2333 = vmatpush2.msra.mxu0 0.0
    %2334 = vmatprep.subr.mxu0 0.0
    %2335 = vmatpush2.msra.mxu0 0.0
    %2336 = vmatprep.subr.mxu0 0.0
    %2337 = vmatpush2.msra.mxu0 0.0
    %2338 = vmatprep.subr.mxu0 0.0
    %2339 = vmatpush2.msra.mxu0 0.0
    %2340 = vmatprep.subr.mxu0 0.0
    %2341 = vmatpush2.msra.mxu0 0.0
    %2342 = vmatprep.subr.mxu0 0.0
    %2343 = vmatpush2.msra.mxu0 0.0
    %2344 = vmatprep.subr.mxu0 0.0
    %2345 = vmatpush2.msra.mxu0 0.0
    %2346 = vmatprep.subr.mxu0 0.0
    %2347 = vmatpush2.msra.mxu0 0.0
    %2348 = vmatprep.subr.mxu0 0.0
    %2349 = vmatpush2.msra.mxu0 0.0
    %2350 = vmatprep.subr.mxu0 0.0
    %2351 = vmatpush2.msra.mxu0 0.0
    %2352 = vmatprep.subr.mxu0 0.0
    %2353 = vmatpush2.msra.mxu0 0.0
    %2354 = vmatprep.subr.mxu0 0.0
    %2355 = vmatpush2.msra.mxu0 0.0
    %2356 = vmatprep.mubr.f32.mxu0 0.0
    %2357 = vmatmul.mubr.f32.gmra.mxu0 %v2290
    %v2358 = vpop.f32.mrf.mxu0
    %v2359 = vadd.f32 0.0, %v2358
    %v2360 = vpop.f32.mrf.mxu0
    %2361 = vdwg.mxu0
    %v2363 = vrot.slane %v2359, 7
    %v2365 = vadd.f32 %v163, %v2363
    %v2366 = vtanh.pop %v2365
    %v2368 = vrot.slane %v2288, 5
    %v2369 = vsel %vm172, %v2368, 0
    %2371 = vmatprep.subr.mxu0 0.0
    %2372 = vmatpush1.msra.mxu0 0.0
    %2373 = vmatprep.subr.mxu0 0.0
    %2374 = vmatpush1.msra.mxu0 0.0
    %2375 = vmatprep.subr.mxu0 0.0
    %2376 = vmatpush1.msra.mxu0 0.0
    %2377 = vmatprep.subr.mxu0 0.0
    %2378 = vmatpush1.msra.mxu0 0.0
    %2379 = vmatprep.subr.mxu0 0.0
    %2380 = vmatpush1.msra.mxu0 0.0
    %2381 = vmatprep.subr.mxu0 0.0
    %2382 = vmatpush1.msra.mxu0 0.0
    %2383 = vmatprep.subr.mxu0 0.0
    %2384 = vmatpush1.msra.mxu0 0.0
    %2385 = vmatprep.subr.mxu0 0.0
    %2386 = vmatpush1.msra.mxu0 0.0
    %2387 = vmatprep.subr.mxu0 0.0
    %2388 = vmatpush1.msra.mxu0 0.0
    %2389 = vmatprep.subr.mxu0 0.0
    %2390 = vmatpush1.msra.mxu0 0.0
    %2391 = vmatprep.subr.mxu0 0.0
    %2392 = vmatpush1.msra.mxu0 0.0
    %2393 = vmatprep.subr.mxu0 0.0
    %2394 = vmatpush1.msra.mxu0 0.0
    %2395 = vmatprep.subr.mxu0 0.0
    %2396 = vmatpush1.msra.mxu0 %v169
    %2397 = vmatprep.subr.mxu0 0.0
    %2398 = vmatpush1.msra.mxu0 %v168
    %2399 = vmatprep.subr.mxu0 0.0
    %2400 = vmatpush1.msra.mxu0 %v167
    %2401 = vmatprep.subr.mxu0 0.0
    %2402 = vmatpush1.msra.mxu0 %v166
    %2403 = vmatprep.subr.mxu0 0.0
    %2404 = vmatpush2.msra.mxu0 0.0
    %2405 = vmatprep.subr.mxu0 0.0
    %2406 = vmatpush2.msra.mxu0 0.0
    %2407 = vmatprep.subr.mxu0 0.0
    %2408 = vmatpush2.msra.mxu0 0.0
    %2409 = vmatprep.subr.mxu0 0.0
    %2410 = vmatpush2.msra.mxu0 0.0
    %2411 = vmatprep.subr.mxu0 0.0
    %2412 = vmatpush2.msra.mxu0 0.0
    %2413 = vmatprep.subr.mxu0 0.0
    %2414 = vmatpush2.msra.mxu0 0.0
    %2415 = vmatprep.subr.mxu0 0.0
    %2416 = vmatpush2.msra.mxu0 0.0
    %2417 = vmatprep.subr.mxu0 0.0
    %2418 = vmatpush2.msra.mxu0 0.0
    %2419 = vmatprep.subr.mxu0 0.0
    %2420 = vmatpush2.msra.mxu0 0.0
    %2421 = vmatprep.subr.mxu0 0.0
    %2422 = vmatpush2.msra.mxu0 0.0
    %2423 = vmatprep.subr.mxu0 0.0
    %2424 = vmatpush2.msra.mxu0 0.0
    %2425 = vmatprep.subr.mxu0 0.0
    %2426 = vmatpush2.msra.mxu0 0.0
    %2427 = vmatprep.subr.mxu0 0.0
    %2428 = vmatpush2.msra.mxu0 0.0
    %2429 = vmatprep.subr.mxu0 0.0
    %2430 = vmatpush2.msra.mxu0 0.0
    %2431 = vmatprep.subr.mxu0 0.0
    %2432 = vmatpush2.msra.mxu0 0.0
    %2433 = vmatprep.subr.mxu0 0.0
    %2434 = vmatpush2.msra.mxu0 0.0
    %2435 = vmatprep.mubr.f32.mxu0 0.0
    %2436 = vmatmul.mubr.f32.gmra.mxu0 %v2369
    %v2437 = vpop.f32.mrf.mxu0
    %v2438 = vadd.f32 0.0, %v2437
    %v2439 = vpop.f32.mrf.mxu0
    %2440 = vdwg.mxu0
    %v2442 = vrot.slane %v2438, 2
    %v2444 = vadd.f32 %v148, %v2442
    %v2445 = vtanh.pop %v2444
    %v2447 = vrot.slane %v2366, 1
    %v2448 = vsel %vm172, %v2447, 0
    %2450 = vmatprep.subr.mxu0 0.0
    %2451 = vmatpush1.msra.mxu0 0.0
    %2452 = vmatprep.subr.mxu0 0.0
    %2453 = vmatpush1.msra.mxu0 0.0
    %2454 = vmatprep.subr.mxu0 0.0
    %2455 = vmatpush1.msra.mxu0 0.0
    %2456 = vmatprep.subr.mxu0 0.0
    %2457 = vmatpush1.msra.mxu0 0.0
    %2458 = vmatprep.subr.mxu0 0.0
    %2459 = vmatpush1.msra.mxu0 0.0
    %2460 = vmatprep.subr.mxu0 0.0
    %2461 = vmatpush1.msra.mxu0 0.0
    %2462 = vmatprep.subr.mxu0 0.0
    %2463 = vmatpush1.msra.mxu0 0.0
    %2464 = vmatprep.subr.mxu0 0.0
    %2465 = vmatpush1.msra.mxu0 0.0
    %2466 = vmatprep.subr.mxu0 0.0
    %2467 = vmatpush1.msra.mxu0 0.0
    %2468 = vmatprep.subr.mxu0 0.0
    %2469 = vmatpush1.msra.mxu0 0.0
    %2470 = vmatprep.subr.mxu0 0.0
    %2471 = vmatpush1.msra.mxu0 0.0
    %2472 = vmatprep.subr.mxu0 0.0
    %2473 = vmatpush1.msra.mxu0 0.0
    %2474 = vmatprep.subr.mxu0 0.0
    %2475 = vmatpush1.msra.mxu0 %v169
    %2476 = vmatprep.subr.mxu0 0.0
    %2477 = vmatpush1.msra.mxu0 %v168
    %2478 = vmatprep.subr.mxu0 0.0
    %2479 = vmatpush1.msra.mxu0 %v167
    %2480 = vmatprep.subr.mxu0 0.0
    %2481 = vmatpush1.msra.mxu0 %v166
    %2482 = vmatprep.subr.mxu0 0.0
    %2483 = vmatpush2.msra.mxu0 0.0
    %2484 = vmatprep.subr.mxu0 0.0
    %2485 = vmatpush2.msra.mxu0 0.0
    %2486 = vmatprep.subr.mxu0 0.0
    %2487 = vmatpush2.msra.mxu0 0.0
    %2488 = vmatprep.subr.mxu0 0.0
    %2489 = vmatpush2.msra.mxu0 0.0
    %2490 = vmatprep.subr.mxu0 0.0
    %2491 = vmatpush2.msra.mxu0 0.0
    %2492 = vmatprep.subr.mxu0 0.0
    %2493 = vmatpush2.msra.mxu0 0.0
    %2494 = vmatprep.subr.mxu0 0.0
    %2495 = vmatpush2.msra.mxu0 0.0
    %2496 = vmatprep.subr.mxu0 0.0
    %2497 = vmatpush2.msra.mxu0 0.0
    %2498 = vmatprep.subr.mxu0 0.0
    %2499 = vmatpush2.msra.mxu0 0.0
    %2500 = vmatprep.subr.mxu0 0.0
    %2501 = vmatpush2.msra.mxu0 0.0
    %2502 = vmatprep.subr.mxu0 0.0
    %2503 = vmatpush2.msra.mxu0 0.0
    %2504 = vmatprep.subr.mxu0 0.0
    %2505 = vmatpush2.msra.mxu0 0.0
    %2506 = vmatprep.subr.mxu0 0.0
    %2507 = vmatpush2.msra.mxu0 0.0
    %2508 = vmatprep.subr.mxu0 0.0
    %2509 = vmatpush2.msra.mxu0 0.0
    %2510 = vmatprep.subr.mxu0 0.0
    %2511 = vmatpush2.msra.mxu0 0.0
    %2512 = vmatprep.subr.mxu0 0.0
    %2513 = vmatpush2.msra.mxu0 0.0
    %2514 = vmatprep.mubr.f32.mxu0 0.0
    %2515 = vmatmul.mubr.f32.gmra.mxu0 %v2448
    %v2516 = vpop.f32.mrf.mxu0
    %v2517 = vadd.f32 0.0, %v2516
    %v2518 = vpop.f32.mrf.mxu0
    %2519 = vdwg.mxu0
    %v2521 = vrot.slane %v2517, 6
    %v2523 = vadd.f32 %v163, %v2521
    %v2524 = vtanh.pop %v2523
    %v2526 = vrot.slane %v2445, 6
    %v2527 = vsel %vm172, %v2526, 0
    %2529 = vmatprep.subr.mxu0 0.0
    %2530 = vmatpush1.msra.mxu0 0.0
    %2531 = vmatprep.subr.mxu0 0.0
    %2532 = vmatpush1.msra.mxu0 0.0
    %2533 = vmatprep.subr.mxu0 0.0
    %2534 = vmatpush1.msra.mxu0 0.0
    %2535 = vmatprep.subr.mxu0 0.0
    %2536 = vmatpush1.msra.mxu0 0.0
    %2537 = vmatprep.subr.mxu0 0.0
    %2538 = vmatpush1.msra.mxu0 0.0
    %2539 = vmatprep.subr.mxu0 0.0
    %2540 = vmatpush1.msra.mxu0 0.0
    %2541 = vmatprep.subr.mxu0 0.0
    %2542 = vmatpush1.msra.mxu0 0.0
    %2543 = vmatprep.subr.mxu0 0.0
    %2544 = vmatpush1.msra.mxu0 0.0
    %2545 = vmatprep.subr.mxu0 0.0
    %2546 = vmatpush1.msra.mxu0 0.0
    %2547 = vmatprep.subr.mxu0 0.0
    %2548 = vmatpush1.msra.mxu0 0.0
    %2549 = vmatprep.subr.mxu0 0.0
    %2550 = vmatpush1.msra.mxu0 0.0
    %2551 = vmatprep.subr.mxu0 0.0
    %2552 = vmatpush1.msra.mxu0 0.0
    %2553 = vmatprep.subr.mxu0 0.0
    %2554 = vmatpush1.msra.mxu0 %v169
    %2555 = vmatprep.subr.mxu0 0.0
    %2556 = vmatpush1.msra.mxu0 %v168
    %2557 = vmatprep.subr.mxu0 0.0
    %2558 = vmatpush1.msra.mxu0 %v167
    %2559 = vmatprep.subr.mxu0 0.0
    %2560 = vmatpush1.msra.mxu0 %v166
    %2561 = vmatprep.subr.mxu0 0.0
    %2562 = vmatpush2.msra.mxu0 0.0
    %2563 = vmatprep.subr.mxu0 0.0
    %2564 = vmatpush2.msra.mxu0 0.0
    %2565 = vmatprep.subr.mxu0 0.0
    %2566 = vmatpush2.msra.mxu0 0.0
    %2567 = vmatprep.subr.mxu0 0.0
    %2568 = vmatpush2.msra.mxu0 0.0
    %2569 = vmatprep.subr.mxu0 0.0
    %2570 = vmatpush2.msra.mxu0 0.0
    %2571 = vmatprep.subr.mxu0 0.0
    %2572 = vmatpush2.msra.mxu0 0.0
    %2573 = vmatprep.subr.mxu0 0.0
    %2574 = vmatpush2.msra.mxu0 0.0
    %2575 = vmatprep.subr.mxu0 0.0
    %2576 = vmatpush2.msra.mxu0 0.0
    %2577 = vmatprep.subr.mxu0 0.0
    %2578 = vmatpush2.msra.mxu0 0.0
    %2579 = vmatprep.subr.mxu0 0.0
    %2580 = vmatpush2.msra.mxu0 0.0
    %2581 = vmatprep.subr.mxu0 0.0
    %2582 = vmatpush2.msra.mxu0 0.0
    %2583 = vmatprep.subr.mxu0 0.0
    %2584 = vmatpush2.msra.mxu0 0.0
    %2585 = vmatprep.subr.mxu0 0.0
    %2586 = vmatpush2.msra.mxu0 0.0
    %2587 = vmatprep.subr.mxu0 0.0
    %2588 = vmatpush2.msra.mxu0 0.0
    %2589 = vmatprep.subr.mxu0 0.0
    %2590 = vmatpush2.msra.mxu0 0.0
    %2591 = vmatprep.subr.mxu0 0.0
    %2592 = vmatpush2.msra.mxu0 0.0
    %2593 = vmatprep.mubr.f32.mxu0 0.0
    %2594 = vmatmul.mubr.f32.gmra.mxu0 %v2527
    %v2595 = vpop.f32.mrf.mxu0
    %v2596 = vadd.f32 0.0, %v2595
    %v2597 = vpop.f32.mrf.mxu0
    %2598 = vdwg.mxu0
    %v2600 = vrot.slane %v2596, 1
    %v2602 = vadd.f32 %v148, %v2600
    %v2603 = vtanh.pop %v2602
    %v2605 = vrot.slane %v2524, 2
    %v2606 = vsel %vm172, %v2605, 0
    %2608 = vmatprep.subr.mxu0 0.0
    %2609 = vmatpush1.msra.mxu0 0.0
    %2610 = vmatprep.subr.mxu0 0.0
    %2611 = vmatpush1.msra.mxu0 0.0
    %2612 = vmatprep.subr.mxu0 0.0
    %2613 = vmatpush1.msra.mxu0 0.0
    %2614 = vmatprep.subr.mxu0 0.0
    %2615 = vmatpush1.msra.mxu0 0.0
    %2616 = vmatprep.subr.mxu0 0.0
    %2617 = vmatpush1.msra.mxu0 0.0
    %2618 = vmatprep.subr.mxu0 0.0
    %2619 = vmatpush1.msra.mxu0 0.0
    %2620 = vmatprep.subr.mxu0 0.0
    %2621 = vmatpush1.msra.mxu0 0.0
    %2622 = vmatprep.subr.mxu0 0.0
    %2623 = vmatpush1.msra.mxu0 0.0
    %2624 = vmatprep.subr.mxu0 0.0
    %2625 = vmatpush1.msra.mxu0 0.0
    %2626 = vmatprep.subr.mxu0 0.0
    %2627 = vmatpush1.msra.mxu0 0.0
    %2628 = vmatprep.subr.mxu0 0.0
    %2629 = vmatpush1.msra.mxu0 0.0
    %2630 = vmatprep.subr.mxu0 0.0
    %2631 = vmatpush1.msra.mxu0 0.0
    %2632 = vmatprep.subr.mxu0 0.0
    %2633 = vmatpush1.msra.mxu0 %v169
    %2634 = vmatprep.subr.mxu0 0.0
    %2635 = vmatpush1.msra.mxu0 %v168
    %2636 = vmatprep.subr.mxu0 0.0
    %2637 = vmatpush1.msra.mxu0 %v167
    %2638 = vmatprep.subr.mxu0 0.0
    %2639 = vmatpush1.msra.mxu0 %v166
    %2640 = vmatprep.subr.mxu0 0.0
    %2641 = vmatpush2.msra.mxu0 0.0
    %2642 = vmatprep.subr.mxu0 0.0
    %2643 = vmatpush2.msra.mxu0 0.0
    %2644 = vmatprep.subr.mxu0 0.0
    %2645 = vmatpush2.msra.mxu0 0.0
    %2646 = vmatprep.subr.mxu0 0.0
    %2647 = vmatpush2.msra.mxu0 0.0
    %2648 = vmatprep.subr.mxu0 0.0
    %2649 = vmatpush2.msra.mxu0 0.0
    %2650 = vmatprep.subr.mxu0 0.0
    %2651 = vmatpush2.msra.mxu0 0.0
    %2652 = vmatprep.subr.mxu0 0.0
    %2653 = vmatpush2.msra.mxu0 0.0
    %2654 = vmatprep.subr.mxu0 0.0
    %2655 = vmatpush2.msra.mxu0 0.0
    %2656 = vmatprep.subr.mxu0 0.0
    %2657 = vmatpush2.msra.mxu0 0.0
    %2658 = vmatprep.subr.mxu0 0.0
    %2659 = vmatpush2.msra.mxu0 0.0
    %2660 = vmatprep.subr.mxu0 0.0
    %2661 = vmatpush2.msra.mxu0 0.0
    %2662 = vmatprep.subr.mxu0 0.0
    %2663 = vmatpush2.msra.mxu0 0.0
    %2664 = vmatprep.subr.mxu0 0.0
    %2665 = vmatpush2.msra.mxu0 0.0
    %2666 = vmatprep.subr.mxu0 0.0
    %2667 = vmatpush2.msra.mxu0 0.0
    %2668 = vmatprep.subr.mxu0 0.0
    %2669 = vmatpush2.msra.mxu0 0.0
    %2670 = vmatprep.subr.mxu0 0.0
    %2671 = vmatpush2.msra.mxu0 0.0
    %2672 = vmatprep.mubr.f32.mxu0 0.0
    %2673 = vmatmul.mubr.f32.gmra.mxu0 %v2606
    %v2674 = vpop.f32.mrf.mxu0
    %v2675 = vadd.f32 0.0, %v2674
    %v2676 = vpop.f32.mrf.mxu0
    %2677 = vdwg.mxu0
    %v2679 = vrot.slane %v2675, 5
    %v2681 = vadd.f32 %v163, %v2679
    %v2682 = vtanh.pop %v2681
    %v2684 = vrot.slane %v2603, 7
    %v2685 = vsel %vm172, %v2684, 0
    %2687 = vmatprep.subr.mxu0 0.0
    %2688 = vmatpush1.msra.mxu0 0.0
    %2689 = vmatprep.subr.mxu0 0.0
    %2690 = vmatpush1.msra.mxu0 0.0
    %2691 = vmatprep.subr.mxu0 0.0
    %2692 = vmatpush1.msra.mxu0 0.0
    %2693 = vmatprep.subr.mxu0 0.0
    %2694 = vmatpush1.msra.mxu0 0.0
    %2695 = vmatprep.subr.mxu0 0.0
    %2696 = vmatpush1.msra.mxu0 0.0
    %2697 = vmatprep.subr.mxu0 0.0
    %2698 = vmatpush1.msra.mxu0 0.0
    %2699 = vmatprep.subr.mxu0 0.0
    %2700 = vmatpush1.msra.mxu0 0.0
    %2701 = vmatprep.subr.mxu0 0.0
    %2702 = vmatpush1.msra.mxu0 0.0
    %2703 = vmatprep.subr.mxu0 0.0
    %2704 = vmatpush1.msra.mxu0 0.0
    %2705 = vmatprep.subr.mxu0 0.0
    %2706 = vmatpush1.msra.mxu0 0.0
    %2707 = vmatprep.subr.mxu0 0.0
    %2708 = vmatpush1.msra.mxu0 0.0
    %2709 = vmatprep.subr.mxu0 0.0
    %2710 = vmatpush1.msra.mxu0 0.0
    %2711 = vmatprep.subr.mxu0 0.0
    %2712 = vmatpush1.msra.mxu0 %v169
    %2713 = vmatprep.subr.mxu0 0.0
    %2714 = vmatpush1.msra.mxu0 %v168
    %2715 = vmatprep.subr.mxu0 0.0
    %2716 = vmatpush1.msra.mxu0 %v167
    %2717 = vmatprep.subr.mxu0 0.0
    %2718 = vmatpush1.msra.mxu0 %v166
    %2719 = vmatprep.subr.mxu0 0.0
    %2720 = vmatpush2.msra.mxu0 0.0
    %2721 = vmatprep.subr.mxu0 0.0
    %2722 = vmatpush2.msra.mxu0 0.0
    %2723 = vmatprep.subr.mxu0 0.0
    %2724 = vmatpush2.msra.mxu0 0.0
    %2725 = vmatprep.subr.mxu0 0.0
    %2726 = vmatpush2.msra.mxu0 0.0
    %2727 = vmatprep.subr.mxu0 0.0
    %2728 = vmatpush2.msra.mxu0 0.0
    %2729 = vmatprep.subr.mxu0 0.0
    %2730 = vmatpush2.msra.mxu0 0.0
    %2731 = vmatprep.subr.mxu0 0.0
    %2732 = vmatpush2.msra.mxu0 0.0
    %2733 = vmatprep.subr.mxu0 0.0
    %2734 = vmatpush2.msra.mxu0 0.0
    %2735 = vmatprep.subr.mxu0 0.0
    %2736 = vmatpush2.msra.mxu0 0.0
    %2737 = vmatprep.subr.mxu0 0.0
    %2738 = vmatpush2.msra.mxu0 0.0
    %2739 = vmatprep.subr.mxu0 0.0
    %2740 = vmatpush2.msra.mxu0 0.0
    %2741 = vmatprep.subr.mxu0 0.0
    %2742 = vmatpush2.msra.mxu0 0.0
    %2743 = vmatprep.subr.mxu0 0.0
    %2744 = vmatpush2.msra.mxu0 0.0
    %2745 = vmatprep.subr.mxu0 0.0
    %2746 = vmatpush2.msra.mxu0 0.0
    %2747 = vmatprep.subr.mxu0 0.0
    %2748 = vmatpush2.msra.mxu0 0.0
    %2749 = vmatprep.subr.mxu0 0.0
    %2750 = vmatpush2.msra.mxu0 0.0
    %2751 = vmatprep.mubr.f32.mxu0 0.0
    %2752 = vmatmul.mubr.f32.gmra.mxu0 %v2685
    %v2753 = vpop.f32.mrf.mxu0
    %v2754 = vadd.f32 0.0, %v2753
    %v2755 = vpop.f32.mrf.mxu0
    %2756 = vdwg.mxu0
    %v2757 = vadd.f32 %v153, %v2754
    %v2758 = vtanh.pop %v2757
    %v2760 = vrot.slane %v2682, 3
    %v2761 = vsel %vm172, %v2760, 0
    %2763 = vmatprep.subr.mxu0 0.0
    %2764 = vmatpush1.msra.mxu0 0.0
    %2765 = vmatprep.subr.mxu0 0.0
    %2766 = vmatpush1.msra.mxu0 0.0
    %2767 = vmatprep.subr.mxu0 0.0
    %2768 = vmatpush1.msra.mxu0 0.0
    %2769 = vmatprep.subr.mxu0 0.0
    %2770 = vmatpush1.msra.mxu0 0.0
    %2771 = vmatprep.subr.mxu0 0.0
    %2772 = vmatpush1.msra.mxu0 0.0
    %2773 = vmatprep.subr.mxu0 0.0
    %2774 = vmatpush1.msra.mxu0 0.0
    %2775 = vmatprep.subr.mxu0 0.0
    %2776 = vmatpush1.msra.mxu0 0.0
    %2777 = vmatprep.subr.mxu0 0.0
    %2778 = vmatpush1.msra.mxu0 0.0
    %2779 = vmatprep.subr.mxu0 0.0
    %2780 = vmatpush1.msra.mxu0 0.0
    %2781 = vmatprep.subr.mxu0 0.0
    %2782 = vmatpush1.msra.mxu0 0.0
    %2783 = vmatprep.subr.mxu0 0.0
    %2784 = vmatpush1.msra.mxu0 0.0
    %2785 = vmatprep.subr.mxu0 0.0
    %2786 = vmatpush1.msra.mxu0 0.0
    %2787 = vmatprep.subr.mxu0 0.0
    %2788 = vmatpush1.msra.mxu0 %v169
    %2789 = vmatprep.subr.mxu0 0.0
    %2790 = vmatpush1.msra.mxu0 %v168
    %2791 = vmatprep.subr.mxu0 0.0
    %2792 = vmatpush1.msra.mxu0 %v167
    %2793 = vmatprep.subr.mxu0 0.0
    %2794 = vmatpush1.msra.mxu0 %v166
    %2795 = vmatprep.subr.mxu0 0.0
    %2796 = vmatpush2.msra.mxu0 0.0
    %2797 = vmatprep.subr.mxu0 0.0
    %2798 = vmatpush2.msra.mxu0 0.0
    %2799 = vmatprep.subr.mxu0 0.0
    %2800 = vmatpush2.msra.mxu0 0.0
    %2801 = vmatprep.subr.mxu0 0.0
    %2802 = vmatpush2.msra.mxu0 0.0
    %2803 = vmatprep.subr.mxu0 0.0
    %2804 = vmatpush2.msra.mxu0 0.0
    %2805 = vmatprep.subr.mxu0 0.0
    %2806 = vmatpush2.msra.mxu0 0.0
    %2807 = vmatprep.subr.mxu0 0.0
    %2808 = vmatpush2.msra.mxu0 0.0
    %2809 = vmatprep.subr.mxu0 0.0
    %2810 = vmatpush2.msra.mxu0 0.0
    %2811 = vmatprep.subr.mxu0 0.0
    %2812 = vmatpush2.msra.mxu0 0.0
    %2813 = vmatprep.subr.mxu0 0.0
    %2814 = vmatpush2.msra.mxu0 0.0
    %2815 = vmatprep.subr.mxu0 0.0
    %2816 = vmatpush2.msra.mxu0 0.0
    %2817 = vmatprep.subr.mxu0 0.0
    %2818 = vmatpush2.msra.mxu0 0.0
    %2819 = vmatprep.subr.mxu0 0.0
    %2820 = vmatpush2.msra.mxu0 0.0
    %2821 = vmatprep.subr.mxu0 0.0
    %2822 = vmatpush2.msra.mxu0 0.0
    %2823 = vmatprep.subr.mxu0 0.0
    %2824 = vmatpush2.msra.mxu0 0.0
    %2825 = vmatprep.subr.mxu0 0.0
    %2826 = vmatpush2.msra.mxu0 0.0
    %2827 = vmatprep.mubr.f32.mxu0 0.0
    %2828 = vmatmul.mubr.f32.gmra.mxu0 %v2761
    %v2829 = vpop.f32.mrf.mxu0
    %v2830 = vadd.f32 0.0, %v2829
    %v2831 = vpop.f32.mrf.mxu0
    %2832 = vdwg.mxu0
    %v2834 = vrot.slane %v2830, 4
    %v2836 = vadd.f32 %v163, %v2834
    %v2837 = vtanh.pop %v2836
    %v2839 = vsel %vm172, %v2758, 0
    %2841 = vmatprep.subr.mxu0 0.0
    %2842 = vmatpush1.msra.mxu0 0.0
    %2843 = vmatprep.subr.mxu0 0.0
    %2844 = vmatpush1.msra.mxu0 0.0
    %2845 = vmatprep.subr.mxu0 0.0
    %2846 = vmatpush1.msra.mxu0 0.0
    %2847 = vmatprep.subr.mxu0 0.0
    %2848 = vmatpush1.msra.mxu0 0.0
    %2849 = vmatprep.subr.mxu0 0.0
    %2850 = vmatpush1.msra.mxu0 0.0
    %2851 = vmatprep.subr.mxu0 0.0
    %2852 = vmatpush1.msra.mxu0 0.0
    %2853 = vmatprep.subr.mxu0 0.0
    %2854 = vmatpush1.msra.mxu0 0.0
    %2855 = vmatprep.subr.mxu0 0.0
    %2856 = vmatpush1.msra.mxu0 0.0
    %2857 = vmatprep.subr.mxu0 0.0
    %2858 = vmatpush1.msra.mxu0 0.0
    %2859 = vmatprep.subr.mxu0 0.0
    %2860 = vmatpush1.msra.mxu0 0.0
    %2861 = vmatprep.subr.mxu0 0.0
    %2862 = vmatpush1.msra.mxu0 0.0
    %2863 = vmatprep.subr.mxu0 0.0
    %2864 = vmatpush1.msra.mxu0 0.0
    %2865 = vmatprep.subr.mxu0 0.0
    %2866 = vmatpush1.msra.mxu0 %v169
    %2867 = vmatprep.subr.mxu0 0.0
    %2868 = vmatpush1.msra.mxu0 %v168
    %2869 = vmatprep.subr.mxu0 0.0
    %2870 = vmatpush1.msra.mxu0 %v167
    %2871 = vmatprep.subr.mxu0 0.0
    %2872 = vmatpush1.msra.mxu0 %v166
    %2873 = vmatprep.subr.mxu0 0.0
    %2874 = vmatpush2.msra.mxu0 0.0
    %2875 = vmatprep.subr.mxu0 0.0
    %2876 = vmatpush2.msra.mxu0 0.0
    %2877 = vmatprep.subr.mxu0 0.0
    %2878 = vmatpush2.msra.mxu0 0.0
    %2879 = vmatprep.subr.mxu0 0.0
    %2880 = vmatpush2.msra.mxu0 0.0
    %2881 = vmatprep.subr.mxu0 0.0
    %2882 = vmatpush2.msra.mxu0 0.0
    %2883 = vmatprep.subr.mxu0 0.0
    %2884 = vmatpush2.msra.mxu0 0.0
    %2885 = vmatprep.subr.mxu0 0.0
    %2886 = vmatpush2.msra.mxu0 0.0
    %2887 = vmatprep.subr.mxu0 0.0
    %2888 = vmatpush2.msra.mxu0 0.0
    %2889 = vmatprep.subr.mxu0 0.0
    %2890 = vmatpush2.msra.mxu0 0.0
    %2891 = vmatprep.subr.mxu0 0.0
    %2892 = vmatpush2.msra.mxu0 0.0
    %2893 = vmatprep.subr.mxu0 0.0
    %2894 = vmatpush2.msra.mxu0 0.0
    %2895 = vmatprep.subr.mxu0 0.0
    %2896 = vmatpush2.msra.mxu0 0.0
    %2897 = vmatprep.subr.mxu0 0.0
    %2898 = vmatpush2.msra.mxu0 0.0
    %2899 = vmatprep.subr.mxu0 0.0
    %2900 = vmatpush2.msra.mxu0 0.0
    %2901 = vmatprep.subr.mxu0 0.0
    %2902 = vmatpush2.msra.mxu0 0.0
    %2903 = vmatprep.subr.mxu0 0.0
    %2904 = vmatpush2.msra.mxu0 0.0
    %2905 = vmatprep.mubr.f32.mxu0 0.0
    %2906 = vmatmul.mubr.f32.gmra.mxu0 %v2839
    %v2907 = vpop.f32.mrf.mxu0
    %v2908 = vadd.f32 0.0, %v2907
    %v2909 = vpop.f32.mrf.mxu0
    %2910 = vdwg.mxu0
    %v2912 = vrot.slane %v2908, 7
    %v2914 = vadd.f32 %v153, %v2912
    %v2915 = vtanh.pop %v2914
    %v2917 = vrot.slane %v2837, 4
    %v2918 = vsel %vm172, %v2917, 0
    %2920 = vmatprep.subr.mxu0 0.0
    %2921 = vmatpush1.msra.mxu0 0.0
    %2922 = vmatprep.subr.mxu0 0.0
    %2923 = vmatpush1.msra.mxu0 0.0
    %2924 = vmatprep.subr.mxu0 0.0
    %2925 = vmatpush1.msra.mxu0 0.0
    %2926 = vmatprep.subr.mxu0 0.0
    %2927 = vmatpush1.msra.mxu0 0.0
    %2928 = vmatprep.subr.mxu0 0.0
    %2929 = vmatpush1.msra.mxu0 0.0
    %2930 = vmatprep.subr.mxu0 0.0
    %2931 = vmatpush1.msra.mxu0 0.0
    %2932 = vmatprep.subr.mxu0 0.0
    %2933 = vmatpush1.msra.mxu0 0.0
    %2934 = vmatprep.subr.mxu0 0.0
    %2935 = vmatpush1.msra.mxu0 0.0
    %2936 = vmatprep.subr.mxu0 0.0
    %2937 = vmatpush1.msra.mxu0 0.0
    %2938 = vmatprep.subr.mxu0 0.0
    %2939 = vmatpush1.msra.mxu0 0.0
    %2940 = vmatprep.subr.mxu0 0.0
    %2941 = vmatpush1.msra.mxu0 0.0
    %2942 = vmatprep.subr.mxu0 0.0
    %2943 = vmatpush1.msra.mxu0 0.0
    %2944 = vmatprep.subr.mxu0 0.0
    %2945 = vmatpush1.msra.mxu0 %v169
    %2946 = vmatprep.subr.mxu0 0.0
    %2947 = vmatpush1.msra.mxu0 %v168
    %2948 = vmatprep.subr.mxu0 0.0
    %2949 = vmatpush1.msra.mxu0 %v167
    %2950 = vmatprep.subr.mxu0 0.0
    %2951 = vmatpush1.msra.mxu0 %v166
    %2952 = vmatprep.subr.mxu0 0.0
    %2953 = vmatpush2.msra.mxu0 0.0
    %2954 = vmatprep.subr.mxu0 0.0
    %2955 = vmatpush2.msra.mxu0 0.0
    %2956 = vmatprep.subr.mxu0 0.0
    %2957 = vmatpush2.msra.mxu0 0.0
    %2958 = vmatprep.subr.mxu0 0.0
    %2959 = vmatpush2.msra.mxu0 0.0
    %2960 = vmatprep.subr.mxu0 0.0
    %2961 = vmatpush2.msra.mxu0 0.0
    %2962 = vmatprep.subr.mxu0 0.0
    %2963 = vmatpush2.msra.mxu0 0.0
    %2964 = vmatprep.subr.mxu0 0.0
    %2965 = vmatpush2.msra.mxu0 0.0
    %2966 = vmatprep.subr.mxu0 0.0
    %2967 = vmatpush2.msra.mxu0 0.0
    %2968 = vmatprep.subr.mxu0 0.0
    %2969 = vmatpush2.msra.mxu0 0.0
    %2970 = vmatprep.subr.mxu0 0.0
    %2971 = vmatpush2.msra.mxu0 0.0
    %2972 = vmatprep.subr.mxu0 0.0
    %2973 = vmatpush2.msra.mxu0 0.0
    %2974 = vmatprep.subr.mxu0 0.0
    %2975 = vmatpush2.msra.mxu0 0.0
    %2976 = vmatprep.subr.mxu0 0.0
    %2977 = vmatpush2.msra.mxu0 0.0
    %2978 = vmatprep.subr.mxu0 0.0
    %2979 = vmatpush2.msra.mxu0 0.0
    %2980 = vmatprep.subr.mxu0 0.0
    %2981 = vmatpush2.msra.mxu0 0.0
    %2982 = vmatprep.subr.mxu0 0.0
    %2983 = vmatpush2.msra.mxu0 0.0
    %2984 = vmatprep.mubr.f32.mxu0 0.0
    %2985 = vmatmul.mubr.f32.gmra.mxu0 %v2918
    %v2986 = vpop.f32.mrf.mxu0
    %v2987 = vadd.f32 0.0, %v2986
    %v2988 = vpop.f32.mrf.mxu0
    %2989 = vdwg.mxu0
    %v2991 = vrot.slane %v2987, 3
    %v2993 = vadd.f32 %v163, %v2991
    %v2994 = vtanh.pop %v2993
    %v2996 = vrot.slane %v2915, 1
    %v2997 = vsel %vm172, %v2996, 0
    %2999 = vmatprep.subr.mxu0 0.0
    %3000 = vmatpush1.msra.mxu0 0.0
    %3001 = vmatprep.subr.mxu0 0.0
    %3002 = vmatpush1.msra.mxu0 0.0
    %3003 = vmatprep.subr.mxu0 0.0
    %3004 = vmatpush1.msra.mxu0 0.0
    %3005 = vmatprep.subr.mxu0 0.0
    %3006 = vmatpush1.msra.mxu0 0.0
    %3007 = vmatprep.subr.mxu0 0.0
    %3008 = vmatpush1.msra.mxu0 0.0
    %3009 = vmatprep.subr.mxu0 0.0
    %3010 = vmatpush1.msra.mxu0 0.0
    %3011 = vmatprep.subr.mxu0 0.0
    %3012 = vmatpush1.msra.mxu0 0.0
    %3013 = vmatprep.subr.mxu0 0.0
    %3014 = vmatpush1.msra.mxu0 0.0
    %3015 = vmatprep.subr.mxu0 0.0
    %3016 = vmatpush1.msra.mxu0 0.0
    %3017 = vmatprep.subr.mxu0 0.0
    %3018 = vmatpush1.msra.mxu0 0.0
    %3019 = vmatprep.subr.mxu0 0.0
    %3020 = vmatpush1.msra.mxu0 0.0
    %3021 = vmatprep.subr.mxu0 0.0
    %3022 = vmatpush1.msra.mxu0 0.0
    %3023 = vmatprep.subr.mxu0 0.0
    %3024 = vmatpush1.msra.mxu0 %v169
    %3025 = vmatprep.subr.mxu0 0.0
    %3026 = vmatpush1.msra.mxu0 %v168
    %3027 = vmatprep.subr.mxu0 0.0
    %3028 = vmatpush1.msra.mxu0 %v167
    %3029 = vmatprep.subr.mxu0 0.0
    %3030 = vmatpush1.msra.mxu0 %v166
    %3031 = vmatprep.subr.mxu0 0.0
    %3032 = vmatpush2.msra.mxu0 0.0
    %3033 = vmatprep.subr.mxu0 0.0
    %3034 = vmatpush2.msra.mxu0 0.0
    %3035 = vmatprep.subr.mxu0 0.0
    %3036 = vmatpush2.msra.mxu0 0.0
    %3037 = vmatprep.subr.mxu0 0.0
    %3038 = vmatpush2.msra.mxu0 0.0
    %3039 = vmatprep.subr.mxu0 0.0
    %3040 = vmatpush2.msra.mxu0 0.0
    %3041 = vmatprep.subr.mxu0 0.0
    %3042 = vmatpush2.msra.mxu0 0.0
    %3043 = vmatprep.subr.mxu0 0.0
    %3044 = vmatpush2.msra.mxu0 0.0
    %3045 = vmatprep.subr.mxu0 0.0
    %3046 = vmatpush2.msra.mxu0 0.0
    %3047 = vmatprep.subr.mxu0 0.0
    %3048 = vmatpush2.msra.mxu0 0.0
    %3049 = vmatprep.subr.mxu0 0.0
    %3050 = vmatpush2.msra.mxu0 0.0
    %3051 = vmatprep.subr.mxu0 0.0
    %3052 = vmatpush2.msra.mxu0 0.0
    %3053 = vmatprep.subr.mxu0 0.0
    %3054 = vmatpush2.msra.mxu0 0.0
    %3055 = vmatprep.subr.mxu0 0.0
    %3056 = vmatpush2.msra.mxu0 0.0
    %3057 = vmatprep.subr.mxu0 0.0
    %3058 = vmatpush2.msra.mxu0 0.0
    %3059 = vmatprep.subr.mxu0 0.0
    %3060 = vmatpush2.msra.mxu0 0.0
    %3061 = vmatprep.subr.mxu0 0.0
    %3062 = vmatpush2.msra.mxu0 0.0
    %3063 = vmatprep.mubr.f32.mxu0 0.0
    %3064 = vmatmul.mubr.f32.gmra.mxu0 %v2997
    %v3065 = vpop.f32.mrf.mxu0
    %v3066 = vadd.f32 0.0, %v3065
    %v3067 = vpop.f32.mrf.mxu0
    %3068 = vdwg.mxu0
    %v3070 = vrot.slane %v3066, 6
    %v3072 = vadd.f32 %v153, %v3070
    %v3073 = vtanh.pop %v3072
    %v3075 = vrot.slane %v2994, 5
    %v3076 = vsel %vm172, %v3075, 0
    %3078 = vmatprep.subr.mxu0 0.0
    %3079 = vmatpush1.msra.mxu0 0.0
    %3080 = vmatprep.subr.mxu0 0.0
    %3081 = vmatpush1.msra.mxu0 0.0
    %3082 = vmatprep.subr.mxu0 0.0
    %3083 = vmatpush1.msra.mxu0 0.0
    %3084 = vmatprep.subr.mxu0 0.0
    %3085 = vmatpush1.msra.mxu0 0.0
    %3086 = vmatprep.subr.mxu0 0.0
    %3087 = vmatpush1.msra.mxu0 0.0
    %3088 = vmatprep.subr.mxu0 0.0
    %3089 = vmatpush1.msra.mxu0 0.0
    %3090 = vmatprep.subr.mxu0 0.0
    %3091 = vmatpush1.msra.mxu0 0.0
    %3092 = vmatprep.subr.mxu0 0.0
    %3093 = vmatpush1.msra.mxu0 0.0
    %3094 = vmatprep.subr.mxu0 0.0
    %3095 = vmatpush1.msra.mxu0 0.0
    %3096 = vmatprep.subr.mxu0 0.0
    %3097 = vmatpush1.msra.mxu0 0.0
    %3098 = vmatprep.subr.mxu0 0.0
    %3099 = vmatpush1.msra.mxu0 0.0
    %3100 = vmatprep.subr.mxu0 0.0
    %3101 = vmatpush1.msra.mxu0 0.0
    %3102 = vmatprep.subr.mxu0 0.0
    %3103 = vmatpush1.msra.mxu0 %v169
    %3104 = vmatprep.subr.mxu0 0.0
    %3105 = vmatpush1.msra.mxu0 %v168
    %3106 = vmatprep.subr.mxu0 0.0
    %3107 = vmatpush1.msra.mxu0 %v167
    %3108 = vmatprep.subr.mxu0 0.0
    %3109 = vmatpush1.msra.mxu0 %v166
    %3110 = vmatprep.subr.mxu0 0.0
    %3111 = vmatpush2.msra.mxu0 0.0
    %3112 = vmatprep.subr.mxu0 0.0
    %3113 = vmatpush2.msra.mxu0 0.0
    %3114 = vmatprep.subr.mxu0 0.0
    %3115 = vmatpush2.msra.mxu0 0.0
    %3116 = vmatprep.subr.mxu0 0.0
    %3117 = vmatpush2.msra.mxu0 0.0
    %3118 = vmatprep.subr.mxu0 0.0
    %3119 = vmatpush2.msra.mxu0 0.0
    %3120 = vmatprep.subr.mxu0 0.0
    %3121 = vmatpush2.msra.mxu0 0.0
    %3122 = vmatprep.subr.mxu0 0.0
    %3123 = vmatpush2.msra.mxu0 0.0
    %3124 = vmatprep.subr.mxu0 0.0
    %3125 = vmatpush2.msra.mxu0 0.0
    %3126 = vmatprep.subr.mxu0 0.0
    %3127 = vmatpush2.msra.mxu0 0.0
    %3128 = vmatprep.subr.mxu0 0.0
    %3129 = vmatpush2.msra.mxu0 0.0
    %3130 = vmatprep.subr.mxu0 0.0
    %3131 = vmatpush2.msra.mxu0 0.0
    %3132 = vmatprep.subr.mxu0 0.0
    %3133 = vmatpush2.msra.mxu0 0.0
    %3134 = vmatprep.subr.mxu0 0.0
    %3135 = vmatpush2.msra.mxu0 0.0
    %3136 = vmatprep.subr.mxu0 0.0
    %3137 = vmatpush2.msra.mxu0 0.0
    %3138 = vmatprep.subr.mxu0 0.0
    %3139 = vmatpush2.msra.mxu0 0.0
    %3140 = vmatprep.subr.mxu0 0.0
    %3141 = vmatpush2.msra.mxu0 0.0
    %3142 = vmatprep.mubr.f32.mxu0 0.0
    %3143 = vmatmul.mubr.f32.gmra.mxu0 %v3076
    %v3144 = vpop.f32.mrf.mxu0
    %v3145 = vadd.f32 0.0, %v3144
    %v3146 = vpop.f32.mrf.mxu0
    %3147 = vdwg.mxu0
    %v3149 = vrot.slane %v3145, 2
    %v3151 = vadd.f32 %v163, %v3149
    %v3152 = vtanh.pop %v3151
    %v3154 = vrot.slane %v3073, 2
    %v3155 = vsel %vm172, %v3154, 0
    %3157 = vmatprep.subr.mxu0 0.0
    %3158 = vmatpush1.msra.mxu0 0.0
    %3159 = vmatprep.subr.mxu0 0.0
    %3160 = vmatpush1.msra.mxu0 0.0
    %3161 = vmatprep.subr.mxu0 0.0
    %3162 = vmatpush1.msra.mxu0 0.0
    %3163 = vmatprep.subr.mxu0 0.0
    %3164 = vmatpush1.msra.mxu0 0.0
    %3165 = vmatprep.subr.mxu0 0.0
    %3166 = vmatpush1.msra.mxu0 0.0
    %3167 = vmatprep.subr.mxu0 0.0
    %3168 = vmatpush1.msra.mxu0 0.0
    %3169 = vmatprep.subr.mxu0 0.0
    %3170 = vmatpush1.msra.mxu0 0.0
    %3171 = vmatprep.subr.mxu0 0.0
    %3172 = vmatpush1.msra.mxu0 0.0
    %3173 = vmatprep.subr.mxu0 0.0
    %3174 = vmatpush1.msra.mxu0 0.0
    %3175 = vmatprep.subr.mxu0 0.0
    %3176 = vmatpush1.msra.mxu0 0.0
    %3177 = vmatprep.subr.mxu0 0.0
    %3178 = vmatpush1.msra.mxu0 0.0
    %3179 = vmatprep.subr.mxu0 0.0
    %3180 = vmatpush1.msra.mxu0 0.0
    %3181 = vmatprep.subr.mxu0 0.0
    %3182 = vmatpush1.msra.mxu0 %v169
    %3183 = vmatprep.subr.mxu0 0.0
    %3184 = vmatpush1.msra.mxu0 %v168
    %3185 = vmatprep.subr.mxu0 0.0
    %3186 = vmatpush1.msra.mxu0 %v167
    %3187 = vmatprep.subr.mxu0 0.0
    %3188 = vmatpush1.msra.mxu0 %v166
    %3189 = vmatprep.subr.mxu0 0.0
    %3190 = vmatpush2.msra.mxu0 0.0
    %3191 = vmatprep.subr.mxu0 0.0
    %3192 = vmatpush2.msra.mxu0 0.0
    %3193 = vmatprep.subr.mxu0 0.0
    %3194 = vmatpush2.msra.mxu0 0.0
    %3195 = vmatprep.subr.mxu0 0.0
    %3196 = vmatpush2.msra.mxu0 0.0
    %3197 = vmatprep.subr.mxu0 0.0
    %3198 = vmatpush2.msra.mxu0 0.0
    %3199 = vmatprep.subr.mxu0 0.0
    %3200 = vmatpush2.msra.mxu0 0.0
    %3201 = vmatprep.subr.mxu0 0.0
    %3202 = vmatpush2.msra.mxu0 0.0
    %3203 = vmatprep.subr.mxu0 0.0
    %3204 = vmatpush2.msra.mxu0 0.0
    %3205 = vmatprep.subr.mxu0 0.0
    %3206 = vmatpush2.msra.mxu0 0.0
    %3207 = vmatprep.subr.mxu0 0.0
    %3208 = vmatpush2.msra.mxu0 0.0
    %3209 = vmatprep.subr.mxu0 0.0
    %3210 = vmatpush2.msra.mxu0 0.0
    %3211 = vmatprep.subr.mxu0 0.0
    %3212 = vmatpush2.msra.mxu0 0.0
    %3213 = vmatprep.subr.mxu0 0.0
    %3214 = vmatpush2.msra.mxu0 0.0
    %3215 = vmatprep.subr.mxu0 0.0
    %3216 = vmatpush2.msra.mxu0 0.0
    %3217 = vmatprep.subr.mxu0 0.0
    %3218 = vmatpush2.msra.mxu0 0.0
    %3219 = vmatprep.subr.mxu0 0.0
    %3220 = vmatpush2.msra.mxu0 0.0
    %3221 = vmatprep.mubr.f32.mxu0 0.0
    %3222 = vmatmul.mubr.f32.gmra.mxu0 %v3155
    %v3223 = vpop.f32.mrf.mxu0
    %v3224 = vadd.f32 0.0, %v3223
    %v3225 = vpop.f32.mrf.mxu0
    %3226 = vdwg.mxu0
    %v3228 = vrot.slane %v3224, 5
    %v3230 = vadd.f32 %v153, %v3228
    %v3231 = vtanh.pop %v3230
    %v3233 = vrot.slane %v3152, 6
    %v3234 = vsel %vm172, %v3233, 0
    %3236 = vmatprep.subr.mxu0 0.0
    %3237 = vmatpush1.msra.mxu0 0.0
    %3238 = vmatprep.subr.mxu0 0.0
    %3239 = vmatpush1.msra.mxu0 0.0
    %3240 = vmatprep.subr.mxu0 0.0
    %3241 = vmatpush1.msra.mxu0 0.0
    %3242 = vmatprep.subr.mxu0 0.0
    %3243 = vmatpush1.msra.mxu0 0.0
    %3244 = vmatprep.subr.mxu0 0.0
    %3245 = vmatpush1.msra.mxu0 0.0
    %3246 = vmatprep.subr.mxu0 0.0
    %3247 = vmatpush1.msra.mxu0 0.0
    %3248 = vmatprep.subr.mxu0 0.0
    %3249 = vmatpush1.msra.mxu0 0.0
    %3250 = vmatprep.subr.mxu0 0.0
    %3251 = vmatpush1.msra.mxu0 0.0
    %3252 = vmatprep.subr.mxu0 0.0
    %3253 = vmatpush1.msra.mxu0 0.0
    %3254 = vmatprep.subr.mxu0 0.0
    %3255 = vmatpush1.msra.mxu0 0.0
    %3256 = vmatprep.subr.mxu0 0.0
    %3257 = vmatpush1.msra.mxu0 0.0
    %3258 = vmatprep.subr.mxu0 0.0
    %3259 = vmatpush1.msra.mxu0 0.0
    %3260 = vmatprep.subr.mxu0 0.0
    %3261 = vmatpush1.msra.mxu0 %v169
    %3262 = vmatprep.subr.mxu0 0.0
    %3263 = vmatpush1.msra.mxu0 %v168
    %3264 = vmatprep.subr.mxu0 0.0
    %3265 = vmatpush1.msra.mxu0 %v167
    %3266 = vmatprep.subr.mxu0 0.0
    %3267 = vmatpush1.msra.mxu0 %v166
    %3268 = vmatprep.subr.mxu0 0.0
    %3269 = vmatpush2.msra.mxu0 0.0
    %3270 = vmatprep.subr.mxu0 0.0
    %3271 = vmatpush2.msra.mxu0 0.0
    %3272 = vmatprep.subr.mxu0 0.0
    %3273 = vmatpush2.msra.mxu0 0.0
    %3274 = vmatprep.subr.mxu0 0.0
    %3275 = vmatpush2.msra.mxu0 0.0
    %3276 = vmatprep.subr.mxu0 0.0
    %3277 = vmatpush2.msra.mxu0 0.0
    %3278 = vmatprep.subr.mxu0 0.0
    %3279 = vmatpush2.msra.mxu0 0.0
    %3280 = vmatprep.subr.mxu0 0.0
    %3281 = vmatpush2.msra.mxu0 0.0
    %3282 = vmatprep.subr.mxu0 0.0
    %3283 = vmatpush2.msra.mxu0 0.0
    %3284 = vmatprep.subr.mxu0 0.0
    %3285 = vmatpush2.msra.mxu0 0.0
    %3286 = vmatprep.subr.mxu0 0.0
    %3287 = vmatpush2.msra.mxu0 0.0
    %3288 = vmatprep.subr.mxu0 0.0
    %3289 = vmatpush2.msra.mxu0 0.0
    %3290 = vmatprep.subr.mxu0 0.0
    %3291 = vmatpush2.msra.mxu0 0.0
    %3292 = vmatprep.subr.mxu0 0.0
    %3293 = vmatpush2.msra.mxu0 0.0
    %3294 = vmatprep.subr.mxu0 0.0
    %3295 = vmatpush2.msra.mxu0 0.0
    %3296 = vmatprep.subr.mxu0 0.0
    %3297 = vmatpush2.msra.mxu0 0.0
    %3298 = vmatprep.subr.mxu0 0.0
    %3299 = vmatpush2.msra.mxu0 0.0
    %3300 = vmatprep.mubr.f32.mxu0 0.0
    %3301 = vmatmul.mubr.f32.gmra.mxu0 %v3234
    %v3302 = vpop.f32.mrf.mxu0
    %v3303 = vadd.f32 0.0, %v3302
    %v3304 = vpop.f32.mrf.mxu0
    %3305 = vdwg.mxu0
    %v3307 = vrot.slane %v3303, 1
    %v3309 = vadd.f32 %v163, %v3307
    %v3310 = vtanh.pop %v3309
    %vm3311 = vcmask 257027
    %3312 = vst.msk [vmem:[#allocation2 - $0x3] sm:$0x8] %vm3311, %v3231
    %vm3313 = vcmask 261127
    %3314 = vst.msk [vmem:[#allocation2 - $0x6] sm:$0x80] %vm3313, %v3310
    // Predicated region
    $region30: #{tpu_custom_call.1} parent=1 // pred_check
      %p3315 = pneg %p24
    $region31: #{tpu_custom_call.1} parent=1 // pred_check_branch
      %3317 = sbr.rel (%p3315) target = $region33
    $region32: #{tpu_custom_call.1} parent=1 // pred_region
      %v3318 = vld [vmem:[#allocation2] sm:$0x3]
      %v3319 = vld [vmem:[%s4] sm:$0xff]
      %v3320 = vld [vmem:[%s4 + $0x8] sm:$0xff]
      %v3321 = vld [vmem:[%s4 + $0x10] sm:$0xff]
      %v3322 = vld [vmem:[%s4 + $0x18] sm:$0xff]
      %v3323 = vld [vmem:[%s5] sm:$0x1]
      %v3325 = vlaneseq
      %v3326 = vshrl.u32 %v3325, 7
      %v3327 = vsub.s32 0, %v3326
      %v3328 = vrot.slane %v3323, %v3327
      %v3331 = vsel %vm172, %v3318, 0
      %3333 = vmatprep.subr.mxu0 0.0
      %3334 = vmatpush1.msra.mxu0 0.0
      %3335 = vmatprep.subr.mxu0 0.0
      %3336 = vmatpush1.msra.mxu0 0.0
      %3337 = vmatprep.subr.mxu0 0.0
      %3338 = vmatpush1.msra.mxu0 0.0
      %3339 = vmatprep.subr.mxu0 0.0
      %3340 = vmatpush1.msra.mxu0 0.0
      %3341 = vmatprep.subr.mxu0 0.0
      %3342 = vmatpush1.msra.mxu0 0.0
      %3343 = vmatprep.subr.mxu0 0.0
      %3344 = vmatpush1.msra.mxu0 0.0
      %3345 = vmatprep.subr.mxu0 0.0
      %3346 = vmatpush1.msra.mxu0 0.0
      %3347 = vmatprep.subr.mxu0 0.0
      %3348 = vmatpush1.msra.mxu0 0.0
      %3349 = vmatprep.subr.mxu0 0.0
      %3350 = vmatpush1.msra.mxu0 0.0
      %3351 = vmatprep.subr.mxu0 0.0
      %3352 = vmatpush1.msra.mxu0 0.0
      %3353 = vmatprep.subr.mxu0 0.0
      %3354 = vmatpush1.msra.mxu0 0.0
      %3355 = vmatprep.subr.mxu0 0.0
      %3356 = vmatpush1.msra.mxu0 0.0
      %3357 = vmatprep.subr.mxu0 0.0
      %3358 = vmatpush1.msra.mxu0 %v3322
      %3359 = vmatprep.subr.mxu0 0.0
      %3360 = vmatpush1.msra.mxu0 %v3321
      %3361 = vmatprep.subr.mxu0 0.0
      %3362 = vmatpush1.msra.mxu0 %v3320
      %3363 = vmatprep.subr.mxu0 0.0
      %3364 = vmatpush1.msra.mxu0 %v3319
      %3365 = vmatprep.subr.mxu0 0.0
      %3366 = vmatpush2.msra.mxu0 0.0
      %3367 = vmatprep.subr.mxu0 0.0
      %3368 = vmatpush2.msra.mxu0 0.0
      %3369 = vmatprep.subr.mxu0 0.0
      %3370 = vmatpush2.msra.mxu0 0.0
      %3371 = vmatprep.subr.mxu0 0.0
      %3372 = vmatpush2.msra.mxu0 0.0
      %3373 = vmatprep.subr.mxu0 0.0
      %3374 = vmatpush2.msra.mxu0 0.0
      %3375 = vmatprep.subr.mxu0 0.0
      %3376 = vmatpush2.msra.mxu0 0.0
      %3377 = vmatprep.subr.mxu0 0.0
      %3378 = vmatpush2.msra.mxu0 0.0
      %3379 = vmatprep.subr.mxu0 0.0
      %3380 = vmatpush2.msra.mxu0 0.0
      %3381 = vmatprep.subr.mxu0 0.0
      %3382 = vmatpush2.msra.mxu0 0.0
      %3383 = vmatprep.subr.mxu0 0.0
      %3384 = vmatpush2.msra.mxu0 0.0
      %3385 = vmatprep.subr.mxu0 0.0
      %3386 = vmatpush2.msra.mxu0 0.0
      %3387 = vmatprep.subr.mxu0 0.0
      %3388 = vmatpush2.msra.mxu0 0.0
      %3389 = vmatprep.subr.mxu0 0.0
      %3390 = vmatpush2.msra.mxu0 0.0
      %3391 = vmatprep.subr.mxu0 0.0
      %3392 = vmatpush2.msra.mxu0 0.0
      %3393 = vmatprep.subr.mxu0 0.0
      %3394 = vmatpush2.msra.mxu0 0.0
      %3395 = vmatprep.subr.mxu0 0.0
      %3396 = vmatpush2.msra.mxu0 0.0
      %3397 = vmatprep.mubr.f32.mxu0 0.0
      %3398 = vmatmul.mubr.f32.gmra.mxu0 %v3331
      %v3399 = vpop.f32.mrf.mxu0
      %v3400 = vadd.f32 %v3328, %v3399
      %v3401 = vpop.f32.mrf.mxu0
      %3402 = vdwg.mxu0
      %vm3403 = vcmask 41984
      %3404 = vst.msk [vmem:[#allocation3] sm:$0x3] %vm3403, %v3400
    $region33: #{tpu_custom_call.1} parent=1 // pred_fallthru
      _
    // Predicated region
    $region34: #{tpu_custom_call.1} parent=1 // pred_check
      _
    $region35: #{tpu_custom_call.1} parent=1 // pred_check_branch
      %3406 = sbr.rel (0) target = $region37
    $region36: #{tpu_custom_call.1} parent=1 // pred_region
      %s3408 = ssub.s32 32, 32
      %3409 = vsyncadd [#allocation4], %s3408
      %s3411 = sshll.u32 [#allocation3], 4
      %s3412 = int_to_ptr.vmem [resolvable:$true] %s3411
      %3414 = dma.vmem_to_hbm [thread:$0]  %s3412, 32, %s6, [#allocation4]
    $region37: #{tpu_custom_call.1} parent=1 // pred_fallthru
      _
    // Predicated region
    $region38: #{tpu_custom_call.1} parent=1 // pred_check
      _
    $region39: #{tpu_custom_call.1} parent=1 // pred_check_branch
      %3416 = sbr.rel (0) target = $region41
    $region40: #{tpu_custom_call.1} parent=1 // pred_region
      %3417 = dma.done [#allocation4], 32
    $region41: #{tpu_custom_call.1} parent=1 // pred_fallthru
      _
    %3418 = vsyncpa [#allocation4], 1

// kernel: tpu_custom_call.1
$region0: #{tpu_custom_call.1}
  #allocation0 [shape = 'u32[]', space=smem, size = 0x4, offset = 0x4, fixed_abs, tag = 'smem constant byte address 0x4 - core index']
  #allocation1 [shape = 'u32[144,128]{1,0:T(1,128)}', space=vmem, size = 0x12000, scoped, tag = 'internal scratch']
  #allocation2 [shape = 'f32[2,32]{1,0:T(2,128)}', space=vmem, size = 0x400, scoped, tag = 'scratch operand']
  %s0 = inlined_call_operand.vmem [shape: f32[2,20,4], index: 0, kind: input, shape index: {}]
  %s1 = inlined_call_operand.vmem [shape: f32[4,32], index: 1, kind: input, shape index: {}]
  %s2 = inlined_call_operand.vmem [shape: f32[32,32], index: 2, kind: input, shape index: {}]
  %s3 = inlined_call_operand.vmem [shape: f32[1,32], index: 3, kind: input, shape index: {}]
  %s4 = inlined_call_operand.vmem [shape: f32[32,6], index: 4, kind: input, shape index: {}]
  %s5 = inlined_call_operand.vmem [shape: f32[1,6], index: 5, kind: input, shape index: {}]
  %s6 = inlined_call_operand.hbm [shape: f32[2,6], index: 6, kind: output, shape index: {}]
  %s7 = sld [smem:[#allocation0]]
  $region42: #{tpu_custom_call.1} parent=0
    _
  %s9 = ssub.s32 1, %s7
  %s10 = scalar_select 0, %s9, %s7
  $region1: #{tpu_custom_call.1} parent=0
    #allocation3 [shape = 'u8[1024]{0}', space=vmem, size = 0x400, scoped, tag = 'output window, operand 0, single buffered']
    #allocation4 [shape = 's32[1]{0}', space=sflag, size = 0x4, scoped, tag = 'scoped memory for tpu_custom_call.1']
    %11 = vsyncpa [#allocation4], 0
    // Predicated region
    $region2: #{tpu_custom_call.1} parent=1 // pred_check
      _
    $region3: #{tpu_custom_call.1} parent=1 // pred_check_branch
      %13 = sbr.rel (0) target = $region5
    $region4: #{tpu_custom_call.1} parent=1 // pred_region
      _
    $region5: #{tpu_custom_call.1} parent=1 // pred_fallthru
      _
    // Predicated region
    $region6: #{tpu_custom_call.1} parent=1 // pred_check
      _
    $region7: #{tpu_custom_call.1} parent=1 // pred_check_branch
      %15 = sbr.rel (0) target = $region9
    $region8: #{tpu_custom_call.1} parent=1 // pred_region
      _
    $region9: #{tpu_custom_call.1} parent=1 // pred_fallthru
      _
    // Predicated region
    $region10: #{tpu_custom_call.1} parent=1 // pred_check
      _
    $region11: #{tpu_custom_call.1} parent=1 // pred_check_branch
      %17 = sbr.rel (0) target = $region13
    $region12: #{tpu_custom_call.1} parent=1 // pred_region
      _
    $region13: #{tpu_custom_call.1} parent=1 // pred_fallthru
      _
    // Predicated region
    $region14: #{tpu_custom_call.1} parent=1 // pred_check
      _
    $region15: #{tpu_custom_call.1} parent=1 // pred_check_branch
      %19 = sbr.rel (0) target = $region17
    $region16: #{tpu_custom_call.1} parent=1 // pred_region
      _
    $region17: #{tpu_custom_call.1} parent=1 // pred_fallthru
      _
    // Predicated region
    $region18: #{tpu_custom_call.1} parent=1 // pred_check
      _
    $region19: #{tpu_custom_call.1} parent=1 // pred_check_branch
      %21 = sbr.rel (0) target = $region21
    $region20: #{tpu_custom_call.1} parent=1 // pred_region
      _
    $region21: #{tpu_custom_call.1} parent=1 // pred_fallthru
      _
    // Predicated region
    $region22: #{tpu_custom_call.1} parent=1 // pred_check
      _
    $region23: #{tpu_custom_call.1} parent=1 // pred_check_branch
      %23 = sbr.rel (0) target = $region25
    $region24: #{tpu_custom_call.1} parent=1 // pred_region
      _
    $region25: #{tpu_custom_call.1} parent=1 // pred_fallthru
      _
    %p24 = scmp.eq.s32.totalorder 0, 0
    // Predicated region
    $region26: #{tpu_custom_call.1} parent=1 // pred_check
      %p25 = pneg %p24
    $region27: #{tpu_custom_call.1} parent=1 // pred_check_branch
      %27 = sbr.rel (%p25) target = $region29
    $region28: #{tpu_custom_call.1} parent=1 // pred_region
      %vm28 = vcmask 254976
      %29 = vst.msk [vmem:[#allocation2] sm:$0x3] %vm28, 0.0
      %vm30 = vcmask 41984
      %31 = vst.msk [vmem:[#allocation3] sm:$0x3] %vm30, 0.0
    $region29: #{tpu_custom_call.1} parent=1 // pred_fallthru
      _
    %v32 = vld [vmem:[%s0] sm:$0xff]
    %v33 = vld [vmem:[%s0 + $0x8] sm:$0xff]
    %v34 = vld [vmem:[%s0 + $0x10] sm:$0xf]
    %v35 = vld [vmem:[%s0 + $0x18] sm:$0xff]
    %v36 = vld [vmem:[%s0 + $0x20] sm:$0xff]
    %v37 = vld [vmem:[%s0 + $0x28] sm:$0xf]
    %v44 = vcombine.high %v32, %v32
    %v45 = vcombine.high %v33, %v33
    %v46 = vcombine.high %v35, %v35
    %v47 = vcombine.high %v36, %v36
    %v48 = vld [vmem:[%s1] sm:$0xf]
    %v49 = vld [vmem:[%s3] sm:$0x1]
    %v51 = vlaneseq
    %v52 = vshrl.u32 %v51, 7
    %v53 = vsub.s32 0, %v52
    %v54 = vrot.slane %v49, %v53
    %v56 = vcombine.low %v32, %v44
    %v57 = vcombine.low %v33, %v45
    %v58 = vcombine.low %v34, %v35
    %v59 = vcombine.low %v46, %v36
    %v60 = vcombine.low %v47, %v37
    %vm61 = vcmask 31744
    %v62 = vsel %vm61, %v56, 0
    %v64 = vsel %vm61, %v57, 0
    %v66 = vsel %vm61, %v58, 0
    %v68 = vsel %vm61, %v59, 0
    %v70 = vsel %vm61, %v60, 0
    %vm72 = vcmask 1043456
    %v74 = vsel %vm72, %v48, 0
    %76 = vmatprep.subr.mxu0 0.0
    %77 = vmatpush1.msra.mxu0 0.0
    %78 = vmatprep.subr.mxu0 0.0
    %79 = vmatpush1.msra.mxu0 0.0
    %80 = vmatprep.subr.mxu0 0.0
    %81 = vmatpush1.msra.mxu0 0.0
    %82 = vmatprep.subr.mxu0 0.0
    %83 = vmatpush1.msra.mxu0 0.0
    %84 = vmatprep.subr.mxu0 0.0
    %85 = vmatpush1.msra.mxu0 0.0
    %86 = vmatprep.subr.mxu0 0.0
    %87 = vmatpush1.msra.mxu0 0.0
    %88 = vmatprep.subr.mxu0 0.0
    %89 = vmatpush1.msra.mxu0 0.0
    %90 = vmatprep.subr.mxu0 0.0
    %91 = vmatpush1.msra.mxu0 0.0
    %92 = vmatprep.subr.mxu0 0.0
    %93 = vmatpush1.msra.mxu0 0.0
    %94 = vmatprep.subr.mxu0 0.0
    %95 = vmatpush1.msra.mxu0 0.0
    %96 = vmatprep.subr.mxu0 0.0
    %97 = vmatpush1.msra.mxu0 0.0
    %98 = vmatprep.subr.mxu0 0.0
    %99 = vmatpush1.msra.mxu0 0.0
    %100 = vmatprep.subr.mxu0 0.0
    %101 = vmatpush1.msra.mxu0 0.0
    %102 = vmatprep.subr.mxu0 0.0
    %103 = vmatpush1.msra.mxu0 0.0
    %104 = vmatprep.subr.mxu0 0.0
    %105 = vmatpush1.msra.mxu0 0.0
    %106 = vmatprep.subr.mxu0 0.0
    %107 = vmatpush1.msra.mxu0 %v74
    %108 = vmatprep.subr.mxu0 0.0
    %109 = vmatpush2.msra.mxu0 0.0
    %110 = vmatprep.subr.mxu0 0.0
    %111 = vmatpush2.msra.mxu0 0.0
    %112 = vmatprep.subr.mxu0 0.0
    %113 = vmatpush2.msra.mxu0 0.0
    %114 = vmatprep.subr.mxu0 0.0
    %115 = vmatpush2.msra.mxu0 0.0
    %116 = vmatprep.subr.mxu0 0.0
    %117 = vmatpush2.msra.mxu0 0.0
    %118 = vmatprep.subr.mxu0 0.0
    %119 = vmatpush2.msra.mxu0 0.0
    %120 = vmatprep.subr.mxu0 0.0
    %121 = vmatpush2.msra.mxu0 0.0
    %122 = vmatprep.subr.mxu0 0.0
    %123 = vmatpush2.msra.mxu0 0.0
    %124 = vmatprep.subr.mxu0 0.0
    %125 = vmatpush2.msra.mxu0 0.0
    %126 = vmatprep.subr.mxu0 0.0
    %127 = vmatpush2.msra.mxu0 0.0
    %128 = vmatprep.subr.mxu0 0.0
    %129 = vmatpush2.msra.mxu0 0.0
    %130 = vmatprep.subr.mxu0 0.0
    %131 = vmatpush2.msra.mxu0 0.0
    %132 = vmatprep.subr.mxu0 0.0
    %133 = vmatpush2.msra.mxu0 0.0
    %134 = vmatprep.subr.mxu0 0.0
    %135 = vmatpush2.msra.mxu0 0.0
    %136 = vmatprep.subr.mxu0 0.0
    %137 = vmatpush2.msra.mxu0 0.0
    %138 = vmatprep.subr.mxu0 0.0
    %139 = vmatpush2.msra.mxu0 0.0
    %140 = vmatprep.mubr.f32.mxu0 0.0
    %141 = vmatmul.mubr.f32.gmra.mxu0 %v62
    %v142 = vpop.f32.mrf.mxu0
    %v143 = vadd.f32 %v54, %v142
    %v144 = vpop.f32.mrf.mxu0
    %145 = vmatprep.mubr.f32.mxu0 0.0
    %146 = vmatmul.mubr.f32.gmra.mxu0 %v64
    %v147 = vpop.f32.mrf.mxu0
    %v148 = vadd.f32 %v54, %v147
    %v149 = vpop.f32.mrf.mxu0
    %150 = vmatprep.mubr.f32.mxu0 0.0
    %151 = vmatmul.mubr.f32.gmra.mxu0 %v66
    %v152 = vpop.f32.mrf.mxu0
    %v153 = vadd.f32 %v54, %v152
    %v154 = vpop.f32.mrf.mxu0
    %155 = vmatprep.mubr.f32.mxu0 0.0
    %156 = vmatmul.mubr.f32.gmra.mxu0 %v68
    %v157 = vpop.f32.mrf.mxu0
    %v158 = vadd.f32 %v54, %v157
    %v159 = vpop.f32.mrf.mxu0
    %160 = vmatprep.mubr.f32.mxu0 0.0
    %161 = vmatmul.mubr.f32.gmra.mxu0 %v70
    %v162 = vpop.f32.mrf.mxu0
    %v163 = vadd.f32 %v54, %v162
    %v164 = vpop.f32.mrf.mxu0
    %165 = vdwg.mxu0
    %v166 = vld [vmem:[%s2] sm:$0xff]
    %v167 = vld [vmem:[%s2 + $0x8] sm:$0xff]
    %v168 = vld [vmem:[%s2 + $0x10] sm:$0xff]
    %v169 = vld [vmem:[%s2 + $0x18] sm:$0xff]
    %v170 = vld [vmem:[#allocation2] sm:$0x1]
    %v171 = vld [vmem:[#allocation2 + $0x1] sm:$0x1]
    %vm172 = vcmask 261120
    %v174 = vsel %vm172, %v170, 0
    %176 = vmatprep.subr.mxu0 0.0
    %177 = vmatpush1.msra.mxu0 0.0
    %178 = vmatprep.subr.mxu0 0.0
    %179 = vmatpush1.msra.mxu0 0.0
    %180 = vmatprep.subr.mxu0 0.0
    %181 = vmatpush1.msra.mxu0 0.0
    %182 = vmatprep.subr.mxu0 0.0
    %183 = vmatpush1.msra.mxu0 0.0
    %184 = vmatprep.subr.mxu0 0.0
    %185 = vmatpush1.msra.mxu0 0.0
    %186 = vmatprep.subr.mxu0 0.0
    %187 = vmatpush1.msra.mxu0 0.0
    %188 = vmatprep.subr.mxu0 0.0
    %189 = vmatpush1.msra.mxu0 0.0
    %190 = vmatprep.subr.mxu0 0.0
    %191 = vmatpush1.msra.mxu0 0.0
    %192 = vmatprep.subr.mxu0 0.0
    %193 = vmatpush1.msra.mxu0 0.0
    %194 = vmatprep.subr.mxu0 0.0
    %195 = vmatpush1.msra.mxu0 0.0
    %196 = vmatprep.subr.mxu0 0.0
    %197 = vmatpush1.msra.mxu0 0.0
    %198 = vmatprep.subr.mxu0 0.0
    %199 = vmatpush1.msra.mxu0 0.0
    %200 = vmatprep.subr.mxu0 0.0
    %201 = vmatpush1.msra.mxu0 %v169
    %202 = vmatprep.subr.mxu0 0.0
    %203 = vmatpush1.msra.mxu0 %v168
    %204 = vmatprep.subr.mxu0 0.0
    %205 = vmatpush1.msra.mxu0 %v167
    %206 = vmatprep.subr.mxu0 0.0
    %207 = vmatpush1.msra.mxu0 %v166
    %208 = vmatprep.subr.mxu0 0.0
    %209 = vmatpush2.msra.mxu0 0.0
    %210 = vmatprep.subr.mxu0 0.0
    %211 = vmatpush2.msra.mxu0 0.0
    %212 = vmatprep.subr.mxu0 0.0
    %213 = vmatpush2.msra.mxu0 0.0
    %214 = vmatprep.subr.mxu0 0.0
    %215 = vmatpush2.msra.mxu0 0.0
    %216 = vmatprep.subr.mxu0 0.0
    %217 = vmatpush2.msra.mxu0 0.0
    %218 = vmatprep.subr.mxu0 0.0
    %219 = vmatpush2.msra.mxu0 0.0
    %220 = vmatprep.subr.mxu0 0.0
    %221 = vmatpush2.msra.mxu0 0.0
    %222 = vmatprep.subr.mxu0 0.0
    %223 = vmatpush2.msra.mxu0 0.0
    %224 = vmatprep.subr.mxu0 0.0
    %225 = vmatpush2.msra.mxu0 0.0
    %226 = vmatprep.subr.mxu0 0.0
    %227 = vmatpush2.msra.mxu0 0.0
    %228 = vmatprep.subr.mxu0 0.0
    %229 = vmatpush2.msra.mxu0 0.0
    %230 = vmatprep.subr.mxu0 0.0
    %231 = vmatpush2.msra.mxu0 0.0
    %232 = vmatprep.subr.mxu0 0.0
    %233 = vmatpush2.msra.mxu0 0.0
    %234 = vmatprep.subr.mxu0 0.0
    %235 = vmatpush2.msra.mxu0 0.0
    %236 = vmatprep.subr.mxu0 0.0
    %237 = vmatpush2.msra.mxu0 0.0
    %238 = vmatprep.subr.mxu0 0.0
    %239 = vmatpush2.msra.mxu0 0.0
    %240 = vmatprep.mubr.f32.mxu0 0.0
    %241 = vmatmul.mubr.f32.gmra.mxu0 %v174
    %v242 = vpop.f32.mrf.mxu0
    %v243 = vadd.f32 0.0, %v242
    %v244 = vpop.f32.mrf.mxu0
    %245 = vdwg.mxu0
    %v246 = vadd.f32 %v143, %v243
    %v247 = vtanh.pop %v246
    %v249 = vsel %vm172, %v171, 0
    %251 = vmatprep.subr.mxu0 0.0
    %252 = vmatpush1.msra.mxu0 0.0
    %253 = vmatprep.subr.mxu0 0.0
    %254 = vmatpush1.msra.mxu0 0.0
    %255 = vmatprep.subr.mxu0 0.0
    %256 = vmatpush1.msra.mxu0 0.0
    %257 = vmatprep.subr.mxu0 0.0
    %258 = vmatpush1.msra.mxu0 0.0
    %259 = vmatprep.subr.mxu0 0.0
    %260 = vmatpush1.msra.mxu0 0.0
    %261 = vmatprep.subr.mxu0 0.0
    %262 = vmatpush1.msra.mxu0 0.0
    %263 = vmatprep.subr.mxu0 0.0
    %264 = vmatpush1.msra.mxu0 0.0
    %265 = vmatprep.subr.mxu0 0.0
    %266 = vmatpush1.msra.mxu0 0.0
    %267 = vmatprep.subr.mxu0 0.0
    %268 = vmatpush1.msra.mxu0 0.0
    %269 = vmatprep.subr.mxu0 0.0
    %270 = vmatpush1.msra.mxu0 0.0
    %271 = vmatprep.subr.mxu0 0.0
    %272 = vmatpush1.msra.mxu0 0.0
    %273 = vmatprep.subr.mxu0 0.0
    %274 = vmatpush1.msra.mxu0 0.0
    %275 = vmatprep.subr.mxu0 0.0
    %276 = vmatpush1.msra.mxu0 %v169
    %277 = vmatprep.subr.mxu0 0.0
    %278 = vmatpush1.msra.mxu0 %v168
    %279 = vmatprep.subr.mxu0 0.0
    %280 = vmatpush1.msra.mxu0 %v167
    %281 = vmatprep.subr.mxu0 0.0
    %282 = vmatpush1.msra.mxu0 %v166
    %283 = vmatprep.subr.mxu0 0.0
    %284 = vmatpush2.msra.mxu0 0.0
    %285 = vmatprep.subr.mxu0 0.0
    %286 = vmatpush2.msra.mxu0 0.0
    %287 = vmatprep.subr.mxu0 0.0
    %288 = vmatpush2.msra.mxu0 0.0
    %289 = vmatprep.subr.mxu0 0.0
    %290 = vmatpush2.msra.mxu0 0.0
    %291 = vmatprep.subr.mxu0 0.0
    %292 = vmatpush2.msra.mxu0 0.0
    %293 = vmatprep.subr.mxu0 0.0
    %294 = vmatpush2.msra.mxu0 0.0
    %295 = vmatprep.subr.mxu0 0.0
    %296 = vmatpush2.msra.mxu0 0.0
    %297 = vmatprep.subr.mxu0 0.0
    %298 = vmatpush2.msra.mxu0 0.0
    %299 = vmatprep.subr.mxu0 0.0
    %300 = vmatpush2.msra.mxu0 0.0
    %301 = vmatprep.subr.mxu0 0.0
    %302 = vmatpush2.msra.mxu0 0.0
    %303 = vmatprep.subr.mxu0 0.0
    %304 = vmatpush2.msra.mxu0 0.0
    %305 = vmatprep.subr.mxu0 0.0
    %306 = vmatpush2.msra.mxu0 0.0
    %307 = vmatprep.subr.mxu0 0.0
    %308 = vmatpush2.msra.mxu0 0.0
    %309 = vmatprep.subr.mxu0 0.0
    %310 = vmatpush2.msra.mxu0 0.0
    %311 = vmatprep.subr.mxu0 0.0
    %312 = vmatpush2.msra.mxu0 0.0
    %313 = vmatprep.subr.mxu0 0.0
    %314 = vmatpush2.msra.mxu0 0.0
    %315 = vmatprep.mubr.f32.mxu0 0.0
    %316 = vmatmul.mubr.f32.gmra.mxu0 %v249
    %v317 = vpop.f32.mrf.mxu0
    %v318 = vadd.f32 0.0, %v317
    %v319 = vpop.f32.mrf.mxu0
    %320 = vdwg.mxu0
    %v322 = vrot.slane %v318, 4
    %v324 = vadd.f32 %v153, %v322
    %v325 = vtanh.pop %v324
    %v327 = vsel %vm172, %v247, 0
    %329 = vmatprep.subr.mxu0 0.0
    %330 = vmatpush1.msra.mxu0 0.0
    %331 = vmatprep.subr.mxu0 0.0
    %332 = vmatpush1.msra.mxu0 0.0
    %333 = vmatprep.subr.mxu0 0.0
    %334 = vmatpush1.msra.mxu0 0.0
    %335 = vmatprep.subr.mxu0 0.0
    %336 = vmatpush1.msra.mxu0 0.0
    %337 = vmatprep.subr.mxu0 0.0
    %338 = vmatpush1.msra.mxu0 0.0
    %339 = vmatprep.subr.mxu0 0.0
    %340 = vmatpush1.msra.mxu0 0.0
    %341 = vmatprep.subr.mxu0 0.0
    %342 = vmatpush1.msra.mxu0 0.0
    %343 = vmatprep.subr.mxu0 0.0
    %344 = vmatpush1.msra.mxu0 0.0
    %345 = vmatprep.subr.mxu0 0.0
    %346 = vmatpush1.msra.mxu0 0.0
    %347 = vmatprep.subr.mxu0 0.0
    %348 = vmatpush1.msra.mxu0 0.0
    %349 = vmatprep.subr.mxu0 0.0
    %350 = vmatpush1.msra.mxu0 0.0
    %351 = vmatprep.subr.mxu0 0.0
    %352 = vmatpush1.msra.mxu0 0.0
    %353 = vmatprep.subr.mxu0 0.0
    %354 = vmatpush1.msra.mxu0 %v169
    %355 = vmatprep.subr.mxu0 0.0
    %356 = vmatpush1.msra.mxu0 %v168
    %357 = vmatprep.subr.mxu0 0.0
    %358 = vmatpush1.msra.mxu0 %v167
    %359 = vmatprep.subr.mxu0 0.0
    %360 = vmatpush1.msra.mxu0 %v166
    %361 = vmatprep.subr.mxu0 0.0
    %362 = vmatpush2.msra.mxu0 0.0
    %363 = vmatprep.subr.mxu0 0.0
    %364 = vmatpush2.msra.mxu0 0.0
    %365 = vmatprep.subr.mxu0 0.0
    %366 = vmatpush2.msra.mxu0 0.0
    %367 = vmatprep.subr.mxu0 0.0
    %368 = vmatpush2.msra.mxu0 0.0
    %369 = vmatprep.subr.mxu0 0.0
    %370 = vmatpush2.msra.mxu0 0.0
    %371 = vmatprep.subr.mxu0 0.0
    %372 = vmatpush2.msra.mxu0 0.0
    %373 = vmatprep.subr.mxu0 0.0
    %374 = vmatpush2.msra.mxu0 0.0
    %375 = vmatprep.subr.mxu0 0.0
    %376 = vmatpush2.msra.mxu0 0.0
    %377 = vmatprep.subr.mxu0 0.0
    %378 = vmatpush2.msra.mxu0 0.0
    %379 = vmatprep.subr.mxu0 0.0
    %380 = vmatpush2.msra.mxu0 0.0
    %381 = vmatprep.subr.mxu0 0.0
    %382 = vmatpush2.msra.mxu0 0.0
    %383 = vmatprep.subr.mxu0 0.0
    %384 = vmatpush2.msra.mxu0 0.0
    %385 = vmatprep.subr.mxu0 0.0
    %386 = vmatpush2.msra.mxu0 0.0
    %387 = vmatprep.subr.mxu0 0.0
    %388 = vmatpush2.msra.mxu0 0.0
    %389 = vmatprep.subr.mxu0 0.0
    %390 = vmatpush2.msra.mxu0 0.0
    %391 = vmatprep.subr.mxu0 0.0
    %392 = vmatpush2.msra.mxu0 0.0
    %393 = vmatprep.mubr.f32.mxu0 0.0
    %394 = vmatmul.mubr.f32.gmra.mxu0 %v327
    %v395 = vpop.f32.mrf.mxu0
    %v396 = vadd.f32 0.0, %v395
    %v397 = vpop.f32.mrf.mxu0
    %398 = vdwg.mxu0
    %v400 = vrot.slane %v396, 7
    %v402 = vadd.f32 %v143, %v400
    %v403 = vtanh.pop %v402
    %v405 = vrot.slane %v325, 4
    %v406 = vsel %vm172, %v405, 0
    %408 = vmatprep.subr.mxu0 0.0
    %409 = vmatpush1.msra.mxu0 0.0
    %410 = vmatprep.subr.mxu0 0.0
    %411 = vmatpush1.msra.mxu0 0.0
    %412 = vmatprep.subr.mxu0 0.0
    %413 = vmatpush1.msra.mxu0 0.0
    %414 = vmatprep.subr.mxu0 0.0
    %415 = vmatpush1.msra.mxu0 0.0
    %416 = vmatprep.subr.mxu0 0.0
    %417 = vmatpush1.msra.mxu0 0.0
    %418 = vmatprep.subr.mxu0 0.0
    %419 = vmatpush1.msra.mxu0 0.0
    %420 = vmatprep.subr.mxu0 0.0
    %421 = vmatpush1.msra.mxu0 0.0
    %422 = vmatprep.subr.mxu0 0.0
    %423 = vmatpush1.msra.mxu0 0.0
    %424 = vmatprep.subr.mxu0 0.0
    %425 = vmatpush1.msra.mxu0 0.0
    %426 = vmatprep.subr.mxu0 0.0
    %427 = vmatpush1.msra.mxu0 0.0
    %428 = vmatprep.subr.mxu0 0.0
    %429 = vmatpush1.msra.mxu0 0.0
    %430 = vmatprep.subr.mxu0 0.0
    %431 = vmatpush1.msra.mxu0 0.0
    %432 = vmatprep.subr.mxu0 0.0
    %433 = vmatpush1.msra.mxu0 %v169
    %434 = vmatprep.subr.mxu0 0.0
    %435 = vmatpush1.msra.mxu0 %v168
    %436 = vmatprep.subr.mxu0 0.0
    %437 = vmatpush1.msra.mxu0 %v167
    %438 = vmatprep.subr.mxu0 0.0
    %439 = vmatpush1.msra.mxu0 %v166
    %440 = vmatprep.subr.mxu0 0.0
    %441 = vmatpush2.msra.mxu0 0.0
    %442 = vmatprep.subr.mxu0 0.0
    %443 = vmatpush2.msra.mxu0 0.0
    %444 = vmatprep.subr.mxu0 0.0
    %445 = vmatpush2.msra.mxu0 0.0
    %446 = vmatprep.subr.mxu0 0.0
    %447 = vmatpush2.msra.mxu0 0.0
    %448 = vmatprep.subr.mxu0 0.0
    %449 = vmatpush2.msra.mxu0 0.0
    %450 = vmatprep.subr.mxu0 0.0
    %451 = vmatpush2.msra.mxu0 0.0
    %452 = vmatprep.subr.mxu0 0.0
    %453 = vmatpush2.msra.mxu0 0.0
    %454 = vmatprep.subr.mxu0 0.0
    %455 = vmatpush2.msra.mxu0 0.0
    %456 = vmatprep.subr.mxu0 0.0
    %457 = vmatpush2.msra.mxu0 0.0
    %458 = vmatprep.subr.mxu0 0.0
    %459 = vmatpush2.msra.mxu0 0.0
    %460 = vmatprep.subr.mxu0 0.0
    %461 = vmatpush2.msra.mxu0 0.0
    %462 = vmatprep.subr.mxu0 0.0
    %463 = vmatpush2.msra.mxu0 0.0
    %464 = vmatprep.subr.mxu0 0.0
    %465 = vmatpush2.msra.mxu0 0.0
    %466 = vmatprep.subr.mxu0 0.0
    %467 = vmatpush2.msra.mxu0 0.0
    %468 = vmatprep.subr.mxu0 0.0
    %469 = vmatpush2.msra.mxu0 0.0
    %470 = vmatprep.subr.mxu0 0.0
    %471 = vmatpush2.msra.mxu0 0.0
    %472 = vmatprep.mubr.f32.mxu0 0.0
    %473 = vmatmul.mubr.f32.gmra.mxu0 %v406
    %v474 = vpop.f32.mrf.mxu0
    %v475 = vadd.f32 0.0, %v474
    %v476 = vpop.f32.mrf.mxu0
    %477 = vdwg.mxu0
    %v479 = vrot.slane %v475, 3
    %v481 = vadd.f32 %v153, %v479
    %v482 = vtanh.pop %v481
    %v484 = vrot.slane %v403, 1
    %v485 = vsel %vm172, %v484, 0
    %487 = vmatprep.subr.mxu0 0.0
    %488 = vmatpush1.msra.mxu0 0.0
    %489 = vmatprep.subr.mxu0 0.0
    %490 = vmatpush1.msra.mxu0 0.0
    %491 = vmatprep.subr.mxu0 0.0
    %492 = vmatpush1.msra.mxu0 0.0
    %493 = vmatprep.subr.mxu0 0.0
    %494 = vmatpush1.msra.mxu0 0.0
    %495 = vmatprep.subr.mxu0 0.0
    %496 = vmatpush1.msra.mxu0 0.0
    %497 = vmatprep.subr.mxu0 0.0
    %498 = vmatpush1.msra.mxu0 0.0
    %499 = vmatprep.subr.mxu0 0.0
    %500 = vmatpush1.msra.mxu0 0.0
    %501 = vmatprep.subr.mxu0 0.0
    %502 = vmatpush1.msra.mxu0 0.0
    %503 = vmatprep.subr.mxu0 0.0
    %504 = vmatpush1.msra.mxu0 0.0
    %505 = vmatprep.subr.mxu0 0.0
    %506 = vmatpush1.msra.mxu0 0.0
    %507 = vmatprep.subr.mxu0 0.0
    %508 = vmatpush1.msra.mxu0 0.0
    %509 = vmatprep.subr.mxu0 0.0
    %510 = vmatpush1.msra.mxu0 0.0
    %511 = vmatprep.subr.mxu0 0.0
    %512 = vmatpush1.msra.mxu0 %v169
    %513 = vmatprep.subr.mxu0 0.0
    %514 = vmatpush1.msra.mxu0 %v168
    %515 = vmatprep.subr.mxu0 0.0
    %516 = vmatpush1.msra.mxu0 %v167
    %517 = vmatprep.subr.mxu0 0.0
    %518 = vmatpush1.msra.mxu0 %v166
    %519 = vmatprep.subr.mxu0 0.0
    %520 = vmatpush2.msra.mxu0 0.0
    %521 = vmatprep.subr.mxu0 0.0
    %522 = vmatpush2.msra.mxu0 0.0
    %523 = vmatprep.subr.mxu0 0.0
    %524 = vmatpush2.msra.mxu0 0.0
    %525 = vmatprep.subr.mxu0 0.0
    %526 = vmatpush2.msra.mxu0 0.0
    %527 = vmatprep.subr.mxu0 0.0
    %528 = vmatpush2.msra.mxu0 0.0
    %529 = vmatprep.subr.mxu0 0.0
    %530 = vmatpush2.msra.mxu0 0.0
    %531 = vmatprep.subr.mxu0 0.0
    %532 = vmatpush2.msra.mxu0 0.0
    %533 = vmatprep.subr.mxu0 0.0
    %534 = vmatpush2.msra.mxu0 0.0
    %535 = vmatprep.subr.mxu0 0.0
    %536 = vmatpush2.msra.mxu0 0.0
    %537 = vmatprep.subr.mxu0 0.0
    %538 = vmatpush2.msra.mxu0 0.0
    %539 = vmatprep.subr.mxu0 0.0
    %540 = vmatpush2.msra.mxu0 0.0
    %541 = vmatprep.subr.mxu0 0.0
    %542 = vmatpush2.msra.mxu0 0.0
    %543 = vmatprep.subr.mxu0 0.0
    %544 = vmatpush2.msra.mxu0 0.0
    %545 = vmatprep.subr.mxu0 0.0
    %546 = vmatpush2.msra.mxu0 0.0
    %547 = vmatprep.subr.mxu0 0.0
    %548 = vmatpush2.msra.mxu0 0.0
    %549 = vmatprep.subr.mxu0 0.0
    %550 = vmatpush2.msra.mxu0 0.0
    %551 = vmatprep.mubr.f32.mxu0 0.0
    %552 = vmatmul.mubr.f32.gmra.mxu0 %v485
    %v553 = vpop.f32.mrf.mxu0
    %v554 = vadd.f32 0.0, %v553
    %v555 = vpop.f32.mrf.mxu0
    %556 = vdwg.mxu0
    %v558 = vrot.slane %v554, 6
    %v560 = vadd.f32 %v143, %v558
    %v561 = vtanh.pop %v560
    %v563 = vrot.slane %v482, 5
    %v564 = vsel %vm172, %v563, 0
    %566 = vmatprep.subr.mxu0 0.0
    %567 = vmatpush1.msra.mxu0 0.0
    %568 = vmatprep.subr.mxu0 0.0
    %569 = vmatpush1.msra.mxu0 0.0
    %570 = vmatprep.subr.mxu0 0.0
    %571 = vmatpush1.msra.mxu0 0.0
    %572 = vmatprep.subr.mxu0 0.0
    %573 = vmatpush1.msra.mxu0 0.0
    %574 = vmatprep.subr.mxu0 0.0
    %575 = vmatpush1.msra.mxu0 0.0
    %576 = vmatprep.subr.mxu0 0.0
    %577 = vmatpush1.msra.mxu0 0.0
    %578 = vmatprep.subr.mxu0 0.0
    %579 = vmatpush1.msra.mxu0 0.0
    %580 = vmatprep.subr.mxu0 0.0
    %581 = vmatpush1.msra.mxu0 0.0
    %582 = vmatprep.subr.mxu0 0.0
    %583 = vmatpush1.msra.mxu0 0.0
    %584 = vmatprep.subr.mxu0 0.0
    %585 = vmatpush1.msra.mxu0 0.0
    %586 = vmatprep.subr.mxu0 0.0
    %587 = vmatpush1.msra.mxu0 0.0
    %588 = vmatprep.subr.mxu0 0.0
    %589 = vmatpush1.msra.mxu0 0.0
    %590 = vmatprep.subr.mxu0 0.0
    %591 = vmatpush1.msra.mxu0 %v169
    %592 = vmatprep.subr.mxu0 0.0
    %593 = vmatpush1.msra.mxu0 %v168
    %594 = vmatprep.subr.mxu0 0.0
    %595 = vmatpush1.msra.mxu0 %v167
    %596 = vmatprep.subr.mxu0 0.0
    %597 = vmatpush1.msra.mxu0 %v166
    %598 = vmatprep.subr.mxu0 0.0
    %599 = vmatpush2.msra.mxu0 0.0
    %600 = vmatprep.subr.mxu0 0.0
    %601 = vmatpush2.msra.mxu0 0.0
    %602 = vmatprep.subr.mxu0 0.0
    %603 = vmatpush2.msra.mxu0 0.0
    %604 = vmatprep.subr.mxu0 0.0
    %605 = vmatpush2.msra.mxu0 0.0
    %606 = vmatprep.subr.mxu0 0.0
    %607 = vmatpush2.msra.mxu0 0.0
    %608 = vmatprep.subr.mxu0 0.0
    %609 = vmatpush2.msra.mxu0 0.0
    %610 = vmatprep.subr.mxu0 0.0
    %611 = vmatpush2.msra.mxu0 0.0
    %612 = vmatprep.subr.mxu0 0.0
    %613 = vmatpush2.msra.mxu0 0.0
    %614 = vmatprep.subr.mxu0 0.0
    %615 = vmatpush2.msra.mxu0 0.0
    %616 = vmatprep.subr.mxu0 0.0
    %617 = vmatpush2.msra.mxu0 0.0
    %618 = vmatprep.subr.mxu0 0.0
    %619 = vmatpush2.msra.mxu0 0.0
    %620 = vmatprep.subr.mxu0 0.0
    %621 = vmatpush2.msra.mxu0 0.0
    %622 = vmatprep.subr.mxu0 0.0
    %623 = vmatpush2.msra.mxu0 0.0
    %624 = vmatprep.subr.mxu0 0.0
    %625 = vmatpush2.msra.mxu0 0.0
    %626 = vmatprep.subr.mxu0 0.0
    %627 = vmatpush2.msra.mxu0 0.0
    %628 = vmatprep.subr.mxu0 0.0
    %629 = vmatpush2.msra.mxu0 0.0
    %630 = vmatprep.mubr.f32.mxu0 0.0
    %631 = vmatmul.mubr.f32.gmra.mxu0 %v564
    %v632 = vpop.f32.mrf.mxu0
    %v633 = vadd.f32 0.0, %v632
    %v634 = vpop.f32.mrf.mxu0
    %635 = vdwg.mxu0
    %v637 = vrot.slane %v633, 2
    %v639 = vadd.f32 %v153, %v637
    %v640 = vtanh.pop %v639
    %v642 = vrot.slane %v561, 2
    %v643 = vsel %vm172, %v642, 0
    %645 = vmatprep.subr.mxu0 0.0
    %646 = vmatpush1.msra.mxu0 0.0
    %647 = vmatprep.subr.mxu0 0.0
    %648 = vmatpush1.msra.mxu0 0.0
    %649 = vmatprep.subr.mxu0 0.0
    %650 = vmatpush1.msra.mxu0 0.0
    %651 = vmatprep.subr.mxu0 0.0
    %652 = vmatpush1.msra.mxu0 0.0
    %653 = vmatprep.subr.mxu0 0.0
    %654 = vmatpush1.msra.mxu0 0.0
    %655 = vmatprep.subr.mxu0 0.0
    %656 = vmatpush1.msra.mxu0 0.0
    %657 = vmatprep.subr.mxu0 0.0
    %658 = vmatpush1.msra.mxu0 0.0
    %659 = vmatprep.subr.mxu0 0.0
    %660 = vmatpush1.msra.mxu0 0.0
    %661 = vmatprep.subr.mxu0 0.0
    %662 = vmatpush1.msra.mxu0 0.0
    %663 = vmatprep.subr.mxu0 0.0
    %664 = vmatpush1.msra.mxu0 0.0
    %665 = vmatprep.subr.mxu0 0.0
    %666 = vmatpush1.msra.mxu0 0.0
    %667 = vmatprep.subr.mxu0 0.0
    %668 = vmatpush1.msra.mxu0 0.0
    %669 = vmatprep.subr.mxu0 0.0
    %670 = vmatpush1.msra.mxu0 %v169
    %671 = vmatprep.subr.mxu0 0.0
    %672 = vmatpush1.msra.mxu0 %v168
    %673 = vmatprep.subr.mxu0 0.0
    %674 = vmatpush1.msra.mxu0 %v167
    %675 = vmatprep.subr.mxu0 0.0
    %676 = vmatpush1.msra.mxu0 %v166
    %677 = vmatprep.subr.mxu0 0.0
    %678 = vmatpush2.msra.mxu0 0.0
    %679 = vmatprep.subr.mxu0 0.0
    %680 = vmatpush2.msra.mxu0 0.0
    %681 = vmatprep.subr.mxu0 0.0
    %682 = vmatpush2.msra.mxu0 0.0
    %683 = vmatprep.subr.mxu0 0.0
    %684 = vmatpush2.msra.mxu0 0.0
    %685 = vmatprep.subr.mxu0 0.0
    %686 = vmatpush2.msra.mxu0 0.0
    %687 = vmatprep.subr.mxu0 0.0
    %688 = vmatpush2.msra.mxu0 0.0
    %689 = vmatprep.subr.mxu0 0.0
    %690 = vmatpush2.msra.mxu0 0.0
    %691 = vmatprep.subr.mxu0 0.0
    %692 = vmatpush2.msra.mxu0 0.0
    %693 = vmatprep.subr.mxu0 0.0
    %694 = vmatpush2.msra.mxu0 0.0
    %695 = vmatprep.subr.mxu0 0.0
    %696 = vmatpush2.msra.mxu0 0.0
    %697 = vmatprep.subr.mxu0 0.0
    %698 = vmatpush2.msra.mxu0 0.0
    %699 = vmatprep.subr.mxu0 0.0
    %700 = vmatpush2.msra.mxu0 0.0
    %701 = vmatprep.subr.mxu0 0.0
    %702 = vmatpush2.msra.mxu0 0.0
    %703 = vmatprep.subr.mxu0 0.0
    %704 = vmatpush2.msra.mxu0 0.0
    %705 = vmatprep.subr.mxu0 0.0
    %706 = vmatpush2.msra.mxu0 0.0
    %707 = vmatprep.subr.mxu0 0.0
    %708 = vmatpush2.msra.mxu0 0.0
    %709 = vmatprep.mubr.f32.mxu0 0.0
    %710 = vmatmul.mubr.f32.gmra.mxu0 %v643
    %v711 = vpop.f32.mrf.mxu0
    %v712 = vadd.f32 0.0, %v711
    %v713 = vpop.f32.mrf.mxu0
    %714 = vdwg.mxu0
    %v716 = vrot.slane %v712, 5
    %v718 = vadd.f32 %v143, %v716
    %v719 = vtanh.pop %v718
    %v721 = vrot.slane %v640, 6
    %v722 = vsel %vm172, %v721, 0
    %724 = vmatprep.subr.mxu0 0.0
    %725 = vmatpush1.msra.mxu0 0.0
    %726 = vmatprep.subr.mxu0 0.0
    %727 = vmatpush1.msra.mxu0 0.0
    %728 = vmatprep.subr.mxu0 0.0
    %729 = vmatpush1.msra.mxu0 0.0
    %730 = vmatprep.subr.mxu0 0.0
    %731 = vmatpush1.msra.mxu0 0.0
    %732 = vmatprep.subr.mxu0 0.0
    %733 = vmatpush1.msra.mxu0 0.0
    %734 = vmatprep.subr.mxu0 0.0
    %735 = vmatpush1.msra.mxu0 0.0
    %736 = vmatprep.subr.mxu0 0.0
    %737 = vmatpush1.msra.mxu0 0.0
    %738 = vmatprep.subr.mxu0 0.0
    %739 = vmatpush1.msra.mxu0 0.0
    %740 = vmatprep.subr.mxu0 0.0
    %741 = vmatpush1.msra.mxu0 0.0
    %742 = vmatprep.subr.mxu0 0.0
    %743 = vmatpush1.msra.mxu0 0.0
    %744 = vmatprep.subr.mxu0 0.0
    %745 = vmatpush1.msra.mxu0 0.0
    %746 = vmatprep.subr.mxu0 0.0
    %747 = vmatpush1.msra.mxu0 0.0
    %748 = vmatprep.subr.mxu0 0.0
    %749 = vmatpush1.msra.mxu0 %v169
    %750 = vmatprep.subr.mxu0 0.0
    %751 = vmatpush1.msra.mxu0 %v168
    %752 = vmatprep.subr.mxu0 0.0
    %753 = vmatpush1.msra.mxu0 %v167
    %754 = vmatprep.subr.mxu0 0.0
    %755 = vmatpush1.msra.mxu0 %v166
    %756 = vmatprep.subr.mxu0 0.0
    %757 = vmatpush2.msra.mxu0 0.0
    %758 = vmatprep.subr.mxu0 0.0
    %759 = vmatpush2.msra.mxu0 0.0
    %760 = vmatprep.subr.mxu0 0.0
    %761 = vmatpush2.msra.mxu0 0.0
    %762 = vmatprep.subr.mxu0 0.0
    %763 = vmatpush2.msra.mxu0 0.0
    %764 = vmatprep.subr.mxu0 0.0
    %765 = vmatpush2.msra.mxu0 0.0
    %766 = vmatprep.subr.mxu0 0.0
    %767 = vmatpush2.msra.mxu0 0.0
    %768 = vmatprep.subr.mxu0 0.0
    %769 = vmatpush2.msra.mxu0 0.0
    %770 = vmatprep.subr.mxu0 0.0
    %771 = vmatpush2.msra.mxu0 0.0
    %772 = vmatprep.subr.mxu0 0.0
    %773 = vmatpush2.msra.mxu0 0.0
    %774 = vmatprep.subr.mxu0 0.0
    %775 = vmatpush2.msra.mxu0 0.0
    %776 = vmatprep.subr.mxu0 0.0
    %777 = vmatpush2.msra.mxu0 0.0
    %778 = vmatprep.subr.mxu0 0.0
    %779 = vmatpush2.msra.mxu0 0.0
    %780 = vmatprep.subr.mxu0 0.0
    %781 = vmatpush2.msra.mxu0 0.0
    %782 = vmatprep.subr.mxu0 0.0
    %783 = vmatpush2.msra.mxu0 0.0
    %784 = vmatprep.subr.mxu0 0.0
    %785 = vmatpush2.msra.mxu0 0.0
    %786 = vmatprep.subr.mxu0 0.0
    %787 = vmatpush2.msra.mxu0 0.0
    %788 = vmatprep.mubr.f32.mxu0 0.0
    %789 = vmatmul.mubr.f32.gmra.mxu0 %v722
    %v790 = vpop.f32.mrf.mxu0
    %v791 = vadd.f32 0.0, %v790
    %v792 = vpop.f32.mrf.mxu0
    %793 = vdwg.mxu0
    %v795 = vrot.slane %v791, 1
    %v797 = vadd.f32 %v153, %v795
    %v798 = vtanh.pop %v797
    %v800 = vrot.slane %v719, 3
    %v801 = vsel %vm172, %v800, 0
    %803 = vmatprep.subr.mxu0 0.0
    %804 = vmatpush1.msra.mxu0 0.0
    %805 = vmatprep.subr.mxu0 0.0
    %806 = vmatpush1.msra.mxu0 0.0
    %807 = vmatprep.subr.mxu0 0.0
    %808 = vmatpush1.msra.mxu0 0.0
    %809 = vmatprep.subr.mxu0 0.0
    %810 = vmatpush1.msra.mxu0 0.0
    %811 = vmatprep.subr.mxu0 0.0
    %812 = vmatpush1.msra.mxu0 0.0
    %813 = vmatprep.subr.mxu0 0.0
    %814 = vmatpush1.msra.mxu0 0.0
    %815 = vmatprep.subr.mxu0 0.0
    %816 = vmatpush1.msra.mxu0 0.0
    %817 = vmatprep.subr.mxu0 0.0
    %818 = vmatpush1.msra.mxu0 0.0
    %819 = vmatprep.subr.mxu0 0.0
    %820 = vmatpush1.msra.mxu0 0.0
    %821 = vmatprep.subr.mxu0 0.0
    %822 = vmatpush1.msra.mxu0 0.0
    %823 = vmatprep.subr.mxu0 0.0
    %824 = vmatpush1.msra.mxu0 0.0
    %825 = vmatprep.subr.mxu0 0.0
    %826 = vmatpush1.msra.mxu0 0.0
    %827 = vmatprep.subr.mxu0 0.0
    %828 = vmatpush1.msra.mxu0 %v169
    %829 = vmatprep.subr.mxu0 0.0
    %830 = vmatpush1.msra.mxu0 %v168
    %831 = vmatprep.subr.mxu0 0.0
    %832 = vmatpush1.msra.mxu0 %v167
    %833 = vmatprep.subr.mxu0 0.0
    %834 = vmatpush1.msra.mxu0 %v166
    %835 = vmatprep.subr.mxu0 0.0
    %836 = vmatpush2.msra.mxu0 0.0
    %837 = vmatprep.subr.mxu0 0.0
    %838 = vmatpush2.msra.mxu0 0.0
    %839 = vmatprep.subr.mxu0 0.0
    %840 = vmatpush2.msra.mxu0 0.0
    %841 = vmatprep.subr.mxu0 0.0
    %842 = vmatpush2.msra.mxu0 0.0
    %843 = vmatprep.subr.mxu0 0.0
    %844 = vmatpush2.msra.mxu0 0.0
    %845 = vmatprep.subr.mxu0 0.0
    %846 = vmatpush2.msra.mxu0 0.0
    %847 = vmatprep.subr.mxu0 0.0
    %848 = vmatpush2.msra.mxu0 0.0
    %849 = vmatprep.subr.mxu0 0.0
    %850 = vmatpush2.msra.mxu0 0.0
    %851 = vmatprep.subr.mxu0 0.0
    %852 = vmatpush2.msra.mxu0 0.0
    %853 = vmatprep.subr.mxu0 0.0
    %854 = vmatpush2.msra.mxu0 0.0
    %855 = vmatprep.subr.mxu0 0.0
    %856 = vmatpush2.msra.mxu0 0.0
    %857 = vmatprep.subr.mxu0 0.0
    %858 = vmatpush2.msra.mxu0 0.0
    %859 = vmatprep.subr.mxu0 0.0
    %860 = vmatpush2.msra.mxu0 0.0
    %861 = vmatprep.subr.mxu0 0.0
    %862 = vmatpush2.msra.mxu0 0.0
    %863 = vmatprep.subr.mxu0 0.0
    %864 = vmatpush2.msra.mxu0 0.0
    %865 = vmatprep.subr.mxu0 0.0
    %866 = vmatpush2.msra.mxu0 0.0
    %867 = vmatprep.mubr.f32.mxu0 0.0
    %868 = vmatmul.mubr.f32.gmra.mxu0 %v801
    %v869 = vpop.f32.mrf.mxu0
    %v870 = vadd.f32 0.0, %v869
    %v871 = vpop.f32.mrf.mxu0
    %872 = vdwg.mxu0
    %v874 = vrot.slane %v870, 4
    %v876 = vadd.f32 %v143, %v874
    %v877 = vtanh.pop %v876
    %v879 = vrot.slane %v798, 7
    %v880 = vsel %vm172, %v879, 0
    %882 = vmatprep.subr.mxu0 0.0
    %883 = vmatpush1.msra.mxu0 0.0
    %884 = vmatprep.subr.mxu0 0.0
    %885 = vmatpush1.msra.mxu0 0.0
    %886 = vmatprep.subr.mxu0 0.0
    %887 = vmatpush1.msra.mxu0 0.0
    %888 = vmatprep.subr.mxu0 0.0
    %889 = vmatpush1.msra.mxu0 0.0
    %890 = vmatprep.subr.mxu0 0.0
    %891 = vmatpush1.msra.mxu0 0.0
    %892 = vmatprep.subr.mxu0 0.0
    %893 = vmatpush1.msra.mxu0 0.0
    %894 = vmatprep.subr.mxu0 0.0
    %895 = vmatpush1.msra.mxu0 0.0
    %896 = vmatprep.subr.mxu0 0.0
    %897 = vmatpush1.msra.mxu0 0.0
    %898 = vmatprep.subr.mxu0 0.0
    %899 = vmatpush1.msra.mxu0 0.0
    %900 = vmatprep.subr.mxu0 0.0
    %901 = vmatpush1.msra.mxu0 0.0
    %902 = vmatprep.subr.mxu0 0.0
    %903 = vmatpush1.msra.mxu0 0.0
    %904 = vmatprep.subr.mxu0 0.0
    %905 = vmatpush1.msra.mxu0 0.0
    %906 = vmatprep.subr.mxu0 0.0
    %907 = vmatpush1.msra.mxu0 %v169
    %908 = vmatprep.subr.mxu0 0.0
    %909 = vmatpush1.msra.mxu0 %v168
    %910 = vmatprep.subr.mxu0 0.0
    %911 = vmatpush1.msra.mxu0 %v167
    %912 = vmatprep.subr.mxu0 0.0
    %913 = vmatpush1.msra.mxu0 %v166
    %914 = vmatprep.subr.mxu0 0.0
    %915 = vmatpush2.msra.mxu0 0.0
    %916 = vmatprep.subr.mxu0 0.0
    %917 = vmatpush2.msra.mxu0 0.0
    %918 = vmatprep.subr.mxu0 0.0
    %919 = vmatpush2.msra.mxu0 0.0
    %920 = vmatprep.subr.mxu0 0.0
    %921 = vmatpush2.msra.mxu0 0.0
    %922 = vmatprep.subr.mxu0 0.0
    %923 = vmatpush2.msra.mxu0 0.0
    %924 = vmatprep.subr.mxu0 0.0
    %925 = vmatpush2.msra.mxu0 0.0
    %926 = vmatprep.subr.mxu0 0.0
    %927 = vmatpush2.msra.mxu0 0.0
    %928 = vmatprep.subr.mxu0 0.0
    %929 = vmatpush2.msra.mxu0 0.0
    %930 = vmatprep.subr.mxu0 0.0
    %931 = vmatpush2.msra.mxu0 0.0
    %932 = vmatprep.subr.mxu0 0.0
    %933 = vmatpush2.msra.mxu0 0.0
    %934 = vmatprep.subr.mxu0 0.0
    %935 = vmatpush2.msra.mxu0 0.0
    %936 = vmatprep.subr.mxu0 0.0
    %937 = vmatpush2.msra.mxu0 0.0
    %938 = vmatprep.subr.mxu0 0.0
    %939 = vmatpush2.msra.mxu0 0.0
    %940 = vmatprep.subr.mxu0 0.0
    %941 = vmatpush2.msra.mxu0 0.0
    %942 = vmatprep.subr.mxu0 0.0
    %943 = vmatpush2.msra.mxu0 0.0
    %944 = vmatprep.subr.mxu0 0.0
    %945 = vmatpush2.msra.mxu0 0.0
    %946 = vmatprep.mubr.f32.mxu0 0.0
    %947 = vmatmul.mubr.f32.gmra.mxu0 %v880
    %v948 = vpop.f32.mrf.mxu0
    %v949 = vadd.f32 0.0, %v948
    %v950 = vpop.f32.mrf.mxu0
    %951 = vdwg.mxu0
    %v952 = vadd.f32 %v158, %v949
    %v953 = vtanh.pop %v952
    %v955 = vrot.slane %v877, 4
    %v956 = vsel %vm172, %v955, 0
    %958 = vmatprep.subr.mxu0 0.0
    %959 = vmatpush1.msra.mxu0 0.0
    %960 = vmatprep.subr.mxu0 0.0
    %961 = vmatpush1.msra.mxu0 0.0
    %962 = vmatprep.subr.mxu0 0.0
    %963 = vmatpush1.msra.mxu0 0.0
    %964 = vmatprep.subr.mxu0 0.0
    %965 = vmatpush1.msra.mxu0 0.0
    %966 = vmatprep.subr.mxu0 0.0
    %967 = vmatpush1.msra.mxu0 0.0
    %968 = vmatprep.subr.mxu0 0.0
    %969 = vmatpush1.msra.mxu0 0.0
    %970 = vmatprep.subr.mxu0 0.0
    %971 = vmatpush1.msra.mxu0 0.0
    %972 = vmatprep.subr.mxu0 0.0
    %973 = vmatpush1.msra.mxu0 0.0
    %974 = vmatprep.subr.mxu0 0.0
    %975 = vmatpush1.msra.mxu0 0.0
    %976 = vmatprep.subr.mxu0 0.0
    %977 = vmatpush1.msra.mxu0 0.0
    %978 = vmatprep.subr.mxu0 0.0
    %979 = vmatpush1.msra.mxu0 0.0
    %980 = vmatprep.subr.mxu0 0.0
    %981 = vmatpush1.msra.mxu0 0.0
    %982 = vmatprep.subr.mxu0 0.0
    %983 = vmatpush1.msra.mxu0 %v169
    %984 = vmatprep.subr.mxu0 0.0
    %985 = vmatpush1.msra.mxu0 %v168
    %986 = vmatprep.subr.mxu0 0.0
    %987 = vmatpush1.msra.mxu0 %v167
    %988 = vmatprep.subr.mxu0 0.0
    %989 = vmatpush1.msra.mxu0 %v166
    %990 = vmatprep.subr.mxu0 0.0
    %991 = vmatpush2.msra.mxu0 0.0
    %992 = vmatprep.subr.mxu0 0.0
    %993 = vmatpush2.msra.mxu0 0.0
    %994 = vmatprep.subr.mxu0 0.0
    %995 = vmatpush2.msra.mxu0 0.0
    %996 = vmatprep.subr.mxu0 0.0
    %997 = vmatpush2.msra.mxu0 0.0
    %998 = vmatprep.subr.mxu0 0.0
    %999 = vmatpush2.msra.mxu0 0.0
    %1000 = vmatprep.subr.mxu0 0.0
    %1001 = vmatpush2.msra.mxu0 0.0
    %1002 = vmatprep.subr.mxu0 0.0
    %1003 = vmatpush2.msra.mxu0 0.0
    %1004 = vmatprep.subr.mxu0 0.0
    %1005 = vmatpush2.msra.mxu0 0.0
    %1006 = vmatprep.subr.mxu0 0.0
    %1007 = vmatpush2.msra.mxu0 0.0
    %1008 = vmatprep.subr.mxu0 0.0
    %1009 = vmatpush2.msra.mxu0 0.0
    %1010 = vmatprep.subr.mxu0 0.0
    %1011 = vmatpush2.msra.mxu0 0.0
    %1012 = vmatprep.subr.mxu0 0.0
    %1013 = vmatpush2.msra.mxu0 0.0
    %1014 = vmatprep.subr.mxu0 0.0
    %1015 = vmatpush2.msra.mxu0 0.0
    %1016 = vmatprep.subr.mxu0 0.0
    %1017 = vmatpush2.msra.mxu0 0.0
    %1018 = vmatprep.subr.mxu0 0.0
    %1019 = vmatpush2.msra.mxu0 0.0
    %1020 = vmatprep.subr.mxu0 0.0
    %1021 = vmatpush2.msra.mxu0 0.0
    %1022 = vmatprep.mubr.f32.mxu0 0.0
    %1023 = vmatmul.mubr.f32.gmra.mxu0 %v956
    %v1024 = vpop.f32.mrf.mxu0
    %v1025 = vadd.f32 0.0, %v1024
    %v1026 = vpop.f32.mrf.mxu0
    %1027 = vdwg.mxu0
    %v1029 = vrot.slane %v1025, 3
    %v1031 = vadd.f32 %v143, %v1029
    %v1032 = vtanh.pop %v1031
    %v1034 = vsel %vm172, %v953, 0
    %1036 = vmatprep.subr.mxu0 0.0
    %1037 = vmatpush1.msra.mxu0 0.0
    %1038 = vmatprep.subr.mxu0 0.0
    %1039 = vmatpush1.msra.mxu0 0.0
    %1040 = vmatprep.subr.mxu0 0.0
    %1041 = vmatpush1.msra.mxu0 0.0
    %1042 = vmatprep.subr.mxu0 0.0
    %1043 = vmatpush1.msra.mxu0 0.0
    %1044 = vmatprep.subr.mxu0 0.0
    %1045 = vmatpush1.msra.mxu0 0.0
    %1046 = vmatprep.subr.mxu0 0.0
    %1047 = vmatpush1.msra.mxu0 0.0
    %1048 = vmatprep.subr.mxu0 0.0
    %1049 = vmatpush1.msra.mxu0 0.0
    %1050 = vmatprep.subr.mxu0 0.0
    %1051 = vmatpush1.msra.mxu0 0.0
    %1052 = vmatprep.subr.mxu0 0.0
    %1053 = vmatpush1.msra.mxu0 0.0
    %1054 = vmatprep.subr.mxu0 0.0
    %1055 = vmatpush1.msra.mxu0 0.0
    %1056 = vmatprep.subr.mxu0 0.0
    %1057 = vmatpush1.msra.mxu0 0.0
    %1058 = vmatprep.subr.mxu0 0.0
    %1059 = vmatpush1.msra.mxu0 0.0
    %1060 = vmatprep.subr.mxu0 0.0
    %1061 = vmatpush1.msra.mxu0 %v169
    %1062 = vmatprep.subr.mxu0 0.0
    %1063 = vmatpush1.msra.mxu0 %v168
    %1064 = vmatprep.subr.mxu0 0.0
    %1065 = vmatpush1.msra.mxu0 %v167
    %1066 = vmatprep.subr.mxu0 0.0
    %1067 = vmatpush1.msra.mxu0 %v166
    %1068 = vmatprep.subr.mxu0 0.0
    %1069 = vmatpush2.msra.mxu0 0.0
    %1070 = vmatprep.subr.mxu0 0.0
    %1071 = vmatpush2.msra.mxu0 0.0
    %1072 = vmatprep.subr.mxu0 0.0
    %1073 = vmatpush2.msra.mxu0 0.0
    %1074 = vmatprep.subr.mxu0 0.0
    %1075 = vmatpush2.msra.mxu0 0.0
    %1076 = vmatprep.subr.mxu0 0.0
    %1077 = vmatpush2.msra.mxu0 0.0
    %1078 = vmatprep.subr.mxu0 0.0
    %1079 = vmatpush2.msra.mxu0 0.0
    %1080 = vmatprep.subr.mxu0 0.0
    %1081 = vmatpush2.msra.mxu0 0.0
    %1082 = vmatprep.subr.mxu0 0.0
    %1083 = vmatpush2.msra.mxu0 0.0
    %1084 = vmatprep.subr.mxu0 0.0
    %1085 = vmatpush2.msra.mxu0 0.0
    %1086 = vmatprep.subr.mxu0 0.0
    %1087 = vmatpush2.msra.mxu0 0.0
    %1088 = vmatprep.subr.mxu0 0.0
    %1089 = vmatpush2.msra.mxu0 0.0
    %1090 = vmatprep.subr.mxu0 0.0
    %1091 = vmatpush2.msra.mxu0 0.0
    %1092 = vmatprep.subr.mxu0 0.0
    %1093 = vmatpush2.msra.mxu0 0.0
    %1094 = vmatprep.subr.mxu0 0.0
    %1095 = vmatpush2.msra.mxu0 0.0
    %1096 = vmatprep.subr.mxu0 0.0
    %1097 = vmatpush2.msra.mxu0 0.0
    %1098 = vmatprep.subr.mxu0 0.0
    %1099 = vmatpush2.msra.mxu0 0.0
    %1100 = vmatprep.mubr.f32.mxu0 0.0
    %1101 = vmatmul.mubr.f32.gmra.mxu0 %v1034
    %v1102 = vpop.f32.mrf.mxu0
    %v1103 = vadd.f32 0.0, %v1102
    %v1104 = vpop.f32.mrf.mxu0
    %1105 = vdwg.mxu0
    %v1107 = vrot.slane %v1103, 7
    %v1109 = vadd.f32 %v158, %v1107
    %v1110 = vtanh.pop %v1109
    %v1112 = vrot.slane %v1032, 5
    %v1113 = vsel %vm172, %v1112, 0
    %1115 = vmatprep.subr.mxu0 0.0
    %1116 = vmatpush1.msra.mxu0 0.0
    %1117 = vmatprep.subr.mxu0 0.0
    %1118 = vmatpush1.msra.mxu0 0.0
    %1119 = vmatprep.subr.mxu0 0.0
    %1120 = vmatpush1.msra.mxu0 0.0
    %1121 = vmatprep.subr.mxu0 0.0
    %1122 = vmatpush1.msra.mxu0 0.0
    %1123 = vmatprep.subr.mxu0 0.0
    %1124 = vmatpush1.msra.mxu0 0.0
    %1125 = vmatprep.subr.mxu0 0.0
    %1126 = vmatpush1.msra.mxu0 0.0
    %1127 = vmatprep.subr.mxu0 0.0
    %1128 = vmatpush1.msra.mxu0 0.0
    %1129 = vmatprep.subr.mxu0 0.0
    %1130 = vmatpush1.msra.mxu0 0.0
    %1131 = vmatprep.subr.mxu0 0.0
    %1132 = vmatpush1.msra.mxu0 0.0
    %1133 = vmatprep.subr.mxu0 0.0
    %1134 = vmatpush1.msra.mxu0 0.0
    %1135 = vmatprep.subr.mxu0 0.0
    %1136 = vmatpush1.msra.mxu0 0.0
    %1137 = vmatprep.subr.mxu0 0.0
    %1138 = vmatpush1.msra.mxu0 0.0
    %1139 = vmatprep.subr.mxu0 0.0
    %1140 = vmatpush1.msra.mxu0 %v169
    %1141 = vmatprep.subr.mxu0 0.0
    %1142 = vmatpush1.msra.mxu0 %v168
    %1143 = vmatprep.subr.mxu0 0.0
    %1144 = vmatpush1.msra.mxu0 %v167
    %1145 = vmatprep.subr.mxu0 0.0
    %1146 = vmatpush1.msra.mxu0 %v166
    %1147 = vmatprep.subr.mxu0 0.0
    %1148 = vmatpush2.msra.mxu0 0.0
    %1149 = vmatprep.subr.mxu0 0.0
    %1150 = vmatpush2.msra.mxu0 0.0
    %1151 = vmatprep.subr.mxu0 0.0
    %1152 = vmatpush2.msra.mxu0 0.0
    %1153 = vmatprep.subr.mxu0 0.0
    %1154 = vmatpush2.msra.mxu0 0.0
    %1155 = vmatprep.subr.mxu0 0.0
    %1156 = vmatpush2.msra.mxu0 0.0
    %1157 = vmatprep.subr.mxu0 0.0
    %1158 = vmatpush2.msra.mxu0 0.0
    %1159 = vmatprep.subr.mxu0 0.0
    %1160 = vmatpush2.msra.mxu0 0.0
    %1161 = vmatprep.subr.mxu0 0.0
    %1162 = vmatpush2.msra.mxu0 0.0
    %1163 = vmatprep.subr.mxu0 0.0
    %1164 = vmatpush2.msra.mxu0 0.0
    %1165 = vmatprep.subr.mxu0 0.0
    %1166 = vmatpush2.msra.mxu0 0.0
    %1167 = vmatprep.subr.mxu0 0.0
    %1168 = vmatpush2.msra.mxu0 0.0
    %1169 = vmatprep.subr.mxu0 0.0
    %1170 = vmatpush2.msra.mxu0 0.0
    %1171 = vmatprep.subr.mxu0 0.0
    %1172 = vmatpush2.msra.mxu0 0.0
    %1173 = vmatprep.subr.mxu0 0.0
    %1174 = vmatpush2.msra.mxu0 0.0
    %1175 = vmatprep.subr.mxu0 0.0
    %1176 = vmatpush2.msra.mxu0 0.0
    %1177 = vmatprep.subr.mxu0 0.0
    %1178 = vmatpush2.msra.mxu0 0.0
    %1179 = vmatprep.mubr.f32.mxu0 0.0
    %1180 = vmatmul.mubr.f32.gmra.mxu0 %v1113
    %v1181 = vpop.f32.mrf.mxu0
    %v1182 = vadd.f32 0.0, %v1181
    %v1183 = vpop.f32.mrf.mxu0
    %1184 = vdwg.mxu0
    %v1186 = vrot.slane %v1182, 2
    %v1188 = vadd.f32 %v143, %v1186
    %v1189 = vtanh.pop %v1188
    %v1191 = vrot.slane %v1110, 1
    %v1192 = vsel %vm172, %v1191, 0
    %1194 = vmatprep.subr.mxu0 0.0
    %1195 = vmatpush1.msra.mxu0 0.0
    %1196 = vmatprep.subr.mxu0 0.0
    %1197 = vmatpush1.msra.mxu0 0.0
    %1198 = vmatprep.subr.mxu0 0.0
    %1199 = vmatpush1.msra.mxu0 0.0
    %1200 = vmatprep.subr.mxu0 0.0
    %1201 = vmatpush1.msra.mxu0 0.0
    %1202 = vmatprep.subr.mxu0 0.0
    %1203 = vmatpush1.msra.mxu0 0.0
    %1204 = vmatprep.subr.mxu0 0.0
    %1205 = vmatpush1.msra.mxu0 0.0
    %1206 = vmatprep.subr.mxu0 0.0
    %1207 = vmatpush1.msra.mxu0 0.0
    %1208 = vmatprep.subr.mxu0 0.0
    %1209 = vmatpush1.msra.mxu0 0.0
    %1210 = vmatprep.subr.mxu0 0.0
    %1211 = vmatpush1.msra.mxu0 0.0
    %1212 = vmatprep.subr.mxu0 0.0
    %1213 = vmatpush1.msra.mxu0 0.0
    %1214 = vmatprep.subr.mxu0 0.0
    %1215 = vmatpush1.msra.mxu0 0.0
    %1216 = vmatprep.subr.mxu0 0.0
    %1217 = vmatpush1.msra.mxu0 0.0
    %1218 = vmatprep.subr.mxu0 0.0
    %1219 = vmatpush1.msra.mxu0 %v169
    %1220 = vmatprep.subr.mxu0 0.0
    %1221 = vmatpush1.msra.mxu0 %v168
    %1222 = vmatprep.subr.mxu0 0.0
    %1223 = vmatpush1.msra.mxu0 %v167
    %1224 = vmatprep.subr.mxu0 0.0
    %1225 = vmatpush1.msra.mxu0 %v166
    %1226 = vmatprep.subr.mxu0 0.0
    %1227 = vmatpush2.msra.mxu0 0.0
    %1228 = vmatprep.subr.mxu0 0.0
    %1229 = vmatpush2.msra.mxu0 0.0
    %1230 = vmatprep.subr.mxu0 0.0
    %1231 = vmatpush2.msra.mxu0 0.0
    %1232 = vmatprep.subr.mxu0 0.0
    %1233 = vmatpush2.msra.mxu0 0.0
    %1234 = vmatprep.subr.mxu0 0.0
    %1235 = vmatpush2.msra.mxu0 0.0
    %1236 = vmatprep.subr.mxu0 0.0
    %1237 = vmatpush2.msra.mxu0 0.0
    %1238 = vmatprep.subr.mxu0 0.0
    %1239 = vmatpush2.msra.mxu0 0.0
    %1240 = vmatprep.subr.mxu0 0.0
    %1241 = vmatpush2.msra.mxu0 0.0
    %1242 = vmatprep.subr.mxu0 0.0
    %1243 = vmatpush2.msra.mxu0 0.0
    %1244 = vmatprep.subr.mxu0 0.0
    %1245 = vmatpush2.msra.mxu0 0.0
    %1246 = vmatprep.subr.mxu0 0.0
    %1247 = vmatpush2.msra.mxu0 0.0
    %1248 = vmatprep.subr.mxu0 0.0
    %1249 = vmatpush2.msra.mxu0 0.0
    %1250 = vmatprep.subr.mxu0 0.0
    %1251 = vmatpush2.msra.mxu0 0.0
    %1252 = vmatprep.subr.mxu0 0.0
    %1253 = vmatpush2.msra.mxu0 0.0
    %1254 = vmatprep.subr.mxu0 0.0
    %1255 = vmatpush2.msra.mxu0 0.0
    %1256 = vmatprep.subr.mxu0 0.0
    %1257 = vmatpush2.msra.mxu0 0.0
    %1258 = vmatprep.mubr.f32.mxu0 0.0
    %1259 = vmatmul.mubr.f32.gmra.mxu0 %v1192
    %v1260 = vpop.f32.mrf.mxu0
    %v1261 = vadd.f32 0.0, %v1260
    %v1262 = vpop.f32.mrf.mxu0
    %1263 = vdwg.mxu0
    %v1265 = vrot.slane %v1261, 6
    %v1267 = vadd.f32 %v158, %v1265
    %v1268 = vtanh.pop %v1267
    %v1270 = vrot.slane %v1189, 6
    %v1271 = vsel %vm172, %v1270, 0
    %1273 = vmatprep.subr.mxu0 0.0
    %1274 = vmatpush1.msra.mxu0 0.0
    %1275 = vmatprep.subr.mxu0 0.0
    %1276 = vmatpush1.msra.mxu0 0.0
    %1277 = vmatprep.subr.mxu0 0.0
    %1278 = vmatpush1.msra.mxu0 0.0
    %1279 = vmatprep.subr.mxu0 0.0
    %1280 = vmatpush1.msra.mxu0 0.0
    %1281 = vmatprep.subr.mxu0 0.0
    %1282 = vmatpush1.msra.mxu0 0.0
    %1283 = vmatprep.subr.mxu0 0.0
    %1284 = vmatpush1.msra.mxu0 0.0
    %1285 = vmatprep.subr.mxu0 0.0
    %1286 = vmatpush1.msra.mxu0 0.0
    %1287 = vmatprep.subr.mxu0 0.0
    %1288 = vmatpush1.msra.mxu0 0.0
    %1289 = vmatprep.subr.mxu0 0.0
    %1290 = vmatpush1.msra.mxu0 0.0
    %1291 = vmatprep.subr.mxu0 0.0
    %1292 = vmatpush1.msra.mxu0 0.0
    %1293 = vmatprep.subr.mxu0 0.0
    %1294 = vmatpush1.msra.mxu0 0.0
    %1295 = vmatprep.subr.mxu0 0.0
    %1296 = vmatpush1.msra.mxu0 0.0
    %1297 = vmatprep.subr.mxu0 0.0
    %1298 = vmatpush1.msra.mxu0 %v169
    %1299 = vmatprep.subr.mxu0 0.0
    %1300 = vmatpush1.msra.mxu0 %v168
    %1301 = vmatprep.subr.mxu0 0.0
    %1302 = vmatpush1.msra.mxu0 %v167
    %1303 = vmatprep.subr.mxu0 0.0
    %1304 = vmatpush1.msra.mxu0 %v166
    %1305 = vmatprep.subr.mxu0 0.0
    %1306 = vmatpush2.msra.mxu0 0.0
    %1307 = vmatprep.subr.mxu0 0.0
    %1308 = vmatpush2.msra.mxu0 0.0
    %1309 = vmatprep.subr.mxu0 0.0
    %1310 = vmatpush2.msra.mxu0 0.0
    %1311 = vmatprep.subr.mxu0 0.0
    %1312 = vmatpush2.msra.mxu0 0.0
    %1313 = vmatprep.subr.mxu0 0.0
    %1314 = vmatpush2.msra.mxu0 0.0
    %1315 = vmatprep.subr.mxu0 0.0
    %1316 = vmatpush2.msra.mxu0 0.0
    %1317 = vmatprep.subr.mxu0 0.0
    %1318 = vmatpush2.msra.mxu0 0.0
    %1319 = vmatprep.subr.mxu0 0.0
    %1320 = vmatpush2.msra.mxu0 0.0
    %1321 = vmatprep.subr.mxu0 0.0
    %1322 = vmatpush2.msra.mxu0 0.0
    %1323 = vmatprep.subr.mxu0 0.0
    %1324 = vmatpush2.msra.mxu0 0.0
    %1325 = vmatprep.subr.mxu0 0.0
    %1326 = vmatpush2.msra.mxu0 0.0
    %1327 = vmatprep.subr.mxu0 0.0
    %1328 = vmatpush2.msra.mxu0 0.0
    %1329 = vmatprep.subr.mxu0 0.0
    %1330 = vmatpush2.msra.mxu0 0.0
    %1331 = vmatprep.subr.mxu0 0.0
    %1332 = vmatpush2.msra.mxu0 0.0
    %1333 = vmatprep.subr.mxu0 0.0
    %1334 = vmatpush2.msra.mxu0 0.0
    %1335 = vmatprep.subr.mxu0 0.0
    %1336 = vmatpush2.msra.mxu0 0.0
    %1337 = vmatprep.mubr.f32.mxu0 0.0
    %1338 = vmatmul.mubr.f32.gmra.mxu0 %v1271
    %v1339 = vpop.f32.mrf.mxu0
    %v1340 = vadd.f32 0.0, %v1339
    %v1341 = vpop.f32.mrf.mxu0
    %1342 = vdwg.mxu0
    %v1344 = vrot.slane %v1340, 1
    %v1346 = vadd.f32 %v143, %v1344
    %v1347 = vtanh.pop %v1346
    %v1349 = vrot.slane %v1268, 2
    %v1350 = vsel %vm172, %v1349, 0
    %1352 = vmatprep.subr.mxu0 0.0
    %1353 = vmatpush1.msra.mxu0 0.0
    %1354 = vmatprep.subr.mxu0 0.0
    %1355 = vmatpush1.msra.mxu0 0.0
    %1356 = vmatprep.subr.mxu0 0.0
    %1357 = vmatpush1.msra.mxu0 0.0
    %1358 = vmatprep.subr.mxu0 0.0
    %1359 = vmatpush1.msra.mxu0 0.0
    %1360 = vmatprep.subr.mxu0 0.0
    %1361 = vmatpush1.msra.mxu0 0.0
    %1362 = vmatprep.subr.mxu0 0.0
    %1363 = vmatpush1.msra.mxu0 0.0
    %1364 = vmatprep.subr.mxu0 0.0
    %1365 = vmatpush1.msra.mxu0 0.0
    %1366 = vmatprep.subr.mxu0 0.0
    %1367 = vmatpush1.msra.mxu0 0.0
    %1368 = vmatprep.subr.mxu0 0.0
    %1369 = vmatpush1.msra.mxu0 0.0
    %1370 = vmatprep.subr.mxu0 0.0
    %1371 = vmatpush1.msra.mxu0 0.0
    %1372 = vmatprep.subr.mxu0 0.0
    %1373 = vmatpush1.msra.mxu0 0.0
    %1374 = vmatprep.subr.mxu0 0.0
    %1375 = vmatpush1.msra.mxu0 0.0
    %1376 = vmatprep.subr.mxu0 0.0
    %1377 = vmatpush1.msra.mxu0 %v169
    %1378 = vmatprep.subr.mxu0 0.0
    %1379 = vmatpush1.msra.mxu0 %v168
    %1380 = vmatprep.subr.mxu0 0.0
    %1381 = vmatpush1.msra.mxu0 %v167
    %1382 = vmatprep.subr.mxu0 0.0
    %1383 = vmatpush1.msra.mxu0 %v166
    %1384 = vmatprep.subr.mxu0 0.0
    %1385 = vmatpush2.msra.mxu0 0.0
    %1386 = vmatprep.subr.mxu0 0.0
    %1387 = vmatpush2.msra.mxu0 0.0
    %1388 = vmatprep.subr.mxu0 0.0
    %1389 = vmatpush2.msra.mxu0 0.0
    %1390 = vmatprep.subr.mxu0 0.0
    %1391 = vmatpush2.msra.mxu0 0.0
    %1392 = vmatprep.subr.mxu0 0.0
    %1393 = vmatpush2.msra.mxu0 0.0
    %1394 = vmatprep.subr.mxu0 0.0
    %1395 = vmatpush2.msra.mxu0 0.0
    %1396 = vmatprep.subr.mxu0 0.0
    %1397 = vmatpush2.msra.mxu0 0.0
    %1398 = vmatprep.subr.mxu0 0.0
    %1399 = vmatpush2.msra.mxu0 0.0
    %1400 = vmatprep.subr.mxu0 0.0
    %1401 = vmatpush2.msra.mxu0 0.0
    %1402 = vmatprep.subr.mxu0 0.0
    %1403 = vmatpush2.msra.mxu0 0.0
    %1404 = vmatprep.subr.mxu0 0.0
    %1405 = vmatpush2.msra.mxu0 0.0
    %1406 = vmatprep.subr.mxu0 0.0
    %1407 = vmatpush2.msra.mxu0 0.0
    %1408 = vmatprep.subr.mxu0 0.0
    %1409 = vmatpush2.msra.mxu0 0.0
    %1410 = vmatprep.subr.mxu0 0.0
    %1411 = vmatpush2.msra.mxu0 0.0
    %1412 = vmatprep.subr.mxu0 0.0
    %1413 = vmatpush2.msra.mxu0 0.0
    %1414 = vmatprep.subr.mxu0 0.0
    %1415 = vmatpush2.msra.mxu0 0.0
    %1416 = vmatprep.mubr.f32.mxu0 0.0
    %1417 = vmatmul.mubr.f32.gmra.mxu0 %v1350
    %v1418 = vpop.f32.mrf.mxu0
    %v1419 = vadd.f32 0.0, %v1418
    %v1420 = vpop.f32.mrf.mxu0
    %1421 = vdwg.mxu0
    %v1423 = vrot.slane %v1419, 5
    %v1425 = vadd.f32 %v158, %v1423
    %v1426 = vtanh.pop %v1425
    %v1428 = vrot.slane %v1347, 7
    %v1429 = vsel %vm172, %v1428, 0
    %1431 = vmatprep.subr.mxu0 0.0
    %1432 = vmatpush1.msra.mxu0 0.0
    %1433 = vmatprep.subr.mxu0 0.0
    %1434 = vmatpush1.msra.mxu0 0.0
    %1435 = vmatprep.subr.mxu0 0.0
    %1436 = vmatpush1.msra.mxu0 0.0
    %1437 = vmatprep.subr.mxu0 0.0
    %1438 = vmatpush1.msra.mxu0 0.0
    %1439 = vmatprep.subr.mxu0 0.0
    %1440 = vmatpush1.msra.mxu0 0.0
    %1441 = vmatprep.subr.mxu0 0.0
    %1442 = vmatpush1.msra.mxu0 0.0
    %1443 = vmatprep.subr.mxu0 0.0
    %1444 = vmatpush1.msra.mxu0 0.0
    %1445 = vmatprep.subr.mxu0 0.0
    %1446 = vmatpush1.msra.mxu0 0.0
    %1447 = vmatprep.subr.mxu0 0.0
    %1448 = vmatpush1.msra.mxu0 0.0
    %1449 = vmatprep.subr.mxu0 0.0
    %1450 = vmatpush1.msra.mxu0 0.0
    %1451 = vmatprep.subr.mxu0 0.0
    %1452 = vmatpush1.msra.mxu0 0.0
    %1453 = vmatprep.subr.mxu0 0.0
    %1454 = vmatpush1.msra.mxu0 0.0
    %1455 = vmatprep.subr.mxu0 0.0
    %1456 = vmatpush1.msra.mxu0 %v169
    %1457 = vmatprep.subr.mxu0 0.0
    %1458 = vmatpush1.msra.mxu0 %v168
    %1459 = vmatprep.subr.mxu0 0.0
    %1460 = vmatpush1.msra.mxu0 %v167
    %1461 = vmatprep.subr.mxu0 0.0
    %1462 = vmatpush1.msra.mxu0 %v166
    %1463 = vmatprep.subr.mxu0 0.0
    %1464 = vmatpush2.msra.mxu0 0.0
    %1465 = vmatprep.subr.mxu0 0.0
    %1466 = vmatpush2.msra.mxu0 0.0
    %1467 = vmatprep.subr.mxu0 0.0
    %1468 = vmatpush2.msra.mxu0 0.0
    %1469 = vmatprep.subr.mxu0 0.0
    %1470 = vmatpush2.msra.mxu0 0.0
    %1471 = vmatprep.subr.mxu0 0.0
    %1472 = vmatpush2.msra.mxu0 0.0
    %1473 = vmatprep.subr.mxu0 0.0
    %1474 = vmatpush2.msra.mxu0 0.0
    %1475 = vmatprep.subr.mxu0 0.0
    %1476 = vmatpush2.msra.mxu0 0.0
    %1477 = vmatprep.subr.mxu0 0.0
    %1478 = vmatpush2.msra.mxu0 0.0
    %1479 = vmatprep.subr.mxu0 0.0
    %1480 = vmatpush2.msra.mxu0 0.0
    %1481 = vmatprep.subr.mxu0 0.0
    %1482 = vmatpush2.msra.mxu0 0.0
    %1483 = vmatprep.subr.mxu0 0.0
    %1484 = vmatpush2.msra.mxu0 0.0
    %1485 = vmatprep.subr.mxu0 0.0
    %1486 = vmatpush2.msra.mxu0 0.0
    %1487 = vmatprep.subr.mxu0 0.0
    %1488 = vmatpush2.msra.mxu0 0.0
    %1489 = vmatprep.subr.mxu0 0.0
    %1490 = vmatpush2.msra.mxu0 0.0
    %1491 = vmatprep.subr.mxu0 0.0
    %1492 = vmatpush2.msra.mxu0 0.0
    %1493 = vmatprep.subr.mxu0 0.0
    %1494 = vmatpush2.msra.mxu0 0.0
    %1495 = vmatprep.mubr.f32.mxu0 0.0
    %1496 = vmatmul.mubr.f32.gmra.mxu0 %v1429
    %v1497 = vpop.f32.mrf.mxu0
    %v1498 = vadd.f32 0.0, %v1497
    %v1499 = vpop.f32.mrf.mxu0
    %1500 = vdwg.mxu0
    %v1501 = vadd.f32 %v148, %v1498
    %v1502 = vtanh.pop %v1501
    %v1504 = vrot.slane %v1426, 3
    %v1505 = vsel %vm172, %v1504, 0
    %1507 = vmatprep.subr.mxu0 0.0
    %1508 = vmatpush1.msra.mxu0 0.0
    %1509 = vmatprep.subr.mxu0 0.0
    %1510 = vmatpush1.msra.mxu0 0.0
    %1511 = vmatprep.subr.mxu0 0.0
    %1512 = vmatpush1.msra.mxu0 0.0
    %1513 = vmatprep.subr.mxu0 0.0
    %1514 = vmatpush1.msra.mxu0 0.0
    %1515 = vmatprep.subr.mxu0 0.0
    %1516 = vmatpush1.msra.mxu0 0.0
    %1517 = vmatprep.subr.mxu0 0.0
    %1518 = vmatpush1.msra.mxu0 0.0
    %1519 = vmatprep.subr.mxu0 0.0
    %1520 = vmatpush1.msra.mxu0 0.0
    %1521 = vmatprep.subr.mxu0 0.0
    %1522 = vmatpush1.msra.mxu0 0.0
    %1523 = vmatprep.subr.mxu0 0.0
    %1524 = vmatpush1.msra.mxu0 0.0
    %1525 = vmatprep.subr.mxu0 0.0
    %1526 = vmatpush1.msra.mxu0 0.0
    %1527 = vmatprep.subr.mxu0 0.0
    %1528 = vmatpush1.msra.mxu0 0.0
    %1529 = vmatprep.subr.mxu0 0.0
    %1530 = vmatpush1.msra.mxu0 0.0
    %1531 = vmatprep.subr.mxu0 0.0
    %1532 = vmatpush1.msra.mxu0 %v169
    %1533 = vmatprep.subr.mxu0 0.0
    %1534 = vmatpush1.msra.mxu0 %v168
    %1535 = vmatprep.subr.mxu0 0.0
    %1536 = vmatpush1.msra.mxu0 %v167
    %1537 = vmatprep.subr.mxu0 0.0
    %1538 = vmatpush1.msra.mxu0 %v166
    %1539 = vmatprep.subr.mxu0 0.0
    %1540 = vmatpush2.msra.mxu0 0.0
    %1541 = vmatprep.subr.mxu0 0.0
    %1542 = vmatpush2.msra.mxu0 0.0
    %1543 = vmatprep.subr.mxu0 0.0
    %1544 = vmatpush2.msra.mxu0 0.0
    %1545 = vmatprep.subr.mxu0 0.0
    %1546 = vmatpush2.msra.mxu0 0.0
    %1547 = vmatprep.subr.mxu0 0.0
    %1548 = vmatpush2.msra.mxu0 0.0
    %1549 = vmatprep.subr.mxu0 0.0
    %1550 = vmatpush2.msra.mxu0 0.0
    %1551 = vmatprep.subr.mxu0 0.0
    %1552 = vmatpush2.msra.mxu0 0.0
    %1553 = vmatprep.subr.mxu0 0.0
    %1554 = vmatpush2.msra.mxu0 0.0
    %1555 = vmatprep.subr.mxu0 0.0
    %1556 = vmatpush2.msra.mxu0 0.0
    %1557 = vmatprep.subr.mxu0 0.0
    %1558 = vmatpush2.msra.mxu0 0.0
    %1559 = vmatprep.subr.mxu0 0.0
    %1560 = vmatpush2.msra.mxu0 0.0
    %1561 = vmatprep.subr.mxu0 0.0
    %1562 = vmatpush2.msra.mxu0 0.0
    %1563 = vmatprep.subr.mxu0 0.0
    %1564 = vmatpush2.msra.mxu0 0.0
    %1565 = vmatprep.subr.mxu0 0.0
    %1566 = vmatpush2.msra.mxu0 0.0
    %1567 = vmatprep.subr.mxu0 0.0
    %1568 = vmatpush2.msra.mxu0 0.0
    %1569 = vmatprep.subr.mxu0 0.0
    %1570 = vmatpush2.msra.mxu0 0.0
    %1571 = vmatprep.mubr.f32.mxu0 0.0
    %1572 = vmatmul.mubr.f32.gmra.mxu0 %v1505
    %v1573 = vpop.f32.mrf.mxu0
    %v1574 = vadd.f32 0.0, %v1573
    %v1575 = vpop.f32.mrf.mxu0
    %1576 = vdwg.mxu0
    %v1578 = vrot.slane %v1574, 4
    %v1580 = vadd.f32 %v158, %v1578
    %v1581 = vtanh.pop %v1580
    %v1583 = vsel %vm172, %v1502, 0
    %1585 = vmatprep.subr.mxu0 0.0
    %1586 = vmatpush1.msra.mxu0 0.0
    %1587 = vmatprep.subr.mxu0 0.0
    %1588 = vmatpush1.msra.mxu0 0.0
    %1589 = vmatprep.subr.mxu0 0.0
    %1590 = vmatpush1.msra.mxu0 0.0
    %1591 = vmatprep.subr.mxu0 0.0
    %1592 = vmatpush1.msra.mxu0 0.0
    %1593 = vmatprep.subr.mxu0 0.0
    %1594 = vmatpush1.msra.mxu0 0.0
    %1595 = vmatprep.subr.mxu0 0.0
    %1596 = vmatpush1.msra.mxu0 0.0
    %1597 = vmatprep.subr.mxu0 0.0
    %1598 = vmatpush1.msra.mxu0 0.0
    %1599 = vmatprep.subr.mxu0 0.0
    %1600 = vmatpush1.msra.mxu0 0.0
    %1601 = vmatprep.subr.mxu0 0.0
    %1602 = vmatpush1.msra.mxu0 0.0
    %1603 = vmatprep.subr.mxu0 0.0
    %1604 = vmatpush1.msra.mxu0 0.0
    %1605 = vmatprep.subr.mxu0 0.0
    %1606 = vmatpush1.msra.mxu0 0.0
    %1607 = vmatprep.subr.mxu0 0.0
    %1608 = vmatpush1.msra.mxu0 0.0
    %1609 = vmatprep.subr.mxu0 0.0
    %1610 = vmatpush1.msra.mxu0 %v169
    %1611 = vmatprep.subr.mxu0 0.0
    %1612 = vmatpush1.msra.mxu0 %v168
    %1613 = vmatprep.subr.mxu0 0.0
    %1614 = vmatpush1.msra.mxu0 %v167
    %1615 = vmatprep.subr.mxu0 0.0
    %1616 = vmatpush1.msra.mxu0 %v166
    %1617 = vmatprep.subr.mxu0 0.0
    %1618 = vmatpush2.msra.mxu0 0.0
    %1619 = vmatprep.subr.mxu0 0.0
    %1620 = vmatpush2.msra.mxu0 0.0
    %1621 = vmatprep.subr.mxu0 0.0
    %1622 = vmatpush2.msra.mxu0 0.0
    %1623 = vmatprep.subr.mxu0 0.0
    %1624 = vmatpush2.msra.mxu0 0.0
    %1625 = vmatprep.subr.mxu0 0.0
    %1626 = vmatpush2.msra.mxu0 0.0
    %1627 = vmatprep.subr.mxu0 0.0
    %1628 = vmatpush2.msra.mxu0 0.0
    %1629 = vmatprep.subr.mxu0 0.0
    %1630 = vmatpush2.msra.mxu0 0.0
    %1631 = vmatprep.subr.mxu0 0.0
    %1632 = vmatpush2.msra.mxu0 0.0
    %1633 = vmatprep.subr.mxu0 0.0
    %1634 = vmatpush2.msra.mxu0 0.0
    %1635 = vmatprep.subr.mxu0 0.0
    %1636 = vmatpush2.msra.mxu0 0.0
    %1637 = vmatprep.subr.mxu0 0.0
    %1638 = vmatpush2.msra.mxu0 0.0
    %1639 = vmatprep.subr.mxu0 0.0
    %1640 = vmatpush2.msra.mxu0 0.0
    %1641 = vmatprep.subr.mxu0 0.0
    %1642 = vmatpush2.msra.mxu0 0.0
    %1643 = vmatprep.subr.mxu0 0.0
    %1644 = vmatpush2.msra.mxu0 0.0
    %1645 = vmatprep.subr.mxu0 0.0
    %1646 = vmatpush2.msra.mxu0 0.0
    %1647 = vmatprep.subr.mxu0 0.0
    %1648 = vmatpush2.msra.mxu0 0.0
    %1649 = vmatprep.mubr.f32.mxu0 0.0
    %1650 = vmatmul.mubr.f32.gmra.mxu0 %v1583
    %v1651 = vpop.f32.mrf.mxu0
    %v1652 = vadd.f32 0.0, %v1651
    %v1653 = vpop.f32.mrf.mxu0
    %1654 = vdwg.mxu0
    %v1656 = vrot.slane %v1652, 7
    %v1658 = vadd.f32 %v148, %v1656
    %v1659 = vtanh.pop %v1658
    %v1661 = vrot.slane %v1581, 4
    %v1662 = vsel %vm172, %v1661, 0
    %1664 = vmatprep.subr.mxu0 0.0
    %1665 = vmatpush1.msra.mxu0 0.0
    %1666 = vmatprep.subr.mxu0 0.0
    %1667 = vmatpush1.msra.mxu0 0.0
    %1668 = vmatprep.subr.mxu0 0.0
    %1669 = vmatpush1.msra.mxu0 0.0
    %1670 = vmatprep.subr.mxu0 0.0
    %1671 = vmatpush1.msra.mxu0 0.0
    %1672 = vmatprep.subr.mxu0 0.0
    %1673 = vmatpush1.msra.mxu0 0.0
    %1674 = vmatprep.subr.mxu0 0.0
    %1675 = vmatpush1.msra.mxu0 0.0
    %1676 = vmatprep.subr.mxu0 0.0
    %1677 = vmatpush1.msra.mxu0 0.0
    %1678 = vmatprep.subr.mxu0 0.0
    %1679 = vmatpush1.msra.mxu0 0.0
    %1680 = vmatprep.subr.mxu0 0.0
    %1681 = vmatpush1.msra.mxu0 0.0
    %1682 = vmatprep.subr.mxu0 0.0
    %1683 = vmatpush1.msra.mxu0 0.0
    %1684 = vmatprep.subr.mxu0 0.0
    %1685 = vmatpush1.msra.mxu0 0.0
    %1686 = vmatprep.subr.mxu0 0.0
    %1687 = vmatpush1.msra.mxu0 0.0
    %1688 = vmatprep.subr.mxu0 0.0
    %1689 = vmatpush1.msra.mxu0 %v169
    %1690 = vmatprep.subr.mxu0 0.0
    %1691 = vmatpush1.msra.mxu0 %v168
    %1692 = vmatprep.subr.mxu0 0.0
    %1693 = vmatpush1.msra.mxu0 %v167
    %1694 = vmatprep.subr.mxu0 0.0
    %1695 = vmatpush1.msra.mxu0 %v166
    %1696 = vmatprep.subr.mxu0 0.0
    %1697 = vmatpush2.msra.mxu0 0.0
    %1698 = vmatprep.subr.mxu0 0.0
    %1699 = vmatpush2.msra.mxu0 0.0
    %1700 = vmatprep.subr.mxu0 0.0
    %1701 = vmatpush2.msra.mxu0 0.0
    %1702 = vmatprep.subr.mxu0 0.0
    %1703 = vmatpush2.msra.mxu0 0.0
    %1704 = vmatprep.subr.mxu0 0.0
    %1705 = vmatpush2.msra.mxu0 0.0
    %1706 = vmatprep.subr.mxu0 0.0
    %1707 = vmatpush2.msra.mxu0 0.0
    %1708 = vmatprep.subr.mxu0 0.0
    %1709 = vmatpush2.msra.mxu0 0.0
    %1710 = vmatprep.subr.mxu0 0.0
    %1711 = vmatpush2.msra.mxu0 0.0
    %1712 = vmatprep.subr.mxu0 0.0
    %1713 = vmatpush2.msra.mxu0 0.0
    %1714 = vmatprep.subr.mxu0 0.0
    %1715 = vmatpush2.msra.mxu0 0.0
    %1716 = vmatprep.subr.mxu0 0.0
    %1717 = vmatpush2.msra.mxu0 0.0
    %1718 = vmatprep.subr.mxu0 0.0
    %1719 = vmatpush2.msra.mxu0 0.0
    %1720 = vmatprep.subr.mxu0 0.0
    %1721 = vmatpush2.msra.mxu0 0.0
    %1722 = vmatprep.subr.mxu0 0.0
    %1723 = vmatpush2.msra.mxu0 0.0
    %1724 = vmatprep.subr.mxu0 0.0
    %1725 = vmatpush2.msra.mxu0 0.0
    %1726 = vmatprep.subr.mxu0 0.0
    %1727 = vmatpush2.msra.mxu0 0.0
    %1728 = vmatprep.mubr.f32.mxu0 0.0
    %1729 = vmatmul.mubr.f32.gmra.mxu0 %v1662
    %v1730 = vpop.f32.mrf.mxu0
    %v1731 = vadd.f32 0.0, %v1730
    %v1732 = vpop.f32.mrf.mxu0
    %1733 = vdwg.mxu0
    %v1735 = vrot.slane %v1731, 3
    %v1737 = vadd.f32 %v158, %v1735
    %v1738 = vtanh.pop %v1737
    %v1740 = vrot.slane %v1659, 1
    %v1741 = vsel %vm172, %v1740, 0
    %1743 = vmatprep.subr.mxu0 0.0
    %1744 = vmatpush1.msra.mxu0 0.0
    %1745 = vmatprep.subr.mxu0 0.0
    %1746 = vmatpush1.msra.mxu0 0.0
    %1747 = vmatprep.subr.mxu0 0.0
    %1748 = vmatpush1.msra.mxu0 0.0
    %1749 = vmatprep.subr.mxu0 0.0
    %1750 = vmatpush1.msra.mxu0 0.0
    %1751 = vmatprep.subr.mxu0 0.0
    %1752 = vmatpush1.msra.mxu0 0.0
    %1753 = vmatprep.subr.mxu0 0.0
    %1754 = vmatpush1.msra.mxu0 0.0
    %1755 = vmatprep.subr.mxu0 0.0
    %1756 = vmatpush1.msra.mxu0 0.0
    %1757 = vmatprep.subr.mxu0 0.0
    %1758 = vmatpush1.msra.mxu0 0.0
    %1759 = vmatprep.subr.mxu0 0.0
    %1760 = vmatpush1.msra.mxu0 0.0
    %1761 = vmatprep.subr.mxu0 0.0
    %1762 = vmatpush1.msra.mxu0 0.0
    %1763 = vmatprep.subr.mxu0 0.0
    %1764 = vmatpush1.msra.mxu0 0.0
    %1765 = vmatprep.subr.mxu0 0.0
    %1766 = vmatpush1.msra.mxu0 0.0
    %1767 = vmatprep.subr.mxu0 0.0
    %1768 = vmatpush1.msra.mxu0 %v169
    %1769 = vmatprep.subr.mxu0 0.0
    %1770 = vmatpush1.msra.mxu0 %v168
    %1771 = vmatprep.subr.mxu0 0.0
    %1772 = vmatpush1.msra.mxu0 %v167
    %1773 = vmatprep.subr.mxu0 0.0
    %1774 = vmatpush1.msra.mxu0 %v166
    %1775 = vmatprep.subr.mxu0 0.0
    %1776 = vmatpush2.msra.mxu0 0.0
    %1777 = vmatprep.subr.mxu0 0.0
    %1778 = vmatpush2.msra.mxu0 0.0
    %1779 = vmatprep.subr.mxu0 0.0
    %1780 = vmatpush2.msra.mxu0 0.0
    %1781 = vmatprep.subr.mxu0 0.0
    %1782 = vmatpush2.msra.mxu0 0.0
    %1783 = vmatprep.subr.mxu0 0.0
    %1784 = vmatpush2.msra.mxu0 0.0
    %1785 = vmatprep.subr.mxu0 0.0
    %1786 = vmatpush2.msra.mxu0 0.0
    %1787 = vmatprep.subr.mxu0 0.0
    %1788 = vmatpush2.msra.mxu0 0.0
    %1789 = vmatprep.subr.mxu0 0.0
    %1790 = vmatpush2.msra.mxu0 0.0
    %1791 = vmatprep.subr.mxu0 0.0
    %1792 = vmatpush2.msra.mxu0 0.0
    %1793 = vmatprep.subr.mxu0 0.0
    %1794 = vmatpush2.msra.mxu0 0.0
    %1795 = vmatprep.subr.mxu0 0.0
    %1796 = vmatpush2.msra.mxu0 0.0
    %1797 = vmatprep.subr.mxu0 0.0
    %1798 = vmatpush2.msra.mxu0 0.0
    %1799 = vmatprep.subr.mxu0 0.0
    %1800 = vmatpush2.msra.mxu0 0.0
    %1801 = vmatprep.subr.mxu0 0.0
    %1802 = vmatpush2.msra.mxu0 0.0
    %1803 = vmatprep.subr.mxu0 0.0
    %1804 = vmatpush2.msra.mxu0 0.0
    %1805 = vmatprep.subr.mxu0 0.0
    %1806 = vmatpush2.msra.mxu0 0.0
    %1807 = vmatprep.mubr.f32.mxu0 0.0
    %1808 = vmatmul.mubr.f32.gmra.mxu0 %v1741
    %v1809 = vpop.f32.mrf.mxu0
    %v1810 = vadd.f32 0.0, %v1809
    %v1811 = vpop.f32.mrf.mxu0
    %1812 = vdwg.mxu0
    %v1814 = vrot.slane %v1810, 6
    %v1816 = vadd.f32 %v148, %v1814
    %v1817 = vtanh.pop %v1816
    %v1819 = vrot.slane %v1738, 5
    %v1820 = vsel %vm172, %v1819, 0
    %1822 = vmatprep.subr.mxu0 0.0
    %1823 = vmatpush1.msra.mxu0 0.0
    %1824 = vmatprep.subr.mxu0 0.0
    %1825 = vmatpush1.msra.mxu0 0.0
    %1826 = vmatprep.subr.mxu0 0.0
    %1827 = vmatpush1.msra.mxu0 0.0
    %1828 = vmatprep.subr.mxu0 0.0
    %1829 = vmatpush1.msra.mxu0 0.0
    %1830 = vmatprep.subr.mxu0 0.0
    %1831 = vmatpush1.msra.mxu0 0.0
    %1832 = vmatprep.subr.mxu0 0.0
    %1833 = vmatpush1.msra.mxu0 0.0
    %1834 = vmatprep.subr.mxu0 0.0
    %1835 = vmatpush1.msra.mxu0 0.0
    %1836 = vmatprep.subr.mxu0 0.0
    %1837 = vmatpush1.msra.mxu0 0.0
    %1838 = vmatprep.subr.mxu0 0.0
    %1839 = vmatpush1.msra.mxu0 0.0
    %1840 = vmatprep.subr.mxu0 0.0
    %1841 = vmatpush1.msra.mxu0 0.0
    %1842 = vmatprep.subr.mxu0 0.0
    %1843 = vmatpush1.msra.mxu0 0.0
    %1844 = vmatprep.subr.mxu0 0.0
    %1845 = vmatpush1.msra.mxu0 0.0
    %1846 = vmatprep.subr.mxu0 0.0
    %1847 = vmatpush1.msra.mxu0 %v169
    %1848 = vmatprep.subr.mxu0 0.0
    %1849 = vmatpush1.msra.mxu0 %v168
    %1850 = vmatprep.subr.mxu0 0.0
    %1851 = vmatpush1.msra.mxu0 %v167
    %1852 = vmatprep.subr.mxu0 0.0
    %1853 = vmatpush1.msra.mxu0 %v166
    %1854 = vmatprep.subr.mxu0 0.0
    %1855 = vmatpush2.msra.mxu0 0.0
    %1856 = vmatprep.subr.mxu0 0.0
    %1857 = vmatpush2.msra.mxu0 0.0
    %1858 = vmatprep.subr.mxu0 0.0
    %1859 = vmatpush2.msra.mxu0 0.0
    %1860 = vmatprep.subr.mxu0 0.0
    %1861 = vmatpush2.msra.mxu0 0.0
    %1862 = vmatprep.subr.mxu0 0.0
    %1863 = vmatpush2.msra.mxu0 0.0
    %1864 = vmatprep.subr.mxu0 0.0
    %1865 = vmatpush2.msra.mxu0 0.0
    %1866 = vmatprep.subr.mxu0 0.0
    %1867 = vmatpush2.msra.mxu0 0.0
    %1868 = vmatprep.subr.mxu0 0.0
    %1869 = vmatpush2.msra.mxu0 0.0
    %1870 = vmatprep.subr.mxu0 0.0
    %1871 = vmatpush2.msra.mxu0 0.0
    %1872 = vmatprep.subr.mxu0 0.0
    %1873 = vmatpush2.msra.mxu0 0.0
    %1874 = vmatprep.subr.mxu0 0.0
    %1875 = vmatpush2.msra.mxu0 0.0
    %1876 = vmatprep.subr.mxu0 0.0
    %1877 = vmatpush2.msra.mxu0 0.0
    %1878 = vmatprep.subr.mxu0 0.0
    %1879 = vmatpush2.msra.mxu0 0.0
    %1880 = vmatprep.subr.mxu0 0.0
    %1881 = vmatpush2.msra.mxu0 0.0
    %1882 = vmatprep.subr.mxu0 0.0
    %1883 = vmatpush2.msra.mxu0 0.0
    %1884 = vmatprep.subr.mxu0 0.0
    %1885 = vmatpush2.msra.mxu0 0.0
    %1886 = vmatprep.mubr.f32.mxu0 0.0
    %1887 = vmatmul.mubr.f32.gmra.mxu0 %v1820
    %v1888 = vpop.f32.mrf.mxu0
    %v1889 = vadd.f32 0.0, %v1888
    %v1890 = vpop.f32.mrf.mxu0
    %1891 = vdwg.mxu0
    %v1893 = vrot.slane %v1889, 2
    %v1895 = vadd.f32 %v158, %v1893
    %v1896 = vtanh.pop %v1895
    %v1898 = vrot.slane %v1817, 2
    %v1899 = vsel %vm172, %v1898, 0
    %1901 = vmatprep.subr.mxu0 0.0
    %1902 = vmatpush1.msra.mxu0 0.0
    %1903 = vmatprep.subr.mxu0 0.0
    %1904 = vmatpush1.msra.mxu0 0.0
    %1905 = vmatprep.subr.mxu0 0.0
    %1906 = vmatpush1.msra.mxu0 0.0
    %1907 = vmatprep.subr.mxu0 0.0
    %1908 = vmatpush1.msra.mxu0 0.0
    %1909 = vmatprep.subr.mxu0 0.0
    %1910 = vmatpush1.msra.mxu0 0.0
    %1911 = vmatprep.subr.mxu0 0.0
    %1912 = vmatpush1.msra.mxu0 0.0
    %1913 = vmatprep.subr.mxu0 0.0
    %1914 = vmatpush1.msra.mxu0 0.0
    %1915 = vmatprep.subr.mxu0 0.0
    %1916 = vmatpush1.msra.mxu0 0.0
    %1917 = vmatprep.subr.mxu0 0.0
    %1918 = vmatpush1.msra.mxu0 0.0
    %1919 = vmatprep.subr.mxu0 0.0
    %1920 = vmatpush1.msra.mxu0 0.0
    %1921 = vmatprep.subr.mxu0 0.0
    %1922 = vmatpush1.msra.mxu0 0.0
    %1923 = vmatprep.subr.mxu0 0.0
    %1924 = vmatpush1.msra.mxu0 0.0
    %1925 = vmatprep.subr.mxu0 0.0
    %1926 = vmatpush1.msra.mxu0 %v169
    %1927 = vmatprep.subr.mxu0 0.0
    %1928 = vmatpush1.msra.mxu0 %v168
    %1929 = vmatprep.subr.mxu0 0.0
    %1930 = vmatpush1.msra.mxu0 %v167
    %1931 = vmatprep.subr.mxu0 0.0
    %1932 = vmatpush1.msra.mxu0 %v166
    %1933 = vmatprep.subr.mxu0 0.0
    %1934 = vmatpush2.msra.mxu0 0.0
    %1935 = vmatprep.subr.mxu0 0.0
    %1936 = vmatpush2.msra.mxu0 0.0
    %1937 = vmatprep.subr.mxu0 0.0
    %1938 = vmatpush2.msra.mxu0 0.0
    %1939 = vmatprep.subr.mxu0 0.0
    %1940 = vmatpush2.msra.mxu0 0.0
    %1941 = vmatprep.subr.mxu0 0.0
    %1942 = vmatpush2.msra.mxu0 0.0
    %1943 = vmatprep.subr.mxu0 0.0
    %1944 = vmatpush2.msra.mxu0 0.0
    %1945 = vmatprep.subr.mxu0 0.0
    %1946 = vmatpush2.msra.mxu0 0.0
    %1947 = vmatprep.subr.mxu0 0.0
    %1948 = vmatpush2.msra.mxu0 0.0
    %1949 = vmatprep.subr.mxu0 0.0
    %1950 = vmatpush2.msra.mxu0 0.0
    %1951 = vmatprep.subr.mxu0 0.0
    %1952 = vmatpush2.msra.mxu0 0.0
    %1953 = vmatprep.subr.mxu0 0.0
    %1954 = vmatpush2.msra.mxu0 0.0
    %1955 = vmatprep.subr.mxu0 0.0
    %1956 = vmatpush2.msra.mxu0 0.0
    %1957 = vmatprep.subr.mxu0 0.0
    %1958 = vmatpush2.msra.mxu0 0.0
    %1959 = vmatprep.subr.mxu0 0.0
    %1960 = vmatpush2.msra.mxu0 0.0
    %1961 = vmatprep.subr.mxu0 0.0
    %1962 = vmatpush2.msra.mxu0 0.0
    %1963 = vmatprep.subr.mxu0 0.0
    %1964 = vmatpush2.msra.mxu0 0.0
    %1965 = vmatprep.mubr.f32.mxu0 0.0
    %1966 = vmatmul.mubr.f32.gmra.mxu0 %v1899
    %v1967 = vpop.f32.mrf.mxu0
    %v1968 = vadd.f32 0.0, %v1967
    %v1969 = vpop.f32.mrf.mxu0
    %1970 = vdwg.mxu0
    %v1972 = vrot.slane %v1968, 5
    %v1974 = vadd.f32 %v148, %v1972
    %v1975 = vtanh.pop %v1974
    %v1977 = vrot.slane %v1896, 6
    %v1978 = vsel %vm172, %v1977, 0
    %1980 = vmatprep.subr.mxu0 0.0
    %1981 = vmatpush1.msra.mxu0 0.0
    %1982 = vmatprep.subr.mxu0 0.0
    %1983 = vmatpush1.msra.mxu0 0.0
    %1984 = vmatprep.subr.mxu0 0.0
    %1985 = vmatpush1.msra.mxu0 0.0
    %1986 = vmatprep.subr.mxu0 0.0
    %1987 = vmatpush1.msra.mxu0 0.0
    %1988 = vmatprep.subr.mxu0 0.0
    %1989 = vmatpush1.msra.mxu0 0.0
    %1990 = vmatprep.subr.mxu0 0.0
    %1991 = vmatpush1.msra.mxu0 0.0
    %1992 = vmatprep.subr.mxu0 0.0
    %1993 = vmatpush1.msra.mxu0 0.0
    %1994 = vmatprep.subr.mxu0 0.0
    %1995 = vmatpush1.msra.mxu0 0.0
    %1996 = vmatprep.subr.mxu0 0.0
    %1997 = vmatpush1.msra.mxu0 0.0
    %1998 = vmatprep.subr.mxu0 0.0
    %1999 = vmatpush1.msra.mxu0 0.0
    %2000 = vmatprep.subr.mxu0 0.0
    %2001 = vmatpush1.msra.mxu0 0.0
    %2002 = vmatprep.subr.mxu0 0.0
    %2003 = vmatpush1.msra.mxu0 0.0
    %2004 = vmatprep.subr.mxu0 0.0
    %2005 = vmatpush1.msra.mxu0 %v169
    %2006 = vmatprep.subr.mxu0 0.0
    %2007 = vmatpush1.msra.mxu0 %v168
    %2008 = vmatprep.subr.mxu0 0.0
    %2009 = vmatpush1.msra.mxu0 %v167
    %2010 = vmatprep.subr.mxu0 0.0
    %2011 = vmatpush1.msra.mxu0 %v166
    %2012 = vmatprep.subr.mxu0 0.0
    %2013 = vmatpush2.msra.mxu0 0.0
    %2014 = vmatprep.subr.mxu0 0.0
    %2015 = vmatpush2.msra.mxu0 0.0
    %2016 = vmatprep.subr.mxu0 0.0
    %2017 = vmatpush2.msra.mxu0 0.0
    %2018 = vmatprep.subr.mxu0 0.0
    %2019 = vmatpush2.msra.mxu0 0.0
    %2020 = vmatprep.subr.mxu0 0.0
    %2021 = vmatpush2.msra.mxu0 0.0
    %2022 = vmatprep.subr.mxu0 0.0
    %2023 = vmatpush2.msra.mxu0 0.0
    %2024 = vmatprep.subr.mxu0 0.0
    %2025 = vmatpush2.msra.mxu0 0.0
    %2026 = vmatprep.subr.mxu0 0.0
    %2027 = vmatpush2.msra.mxu0 0.0
    %2028 = vmatprep.subr.mxu0 0.0
    %2029 = vmatpush2.msra.mxu0 0.0
    %2030 = vmatprep.subr.mxu0 0.0
    %2031 = vmatpush2.msra.mxu0 0.0
    %2032 = vmatprep.subr.mxu0 0.0
    %2033 = vmatpush2.msra.mxu0 0.0
    %2034 = vmatprep.subr.mxu0 0.0
    %2035 = vmatpush2.msra.mxu0 0.0
    %2036 = vmatprep.subr.mxu0 0.0
    %2037 = vmatpush2.msra.mxu0 0.0
    %2038 = vmatprep.subr.mxu0 0.0
    %2039 = vmatpush2.msra.mxu0 0.0
    %2040 = vmatprep.subr.mxu0 0.0
    %2041 = vmatpush2.msra.mxu0 0.0
    %2042 = vmatprep.subr.mxu0 0.0
    %2043 = vmatpush2.msra.mxu0 0.0
    %2044 = vmatprep.mubr.f32.mxu0 0.0
    %2045 = vmatmul.mubr.f32.gmra.mxu0 %v1978
    %v2046 = vpop.f32.mrf.mxu0
    %v2047 = vadd.f32 0.0, %v2046
    %v2048 = vpop.f32.mrf.mxu0
    %2049 = vdwg.mxu0
    %v2051 = vrot.slane %v2047, 1
    %v2053 = vadd.f32 %v158, %v2051
    %v2054 = vtanh.pop %v2053
    %v2056 = vrot.slane %v1975, 3
    %v2057 = vsel %vm172, %v2056, 0
    %2059 = vmatprep.subr.mxu0 0.0
    %2060 = vmatpush1.msra.mxu0 0.0
    %2061 = vmatprep.subr.mxu0 0.0
    %2062 = vmatpush1.msra.mxu0 0.0
    %2063 = vmatprep.subr.mxu0 0.0
    %2064 = vmatpush1.msra.mxu0 0.0
    %2065 = vmatprep.subr.mxu0 0.0
    %2066 = vmatpush1.msra.mxu0 0.0
    %2067 = vmatprep.subr.mxu0 0.0
    %2068 = vmatpush1.msra.mxu0 0.0
    %2069 = vmatprep.subr.mxu0 0.0
    %2070 = vmatpush1.msra.mxu0 0.0
    %2071 = vmatprep.subr.mxu0 0.0
    %2072 = vmatpush1.msra.mxu0 0.0
    %2073 = vmatprep.subr.mxu0 0.0
    %2074 = vmatpush1.msra.mxu0 0.0
    %2075 = vmatprep.subr.mxu0 0.0
    %2076 = vmatpush1.msra.mxu0 0.0
    %2077 = vmatprep.subr.mxu0 0.0
    %2078 = vmatpush1.msra.mxu0 0.0
    %2079 = vmatprep.subr.mxu0 0.0
    %2080 = vmatpush1.msra.mxu0 0.0
    %2081 = vmatprep.subr.mxu0 0.0
    %2082 = vmatpush1.msra.mxu0 0.0
    %2083 = vmatprep.subr.mxu0 0.0
    %2084 = vmatpush1.msra.mxu0 %v169
    %2085 = vmatprep.subr.mxu0 0.0
    %2086 = vmatpush1.msra.mxu0 %v168
    %2087 = vmatprep.subr.mxu0 0.0
    %2088 = vmatpush1.msra.mxu0 %v167
    %2089 = vmatprep.subr.mxu0 0.0
    %2090 = vmatpush1.msra.mxu0 %v166
    %2091 = vmatprep.subr.mxu0 0.0
    %2092 = vmatpush2.msra.mxu0 0.0
    %2093 = vmatprep.subr.mxu0 0.0
    %2094 = vmatpush2.msra.mxu0 0.0
    %2095 = vmatprep.subr.mxu0 0.0
    %2096 = vmatpush2.msra.mxu0 0.0
    %2097 = vmatprep.subr.mxu0 0.0
    %2098 = vmatpush2.msra.mxu0 0.0
    %2099 = vmatprep.subr.mxu0 0.0
    %2100 = vmatpush2.msra.mxu0 0.0
    %2101 = vmatprep.subr.mxu0 0.0
    %2102 = vmatpush2.msra.mxu0 0.0
    %2103 = vmatprep.subr.mxu0 0.0
    %2104 = vmatpush2.msra.mxu0 0.0
    %2105 = vmatprep.subr.mxu0 0.0
    %2106 = vmatpush2.msra.mxu0 0.0
    %2107 = vmatprep.subr.mxu0 0.0
    %2108 = vmatpush2.msra.mxu0 0.0
    %2109 = vmatprep.subr.mxu0 0.0
    %2110 = vmatpush2.msra.mxu0 0.0
    %2111 = vmatprep.subr.mxu0 0.0
    %2112 = vmatpush2.msra.mxu0 0.0
    %2113 = vmatprep.subr.mxu0 0.0
    %2114 = vmatpush2.msra.mxu0 0.0
    %2115 = vmatprep.subr.mxu0 0.0
    %2116 = vmatpush2.msra.mxu0 0.0
    %2117 = vmatprep.subr.mxu0 0.0
    %2118 = vmatpush2.msra.mxu0 0.0
    %2119 = vmatprep.subr.mxu0 0.0
    %2120 = vmatpush2.msra.mxu0 0.0
    %2121 = vmatprep.subr.mxu0 0.0
    %2122 = vmatpush2.msra.mxu0 0.0
    %2123 = vmatprep.mubr.f32.mxu0 0.0
    %2124 = vmatmul.mubr.f32.gmra.mxu0 %v2057
    %v2125 = vpop.f32.mrf.mxu0
    %v2126 = vadd.f32 0.0, %v2125
    %v2127 = vpop.f32.mrf.mxu0
    %2128 = vdwg.mxu0
    %v2130 = vrot.slane %v2126, 4
    %v2132 = vadd.f32 %v148, %v2130
    %v2133 = vtanh.pop %v2132
    %v2135 = vrot.slane %v2054, 7
    %v2136 = vsel %vm172, %v2135, 0
    %2138 = vmatprep.subr.mxu0 0.0
    %2139 = vmatpush1.msra.mxu0 0.0
    %2140 = vmatprep.subr.mxu0 0.0
    %2141 = vmatpush1.msra.mxu0 0.0
    %2142 = vmatprep.subr.mxu0 0.0
    %2143 = vmatpush1.msra.mxu0 0.0
    %2144 = vmatprep.subr.mxu0 0.0
    %2145 = vmatpush1.msra.mxu0 0.0
    %2146 = vmatprep.subr.mxu0 0.0
    %2147 = vmatpush1.msra.mxu0 0.0
    %2148 = vmatprep.subr.mxu0 0.0
    %2149 = vmatpush1.msra.mxu0 0.0
    %2150 = vmatprep.subr.mxu0 0.0
    %2151 = vmatpush1.msra.mxu0 0.0
    %2152 = vmatprep.subr.mxu0 0.0
    %2153 = vmatpush1.msra.mxu0 0.0
    %2154 = vmatprep.subr.mxu0 0.0
    %2155 = vmatpush1.msra.mxu0 0.0
    %2156 = vmatprep.subr.mxu0 0.0
    %2157 = vmatpush1.msra.mxu0 0.0
    %2158 = vmatprep.subr.mxu0 0.0
    %2159 = vmatpush1.msra.mxu0 0.0
    %2160 = vmatprep.subr.mxu0 0.0
    %2161 = vmatpush1.msra.mxu0 0.0
    %2162 = vmatprep.subr.mxu0 0.0
    %2163 = vmatpush1.msra.mxu0 %v169
    %2164 = vmatprep.subr.mxu0 0.0
    %2165 = vmatpush1.msra.mxu0 %v168
    %2166 = vmatprep.subr.mxu0 0.0
    %2167 = vmatpush1.msra.mxu0 %v167
    %2168 = vmatprep.subr.mxu0 0.0
    %2169 = vmatpush1.msra.mxu0 %v166
    %2170 = vmatprep.subr.mxu0 0.0
    %2171 = vmatpush2.msra.mxu0 0.0
    %2172 = vmatprep.subr.mxu0 0.0
    %2173 = vmatpush2.msra.mxu0 0.0
    %2174 = vmatprep.subr.mxu0 0.0
    %2175 = vmatpush2.msra.mxu0 0.0
    %2176 = vmatprep.subr.mxu0 0.0
    %2177 = vmatpush2.msra.mxu0 0.0
    %2178 = vmatprep.subr.mxu0 0.0
    %2179 = vmatpush2.msra.mxu0 0.0
    %2180 = vmatprep.subr.mxu0 0.0
    %2181 = vmatpush2.msra.mxu0 0.0
    %2182 = vmatprep.subr.mxu0 0.0
    %2183 = vmatpush2.msra.mxu0 0.0
    %2184 = vmatprep.subr.mxu0 0.0
    %2185 = vmatpush2.msra.mxu0 0.0
    %2186 = vmatprep.subr.mxu0 0.0
    %2187 = vmatpush2.msra.mxu0 0.0
    %2188 = vmatprep.subr.mxu0 0.0
    %2189 = vmatpush2.msra.mxu0 0.0
    %2190 = vmatprep.subr.mxu0 0.0
    %2191 = vmatpush2.msra.mxu0 0.0
    %2192 = vmatprep.subr.mxu0 0.0
    %2193 = vmatpush2.msra.mxu0 0.0
    %2194 = vmatprep.subr.mxu0 0.0
    %2195 = vmatpush2.msra.mxu0 0.0
    %2196 = vmatprep.subr.mxu0 0.0
    %2197 = vmatpush2.msra.mxu0 0.0
    %2198 = vmatprep.subr.mxu0 0.0
    %2199 = vmatpush2.msra.mxu0 0.0
    %2200 = vmatprep.subr.mxu0 0.0
    %2201 = vmatpush2.msra.mxu0 0.0
    %2202 = vmatprep.mubr.f32.mxu0 0.0
    %2203 = vmatmul.mubr.f32.gmra.mxu0 %v2136
    %v2204 = vpop.f32.mrf.mxu0
    %v2205 = vadd.f32 0.0, %v2204
    %v2206 = vpop.f32.mrf.mxu0
    %2207 = vdwg.mxu0
    %v2208 = vadd.f32 %v163, %v2205
    %v2209 = vtanh.pop %v2208
    %v2211 = vrot.slane %v2133, 4
    %v2212 = vsel %vm172, %v2211, 0
    %2214 = vmatprep.subr.mxu0 0.0
    %2215 = vmatpush1.msra.mxu0 0.0
    %2216 = vmatprep.subr.mxu0 0.0
    %2217 = vmatpush1.msra.mxu0 0.0
    %2218 = vmatprep.subr.mxu0 0.0
    %2219 = vmatpush1.msra.mxu0 0.0
    %2220 = vmatprep.subr.mxu0 0.0
    %2221 = vmatpush1.msra.mxu0 0.0
    %2222 = vmatprep.subr.mxu0 0.0
    %2223 = vmatpush1.msra.mxu0 0.0
    %2224 = vmatprep.subr.mxu0 0.0
    %2225 = vmatpush1.msra.mxu0 0.0
    %2226 = vmatprep.subr.mxu0 0.0
    %2227 = vmatpush1.msra.mxu0 0.0
    %2228 = vmatprep.subr.mxu0 0.0
    %2229 = vmatpush1.msra.mxu0 0.0
    %2230 = vmatprep.subr.mxu0 0.0
    %2231 = vmatpush1.msra.mxu0 0.0
    %2232 = vmatprep.subr.mxu0 0.0
    %2233 = vmatpush1.msra.mxu0 0.0
    %2234 = vmatprep.subr.mxu0 0.0
    %2235 = vmatpush1.msra.mxu0 0.0
    %2236 = vmatprep.subr.mxu0 0.0
    %2237 = vmatpush1.msra.mxu0 0.0
    %2238 = vmatprep.subr.mxu0 0.0
    %2239 = vmatpush1.msra.mxu0 %v169
    %2240 = vmatprep.subr.mxu0 0.0
    %2241 = vmatpush1.msra.mxu0 %v168
    %2242 = vmatprep.subr.mxu0 0.0
    %2243 = vmatpush1.msra.mxu0 %v167
    %2244 = vmatprep.subr.mxu0 0.0
    %2245 = vmatpush1.msra.mxu0 %v166
    %2246 = vmatprep.subr.mxu0 0.0
    %2247 = vmatpush2.msra.mxu0 0.0
    %2248 = vmatprep.subr.mxu0 0.0
    %2249 = vmatpush2.msra.mxu0 0.0
    %2250 = vmatprep.subr.mxu0 0.0
    %2251 = vmatpush2.msra.mxu0 0.0
    %2252 = vmatprep.subr.mxu0 0.0
    %2253 = vmatpush2.msra.mxu0 0.0
    %2254 = vmatprep.subr.mxu0 0.0
    %2255 = vmatpush2.msra.mxu0 0.0
    %2256 = vmatprep.subr.mxu0 0.0
    %2257 = vmatpush2.msra.mxu0 0.0
    %2258 = vmatprep.subr.mxu0 0.0
    %2259 = vmatpush2.msra.mxu0 0.0
    %2260 = vmatprep.subr.mxu0 0.0
    %2261 = vmatpush2.msra.mxu0 0.0
    %2262 = vmatprep.subr.mxu0 0.0
    %2263 = vmatpush2.msra.mxu0 0.0
    %2264 = vmatprep.subr.mxu0 0.0
    %2265 = vmatpush2.msra.mxu0 0.0
    %2266 = vmatprep.subr.mxu0 0.0
    %2267 = vmatpush2.msra.mxu0 0.0
    %2268 = vmatprep.subr.mxu0 0.0
    %2269 = vmatpush2.msra.mxu0 0.0
    %2270 = vmatprep.subr.mxu0 0.0
    %2271 = vmatpush2.msra.mxu0 0.0
    %2272 = vmatprep.subr.mxu0 0.0
    %2273 = vmatpush2.msra.mxu0 0.0
    %2274 = vmatprep.subr.mxu0 0.0
    %2275 = vmatpush2.msra.mxu0 0.0
    %2276 = vmatprep.subr.mxu0 0.0
    %2277 = vmatpush2.msra.mxu0 0.0
    %2278 = vmatprep.mubr.f32.mxu0 0.0
    %2279 = vmatmul.mubr.f32.gmra.mxu0 %v2212
    %v2280 = vpop.f32.mrf.mxu0
    %v2281 = vadd.f32 0.0, %v2280
    %v2282 = vpop.f32.mrf.mxu0
    %2283 = vdwg.mxu0
    %v2285 = vrot.slane %v2281, 3
    %v2287 = vadd.f32 %v148, %v2285
    %v2288 = vtanh.pop %v2287
    %v2290 = vsel %vm172, %v2209, 0
    %2292 = vmatprep.subr.mxu0 0.0
    %2293 = vmatpush1.msra.mxu0 0.0
    %2294 = vmatprep.subr.mxu0 0.0
    %2295 = vmatpush1.msra.mxu0 0.0
    %2296 = vmatprep.subr.mxu0 0.0
    %2297 = vmatpush1.msra.mxu0 0.0
    %2298 = vmatprep.subr.mxu0 0.0
    %2299 = vmatpush1.msra.mxu0 0.0
    %2300 = vmatprep.subr.mxu0 0.0
    %2301 = vmatpush1.msra.mxu0 0.0
    %2302 = vmatprep.subr.mxu0 0.0
    %2303 = vmatpush1.msra.mxu0 0.0
    %2304 = vmatprep.subr.mxu0 0.0
    %2305 = vmatpush1.msra.mxu0 0.0
    %2306 = vmatprep.subr.mxu0 0.0
    %2307 = vmatpush1.msra.mxu0 0.0
    %2308 = vmatprep.subr.mxu0 0.0
    %2309 = vmatpush1.msra.mxu0 0.0
    %2310 = vmatprep.subr.mxu0 0.0
    %2311 = vmatpush1.msra.mxu0 0.0
    %2312 = vmatprep.subr.mxu0 0.0
    %2313 = vmatpush1.msra.mxu0 0.0
    %2314 = vmatprep.subr.mxu0 0.0
    %2315 = vmatpush1.msra.mxu0 0.0
    %2316 = vmatprep.subr.mxu0 0.0
    %2317 = vmatpush1.msra.mxu0 %v169
    %2318 = vmatprep.subr.mxu0 0.0
    %2319 = vmatpush1.msra.mxu0 %v168
    %2320 = vmatprep.subr.mxu0 0.0
    %2321 = vmatpush1.msra.mxu0 %v167
    %2322 = vmatprep.subr.mxu0 0.0
    %2323 = vmatpush1.msra.mxu0 %v166
    %2324 = vmatprep.subr.mxu0 0.0
    %2325 = vmatpush2.msra.mxu0 0.0
    %2326 = vmatprep.subr.mxu0 0.0
    %2327 = vmatpush2.msra.mxu0 0.0
    %2328 = vmatprep.subr.mxu0 0.0
    %2329 = vmatpush2.msra.mxu0 0.0
    %2330 = vmatprep.subr.mxu0 0.0
    %2331 = vmatpush2.msra.mxu0 0.0
    %2332 = vmatprep.subr.mxu0 0.0
    %2333 = vmatpush2.msra.mxu0 0.0
    %2334 = vmatprep.subr.mxu0 0.0
    %2335 = vmatpush2.msra.mxu0 0.0
    %2336 = vmatprep.subr.mxu0 0.0
    %2337 = vmatpush2.msra.mxu0 0.0
    %2338 = vmatprep.subr.mxu0 0.0
    %2339 = vmatpush2.msra.mxu0 0.0
    %2340 = vmatprep.subr.mxu0 0.0
    %2341 = vmatpush2.msra.mxu0 0.0
    %2342 = vmatprep.subr.mxu0 0.0
    %2343 = vmatpush2.msra.mxu0 0.0
    %2344 = vmatprep.subr.mxu0 0.0
    %2345 = vmatpush2.msra.mxu0 0.0
    %2346 = vmatprep.subr.mxu0 0.0
    %2347 = vmatpush2.msra.mxu0 0.0
    %2348 = vmatprep.subr.mxu0 0.0
    %2349 = vmatpush2.msra.mxu0 0.0
    %2350 = vmatprep.subr.mxu0 0.0
    %2351 = vmatpush2.msra.mxu0 0.0
    %2352 = vmatprep.subr.mxu0 0.0
    %2353 = vmatpush2.msra.mxu0 0.0
    %2354 = vmatprep.subr.mxu0 0.0
    %2355 = vmatpush2.msra.mxu0 0.0
    %2356 = vmatprep.mubr.f32.mxu0 0.0
    %2357 = vmatmul.mubr.f32.gmra.mxu0 %v2290
    %v2358 = vpop.f32.mrf.mxu0
    %v2359 = vadd.f32 0.0, %v2358
    %v2360 = vpop.f32.mrf.mxu0
    %2361 = vdwg.mxu0
    %v2363 = vrot.slane %v2359, 7
    %v2365 = vadd.f32 %v163, %v2363
    %v2366 = vtanh.pop %v2365
    %v2368 = vrot.slane %v2288, 5
    %v2369 = vsel %vm172, %v2368, 0
    %2371 = vmatprep.subr.mxu0 0.0
    %2372 = vmatpush1.msra.mxu0 0.0
    %2373 = vmatprep.subr.mxu0 0.0
    %2374 = vmatpush1.msra.mxu0 0.0
    %2375 = vmatprep.subr.mxu0 0.0
    %2376 = vmatpush1.msra.mxu0 0.0
    %2377 = vmatprep.subr.mxu0 0.0
    %2378 = vmatpush1.msra.mxu0 0.0
    %2379 = vmatprep.subr.mxu0 0.0
    %2380 = vmatpush1.msra.mxu0 0.0
    %2381 = vmatprep.subr.mxu0 0.0
    %2382 = vmatpush1.msra.mxu0 0.0
    %2383 = vmatprep.subr.mxu0 0.0
    %2384 = vmatpush1.msra.mxu0 0.0
    %2385 = vmatprep.subr.mxu0 0.0
    %2386 = vmatpush1.msra.mxu0 0.0
    %2387 = vmatprep.subr.mxu0 0.0
    %2388 = vmatpush1.msra.mxu0 0.0
    %2389 = vmatprep.subr.mxu0 0.0
    %2390 = vmatpush1.msra.mxu0 0.0
    %2391 = vmatprep.subr.mxu0 0.0
    %2392 = vmatpush1.msra.mxu0 0.0
    %2393 = vmatprep.subr.mxu0 0.0
    %2394 = vmatpush1.msra.mxu0 0.0
    %2395 = vmatprep.subr.mxu0 0.0
    %2396 = vmatpush1.msra.mxu0 %v169
    %2397 = vmatprep.subr.mxu0 0.0
    %2398 = vmatpush1.msra.mxu0 %v168
    %2399 = vmatprep.subr.mxu0 0.0
    %2400 = vmatpush1.msra.mxu0 %v167
    %2401 = vmatprep.subr.mxu0 0.0
    %2402 = vmatpush1.msra.mxu0 %v166
    %2403 = vmatprep.subr.mxu0 0.0
    %2404 = vmatpush2.msra.mxu0 0.0
    %2405 = vmatprep.subr.mxu0 0.0
    %2406 = vmatpush2.msra.mxu0 0.0
    %2407 = vmatprep.subr.mxu0 0.0
    %2408 = vmatpush2.msra.mxu0 0.0
    %2409 = vmatprep.subr.mxu0 0.0
    %2410 = vmatpush2.msra.mxu0 0.0
    %2411 = vmatprep.subr.mxu0 0.0
    %2412 = vmatpush2.msra.mxu0 0.0
    %2413 = vmatprep.subr.mxu0 0.0
    %2414 = vmatpush2.msra.mxu0 0.0
    %2415 = vmatprep.subr.mxu0 0.0
    %2416 = vmatpush2.msra.mxu0 0.0
    %2417 = vmatprep.subr.mxu0 0.0
    %2418 = vmatpush2.msra.mxu0 0.0
    %2419 = vmatprep.subr.mxu0 0.0
    %2420 = vmatpush2.msra.mxu0 0.0
    %2421 = vmatprep.subr.mxu0 0.0
    %2422 = vmatpush2.msra.mxu0 0.0
    %2423 = vmatprep.subr.mxu0 0.0
    %2424 = vmatpush2.msra.mxu0 0.0
    %2425 = vmatprep.subr.mxu0 0.0
    %2426 = vmatpush2.msra.mxu0 0.0
    %2427 = vmatprep.subr.mxu0 0.0
    %2428 = vmatpush2.msra.mxu0 0.0
    %2429 = vmatprep.subr.mxu0 0.0
    %2430 = vmatpush2.msra.mxu0 0.0
    %2431 = vmatprep.subr.mxu0 0.0
    %2432 = vmatpush2.msra.mxu0 0.0
    %2433 = vmatprep.subr.mxu0 0.0
    %2434 = vmatpush2.msra.mxu0 0.0
    %2435 = vmatprep.mubr.f32.mxu0 0.0
    %2436 = vmatmul.mubr.f32.gmra.mxu0 %v2369
    %v2437 = vpop.f32.mrf.mxu0
    %v2438 = vadd.f32 0.0, %v2437
    %v2439 = vpop.f32.mrf.mxu0
    %2440 = vdwg.mxu0
    %v2442 = vrot.slane %v2438, 2
    %v2444 = vadd.f32 %v148, %v2442
    %v2445 = vtanh.pop %v2444
    %v2447 = vrot.slane %v2366, 1
    %v2448 = vsel %vm172, %v2447, 0
    %2450 = vmatprep.subr.mxu0 0.0
    %2451 = vmatpush1.msra.mxu0 0.0
    %2452 = vmatprep.subr.mxu0 0.0
    %2453 = vmatpush1.msra.mxu0 0.0
    %2454 = vmatprep.subr.mxu0 0.0
    %2455 = vmatpush1.msra.mxu0 0.0
    %2456 = vmatprep.subr.mxu0 0.0
    %2457 = vmatpush1.msra.mxu0 0.0
    %2458 = vmatprep.subr.mxu0 0.0
    %2459 = vmatpush1.msra.mxu0 0.0
    %2460 = vmatprep.subr.mxu0 0.0
    %2461 = vmatpush1.msra.mxu0 0.0
    %2462 = vmatprep.subr.mxu0 0.0
    %2463 = vmatpush1.msra.mxu0 0.0
    %2464 = vmatprep.subr.mxu0 0.0
    %2465 = vmatpush1.msra.mxu0 0.0
    %2466 = vmatprep.subr.mxu0 0.0
    %2467 = vmatpush1.msra.mxu0 0.0
    %2468 = vmatprep.subr.mxu0 0.0
    %2469 = vmatpush1.msra.mxu0 0.0
    %2470 = vmatprep.subr.mxu0 0.0
    %2471 = vmatpush1.msra.mxu0 0.0
    %2472 = vmatprep.subr.mxu0 0.0
    %2473 = vmatpush1.msra.mxu0 0.0
    %2474 = vmatprep.subr.mxu0 0.0
    %2475 = vmatpush1.msra.mxu0 %v169
    %2476 = vmatprep.subr.mxu0 0.0
    %2477 = vmatpush1.msra.mxu0 %v168
    %2478 = vmatprep.subr.mxu0 0.0
    %2479 = vmatpush1.msra.mxu0 %v167
    %2480 = vmatprep.subr.mxu0 0.0
    %2481 = vmatpush1.msra.mxu0 %v166
    %2482 = vmatprep.subr.mxu0 0.0
    %2483 = vmatpush2.msra.mxu0 0.0
    %2484 = vmatprep.subr.mxu0 0.0
    %2485 = vmatpush2.msra.mxu0 0.0
    %2486 = vmatprep.subr.mxu0 0.0
    %2487 = vmatpush2.msra.mxu0 0.0
    %2488 = vmatprep.subr.mxu0 0.0
    %2489 = vmatpush2.msra.mxu0 0.0
    %2490 = vmatprep.subr.mxu0 0.0
    %2491 = vmatpush2.msra.mxu0 0.0
    %2492 = vmatprep.subr.mxu0 0.0
    %2493 = vmatpush2.msra.mxu0 0.0
    %2494 = vmatprep.subr.mxu0 0.0
    %2495 = vmatpush2.msra.mxu0 0.0
    %2496 = vmatprep.subr.mxu0 0.0
    %2497 = vmatpush2.msra.mxu0 0.0
    %2498 = vmatprep.subr.mxu0 0.0
    %2499 = vmatpush2.msra.mxu0 0.0
    %2500 = vmatprep.subr.mxu0 0.0
    %2501 = vmatpush2.msra.mxu0 0.0
    %2502 = vmatprep.subr.mxu0 0.0
    %2503 = vmatpush2.msra.mxu0 0.0
    %2504 = vmatprep.subr.mxu0 0.0
    %2505 = vmatpush2.msra.mxu0 0.0
    %2506 = vmatprep.subr.mxu0 0.0
    %2507 = vmatpush2.msra.mxu0 0.0
    %2508 = vmatprep.subr.mxu0 0.0
    %2509 = vmatpush2.msra.mxu0 0.0
    %2510 = vmatprep.subr.mxu0 0.0
    %2511 = vmatpush2.msra.mxu0 0.0
    %2512 = vmatprep.subr.mxu0 0.0
    %2513 = vmatpush2.msra.mxu0 0.0
    %2514 = vmatprep.mubr.f32.mxu0 0.0
    %2515 = vmatmul.mubr.f32.gmra.mxu0 %v2448
    %v2516 = vpop.f32.mrf.mxu0
    %v2517 = vadd.f32 0.0, %v2516
    %v2518 = vpop.f32.mrf.mxu0
    %2519 = vdwg.mxu0
    %v2521 = vrot.slane %v2517, 6
    %v2523 = vadd.f32 %v163, %v2521
    %v2524 = vtanh.pop %v2523
    %v2526 = vrot.slane %v2445, 6
    %v2527 = vsel %vm172, %v2526, 0
    %2529 = vmatprep.subr.mxu0 0.0
    %2530 = vmatpush1.msra.mxu0 0.0
    %2531 = vmatprep.subr.mxu0 0.0
    %2532 = vmatpush1.msra.mxu0 0.0
    %2533 = vmatprep.subr.mxu0 0.0
    %2534 = vmatpush1.msra.mxu0 0.0
    %2535 = vmatprep.subr.mxu0 0.0
    %2536 = vmatpush1.msra.mxu0 0.0
    %2537 = vmatprep.subr.mxu0 0.0
    %2538 = vmatpush1.msra.mxu0 0.0
    %2539 = vmatprep.subr.mxu0 0.0
    %2540 = vmatpush1.msra.mxu0 0.0
    %2541 = vmatprep.subr.mxu0 0.0
    %2542 = vmatpush1.msra.mxu0 0.0
    %2543 = vmatprep.subr.mxu0 0.0
    %2544 = vmatpush1.msra.mxu0 0.0
    %2545 = vmatprep.subr.mxu0 0.0
    %2546 = vmatpush1.msra.mxu0 0.0
    %2547 = vmatprep.subr.mxu0 0.0
    %2548 = vmatpush1.msra.mxu0 0.0
    %2549 = vmatprep.subr.mxu0 0.0
    %2550 = vmatpush1.msra.mxu0 0.0
    %2551 = vmatprep.subr.mxu0 0.0
    %2552 = vmatpush1.msra.mxu0 0.0
    %2553 = vmatprep.subr.mxu0 0.0
    %2554 = vmatpush1.msra.mxu0 %v169
    %2555 = vmatprep.subr.mxu0 0.0
    %2556 = vmatpush1.msra.mxu0 %v168
    %2557 = vmatprep.subr.mxu0 0.0
    %2558 = vmatpush1.msra.mxu0 %v167
    %2559 = vmatprep.subr.mxu0 0.0
    %2560 = vmatpush1.msra.mxu0 %v166
    %2561 = vmatprep.subr.mxu0 0.0
    %2562 = vmatpush2.msra.mxu0 0.0
    %2563 = vmatprep.subr.mxu0 0.0
    %2564 = vmatpush2.msra.mxu0 0.0
    %2565 = vmatprep.subr.mxu0 0.0
    %2566 = vmatpush2.msra.mxu0 0.0
    %2567 = vmatprep.subr.mxu0 0.0
    %2568 = vmatpush2.msra.mxu0 0.0
    %2569 = vmatprep.subr.mxu0 0.0
    %2570 = vmatpush2.msra.mxu0 0.0
    %2571 = vmatprep.subr.mxu0 0.0
    %2572 = vmatpush2.msra.mxu0 0.0
    %2573 = vmatprep.subr.mxu0 0.0
    %2574 = vmatpush2.msra.mxu0 0.0
    %2575 = vmatprep.subr.mxu0 0.0
    %2576 = vmatpush2.msra.mxu0 0.0
    %2577 = vmatprep.subr.mxu0 0.0
    %2578 = vmatpush2.msra.mxu0 0.0
    %2579 = vmatprep.subr.mxu0 0.0
    %2580 = vmatpush2.msra.mxu0 0.0
    %2581 = vmatprep.subr.mxu0 0.0
    %2582 = vmatpush2.msra.mxu0 0.0
    %2583 = vmatprep.subr.mxu0 0.0
    %2584 = vmatpush2.msra.mxu0 0.0
    %2585 = vmatprep.subr.mxu0 0.0
    %2586 = vmatpush2.msra.mxu0 0.0
    %2587 = vmatprep.subr.mxu0 0.0
    %2588 = vmatpush2.msra.mxu0 0.0
    %2589 = vmatprep.subr.mxu0 0.0
    %2590 = vmatpush2.msra.mxu0 0.0
    %2591 = vmatprep.subr.mxu0 0.0
    %2592 = vmatpush2.msra.mxu0 0.0
    %2593 = vmatprep.mubr.f32.mxu0 0.0
    %2594 = vmatmul.mubr.f32.gmra.mxu0 %v2527
    %v2595 = vpop.f32.mrf.mxu0
    %v2596 = vadd.f32 0.0, %v2595
    %v2597 = vpop.f32.mrf.mxu0
    %2598 = vdwg.mxu0
    %v2600 = vrot.slane %v2596, 1
    %v2602 = vadd.f32 %v148, %v2600
    %v2603 = vtanh.pop %v2602
    %v2605 = vrot.slane %v2524, 2
    %v2606 = vsel %vm172, %v2605, 0
    %2608 = vmatprep.subr.mxu0 0.0
    %2609 = vmatpush1.msra.mxu0 0.0
    %2610 = vmatprep.subr.mxu0 0.0
    %2611 = vmatpush1.msra.mxu0 0.0
    %2612 = vmatprep.subr.mxu0 0.0
    %2613 = vmatpush1.msra.mxu0 0.0
    %2614 = vmatprep.subr.mxu0 0.0
    %2615 = vmatpush1.msra.mxu0 0.0
    %2616 = vmatprep.subr.mxu0 0.0
    %2617 = vmatpush1.msra.mxu0 0.0
    %2618 = vmatprep.subr.mxu0 0.0
    %2619 = vmatpush1.msra.mxu0 0.0
    %2620 = vmatprep.subr.mxu0 0.0
    %2621 = vmatpush1.msra.mxu0 0.0
    %2622 = vmatprep.subr.mxu0 0.0
    %2623 = vmatpush1.msra.mxu0 0.0
    %2624 = vmatprep.subr.mxu0 0.0
    %2625 = vmatpush1.msra.mxu0 0.0
    %2626 = vmatprep.subr.mxu0 0.0
    %2627 = vmatpush1.msra.mxu0 0.0
    %2628 = vmatprep.subr.mxu0 0.0
    %2629 = vmatpush1.msra.mxu0 0.0
    %2630 = vmatprep.subr.mxu0 0.0
    %2631 = vmatpush1.msra.mxu0 0.0
    %2632 = vmatprep.subr.mxu0 0.0
    %2633 = vmatpush1.msra.mxu0 %v169
    %2634 = vmatprep.subr.mxu0 0.0
    %2635 = vmatpush1.msra.mxu0 %v168
    %2636 = vmatprep.subr.mxu0 0.0
    %2637 = vmatpush1.msra.mxu0 %v167
    %2638 = vmatprep.subr.mxu0 0.0
    %2639 = vmatpush1.msra.mxu0 %v166
    %2640 = vmatprep.subr.mxu0 0.0
    %2641 = vmatpush2.msra.mxu0 0.0
    %2642 = vmatprep.subr.mxu0 0.0
    %2643 = vmatpush2.msra.mxu0 0.0
    %2644 = vmatprep.subr.mxu0 0.0
    %2645 = vmatpush2.msra.mxu0 0.0
    %2646 = vmatprep.subr.mxu0 0.0
    %2647 = vmatpush2.msra.mxu0 0.0
    %2648 = vmatprep.subr.mxu0 0.0
    %2649 = vmatpush2.msra.mxu0 0.0
    %2650 = vmatprep.subr.mxu0 0.0
    %2651 = vmatpush2.msra.mxu0 0.0
    %2652 = vmatprep.subr.mxu0 0.0
    %2653 = vmatpush2.msra.mxu0 0.0
    %2654 = vmatprep.subr.mxu0 0.0
    %2655 = vmatpush2.msra.mxu0 0.0
    %2656 = vmatprep.subr.mxu0 0.0
    %2657 = vmatpush2.msra.mxu0 0.0
    %2658 = vmatprep.subr.mxu0 0.0
    %2659 = vmatpush2.msra.mxu0 0.0
    %2660 = vmatprep.subr.mxu0 0.0
    %2661 = vmatpush2.msra.mxu0 0.0
    %2662 = vmatprep.subr.mxu0 0.0
    %2663 = vmatpush2.msra.mxu0 0.0
    %2664 = vmatprep.subr.mxu0 0.0
    %2665 = vmatpush2.msra.mxu0 0.0
    %2666 = vmatprep.subr.mxu0 0.0
    %2667 = vmatpush2.msra.mxu0 0.0
    %2668 = vmatprep.subr.mxu0 0.0
    %2669 = vmatpush2.msra.mxu0 0.0
    %2670 = vmatprep.subr.mxu0 0.0
    %2671 = vmatpush2.msra.mxu0 0.0
    %2672 = vmatprep.mubr.f32.mxu0 0.0
    %2673 = vmatmul.mubr.f32.gmra.mxu0 %v2606
    %v2674 = vpop.f32.mrf.mxu0
    %v2675 = vadd.f32 0.0, %v2674
    %v2676 = vpop.f32.mrf.mxu0
    %2677 = vdwg.mxu0
    %v2679 = vrot.slane %v2675, 5
    %v2681 = vadd.f32 %v163, %v2679
    %v2682 = vtanh.pop %v2681
    %v2684 = vrot.slane %v2603, 7
    %v2685 = vsel %vm172, %v2684, 0
    %2687 = vmatprep.subr.mxu0 0.0
    %2688 = vmatpush1.msra.mxu0 0.0
    %2689 = vmatprep.subr.mxu0 0.0
    %2690 = vmatpush1.msra.mxu0 0.0
    %2691 = vmatprep.subr.mxu0 0.0
    %2692 = vmatpush1.msra.mxu0 0.0
    %2693 = vmatprep.subr.mxu0 0.0
    %2694 = vmatpush1.msra.mxu0 0.0
    %2695 = vmatprep.subr.mxu0 0.0
    %2696 = vmatpush1.msra.mxu0 0.0
    %2697 = vmatprep.subr.mxu0 0.0
    %2698 = vmatpush1.msra.mxu0 0.0
    %2699 = vmatprep.subr.mxu0 0.0
    %2700 = vmatpush1.msra.mxu0 0.0
    %2701 = vmatprep.subr.mxu0 0.0
    %2702 = vmatpush1.msra.mxu0 0.0
    %2703 = vmatprep.subr.mxu0 0.0
    %2704 = vmatpush1.msra.mxu0 0.0
    %2705 = vmatprep.subr.mxu0 0.0
    %2706 = vmatpush1.msra.mxu0 0.0
    %2707 = vmatprep.subr.mxu0 0.0
    %2708 = vmatpush1.msra.mxu0 0.0
    %2709 = vmatprep.subr.mxu0 0.0
    %2710 = vmatpush1.msra.mxu0 0.0
    %2711 = vmatprep.subr.mxu0 0.0
    %2712 = vmatpush1.msra.mxu0 %v169
    %2713 = vmatprep.subr.mxu0 0.0
    %2714 = vmatpush1.msra.mxu0 %v168
    %2715 = vmatprep.subr.mxu0 0.0
    %2716 = vmatpush1.msra.mxu0 %v167
    %2717 = vmatprep.subr.mxu0 0.0
    %2718 = vmatpush1.msra.mxu0 %v166
    %2719 = vmatprep.subr.mxu0 0.0
    %2720 = vmatpush2.msra.mxu0 0.0
    %2721 = vmatprep.subr.mxu0 0.0
    %2722 = vmatpush2.msra.mxu0 0.0
    %2723 = vmatprep.subr.mxu0 0.0
    %2724 = vmatpush2.msra.mxu0 0.0
    %2725 = vmatprep.subr.mxu0 0.0
    %2726 = vmatpush2.msra.mxu0 0.0
    %2727 = vmatprep.subr.mxu0 0.0
    %2728 = vmatpush2.msra.mxu0 0.0
    %2729 = vmatprep.subr.mxu0 0.0
    %2730 = vmatpush2.msra.mxu0 0.0
    %2731 = vmatprep.subr.mxu0 0.0
    %2732 = vmatpush2.msra.mxu0 0.0
    %2733 = vmatprep.subr.mxu0 0.0
    %2734 = vmatpush2.msra.mxu0 0.0
    %2735 = vmatprep.subr.mxu0 0.0
    %2736 = vmatpush2.msra.mxu0 0.0
    %2737 = vmatprep.subr.mxu0 0.0
    %2738 = vmatpush2.msra.mxu0 0.0
    %2739 = vmatprep.subr.mxu0 0.0
    %2740 = vmatpush2.msra.mxu0 0.0
    %2741 = vmatprep.subr.mxu0 0.0
    %2742 = vmatpush2.msra.mxu0 0.0
    %2743 = vmatprep.subr.mxu0 0.0
    %2744 = vmatpush2.msra.mxu0 0.0
    %2745 = vmatprep.subr.mxu0 0.0
    %2746 = vmatpush2.msra.mxu0 0.0
    %2747 = vmatprep.subr.mxu0 0.0
    %2748 = vmatpush2.msra.mxu0 0.0
    %2749 = vmatprep.subr.mxu0 0.0
    %2750 = vmatpush2.msra.mxu0 0.0
    %2751 = vmatprep.mubr.f32.mxu0 0.0
    %2752 = vmatmul.mubr.f32.gmra.mxu0 %v2685
    %v2753 = vpop.f32.mrf.mxu0
    %v2754 = vadd.f32 0.0, %v2753
    %v2755 = vpop.f32.mrf.mxu0
    %2756 = vdwg.mxu0
    %v2757 = vadd.f32 %v153, %v2754
    %v2758 = vtanh.pop %v2757
    %v2760 = vrot.slane %v2682, 3
    %v2761 = vsel %vm172, %v2760, 0
    %2763 = vmatprep.subr.mxu0 0.0
    %2764 = vmatpush1.msra.mxu0 0.0
    %2765 = vmatprep.subr.mxu0 0.0
    %2766 = vmatpush1.msra.mxu0 0.0
    %2767 = vmatprep.subr.mxu0 0.0
    %2768 = vmatpush1.msra.mxu0 0.0
    %2769 = vmatprep.subr.mxu0 0.0
    %2770 = vmatpush1.msra.mxu0 0.0
    %2771 = vmatprep.subr.mxu0 0.0
    %2772 = vmatpush1.msra.mxu0 0.0
    %2773 = vmatprep.subr.mxu0 0.0
    %2774 = vmatpush1.msra.mxu0 0.0
    %2775 = vmatprep.subr.mxu0 0.0
    %2776 = vmatpush1.msra.mxu0 0.0
    %2777 = vmatprep.subr.mxu0 0.0
    %2778 = vmatpush1.msra.mxu0 0.0
    %2779 = vmatprep.subr.mxu0 0.0
    %2780 = vmatpush1.msra.mxu0 0.0
    %2781 = vmatprep.subr.mxu0 0.0
    %2782 = vmatpush1.msra.mxu0 0.0
    %2783 = vmatprep.subr.mxu0 0.0
    %2784 = vmatpush1.msra.mxu0 0.0
    %2785 = vmatprep.subr.mxu0 0.0
    %2786 = vmatpush1.msra.mxu0 0.0
    %2787 = vmatprep.subr.mxu0 0.0
    %2788 = vmatpush1.msra.mxu0 %v169
    %2789 = vmatprep.subr.mxu0 0.0
    %2790 = vmatpush1.msra.mxu0 %v168
    %2791 = vmatprep.subr.mxu0 0.0
    %2792 = vmatpush1.msra.mxu0 %v167
    %2793 = vmatprep.subr.mxu0 0.0
    %2794 = vmatpush1.msra.mxu0 %v166
    %2795 = vmatprep.subr.mxu0 0.0
    %2796 = vmatpush2.msra.mxu0 0.0
    %2797 = vmatprep.subr.mxu0 0.0
    %2798 = vmatpush2.msra.mxu0 0.0
    %2799 = vmatprep.subr.mxu0 0.0
    %2800 = vmatpush2.msra.mxu0 0.0
    %2801 = vmatprep.subr.mxu0 0.0
    %2802 = vmatpush2.msra.mxu0 0.0
    %2803 = vmatprep.subr.mxu0 0.0
    %2804 = vmatpush2.msra.mxu0 0.0
    %2805 = vmatprep.subr.mxu0 0.0
    %2806 = vmatpush2.msra.mxu0 0.0
    %2807 = vmatprep.subr.mxu0 0.0
    %2808 = vmatpush2.msra.mxu0 0.0
    %2809 = vmatprep.subr.mxu0 0.0
    %2810 = vmatpush2.msra.mxu0 0.0
    %2811 = vmatprep.subr.mxu0 0.0
    %2812 = vmatpush2.msra.mxu0 0.0
    %2813 = vmatprep.subr.mxu0 0.0
    %2814 = vmatpush2.msra.mxu0 0.0
    %2815 = vmatprep.subr.mxu0 0.0
    %2816 = vmatpush2.msra.mxu0 0.0
    %2817 = vmatprep.subr.mxu0 0.0
    %2818 = vmatpush2.msra.mxu0 0.0
    %2819 = vmatprep.subr.mxu0 0.0
    %2820 = vmatpush2.msra.mxu0 0.0
    %2821 = vmatprep.subr.mxu0 0.0
    %2822 = vmatpush2.msra.mxu0 0.0
    %2823 = vmatprep.subr.mxu0 0.0
    %2824 = vmatpush2.msra.mxu0 0.0
    %2825 = vmatprep.subr.mxu0 0.0
    %2826 = vmatpush2.msra.mxu0 0.0
    %2827 = vmatprep.mubr.f32.mxu0 0.0
    %2828 = vmatmul.mubr.f32.gmra.mxu0 %v2761
    %v2829 = vpop.f32.mrf.mxu0
    %v2830 = vadd.f32 0.0, %v2829
    %v2831 = vpop.f32.mrf.mxu0
    %2832 = vdwg.mxu0
    %v2834 = vrot.slane %v2830, 4
    %v2836 = vadd.f32 %v163, %v2834
    %v2837 = vtanh.pop %v2836
    %v2839 = vsel %vm172, %v2758, 0
    %2841 = vmatprep.subr.mxu0 0.0
    %2842 = vmatpush1.msra.mxu0 0.0
    %2843 = vmatprep.subr.mxu0 0.0
    %2844 = vmatpush1.msra.mxu0 0.0
    %2845 = vmatprep.subr.mxu0 0.0
    %2846 = vmatpush1.msra.mxu0 0.0
    %2847 = vmatprep.subr.mxu0 0.0
    %2848 = vmatpush1.msra.mxu0 0.0
    %2849 = vmatprep.subr.mxu0 0.0
    %2850 = vmatpush1.msra.mxu0 0.0
    %2851 = vmatprep.subr.mxu0 0.0
    %2852 = vmatpush1.msra.mxu0 0.0
    %2853 = vmatprep.subr.mxu0 0.0
    %2854 = vmatpush1.msra.mxu0 0.0
    %2855 = vmatprep.subr.mxu0 0.0
    %2856 = vmatpush1.msra.mxu0 0.0
    %2857 = vmatprep.subr.mxu0 0.0
    %2858 = vmatpush1.msra.mxu0 0.0
    %2859 = vmatprep.subr.mxu0 0.0
    %2860 = vmatpush1.msra.mxu0 0.0
    %2861 = vmatprep.subr.mxu0 0.0
    %2862 = vmatpush1.msra.mxu0 0.0
    %2863 = vmatprep.subr.mxu0 0.0
    %2864 = vmatpush1.msra.mxu0 0.0
    %2865 = vmatprep.subr.mxu0 0.0
    %2866 = vmatpush1.msra.mxu0 %v169
    %2867 = vmatprep.subr.mxu0 0.0
    %2868 = vmatpush1.msra.mxu0 %v168
    %2869 = vmatprep.subr.mxu0 0.0
    %2870 = vmatpush1.msra.mxu0 %v167
    %2871 = vmatprep.subr.mxu0 0.0
    %2872 = vmatpush1.msra.mxu0 %v166
    %2873 = vmatprep.subr.mxu0 0.0
    %2874 = vmatpush2.msra.mxu0 0.0
    %2875 = vmatprep.subr.mxu0 0.0
    %2876 = vmatpush2.msra.mxu0 0.0
    %2877 = vmatprep.subr.mxu0 0.0
    %2878 = vmatpush2.msra.mxu0 0.0
    %2879 = vmatprep.subr.mxu0 0.0
    %2880 = vmatpush2.msra.mxu0 0.0
    %2881 = vmatprep.subr.mxu0 0.0
    %2882 = vmatpush2.msra.mxu0 0.0
    %2883 = vmatprep.subr.mxu0 0.0
    %2884 = vmatpush2.msra.mxu0 0.0
    %2885 = vmatprep.subr.mxu0 0.0
    %2886 = vmatpush2.msra.mxu0 0.0
    %2887 = vmatprep.subr.mxu0 0.0
    %2888 = vmatpush2.msra.mxu0 0.0
    %2889 = vmatprep.subr.mxu0 0.0
    %2890 = vmatpush2.msra.mxu0 0.0
    %2891 = vmatprep.subr.mxu0 0.0
    %2892 = vmatpush2.msra.mxu0 0.0
    %2893 = vmatprep.subr.mxu0 0.0
    %2894 = vmatpush2.msra.mxu0 0.0
    %2895 = vmatprep.subr.mxu0 0.0
    %2896 = vmatpush2.msra.mxu0 0.0
    %2897 = vmatprep.subr.mxu0 0.0
    %2898 = vmatpush2.msra.mxu0 0.0
    %2899 = vmatprep.subr.mxu0 0.0
    %2900 = vmatpush2.msra.mxu0 0.0
    %2901 = vmatprep.subr.mxu0 0.0
    %2902 = vmatpush2.msra.mxu0 0.0
    %2903 = vmatprep.subr.mxu0 0.0
    %2904 = vmatpush2.msra.mxu0 0.0
    %2905 = vmatprep.mubr.f32.mxu0 0.0
    %2906 = vmatmul.mubr.f32.gmra.mxu0 %v2839
    %v2907 = vpop.f32.mrf.mxu0
    %v2908 = vadd.f32 0.0, %v2907
    %v2909 = vpop.f32.mrf.mxu0
    %2910 = vdwg.mxu0
    %v2912 = vrot.slane %v2908, 7
    %v2914 = vadd.f32 %v153, %v2912
    %v2915 = vtanh.pop %v2914
    %v2917 = vrot.slane %v2837, 4
    %v2918 = vsel %vm172, %v2917, 0
    %2920 = vmatprep.subr.mxu0 0.0
    %2921 = vmatpush1.msra.mxu0 0.0
    %2922 = vmatprep.subr.mxu0 0.0
    %2923 = vmatpush1.msra.mxu0 0.0
    %2924 = vmatprep.subr.mxu0 0.0
    %2925 = vmatpush1.msra.mxu0 0.0
    %2926 = vmatprep.subr.mxu0 0.0
    %2927 = vmatpush1.msra.mxu0 0.0
    %2928 = vmatprep.subr.mxu0 0.0
    %2929 = vmatpush1.msra.mxu0 0.0
    %2930 = vmatprep.subr.mxu0 0.0
    %2931 = vmatpush1.msra.mxu0 0.0
    %2932 = vmatprep.subr.mxu0 0.0
    %2933 = vmatpush1.msra.mxu0 0.0
    %2934 = vmatprep.subr.mxu0 0.0
    %2935 = vmatpush1.msra.mxu0 0.0
    %2936 = vmatprep.subr.mxu0 0.0
    %2937 = vmatpush1.msra.mxu0 0.0
    %2938 = vmatprep.subr.mxu0 0.0
    %2939 = vmatpush1.msra.mxu0 0.0
    %2940 = vmatprep.subr.mxu0 0.0
    %2941 = vmatpush1.msra.mxu0 0.0
    %2942 = vmatprep.subr.mxu0 0.0
    %2943 = vmatpush1.msra.mxu0 0.0
    %2944 = vmatprep.subr.mxu0 0.0
    %2945 = vmatpush1.msra.mxu0 %v169
    %2946 = vmatprep.subr.mxu0 0.0
    %2947 = vmatpush1.msra.mxu0 %v168
    %2948 = vmatprep.subr.mxu0 0.0
    %2949 = vmatpush1.msra.mxu0 %v167
    %2950 = vmatprep.subr.mxu0 0.0
    %2951 = vmatpush1.msra.mxu0 %v166
    %2952 = vmatprep.subr.mxu0 0.0
    %2953 = vmatpush2.msra.mxu0 0.0
    %2954 = vmatprep.subr.mxu0 0.0
    %2955 = vmatpush2.msra.mxu0 0.0
    %2956 = vmatprep.subr.mxu0 0.0
    %2957 = vmatpush2.msra.mxu0 0.0
    %2958 = vmatprep.subr.mxu0 0.0
    %2959 = vmatpush2.msra.mxu0 0.0
    %2960 = vmatprep.subr.mxu0 0.0
    %2961 = vmatpush2.msra.mxu0 0.0
    %2962 = vmatprep.subr.mxu0 0.0
    %2963 = vmatpush2.msra.mxu0 0.0
    %2964 = vmatprep.subr.mxu0 0.0
    %2965 = vmatpush2.msra.mxu0 0.0
    %2966 = vmatprep.subr.mxu0 0.0
    %2967 = vmatpush2.msra.mxu0 0.0
    %2968 = vmatprep.subr.mxu0 0.0
    %2969 = vmatpush2.msra.mxu0 0.0
    %2970 = vmatprep.subr.mxu0 0.0
    %2971 = vmatpush2.msra.mxu0 0.0
    %2972 = vmatprep.subr.mxu0 0.0
    %2973 = vmatpush2.msra.mxu0 0.0
    %2974 = vmatprep.subr.mxu0 0.0
    %2975 = vmatpush2.msra.mxu0 0.0
    %2976 = vmatprep.subr.mxu0 0.0
    %2977 = vmatpush2.msra.mxu0 0.0
    %2978 = vmatprep.subr.mxu0 0.0
    %2979 = vmatpush2.msra.mxu0 0.0
    %2980 = vmatprep.subr.mxu0 0.0
    %2981 = vmatpush2.msra.mxu0 0.0
    %2982 = vmatprep.subr.mxu0 0.0
    %2983 = vmatpush2.msra.mxu0 0.0
    %2984 = vmatprep.mubr.f32.mxu0 0.0
    %2985 = vmatmul.mubr.f32.gmra.mxu0 %v2918
    %v2986 = vpop.f32.mrf.mxu0
    %v2987 = vadd.f32 0.0, %v2986
    %v2988 = vpop.f32.mrf.mxu0
    %2989 = vdwg.mxu0
    %v2991 = vrot.slane %v2987, 3
    %v2993 = vadd.f32 %v163, %v2991
    %v2994 = vtanh.pop %v2993
    %v2996 = vrot.slane %v2915, 1
    %v2997 = vsel %vm172, %v2996, 0
    %2999 = vmatprep.subr.mxu0 0.0
    %3000 = vmatpush1.msra.mxu0 0.0
    %3001 = vmatprep.subr.mxu0 0.0
    %3002 = vmatpush1.msra.mxu0 0.0
    %3003 = vmatprep.subr.mxu0 0.0
    %3004 = vmatpush1.msra.mxu0 0.0
    %3005 = vmatprep.subr.mxu0 0.0
    %3006 = vmatpush1.msra.mxu0 0.0
    %3007 = vmatprep.subr.mxu0 0.0
    %3008 = vmatpush1.msra.mxu0 0.0
    %3009 = vmatprep.subr.mxu0 0.0
    %3010 = vmatpush1.msra.mxu0 0.0
    %3011 = vmatprep.subr.mxu0 0.0
    %3012 = vmatpush1.msra.mxu0 0.0
    %3013 = vmatprep.subr.mxu0 0.0
    %3014 = vmatpush1.msra.mxu0 0.0
    %3015 = vmatprep.subr.mxu0 0.0
    %3016 = vmatpush1.msra.mxu0 0.0
    %3017 = vmatprep.subr.mxu0 0.0
    %3018 = vmatpush1.msra.mxu0 0.0
    %3019 = vmatprep.subr.mxu0 0.0
    %3020 = vmatpush1.msra.mxu0 0.0
    %3021 = vmatprep.subr.mxu0 0.0
    %3022 = vmatpush1.msra.mxu0 0.0
    %3023 = vmatprep.subr.mxu0 0.0
    %3024 = vmatpush1.msra.mxu0 %v169
    %3025 = vmatprep.subr.mxu0 0.0
    %3026 = vmatpush1.msra.mxu0 %v168
    %3027 = vmatprep.subr.mxu0 0.0
    %3028 = vmatpush1.msra.mxu0 %v167
    %3029 = vmatprep.subr.mxu0 0.0
    %3030 = vmatpush1.msra.mxu0 %v166
    %3031 = vmatprep.subr.mxu0 0.0
    %3032 = vmatpush2.msra.mxu0 0.0
    %3033 = vmatprep.subr.mxu0 0.0
    %3034 = vmatpush2.msra.mxu0 0.0
    %3035 = vmatprep.subr.mxu0 0.0
    %3036 = vmatpush2.msra.mxu0 0.0
    %3037 = vmatprep.subr.mxu0 0.0
    %3038 = vmatpush2.msra.mxu0 0.0
    %3039 = vmatprep.subr.mxu0 0.0
    %3040 = vmatpush2.msra.mxu0 0.0
    %3041 = vmatprep.subr.mxu0 0.0
    %3042 = vmatpush2.msra.mxu0 0.0
    %3043 = vmatprep.subr.mxu0 0.0
    %3044 = vmatpush2.msra.mxu0 0.0
    %3045 = vmatprep.subr.mxu0 0.0
    %3046 = vmatpush2.msra.mxu0 0.0
    %3047 = vmatprep.subr.mxu0 0.0
    %3048 = vmatpush2.msra.mxu0 0.0
    %3049 = vmatprep.subr.mxu0 0.0
    %3050 = vmatpush2.msra.mxu0 0.0
    %3051 = vmatprep.subr.mxu0 0.0
    %3052 = vmatpush2.msra.mxu0 0.0
    %3053 = vmatprep.subr.mxu0 0.0
    %3054 = vmatpush2.msra.mxu0 0.0
    %3055 = vmatprep.subr.mxu0 0.0
    %3056 = vmatpush2.msra.mxu0 0.0
    %3057 = vmatprep.subr.mxu0 0.0
    %3058 = vmatpush2.msra.mxu0 0.0
    %3059 = vmatprep.subr.mxu0 0.0
    %3060 = vmatpush2.msra.mxu0 0.0
    %3061 = vmatprep.subr.mxu0 0.0
    %3062 = vmatpush2.msra.mxu0 0.0
    %3063 = vmatprep.mubr.f32.mxu0 0.0
    %3064 = vmatmul.mubr.f32.gmra.mxu0 %v2997
    %v3065 = vpop.f32.mrf.mxu0
    %v3066 = vadd.f32 0.0, %v3065
    %v3067 = vpop.f32.mrf.mxu0
    %3068 = vdwg.mxu0
    %v3070 = vrot.slane %v3066, 6
    %v3072 = vadd.f32 %v153, %v3070
    %v3073 = vtanh.pop %v3072
    %v3075 = vrot.slane %v2994, 5
    %v3076 = vsel %vm172, %v3075, 0
    %3078 = vmatprep.subr.mxu0 0.0
    %3079 = vmatpush1.msra.mxu0 0.0
    %3080 = vmatprep.subr.mxu0 0.0
    %3081 = vmatpush1.msra.mxu0 0.0
    %3082 = vmatprep.subr.mxu0 0.0
    %3083 = vmatpush1.msra.mxu0 0.0
    %3084 = vmatprep.subr.mxu0 0.0
    %3085 = vmatpush1.msra.mxu0 0.0
    %3086 = vmatprep.subr.mxu0 0.0
    %3087 = vmatpush1.msra.mxu0 0.0
    %3088 = vmatprep.subr.mxu0 0.0
    %3089 = vmatpush1.msra.mxu0 0.0
    %3090 = vmatprep.subr.mxu0 0.0
    %3091 = vmatpush1.msra.mxu0 0.0
    %3092 = vmatprep.subr.mxu0 0.0
    %3093 = vmatpush1.msra.mxu0 0.0
    %3094 = vmatprep.subr.mxu0 0.0
    %3095 = vmatpush1.msra.mxu0 0.0
    %3096 = vmatprep.subr.mxu0 0.0
    %3097 = vmatpush1.msra.mxu0 0.0
    %3098 = vmatprep.subr.mxu0 0.0
    %3099 = vmatpush1.msra.mxu0 0.0
    %3100 = vmatprep.subr.mxu0 0.0
    %3101 = vmatpush1.msra.mxu0 0.0
    %3102 = vmatprep.subr.mxu0 0.0
    %3103 = vmatpush1.msra.mxu0 %v169
    %3104 = vmatprep.subr.mxu0 0.0
    %3105 = vmatpush1.msra.mxu0 %v168
    %3106 = vmatprep.subr.mxu0 0.0
    %3107 = vmatpush1.msra.mxu0 %v167
    %3108 = vmatprep.subr.mxu0 0.0
    %3109 = vmatpush1.msra.mxu0 %v166
    %3110 = vmatprep.subr.mxu0 0.0
    %3111 = vmatpush2.msra.mxu0 0.0
    %3112 = vmatprep.subr.mxu0 0.0
    %3113 = vmatpush2.msra.mxu0 0.0
    %3114 = vmatprep.subr.mxu0 0.0
    %3115 = vmatpush2.msra.mxu0 0.0
    %3116 = vmatprep.subr.mxu0 0.0
    %3117 = vmatpush2.msra.mxu0 0.0
    %3118 = vmatprep.subr.mxu0 0.0
    %3119 = vmatpush2.msra.mxu0 0.0
    %3120 = vmatprep.subr.mxu0 0.0
    %3121 = vmatpush2.msra.mxu0 0.0
    %3122 = vmatprep.subr.mxu0 0.0
    %3123 = vmatpush2.msra.mxu0 0.0
    %3124 = vmatprep.subr.mxu0 0.0
    %3125 = vmatpush2.msra.mxu0 0.0
    %3126 = vmatprep.subr.mxu0 0.0
    %3127 = vmatpush2.msra.mxu0 0.0
    %3128 = vmatprep.subr.mxu0 0.0
    %3129 = vmatpush2.msra.mxu0 0.0
    %3130 = vmatprep.subr.mxu0 0.0
    %3131 = vmatpush2.msra.mxu0 0.0
    %3132 = vmatprep.subr.mxu0 0.0
    %3133 = vmatpush2.msra.mxu0 0.0
    %3134 = vmatprep.subr.mxu0 0.0
    %3135 = vmatpush2.msra.mxu0 0.0
    %3136 = vmatprep.subr.mxu0 0.0
    %3137 = vmatpush2.msra.mxu0 0.0
    %3138 = vmatprep.subr.mxu0 0.0
    %3139 = vmatpush2.msra.mxu0 0.0
    %3140 = vmatprep.subr.mxu0 0.0
    %3141 = vmatpush2.msra.mxu0 0.0
    %3142 = vmatprep.mubr.f32.mxu0 0.0
    %3143 = vmatmul.mubr.f32.gmra.mxu0 %v3076
    %v3144 = vpop.f32.mrf.mxu0
    %v3145 = vadd.f32 0.0, %v3144
    %v3146 = vpop.f32.mrf.mxu0
    %3147 = vdwg.mxu0
    %v3149 = vrot.slane %v3145, 2
    %v3151 = vadd.f32 %v163, %v3149
    %v3152 = vtanh.pop %v3151
    %v3154 = vrot.slane %v3073, 2
    %v3155 = vsel %vm172, %v3154, 0
    %3157 = vmatprep.subr.mxu0 0.0
    %3158 = vmatpush1.msra.mxu0 0.0
    %3159 = vmatprep.subr.mxu0 0.0
    %3160 = vmatpush1.msra.mxu0 0.0
    %3161 = vmatprep.subr.mxu0 0.0
    %3162 = vmatpush1.msra.mxu0 0.0
    %3163 = vmatprep.subr.mxu0 0.0
    %3164 = vmatpush1.msra.mxu0 0.0
    %3165 = vmatprep.subr.mxu0 0.0
    %3166 = vmatpush1.msra.mxu0 0.0
    %3167 = vmatprep.subr.mxu0 0.0
    %3168 = vmatpush1.msra.mxu0 0.0
    %3169 = vmatprep.subr.mxu0 0.0
    %3170 = vmatpush1.msra.mxu0 0.0
    %3171 = vmatprep.subr.mxu0 0.0
    %3172 = vmatpush1.msra.mxu0 0.0
    %3173 = vmatprep.subr.mxu0 0.0
    %3174 = vmatpush1.msra.mxu0 0.0
    %3175 = vmatprep.subr.mxu0 0.0
    %3176 = vmatpush1.msra.mxu0 0.0
    %3177 = vmatprep.subr.mxu0 0.0
    %3178 = vmatpush1.msra.mxu0 0.0
    %3179 = vmatprep.subr.mxu0 0.0
    %3180 = vmatpush1.msra.mxu0 0.0
    %3181 = vmatprep.subr.mxu0 0.0
    %3182 = vmatpush1.msra.mxu0 %v169
    %3183 = vmatprep.subr.mxu0 0.0
    %3184 = vmatpush1.msra.mxu0 %v168
    %3185 = vmatprep.subr.mxu0 0.0
    %3186 = vmatpush1.msra.mxu0 %v167
    %3187 = vmatprep.subr.mxu0 0.0
    %3188 = vmatpush1.msra.mxu0 %v166
    %3189 = vmatprep.subr.mxu0 0.0
    %3190 = vmatpush2.msra.mxu0 0.0
    %3191 = vmatprep.subr.mxu0 0.0
    %3192 = vmatpush2.msra.mxu0 0.0
    %3193 = vmatprep.subr.mxu0 0.0
    %3194 = vmatpush2.msra.mxu0 0.0
    %3195 = vmatprep.subr.mxu0 0.0
    %3196 = vmatpush2.msra.mxu0 0.0
    %3197 = vmatprep.subr.mxu0 0.0
    %3198 = vmatpush2.msra.mxu0 0.0
    %3199 = vmatprep.subr.mxu0 0.0
    %3200 = vmatpush2.msra.mxu0 0.0
    %3201 = vmatprep.subr.mxu0 0.0
    %3202 = vmatpush2.msra.mxu0 0.0
    %3203 = vmatprep.subr.mxu0 0.0
    %3204 = vmatpush2.msra.mxu0 0.0
    %3205 = vmatprep.subr.mxu0 0.0
    %3206 = vmatpush2.msra.mxu0 0.0
    %3207 = vmatprep.subr.mxu0 0.0
    %3208 = vmatpush2.msra.mxu0 0.0
    %3209 = vmatprep.subr.mxu0 0.0
    %3210 = vmatpush2.msra.mxu0 0.0
    %3211 = vmatprep.subr.mxu0 0.0
    %3212 = vmatpush2.msra.mxu0 0.0
    %3213 = vmatprep.subr.mxu0 0.0
    %3214 = vmatpush2.msra.mxu0 0.0
    %3215 = vmatprep.subr.mxu0 0.0
    %3216 = vmatpush2.msra.mxu0 0.0
    %3217 = vmatprep.subr.mxu0 0.0
    %3218 = vmatpush2.msra.mxu0 0.0
    %3219 = vmatprep.subr.mxu0 0.0
    %3220 = vmatpush2.msra.mxu0 0.0
    %3221 = vmatprep.mubr.f32.mxu0 0.0
    %3222 = vmatmul.mubr.f32.gmra.mxu0 %v3155
    %v3223 = vpop.f32.mrf.mxu0
    %v3224 = vadd.f32 0.0, %v3223
    %v3225 = vpop.f32.mrf.mxu0
    %3226 = vdwg.mxu0
    %v3228 = vrot.slane %v3224, 5
    %v3230 = vadd.f32 %v153, %v3228
    %v3231 = vtanh.pop %v3230
    %v3233 = vrot.slane %v3152, 6
    %v3234 = vsel %vm172, %v3233, 0
    %3236 = vmatprep.subr.mxu0 0.0
    %3237 = vmatpush1.msra.mxu0 0.0
    %3238 = vmatprep.subr.mxu0 0.0
    %3239 = vmatpush1.msra.mxu0 0.0
    %3240 = vmatprep.subr.mxu0 0.0
    %3241 = vmatpush1.msra.mxu0 0.0
    %3242 = vmatprep.subr.mxu0 0.0
    %3243 = vmatpush1.msra.mxu0 0.0
    %3244 = vmatprep.subr.mxu0 0.0
    %3245 = vmatpush1.msra.mxu0 0.0
    %3246 = vmatprep.subr.mxu0 0.0
    %3247 = vmatpush1.msra.mxu0 0.0
    %3248 = vmatprep.subr.mxu0 0.0
    %3249 = vmatpush1.msra.mxu0 0.0
    %3250 = vmatprep.subr.mxu0 0.0
    %3251 = vmatpush1.msra.mxu0 0.0
    %3252 = vmatprep.subr.mxu0 0.0
    %3253 = vmatpush1.msra.mxu0 0.0
    %3254 = vmatprep.subr.mxu0 0.0
    %3255 = vmatpush1.msra.mxu0 0.0
    %3256 = vmatprep.subr.mxu0 0.0
    %3257 = vmatpush1.msra.mxu0 0.0
    %3258 = vmatprep.subr.mxu0 0.0
    %3259 = vmatpush1.msra.mxu0 0.0
    %3260 = vmatprep.subr.mxu0 0.0
    %3261 = vmatpush1.msra.mxu0 %v169
    %3262 = vmatprep.subr.mxu0 0.0
    %3263 = vmatpush1.msra.mxu0 %v168
    %3264 = vmatprep.subr.mxu0 0.0
    %3265 = vmatpush1.msra.mxu0 %v167
    %3266 = vmatprep.subr.mxu0 0.0
    %3267 = vmatpush1.msra.mxu0 %v166
    %3268 = vmatprep.subr.mxu0 0.0
    %3269 = vmatpush2.msra.mxu0 0.0
    %3270 = vmatprep.subr.mxu0 0.0
    %3271 = vmatpush2.msra.mxu0 0.0
    %3272 = vmatprep.subr.mxu0 0.0
    %3273 = vmatpush2.msra.mxu0 0.0
    %3274 = vmatprep.subr.mxu0 0.0
    %3275 = vmatpush2.msra.mxu0 0.0
    %3276 = vmatprep.subr.mxu0 0.0
    %3277 = vmatpush2.msra.mxu0 0.0
    %3278 = vmatprep.subr.mxu0 0.0
    %3279 = vmatpush2.msra.mxu0 0.0
    %3280 = vmatprep.subr.mxu0 0.0
    %3281 = vmatpush2.msra.mxu0 0.0
    %3282 = vmatprep.subr.mxu0 0.0
    %3283 = vmatpush2.msra.mxu0 0.0
    %3284 = vmatprep.subr.mxu0 0.0
    %3285 = vmatpush2.msra.mxu0 0.0
    %3286 = vmatprep.subr.mxu0 0.0
    %3287 = vmatpush2.msra.mxu0 0.0
    %3288 = vmatprep.subr.mxu0 0.0
    %3289 = vmatpush2.msra.mxu0 0.0
    %3290 = vmatprep.subr.mxu0 0.0
    %3291 = vmatpush2.msra.mxu0 0.0
    %3292 = vmatprep.subr.mxu0 0.0
    %3293 = vmatpush2.msra.mxu0 0.0
    %3294 = vmatprep.subr.mxu0 0.0
    %3295 = vmatpush2.msra.mxu0 0.0
    %3296 = vmatprep.subr.mxu0 0.0
    %3297 = vmatpush2.msra.mxu0 0.0
    %3298 = vmatprep.subr.mxu0 0.0
    %3299 = vmatpush2.msra.mxu0 0.0
    %3300 = vmatprep.mubr.f32.mxu0 0.0
    %3301 = vmatmul.mubr.f32.gmra.mxu0 %v3234
    %v3302 = vpop.f32.mrf.mxu0
    %v3303 = vadd.f32 0.0, %v3302
    %v3304 = vpop.f32.mrf.mxu0
    %3305 = vdwg.mxu0
    %v3307 = vrot.slane %v3303, 1
    %v3309 = vadd.f32 %v163, %v3307
    %v3310 = vtanh.pop %v3309
    %vm3311 = vcmask 257027
    %3312 = vst.msk [vmem:[#allocation2 - $0x3] sm:$0x8] %vm3311, %v3231
    %vm3313 = vcmask 261127
    %3314 = vst.msk [vmem:[#allocation2 - $0x6] sm:$0x80] %vm3313, %v3310
    // Predicated region
    $region30: #{tpu_custom_call.1} parent=1 // pred_check
      %p3315 = pneg %p24
    $region31: #{tpu_custom_call.1} parent=1 // pred_check_branch
      %3317 = sbr.rel (%p3315) target = $region33
    $region32: #{tpu_custom_call.1} parent=1 // pred_region
      %v3318 = vld [vmem:[#allocation2] sm:$0x3]
      %v3319 = vld [vmem:[%s4] sm:$0xff]
      %v3320 = vld [vmem:[%s4 + $0x8] sm:$0xff]
      %v3321 = vld [vmem:[%s4 + $0x10] sm:$0xff]
      %v3322 = vld [vmem:[%s4 + $0x18] sm:$0xff]
      %v3323 = vld [vmem:[%s5] sm:$0x1]
      %v3325 = vlaneseq
      %v3326 = vshrl.u32 %v3325, 7
      %v3327 = vsub.s32 0, %v3326
      %v3328 = vrot.slane %v3323, %v3327
      %v3331 = vsel %vm172, %v3318, 0
      %3333 = vmatprep.subr.mxu0 0.0
      %3334 = vmatpush1.msra.mxu0 0.0
      %3335 = vmatprep.subr.mxu0 0.0
      %3336 = vmatpush1.msra.mxu0 0.0
      %3337 = vmatprep.subr.mxu0 0.0
      %3338 = vmatpush1.msra.mxu0 0.0
      %3339 = vmatprep.subr.mxu0 0.0
      %3340 = vmatpush1.msra.mxu0 0.0
      %3341 = vmatprep.subr.mxu0 0.0
      %3342 = vmatpush1.msra.mxu0 0.0
      %3343 = vmatprep.subr.mxu0 0.0
      %3344 = vmatpush1.msra.mxu0 0.0
      %3345 = vmatprep.subr.mxu0 0.0
      %3346 = vmatpush1.msra.mxu0 0.0
      %3347 = vmatprep.subr.mxu0 0.0
      %3348 = vmatpush1.msra.mxu0 0.0
      %3349 = vmatprep.subr.mxu0 0.0
      %3350 = vmatpush1.msra.mxu0 0.0
      %3351 = vmatprep.subr.mxu0 0.0
      %3352 = vmatpush1.msra.mxu0 0.0
      %3353 = vmatprep.subr.mxu0 0.0
      %3354 = vmatpush1.msra.mxu0 0.0
      %3355 = vmatprep.subr.mxu0 0.0
      %3356 = vmatpush1.msra.mxu0 0.0
      %3357 = vmatprep.subr.mxu0 0.0
      %3358 = vmatpush1.msra.mxu0 %v3322
      %3359 = vmatprep.subr.mxu0 0.0
      %3360 = vmatpush1.msra.mxu0 %v3321
      %3361 = vmatprep.subr.mxu0 0.0
      %3362 = vmatpush1.msra.mxu0 %v3320
      %3363 = vmatprep.subr.mxu0 0.0
      %3364 = vmatpush1.msra.mxu0 %v3319
      %3365 = vmatprep.subr.mxu0 0.0
      %3366 = vmatpush2.msra.mxu0 0.0
      %3367 = vmatprep.subr.mxu0 0.0
      %3368 = vmatpush2.msra.mxu0 0.0
      %3369 = vmatprep.subr.mxu0 0.0
      %3370 = vmatpush2.msra.mxu0 0.0
      %3371 = vmatprep.subr.mxu0 0.0
      %3372 = vmatpush2.msra.mxu0 0.0
      %3373 = vmatprep.subr.mxu0 0.0
      %3374 = vmatpush2.msra.mxu0 0.0
      %3375 = vmatprep.subr.mxu0 0.0
      %3376 = vmatpush2.msra.mxu0 0.0
      %3377 = vmatprep.subr.mxu0 0.0
      %3378 = vmatpush2.msra.mxu0 0.0
      %3379 = vmatprep.subr.mxu0 0.0
      %3380 = vmatpush2.msra.mxu0 0.0
      %3381 = vmatprep.subr.mxu0 0.0
      %3382 = vmatpush2.msra.mxu0 0.0
      %3383 = vmatprep.subr.mxu0 0.0
      %3384 = vmatpush2.msra.mxu0 0.0
      %3385 = vmatprep.subr.mxu0 0.0
      %3386 = vmatpush2.msra.mxu0 0.0
      %3387 = vmatprep.subr.mxu0 0.0
      %3388 = vmatpush2.msra.mxu0 0.0
      %3389 = vmatprep.subr.mxu0 0.0
      %3390 = vmatpush2.msra.mxu0 0.0
      %3391 = vmatprep.subr.mxu0 0.0
      %3392 = vmatpush2.msra.mxu0 0.0
      %3393 = vmatprep.subr.mxu0 0.0
      %3394 = vmatpush2.msra.mxu0 0.0
      %3395 = vmatprep.subr.mxu0 0.0
      %3396 = vmatpush2.msra.mxu0 0.0
      %3397 = vmatprep.mubr.f32.mxu0 0.0
      %3398 = vmatmul.mubr.f32.gmra.mxu0 %v3331
      %v3399 = vpop.f32.mrf.mxu0
      %v3400 = vadd.f32 %v3328, %v3399
      %v3401 = vpop.f32.mrf.mxu0
      %3402 = vdwg.mxu0
      %vm3403 = vcmask 41984
      %3404 = vst.msk [vmem:[#allocation3] sm:$0x3] %vm3403, %v3400
    $region33: #{tpu_custom_call.1} parent=1 // pred_fallthru
      _
    // Predicated region
    $region34: #{tpu_custom_call.1} parent=1 // pred_check
      _
    $region35: #{tpu_custom_call.1} parent=1 // pred_check_branch
      %3406 = sbr.rel (0) target = $region37
    $region36: #{tpu_custom_call.1} parent=1 // pred_region
      %s3408 = ssub.s32 32, 32
      %3409 = vsyncadd [#allocation4], %s3408
      %s3411 = sshll.u32 [#allocation3], 4
      %s3412 = int_to_ptr.vmem [resolvable:$true] %s3411
      %3414 = dma.vmem_to_hbm [thread:$0]  %s3412, 32, %s6, [#allocation4]
    $region37: #{tpu_custom_call.1} parent=1 // pred_fallthru
      _
    // Predicated region
    $region38: #{tpu_custom_call.1} parent=1 // pred_check
      _
    $region39: #{tpu_custom_call.1} parent=1 // pred_check_branch
      %3416 = sbr.rel (0) target = $region41
    $region40: #{tpu_custom_call.1} parent=1 // pred_region
      %3417 = dma.done [#allocation4], 32
    $region41: #{tpu_custom_call.1} parent=1 // pred_fallthru
      _
    %3418 = vsyncpa [#allocation4], 1

</llo_original>
